<compile_context>
chip_gen: v6e
topology: v6e:2x2x1
jax: 0.10.0
libtpu: 0.0.40
codegen_flags: <defaults>
</compile_context>

<pallas_src>
import jax
import jax.numpy as jnp
from jax import lax
from jax.experimental import pallas as pl
from jax.experimental.pallas import tpu as pltpu


def _round_up(x, m):
    return (x + m - 1) // m * m


# ---------------------------------------------------------------------------
# Host-side layout prep: conv1 im2col, columns ordered (parity d, batch, grid)
# ---------------------------------------------------------------------------
def _build_cols1(x):
    """x: (B, C, H, W) f32.  Returns (cols1 bf16, geometry).

    cols1[(c, dh1, dw1, kh', kw'), d*(B*NPB) + b*NPB + oh2'*PW + ow2']
        = x[b, c, 4*(2*oh2' + dh + kh') + dh1, 4*(2*ow2' + dw + kw') + dw1]
    i.e. an im2col for conv1 (k=8, s=4) whose *columns* are pre-grouped by the
    parity d=(dh,dw) of the conv1 output position, so that conv2's
    space-to-depth is a 4-way aligned row-block scatter inside the kernel.
    """
    B, C, H, W = x.shape
    assert H % 4 == 0 and W % 4 == 0, (H, W)
    oh1, ow1 = (H - 8) // 4 + 1, (W - 8) // 4 + 1        # conv1 out (20, 20)
    assert oh1 % 2 == 0 and ow1 % 2 == 0, (oh1, ow1)
    ph, pw = oh1 // 2, ow1 // 2                          # parity grid (10, 10)
    p = ph * pw
    npb = _round_up(p, 128)                              # per-(d, b) lane pad
    u, v = H // 4, W // 4                                # s2d(4) spatial (21,21)

    xb = x.astype(jnp.bfloat16)
    # space-to-depth(4):  x4[b, c, dh1, dw1, u, v] = x[b, c, 4u+dh1, 4v+dw1]
    x4 = xb.reshape(B, C, u, 4, v, 4).transpose(0, 1, 3, 5, 2, 4)
    slabs = []
    for kh in range(2):                                  # conv1 as 2x2 stride-1
        for kw in range(2):
            s = x4[:, :, :, :, kh:kh + oh1, kw:kw + ow1]   # (B,C,4,4,oh1,ow1)
            slabs.append(s.reshape(B, C, 4, 4, ph, 2, pw, 2))
    st = jnp.stack(slabs, axis=0).reshape(2, 2, B, C, 4, 4, ph, 2, pw, 2)
    # axes: (kh', kw', b, c, dh1, dw1, oh2', dh, ow2', dw)
    st = st.transpose(3, 4, 5, 0, 1, 7, 9, 2, 6, 8)
    # axes: (c, dh1, dw1, kh', kw', dh, dw, b, oh2', ow2')
    k_rows = C * 4 * 4 * 2 * 2
    cols = st.reshape(k_rows, 4, B, p)
    cols = jnp.pad(cols, ((0, 0), (0, 0), (0, 0), (0, npb - p)))
    cols = cols.reshape(k_rows, 4 * B * npb)
    return cols, {"ph": ph, "pw": pw, "p": p, "npb": npb}


# ---------------------------------------------------------------------------
# Pallas kernel 1: fused conv1 -> conv2 -> conv3 (bias + ReLU each), in VMEM
# ---------------------------------------------------------------------------
def conv_stack(cols1, kp, *, batch, npb, pw):
    nb = batch * npb                      # lane width of every layer (B*128)
    oc1, k1 = kp["c1_w"].shape            # (32, 256)
    oc2 = kp["c2_w"].shape[1]             # 64
    s2d_c = 4 * oc1                       # 128 = conv2 s2d input channels
    oc3 = kp["c3_w"].shape[1]             # 64

    def kernel(cols_ref, w1_ref, b1_ref, w2_ref, b2_ref, w3_ref, b3_ref,
               out_ref, a1_ref, a2_ref):
        # Zero the scratch so shifted window reads past the valid region see
        # zeros (they only feed discarded padding columns, but keep it clean).
        a1_ref[...] = jnp.zeros(a1_ref.shape, a1_ref.dtype)
        a2_ref[...] = jnp.zeros(a2_ref.shape, a2_ref.dtype)

        # conv1: one bf16 matmul over the pre-built im2col columns.
        h = jnp.dot(w1_ref[...], cols_ref[...],
                    preferred_element_type=jnp.float32)         # (32, 4*nb)
        h = jnp.maximum(h + b1_ref[...], 0.0).astype(jnp.bfloat16)
        # Scatter the 4 parity blocks into conv2's space-to-depth input rows
        # (aligned sublane-block writes, aligned lane-block reads).
        for d in range(4):
            a1_ref[d * oc1:(d + 1) * oc1, 0:nb] = h[:, d * nb:(d + 1) * nb]

        # conv2 (k=4, s=2) == 2x2 stride-1 conv on the s2d input:
        # 4 shifted-window matmuls accumulated in f32.
        acc2 = jnp.zeros((oc2, nb), jnp.float32)
        for kh in range(2):
            for kw in range(2):
                sh = kh * pw + kw
                acc2 = acc2 + jnp.dot(w2_ref[kh * 2 + kw],
                                      a1_ref[:, sh:sh + nb],
                                      preferred_element_type=jnp.float32)
        a2 = jnp.maximum(acc2 + b2_ref[...], 0.0).astype(jnp.bfloat16)
        a2_ref[:, 0:nb] = a2

        # conv3 (k=3, s=1): 9 shifted-window matmuls.
        acc3 = jnp.zeros((oc3, nb), jnp.float32)
        for kh in range(3):
            for kw in range(3):
                sh = kh * pw + kw
                acc3 = acc3 + jnp.dot(w3_ref[kh * 3 + kw],
                                      a2_ref[:, sh:sh + nb],
                                      preferred_element_type=jnp.float32)
        out_ref[...] = jnp.maximum(acc3 + b3_ref[...], 0.0)

    cost = pl.CostEstimate(
        flops=2 * nb * (oc1 * k1 * 4 + 4 * oc2 * s2d_c + 9 * oc3 * oc2),
        transcendentals=0,
        bytes_accessed=(cols1.size * 2 + kp["c1_w"].size * 2
                        + kp["c2_w"].size * 2 + kp["c3_w"].size * 2
                        + (oc1 + oc2 + oc3) * 4 + oc3 * nb * 4))

    return pl.pallas_call(
        kernel,
        out_shape=jax.ShapeDtypeStruct((oc3, nb), jnp.float32),
        grid_spec=pltpu.PrefetchScalarGridSpec(
            num_scalar_prefetch=0,
            grid=(1,),
            in_specs=[
                pl.BlockSpec(cols1.shape, lambda i: (0, 0)),        # im2col
                pl.BlockSpec(kp["c1_w"].shape, lambda i: (0, 0)),   # w1 bf16
                pl.BlockSpec(kp["c1_b"].shape, lambda i: (0, 0)),   # b1 f32
                pl.BlockSpec(kp["c2_w"].shape, lambda i: (0, 0, 0)),
                pl.BlockSpec(kp["c2_b"].shape, lambda i: (0, 0)),
                pl.BlockSpec(kp["c3_w"].shape, lambda i: (0, 0, 0)),
                pl.BlockSpec(kp["c3_b"].shape, lambda i: (0, 0)),
            ],
            out_specs=pl.BlockSpec((oc3, nb), lambda i: (0, 0)),
            scratch_shapes=[
                pltpu.VMEM((s2d_c, nb + 128), jnp.bfloat16),   # conv2 input
                pltpu.VMEM((oc2, nb + 128), jnp.bfloat16),     # conv3 input
            ],
        ),
        compiler_params=pltpu.CompilerParams(
            dimension_semantics=("arbitrary",),
            vmem_limit_bytes=8 * 1024 * 1024),
        cost_estimate=cost,
    )(cols1, kp["c1_w"], kp["c1_b"], kp["c2_w"], kp["c2_b"],
      kp["c3_w"], kp["c3_b"])


# ---------------------------------------------------------------------------
# Pallas kernel 2: fused FC1(+ReLU)+FC2, FC1 weight fully resident, 1 grid step
# ---------------------------------------------------------------------------
def fc_head(flat_bf16, kp):
    B, kpd = flat_bf16.shape
    kw1, hdim = kp["fc1_w"].shape
    assert kw1 == kpd, (kw1, kpd)
    hdim2, apad = kp["fc2_w"].shape
    assert hdim2 == hdim

    def kernel(x_ref, w1_ref, b1_ref, w2_ref, b2_ref, o_ref):
        h = jnp.dot(x_ref[...], w1_ref[...],
                    preferred_element_type=jnp.float32)          # (B, 512)
        h = jnp.maximum(h + b1_ref[...], 0.0).astype(jnp.bfloat16)
        o_ref[...] = (jnp.dot(h, w2_ref[...],
                              preferred_element_type=jnp.float32)
                      + b2_ref[...])

    cost = pl.CostEstimate(
        flops=2 * B * kpd * hdim + 2 * B * hdim * apad,
        transcendentals=0,
        bytes_accessed=(B * kpd * 2 + kpd * hdim * 2 + hdim * 4
                        + hdim * apad * 2 + apad * 4 + B * apad * 4))

    return pl.pallas_call(
        kernel,
        out_shape=jax.ShapeDtypeStruct((B, apad), jnp.float32),
        grid_spec=pltpu.PrefetchScalarGridSpec(
            num_scalar_prefetch=0,
            grid=(1,),
            in_specs=[
                pl.BlockSpec((B, kpd), lambda i: (0, 0)),     # activations bf16
                pl.BlockSpec((kpd, hdim), lambda i: (0, 0)),  # fc1_w resident
                pl.BlockSpec((1, hdim), lambda i: (0, 0)),    # b1
                pl.BlockSpec((hdim, apad), lambda i: (0, 0)),  # fc2_w
                pl.BlockSpec((1, apad), lambda i: (0, 0)),     # b2
            ],
            out_specs=pl.BlockSpec((B, apad), lambda i: (0, 0)),
        ),
        compiler_params=pltpu.CompilerParams(
            dimension_semantics=("arbitrary",),
            vmem_limit_bytes=12 * 1024 * 1024),
        cost_estimate=cost,
    )(flat_bf16, kp["fc1_w"], kp["fc1_b"], kp["fc2_w"], kp["fc2_b"])


# ---------------------------------------------------------------------------
# Parameters (PyTorch semantics) + one-time kernel-layout prep + forward
# ---------------------------------------------------------------------------
def init_dqn_params(key, input_shape, n_actions):
    """f32 master parameters in PyTorch layouts (OIHW convs, (fin,fout) fcs)."""
    C, H, W = input_shape
    keys = jax.random.split(key, 10)

    def conv_init(kw_, kb_, oc, ic, k):
        fan_in = ic * k * k
        w = jax.random.normal(kw_, (oc, ic, k, k), jnp.float32) / jnp.sqrt(fan_in)
        b = jax.random.normal(kb_, (oc,), jnp.float32) * 0.01
        return w, b

    def fc_init(kw_, kb_, fin, fout):
        w = jax.random.normal(kw_, (fin, fout), jnp.float32) / jnp.sqrt(fin)
        b = jax.random.normal(kb_, (fout,), jnp.float32) * 0.01
        return w, b

    p = {}
    p["c1_w"], p["c1_b"] = conv_init(keys[0], keys[1], 32, C, 8)
    p["c2_w"], p["c2_b"] = conv_init(keys[2], keys[3], 64, 32, 4)
    p["c3_w"], p["c3_b"] = conv_init(keys[4], keys[5], 64, 64, 3)
    h1, w1 = (H - 8) // 4 + 1, (W - 8) // 4 + 1
    h2, w2 = (h1 - 4) // 2 + 1, (w1 - 4) // 2 + 1
    h3, w3 = h2 - 2, w2 - 2
    conv_out = 64 * h3 * w3                       # matches DQN._get_conv_out
    p["fc1_w"], p["fc1_b"] = fc_init(keys[6], keys[7], conv_out, 512)
    p["fc2_w"], p["fc2_b"] = fc_init(keys[8], keys[9], 512, n_actions)
    return p


def prepare_params(params):
    """One-time kernel layouts: bf16 weights, space-to-depth conv weight
    orderings matching the in-kernel im2col, FC dims padded to lane multiples."""
    kp = {}
    # conv1: (32, C, 8, 8) -> (32, C*4*4*2*2), K ordered (c, dh1, dw1, kh', kw')
    w1 = params["c1_w"]
    oc1, c_in = w1.shape[0], w1.shape[1]
    w1 = w1.reshape(oc1, c_in, 2, 4, 2, 4)        # (oc, c, kh', dh1, kw', dw1)
    w1 = w1.transpose(0, 1, 3, 5, 2, 4)           # (oc, c, dh1, dw1, kh', kw')
    kp["c1_w"] = w1.reshape(oc1, c_in * 64).astype(jnp.bfloat16)
    kp["c1_b"] = params["c1_b"].reshape(oc1, 1).astype(jnp.float32)
    # conv2: (64, 32, 4, 4) -> (4, 64, 128); idx = kh'*2+kw', col = (dh,dw,c2)
    w2 = params["c2_w"]
    oc2, c2 = w2.shape[0], w2.shape[1]
    w2 = w2.reshape(oc2, c2, 2, 2, 2, 2)          # (oc2, c2, kh', dh, kw', dw)
    w2 = w2.transpose(2, 4, 0, 3, 5, 1)           # (kh', kw', oc2, dh, dw, c2)
    kp["c2_w"] = w2.reshape(4, oc2, 4 * c2).astype(jnp.bfloat16)
    kp["c2_b"] = params["c2_b"].reshape(oc2, 1).astype(jnp.float32)
    # conv3: (64, 64, 3, 3) -> (9, 64, 64); idx = kh3*3+kw3
    w3 = params["c3_w"]
    oc3, c3 = w3.shape[0], w3.shape[1]
    kp["c3_w"] = w3.transpose(2, 3, 0, 1).reshape(9, oc3, c3).astype(jnp.bfloat16)
    kp["c3_b"] = params["c3_b"].reshape(oc3, 1).astype(jnp.float32)
    # FC1: K padded to a multiple of 128, resident bf16
    w_fc1 = params["fc1_w"]
    k_in, hidden = w_fc1.shape
    k_pad = _round_up(k_in, 128)
    if k_pad != k_in:
        w_fc1 = jnp.pad(w_fc1, ((0, k_pad - k_in), (0, 0)))
    kp["fc1_w"] = w_fc1.astype(jnp.bfloat16)
    kp["fc1_b"] = params["fc1_b"].reshape(1, hidden).astype(jnp.float32)
    # FC2: n_actions padded to 128 lanes (lane-dense output store)
    w_fc2 = params["fc2_w"]
    n_act = w_fc2.shape[1]
    a_pad = _round_up(n_act, 128)
    kp["fc2_w"] = jnp.pad(w_fc2, ((0, 0), (0, a_pad - n_act))).astype(jnp.bfloat16)
    kp["fc2_b"] = jnp.pad(params["fc2_b"].reshape(1, n_act),
                          ((0, 0), (0, a_pad - n_act))).astype(jnp.float32)
    return kp


def dqn_forward(kp, x, *, n_actions):
    """x: (B, C, H, W) f32 (PyTorch NCHW). Returns (B, n_actions) f32."""
    B = x.shape[0]
    cols1, geo = _build_cols1(x)                       # layout-only XLA prep
    out3 = conv_stack(cols1, kp, batch=B, npb=geo["npb"], pw=geo["pw"])
    # Flatten conv3 output: (OC3, B*NPB grid) -> (B, OC3*7*7) in torch order.
    oc3 = out3.shape[0]
    ph, pw, p, npb = geo["ph"], geo["pw"], geo["p"], geo["npb"]
    h3, w3 = (ph - 1) - 2, (pw - 1) - 2                # conv3 out spatial (7,7)
    t = out3.reshape(oc3, B, npb)[:, :, :p].reshape(oc3, B, ph, pw)
    t = t[:, :, :h3, :w3].transpose(1, 0, 2, 3)        # (B, OC3, 7, 7)
    flat = t.reshape(B, oc3 * h3 * w3)                 # == torch .view(B, -1)
    k_pad = kp["fc1_w"].shape[0]
    if k_pad != flat.shape[1]:
        flat = jnp.pad(flat, ((0, 0), (0, k_pad - flat.shape[1])))
    q_pad = fc_head(flat.astype(jnp.bfloat16), kp)
    return q_pad[:, :n_actions]


# ---------------------------------------------------------------------------
# Pure-JAX reference (mirrors the bf16 weight/activation quantization points)
# ---------------------------------------------------------------------------
def _q(a):
    return a.astype(jnp.bfloat16).astype(jnp.float32)


def dqn_forward_ref(params, x):
    y = _q(x)
    for name, s in (("c1", 4), ("c2", 2), ("c3", 1)):
        w = _q(params[f"{name}_w"])
        b = params[f"{name}_b"]
        y = lax.conv_general_dilated(
            y, w, (s, s), "VALID",
            dimension_numbers=("NCHW", "OIHW", "NCHW"),
            precision=lax.Precision.HIGHEST)
        y = jnp.maximum(y + b[None, :, None, None], 0.0)
        y = _q(y)
    flat = y.reshape(y.shape[0], -1)
    h = jnp.maximum(
        jnp.dot(flat, _q(params["fc1_w"]),
                precision=lax.Precision.HIGHEST) + params["fc1_b"], 0.0)
    h = _q(h)
    return (jnp.dot(h, _q(params["fc2_w"]),
                    precision=lax.Precision.HIGHEST) + params["fc2_b"])


# ---------------------------------------------------------------------------
if __name__ == "__main__":
    input_shape = (4, 84, 84)      # (C, H, W) as in the PyTorch module
    n_actions = 7
    batch = 2

    key = jax.random.PRNGKey(0)
    key_p, key_x = jax.random.split(key)
    params = init_dqn_params(key_p, input_shape, n_actions)
    kparams = prepare_params(params)
    x = jax.random.normal(key_x, (batch,) + input_shape, jnp.float32)

    fwd = jax.jit(lambda kp_, x_: dqn_forward(kp_, x_, n_actions=n_actions))
    q = jax.block_until_ready(fwd(kparams, x))

    q_ref = jax.block_until_ready(dqn_forward_ref(params, x))
    assert q.shape == (batch, n_actions), q.shape
    max_err = float(jnp.max(jnp.abs(q - q_ref)))
    assert jnp.allclose(q, q_ref, rtol=1e-2, atol=1e-2), ("max abs err", max_err)

    print("KERNEL_OK")
</pallas_src>

<mosaic_0001>
module attributes {stable_mosaic.version = 11 : i64} {
  func.func @kernel(%arg0: i32, %arg1: memref<256x1024xbf16, #tpu.memory_space<vmem>>, %arg2: memref<32x256xbf16, #tpu.memory_space<vmem>>, %arg3: memref<32x1xf32, #tpu.memory_space<vmem>>, %arg4: memref<4x64x128xbf16, #tpu.memory_space<vmem>>, %arg5: memref<64x1xf32, #tpu.memory_space<vmem>>, %arg6: memref<9x64x64xbf16, #tpu.memory_space<vmem>>, %arg7: memref<64x1xf32, #tpu.memory_space<vmem>>, %arg8: memref<64x256xf32, #tpu.memory_space<vmem>>, %arg9: memref<128x384xbf16, #tpu.memory_space<vmem>>, %arg10: memref<64x384xbf16, #tpu.memory_space<vmem>>) attributes {dimension_semantics = [#tpu.dimension_semantics<arbitrary>], iteration_bounds = array<i64: 1>, scalar_prefetch = 0 : i64, scratch_operands = 2 : i64, tpu.core_type = #tpu.core_type<tc>, window_params = [{pipeline_mode = #tpu.pipeline_mode<synchronous>, transform_indices = @transform_0, window_bounds = array<i64: 256, 1024>}, {pipeline_mode = #tpu.pipeline_mode<synchronous>, transform_indices = @transform_1, window_bounds = array<i64: 32, 256>}, {pipeline_mode = #tpu.pipeline_mode<synchronous>, transform_indices = @transform_2, window_bounds = array<i64: 32, 1>}, {pipeline_mode = #tpu.pipeline_mode<synchronous>, transform_indices = @transform_3, window_bounds = array<i64: 4, 64, 128>}, {pipeline_mode = #tpu.pipeline_mode<synchronous>, transform_indices = @transform_4, window_bounds = array<i64: 64, 1>}, {pipeline_mode = #tpu.pipeline_mode<synchronous>, transform_indices = @transform_5, window_bounds = array<i64: 9, 64, 64>}, {pipeline_mode = #tpu.pipeline_mode<synchronous>, transform_indices = @transform_6, window_bounds = array<i64: 64, 1>}, {pipeline_mode = #tpu.pipeline_mode<synchronous>, transform_indices = @transform_7, window_bounds = array<i64: 64, 256>}]} {
    %cst = arith.constant 0.000000e+00 : bf16
    %0 = vector.broadcast %cst : bf16 to vector<128x384xbf16>
    %c0 = arith.constant 0 : index
    %c0_0 = arith.constant 0 : index
    %1 = vector.load %arg9[%c0, %c0_0] : memref<128x384xbf16, #tpu.memory_space<vmem>>, vector<128x384xbf16>
    tpu.vector_store %arg9[%c0, %c0_0], %0 {strides = array<i32>} : memref<128x384xbf16, #tpu.memory_space<vmem>>, vector<128x384xbf16>,
    %cst_1 = arith.constant 0.000000e+00 : bf16
    %2 = vector.broadcast %cst_1 : bf16 to vector<64x384xbf16>
    %c0_2 = arith.constant 0 : index
    %c0_3 = arith.constant 0 : index
    %3 = vector.load %arg10[%c0_2, %c0_3] : memref<64x384xbf16, #tpu.memory_space<vmem>>, vector<64x384xbf16>
    tpu.vector_store %arg10[%c0_2, %c0_3], %2 {strides = array<i32>} : memref<64x384xbf16, #tpu.memory_space<vmem>>, vector<64x384xbf16>,
    %c0_4 = arith.constant 0 : index
    %c0_5 = arith.constant 0 : index
    %4 = vector.load %arg2[%c0_4, %c0_5] : memref<32x256xbf16, #tpu.memory_space<vmem>>, vector<32x256xbf16>
    %c0_6 = arith.constant 0 : index
    %c0_7 = arith.constant 0 : index
    %5 = vector.load %arg1[%c0_6, %c0_7] : memref<256x1024xbf16, #tpu.memory_space<vmem>>, vector<256x1024xbf16>
    %cst_8 = arith.constant dense<0.000000e+00> : vector<32x1024xf32>
    %6 = tpu.matmul %4, %5, %cst_8 {dimension_numbers = #tpu.dot_dimension_numbers<[1], [0], [0], [1], [0, 0, 1, 1], [], []>} : vector<32x256xbf16>, vector<256x1024xbf16>, vector<32x1024xf32> -> vector<32x1024xf32>
    %c0_9 = arith.constant 0 : index
    %c0_10 = arith.constant 0 : index
    %7 = vector.load %arg3[%c0_9, %c0_10] : memref<32x1xf32, #tpu.memory_space<vmem>>, vector<32x1xf32>
    %8 = vector.broadcast %7 : vector<32x1xf32> to vector<32x1024xf32>
    %9 = arith.addf %6, %8 : vector<32x1024xf32>
    %cst_11 = arith.constant 0.000000e+00 : f32
    %10 = vector.broadcast %cst_11 : f32 to vector<32x1024xf32>
    %11 = arith.maximumf %9, %10 : vector<32x1024xf32>
    %12 = arith.truncf %11 : vector<32x1024xf32> to vector<32x1024xbf16>
    %13 = vector.extract_strided_slice %12 {offsets = [0, 0], sizes = [32, 256], strides = [1, 1]} : vector<32x1024xbf16> to vector<32x256xbf16>
    %c0_12 = arith.constant 0 : index
    %c0_13 = arith.constant 0 : index
    %14 = vector.load %arg9[%c0_12, %c0_13] : memref<128x384xbf16, #tpu.memory_space<vmem>>, vector<32x256xbf16>
    tpu.vector_store %arg9[%c0_12, %c0_13], %13 {strides = array<i32>} : memref<128x384xbf16, #tpu.memory_space<vmem>>, vector<32x256xbf16>,
    %15 = vector.extract_strided_slice %12 {offsets = [0, 256], sizes = [32, 256], strides = [1, 1]} : vector<32x1024xbf16> to vector<32x256xbf16>
    %c32 = arith.constant 32 : index
    %c0_14 = arith.constant 0 : index
    %16 = vector.load %arg9[%c32, %c0_14] : memref<128x384xbf16, #tpu.memory_space<vmem>>, vector<32x256xbf16>
    tpu.vector_store %arg9[%c32, %c0_14], %15 {strides = array<i32>} : memref<128x384xbf16, #tpu.memory_space<vmem>>, vector<32x256xbf16>,
    %17 = vector.extract_strided_slice %12 {offsets = [0, 512], sizes = [32, 256], strides = [1, 1]} : vector<32x1024xbf16> to vector<32x256xbf16>
    %c64 = arith.constant 64 : index
    %c0_15 = arith.constant 0 : index
    %18 = vector.load %arg9[%c64, %c0_15] : memref<128x384xbf16, #tpu.memory_space<vmem>>, vector<32x256xbf16>
    tpu.vector_store %arg9[%c64, %c0_15], %17 {strides = array<i32>} : memref<128x384xbf16, #tpu.memory_space<vmem>>, vector<32x256xbf16>,
    %19 = vector.extract_strided_slice %12 {offsets = [0, 768], sizes = [32, 256], strides = [1, 1]} : vector<32x1024xbf16> to vector<32x256xbf16>
    %c96 = arith.constant 96 : index
    %c0_16 = arith.constant 0 : index
    %20 = vector.load %arg9[%c96, %c0_16] : memref<128x384xbf16, #tpu.memory_space<vmem>>, vector<32x256xbf16>
    tpu.vector_store %arg9[%c96, %c0_16], %19 {strides = array<i32>} : memref<128x384xbf16, #tpu.memory_space<vmem>>, vector<32x256xbf16>,
    %cst_17 = arith.constant 0.000000e+00 : f32
    %21 = vector.broadcast %cst_17 : f32 to vector<64x256xf32>
    %c0_18 = arith.constant 0 : index
    %c0_19 = arith.constant 0 : index
    %c0_20 = arith.constant 0 : index
    %22 = vector.load %arg4[%c0_18, %c0_19, %c0_20] : memref<4x64x128xbf16, #tpu.memory_space<vmem>>, vector<1x64x128xbf16>
    %23 = vector.shape_cast %22 : vector<1x64x128xbf16> to vector<64x128xbf16>
    %c0_21 = arith.constant 0 : index
    %c0_22 = arith.constant 0 : index
    %24 = vector.load %arg9[%c0_21, %c0_22] : memref<128x384xbf16, #tpu.memory_space<vmem>>, vector<128x256xbf16>
    %cst_23 = arith.constant dense<0.000000e+00> : vector<64x256xf32>
    %25 = tpu.matmul %23, %24, %cst_23 {dimension_numbers = #tpu.dot_dimension_numbers<[1], [0], [0], [1], [0, 0, 1, 1], [], []>} : vector<64x128xbf16>, vector<128x256xbf16>, vector<64x256xf32> -> vector<64x256xf32>
    %26 = arith.addf %21, %25 : vector<64x256xf32>
    %c1 = arith.constant 1 : index
    %c0_24 = arith.constant 0 : index
    %c0_25 = arith.constant 0 : index
    %27 = vector.load %arg4[%c1, %c0_24, %c0_25] : memref<4x64x128xbf16, #tpu.memory_space<vmem>>, vector<1x64x128xbf16>
    %28 = vector.shape_cast %27 : vector<1x64x128xbf16> to vector<64x128xbf16>
    %c0_26 = arith.constant 0 : index
    %c1_27 = arith.constant 1 : index
    %29 = vector.load %arg9[%c0_26, %c1_27] : memref<128x384xbf16, #tpu.memory_space<vmem>>, vector<128x256xbf16>
    %cst_28 = arith.constant dense<0.000000e+00> : vector<64x256xf32>
    %30 = tpu.matmul %28, %29, %cst_28 {dimension_numbers = #tpu.dot_dimension_numbers<[1], [0], [0], [1], [0, 0, 1, 1], [], []>} : vector<64x128xbf16>, vector<128x256xbf16>, vector<64x256xf32> -> vector<64x256xf32>
    %31 = arith.addf %26, %30 : vector<64x256xf32>
    %c2 = arith.constant 2 : index
    %c0_29 = arith.constant 0 : index
    %c0_30 = arith.constant 0 : index
    %32 = vector.load %arg4[%c2, %c0_29, %c0_30] : memref<4x64x128xbf16, #tpu.memory_space<vmem>>, vector<1x64x128xbf16>
    %33 = vector.shape_cast %32 : vector<1x64x128xbf16> to vector<64x128xbf16>
    %c0_31 = arith.constant 0 : index
    %c10 = arith.constant 10 : index
    %34 = vector.load %arg9[%c0_31, %c10] : memref<128x384xbf16, #tpu.memory_space<vmem>>, vector<128x256xbf16>
    %cst_32 = arith.constant dense<0.000000e+00> : vector<64x256xf32>
    %35 = tpu.matmul %33, %34, %cst_32 {dimension_numbers = #tpu.dot_dimension_numbers<[1], [0], [0], [1], [0, 0, 1, 1], [], []>} : vector<64x128xbf16>, vector<128x256xbf16>, vector<64x256xf32> -> vector<64x256xf32>
    %36 = arith.addf %31, %35 : vector<64x256xf32>
    %c3 = arith.constant 3 : index
    %c0_33 = arith.constant 0 : index
    %c0_34 = arith.constant 0 : index
    %37 = vector.load %arg4[%c3, %c0_33, %c0_34] : memref<4x64x128xbf16, #tpu.memory_space<vmem>>, vector<1x64x128xbf16>
    %38 = vector.shape_cast %37 : vector<1x64x128xbf16> to vector<64x128xbf16>
    %c0_35 = arith.constant 0 : index
    %c11 = arith.constant 11 : index
    %39 = vector.load %arg9[%c0_35, %c11] : memref<128x384xbf16, #tpu.memory_space<vmem>>, vector<128x256xbf16>
    %cst_36 = arith.constant dense<0.000000e+00> : vector<64x256xf32>
    %40 = tpu.matmul %38, %39, %cst_36 {dimension_numbers = #tpu.dot_dimension_numbers<[1], [0], [0], [1], [0, 0, 1, 1], [], []>} : vector<64x128xbf16>, vector<128x256xbf16>, vector<64x256xf32> -> vector<64x256xf32>
    %41 = arith.addf %36, %40 : vector<64x256xf32>
    %c0_37 = arith.constant 0 : index
    %c0_38 = arith.constant 0 : index
    %42 = vector.load %arg5[%c0_37, %c0_38] : memref<64x1xf32, #tpu.memory_space<vmem>>, vector<64x1xf32>
    %43 = vector.broadcast %42 : vector<64x1xf32> to vector<64x256xf32>
    %44 = arith.addf %41, %43 : vector<64x256xf32>
    %cst_39 = arith.constant 0.000000e+00 : f32
    %45 = vector.broadcast %cst_39 : f32 to vector<64x256xf32>
    %46 = arith.maximumf %44, %45 : vector<64x256xf32>
    %47 = arith.truncf %46 : vector<64x256xf32> to vector<64x256xbf16>
    %c0_40 = arith.constant 0 : index
    %c0_41 = arith.constant 0 : index
    %48 = vector.load %arg10[%c0_40, %c0_41] : memref<64x384xbf16, #tpu.memory_space<vmem>>, vector<64x256xbf16>
    tpu.vector_store %arg10[%c0_40, %c0_41], %47 {strides = array<i32>} : memref<64x384xbf16, #tpu.memory_space<vmem>>, vector<64x256xbf16>,
    %cst_42 = arith.constant 0.000000e+00 : f32
    %49 = vector.broadcast %cst_42 : f32 to vector<64x256xf32>
    %c0_43 = arith.constant 0 : index
    %c0_44 = arith.constant 0 : index
    %c0_45 = arith.constant 0 : index
    %50 = vector.load %arg6[%c0_43, %c0_44, %c0_45] : memref<9x64x64xbf16, #tpu.memory_space<vmem>>, vector<1x64x64xbf16>
    %51 = vector.shape_cast %50 : vector<1x64x64xbf16> to vector<64x64xbf16>
    %c0_46 = arith.constant 0 : index
    %c0_47 = arith.constant 0 : index
    %52 = vector.load %arg10[%c0_46, %c0_47] : memref<64x384xbf16, #tpu.memory_space<vmem>>, vector<64x256xbf16>
    %cst_48 = arith.constant dense<0.000000e+00> : vector<64x256xf32>
    %53 = tpu.matmul %51, %52, %cst_48 {dimension_numbers = #tpu.dot_dimension_numbers<[1], [0], [0], [1], [0, 0, 1, 1], [], []>} : vector<64x64xbf16>, vector<64x256xbf16>, vector<64x256xf32> -> vector<64x256xf32>
    %54 = arith.addf %49, %53 : vector<64x256xf32>
    %c1_49 = arith.constant 1 : index
    %c0_50 = arith.constant 0 : index
    %c0_51 = arith.constant 0 : index
    %55 = vector.load %arg6[%c1_49, %c0_50, %c0_51] : memref<9x64x64xbf16, #tpu.memory_space<vmem>>, vector<1x64x64xbf16>
    %56 = vector.shape_cast %55 : vector<1x64x64xbf16> to vector<64x64xbf16>
    %c0_52 = arith.constant 0 : index
    %c1_53 = arith.constant 1 : index
    %57 = vector.load %arg10[%c0_52, %c1_53] : memref<64x384xbf16, #tpu.memory_space<vmem>>, vector<64x256xbf16>
    %cst_54 = arith.constant dense<0.000000e+00> : vector<64x256xf32>
    %58 = tpu.matmul %56, %57, %cst_54 {dimension_numbers = #tpu.dot_dimension_numbers<[1], [0], [0], [1], [0, 0, 1, 1], [], []>} : vector<64x64xbf16>, vector<64x256xbf16>, vector<64x256xf32> -> vector<64x256xf32>
    %59 = arith.addf %54, %58 : vector<64x256xf32>
    %c2_55 = arith.constant 2 : index
    %c0_56 = arith.constant 0 : index
    %c0_57 = arith.constant 0 : index
    %60 = vector.load %arg6[%c2_55, %c0_56, %c0_57] : memref<9x64x64xbf16, #tpu.memory_space<vmem>>, vector<1x64x64xbf16>
    %61 = vector.shape_cast %60 : vector<1x64x64xbf16> to vector<64x64xbf16>
    %c0_58 = arith.constant 0 : index
    %c2_59 = arith.constant 2 : index
    %62 = vector.load %arg10[%c0_58, %c2_59] : memref<64x384xbf16, #tpu.memory_space<vmem>>, vector<64x256xbf16>
    %cst_60 = arith.constant dense<0.000000e+00> : vector<64x256xf32>
    %63 = tpu.matmul %61, %62, %cst_60 {dimension_numbers = #tpu.dot_dimension_numbers<[1], [0], [0], [1], [0, 0, 1, 1], [], []>} : vector<64x64xbf16>, vector<64x256xbf16>, vector<64x256xf32> -> vector<64x256xf32>
    %64 = arith.addf %59, %63 : vector<64x256xf32>
    %c3_61 = arith.constant 3 : index
    %c0_62 = arith.constant 0 : index
    %c0_63 = arith.constant 0 : index
    %65 = vector.load %arg6[%c3_61, %c0_62, %c0_63] : memref<9x64x64xbf16, #tpu.memory_space<vmem>>, vector<1x64x64xbf16>
    %66 = vector.shape_cast %65 : vector<1x64x64xbf16> to vector<64x64xbf16>
    %c0_64 = arith.constant 0 : index
    %c10_65 = arith.constant 10 : index
    %67 = vector.load %arg10[%c0_64, %c10_65] : memref<64x384xbf16, #tpu.memory_space<vmem>>, vector<64x256xbf16>
    %cst_66 = arith.constant dense<0.000000e+00> : vector<64x256xf32>
    %68 = tpu.matmul %66, %67, %cst_66 {dimension_numbers = #tpu.dot_dimension_numbers<[1], [0], [0], [1], [0, 0, 1, 1], [], []>} : vector<64x64xbf16>, vector<64x256xbf16>, vector<64x256xf32> -> vector<64x256xf32>
    %69 = arith.addf %64, %68 : vector<64x256xf32>
    %c4 = arith.constant 4 : index
    %c0_67 = arith.constant 0 : index
    %c0_68 = arith.constant 0 : index
    %70 = vector.load %arg6[%c4, %c0_67, %c0_68] : memref<9x64x64xbf16, #tpu.memory_space<vmem>>, vector<1x64x64xbf16>
    %71 = vector.shape_cast %70 : vector<1x64x64xbf16> to vector<64x64xbf16>
    %c0_69 = arith.constant 0 : index
    %c11_70 = arith.constant 11 : index
    %72 = vector.load %arg10[%c0_69, %c11_70] : memref<64x384xbf16, #tpu.memory_space<vmem>>, vector<64x256xbf16>
    %cst_71 = arith.constant dense<0.000000e+00> : vector<64x256xf32>
    %73 = tpu.matmul %71, %72, %cst_71 {dimension_numbers = #tpu.dot_dimension_numbers<[1], [0], [0], [1], [0, 0, 1, 1], [], []>} : vector<64x64xbf16>, vector<64x256xbf16>, vector<64x256xf32> -> vector<64x256xf32>
    %74 = arith.addf %69, %73 : vector<64x256xf32>
    %c5 = arith.constant 5 : index
    %c0_72 = arith.constant 0 : index
    %c0_73 = arith.constant 0 : index
    %75 = vector.load %arg6[%c5, %c0_72, %c0_73] : memref<9x64x64xbf16, #tpu.memory_space<vmem>>, vector<1x64x64xbf16>
    %76 = vector.shape_cast %75 : vector<1x64x64xbf16> to vector<64x64xbf16>
    %c0_74 = arith.constant 0 : index
    %c12 = arith.constant 12 : index
    %77 = vector.load %arg10[%c0_74, %c12] : memref<64x384xbf16, #tpu.memory_space<vmem>>, vector<64x256xbf16>
    %cst_75 = arith.constant dense<0.000000e+00> : vector<64x256xf32>
    %78 = tpu.matmul %76, %77, %cst_75 {dimension_numbers = #tpu.dot_dimension_numbers<[1], [0], [0], [1], [0, 0, 1, 1], [], []>} : vector<64x64xbf16>, vector<64x256xbf16>, vector<64x256xf32> -> vector<64x256xf32>
    %79 = arith.addf %74, %78 : vector<64x256xf32>
    %c6 = arith.constant 6 : index
    %c0_76 = arith.constant 0 : index
    %c0_77 = arith.constant 0 : index
    %80 = vector.load %arg6[%c6, %c0_76, %c0_77] : memref<9x64x64xbf16, #tpu.memory_space<vmem>>, vector<1x64x64xbf16>
    %81 = vector.shape_cast %80 : vector<1x64x64xbf16> to vector<64x64xbf16>
    %c0_78 = arith.constant 0 : index
    %c20 = arith.constant 20 : index
    %82 = vector.load %arg10[%c0_78, %c20] : memref<64x384xbf16, #tpu.memory_space<vmem>>, vector<64x256xbf16>
    %cst_79 = arith.constant dense<0.000000e+00> : vector<64x256xf32>
    %83 = tpu.matmul %81, %82, %cst_79 {dimension_numbers = #tpu.dot_dimension_numbers<[1], [0], [0], [1], [0, 0, 1, 1], [], []>} : vector<64x64xbf16>, vector<64x256xbf16>, vector<64x256xf32> -> vector<64x256xf32>
    %84 = arith.addf %79, %83 : vector<64x256xf32>
    %c7 = arith.constant 7 : index
    %c0_80 = arith.constant 0 : index
    %c0_81 = arith.constant 0 : index
    %85 = vector.load %arg6[%c7, %c0_80, %c0_81] : memref<9x64x64xbf16, #tpu.memory_space<vmem>>, vector<1x64x64xbf16>
    %86 = vector.shape_cast %85 : vector<1x64x64xbf16> to vector<64x64xbf16>
    %c0_82 = arith.constant 0 : index
    %c21 = arith.constant 21 : index
    %87 = vector.load %arg10[%c0_82, %c21] : memref<64x384xbf16, #tpu.memory_space<vmem>>, vector<64x256xbf16>
    %cst_83 = arith.constant dense<0.000000e+00> : vector<64x256xf32>
    %88 = tpu.matmul %86, %87, %cst_83 {dimension_numbers = #tpu.dot_dimension_numbers<[1], [0], [0], [1], [0, 0, 1, 1], [], []>} : vector<64x64xbf16>, vector<64x256xbf16>, vector<64x256xf32> -> vector<64x256xf32>
    %89 = arith.addf %84, %88 : vector<64x256xf32>
    %c8 = arith.constant 8 : index
    %c0_84 = arith.constant 0 : index
    %c0_85 = arith.constant 0 : index
    %90 = vector.load %arg6[%c8, %c0_84, %c0_85] : memref<9x64x64xbf16, #tpu.memory_space<vmem>>, vector<1x64x64xbf16>
    %91 = vector.shape_cast %90 : vector<1x64x64xbf16> to vector<64x64xbf16>
    %c0_86 = arith.constant 0 : index
    %c22 = arith.constant 22 : index
    %92 = vector.load %arg10[%c0_86, %c22] : memref<64x384xbf16, #tpu.memory_space<vmem>>, vector<64x256xbf16>
    %cst_87 = arith.constant dense<0.000000e+00> : vector<64x256xf32>
    %93 = tpu.matmul %91, %92, %cst_87 {dimension_numbers = #tpu.dot_dimension_numbers<[1], [0], [0], [1], [0, 0, 1, 1], [], []>} : vector<64x64xbf16>, vector<64x256xbf16>, vector<64x256xf32> -> vector<64x256xf32>
    %94 = arith.addf %89, %93 : vector<64x256xf32>
    %c0_88 = arith.constant 0 : index
    %c0_89 = arith.constant 0 : index
    %95 = vector.load %arg7[%c0_88, %c0_89] : memref<64x1xf32, #tpu.memory_space<vmem>>, vector<64x1xf32>
    %96 = vector.broadcast %95 : vector<64x1xf32> to vector<64x256xf32>
    %97 = arith.addf %94, %96 : vector<64x256xf32>
    %cst_90 = arith.constant 0.000000e+00 : f32
    %98 = vector.broadcast %cst_90 : f32 to vector<64x256xf32>
    %99 = arith.maximumf %97, %98 : vector<64x256xf32>
    %c0_91 = arith.constant 0 : index
    %c0_92 = arith.constant 0 : index
    %100 = vector.load %arg8[%c0_91, %c0_92] : memref<64x256xf32, #tpu.memory_space<vmem>>, vector<64x256xf32>
    tpu.vector_store %arg8[%c0_91, %c0_92], %99 {strides = array<i32>} : memref<64x256xf32, #tpu.memory_space<vmem>>, vector<64x256xf32>,
    return
  }
  func.func @transform_0(%arg0: i32) -> (i32, i32) {
    %c0_i32 = arith.constant 0 : i32
    %c0_i32_0 = arith.constant 0 : i32
    %c0_i32_1 = arith.constant 0 : i32
    return %c0_i32, %c0_i32_0 : i32, i32
  }
  func.func @transform_1(%arg0: i32) -> (i32, i32) {
    %c0_i32 = arith.constant 0 : i32
    %c0_i32_0 = arith.constant 0 : i32
    %c0_i32_1 = arith.constant 0 : i32
    return %c0_i32, %c0_i32_0 : i32, i32
  }
  func.func @transform_2(%arg0: i32) -> (i32, i32) {
    %c0_i32 = arith.constant 0 : i32
    %c0_i32_0 = arith.constant 0 : i32
    %c0_i32_1 = arith.constant 0 : i32
    return %c0_i32, %c0_i32_0 : i32, i32
  }
  func.func @transform_3(%arg0: i32) -> (i32, i32, i32) {
    %c0_i32 = arith.constant 0 : i32
    %c0_i32_0 = arith.constant 0 : i32
    %c0_i32_1 = arith.constant 0 : i32
    %c0_i32_2 = arith.constant 0 : i32
    return %c0_i32, %c0_i32_0, %c0_i32_1 : i32, i32, i32
  }
  func.func @transform_4(%arg0: i32) -> (i32, i32) {
    %c0_i32 = arith.constant 0 : i32
    %c0_i32_0 = arith.constant 0 : i32
    %c0_i32_1 = arith.constant 0 : i32
    return %c0_i32, %c0_i32_0 : i32, i32
  }
  func.func @transform_5(%arg0: i32) -> (i32, i32, i32) {
    %c0_i32 = arith.constant 0 : i32
    %c0_i32_0 = arith.constant 0 : i32
    %c0_i32_1 = arith.constant 0 : i32
    %c0_i32_2 = arith.constant 0 : i32
    return %c0_i32, %c0_i32_0, %c0_i32_1 : i32, i32, i32
  }
  func.func @transform_6(%arg0: i32) -> (i32, i32) {
    %c0_i32 = arith.constant 0 : i32
    %c0_i32_0 = arith.constant 0 : i32
    %c0_i32_1 = arith.constant 0 : i32
    return %c0_i32, %c0_i32_0 : i32, i32
  }
  func.func @transform_7(%arg0: i32) -> (i32, i32) {
    %c0_i32 = arith.constant 0 : i32
    %c0_i32_0 = arith.constant 0 : i32
    %c0_i32_1 = arith.constant 0 : i32
    return %c0_i32, %c0_i32_0 : i32, i32
  }
}

module attributes {stable_mosaic.version = 11 : i64} {
  func.func @kernel(%arg0: i32, %arg1: memref<2x3200xbf16, #tpu.memory_space<vmem>>, %arg2: memref<3200x512xbf16, #tpu.memory_space<vmem>>, %arg3: memref<1x512xf32, #tpu.memory_space<vmem>>, %arg4: memref<512x128xbf16, #tpu.memory_space<vmem>>, %arg5: memref<1x128xf32, #tpu.memory_space<vmem>>, %arg6: memref<2x128xf32, #tpu.memory_space<vmem>>) attributes {dimension_semantics = [#tpu.dimension_semantics<arbitrary>], iteration_bounds = array<i64: 1>, scalar_prefetch = 0 : i64, scratch_operands = 0 : i64, tpu.core_type = #tpu.core_type<tc>, window_params = [{pipeline_mode = #tpu.pipeline_mode<synchronous>, transform_indices = @transform_0, window_bounds = array<i64: 2, 3200>}, {pipeline_mode = #tpu.pipeline_mode<synchronous>, transform_indices = @transform_1, window_bounds = array<i64: 3200, 512>}, {pipeline_mode = #tpu.pipeline_mode<synchronous>, transform_indices = @transform_2, window_bounds = array<i64: 1, 512>}, {pipeline_mode = #tpu.pipeline_mode<synchronous>, transform_indices = @transform_3, window_bounds = array<i64: 512, 128>}, {pipeline_mode = #tpu.pipeline_mode<synchronous>, transform_indices = @transform_4, window_bounds = array<i64: 1, 128>}, {pipeline_mode = #tpu.pipeline_mode<synchronous>, transform_indices = @transform_5, window_bounds = array<i64: 2, 128>}]} {
    %c0 = arith.constant 0 : index
    %c0_0 = arith.constant 0 : index
    %0 = vector.load %arg1[%c0, %c0_0] : memref<2x3200xbf16, #tpu.memory_space<vmem>>, vector<2x3200xbf16>
    %c0_1 = arith.constant 0 : index
    %c0_2 = arith.constant 0 : index
    %1 = vector.load %arg2[%c0_1, %c0_2] : memref<3200x512xbf16, #tpu.memory_space<vmem>>, vector<3200x512xbf16>
    %cst = arith.constant dense<0.000000e+00> : vector<2x512xf32>
    %2 = tpu.matmul %0, %1, %cst {dimension_numbers = #tpu.dot_dimension_numbers<[1], [0], [0], [1], [0, 0, 1, 1], [], []>} : vector<2x3200xbf16>, vector<3200x512xbf16>, vector<2x512xf32> -> vector<2x512xf32>
    %c0_3 = arith.constant 0 : index
    %c0_4 = arith.constant 0 : index
    %3 = vector.load %arg3[%c0_3, %c0_4] : memref<1x512xf32, #tpu.memory_space<vmem>>, vector<1x512xf32>
    %4 = vector.broadcast %3 : vector<1x512xf32> to vector<2x512xf32>
    %5 = arith.addf %2, %4 : vector<2x512xf32>
    %cst_5 = arith.constant 0.000000e+00 : f32
    %6 = vector.broadcast %cst_5 : f32 to vector<2x512xf32>
    %7 = arith.maximumf %5, %6 : vector<2x512xf32>
    %8 = arith.truncf %7 : vector<2x512xf32> to vector<2x512xbf16>
    %c0_6 = arith.constant 0 : index
    %c0_7 = arith.constant 0 : index
    %9 = vector.load %arg4[%c0_6, %c0_7] : memref<512x128xbf16, #tpu.memory_space<vmem>>, vector<512x128xbf16>
    %cst_8 = arith.constant dense<0.000000e+00> : vector<2x128xf32>
    %10 = tpu.matmul %8, %9, %cst_8 {dimension_numbers = #tpu.dot_dimension_numbers<[1], [0], [0], [1], [0, 0, 1, 1], [], []>} : vector<2x512xbf16>, vector<512x128xbf16>, vector<2x128xf32> -> vector<2x128xf32>
    %c0_9 = arith.constant 0 : index
    %c0_10 = arith.constant 0 : index
    %11 = vector.load %arg5[%c0_9, %c0_10] : memref<1x128xf32, #tpu.memory_space<vmem>>, vector<1x128xf32>
    %12 = vector.broadcast %11 : vector<1x128xf32> to vector<2x128xf32>
    %13 = arith.addf %10, %12 : vector<2x128xf32>
    %c0_11 = arith.constant 0 : index
    %c0_12 = arith.constant 0 : index
    %14 = vector.load %arg6[%c0_11, %c0_12] : memref<2x128xf32, #tpu.memory_space<vmem>>, vector<2x128xf32>
    tpu.vector_store %arg6[%c0_11, %c0_12], %13 {strides = array<i32>} : memref<2x128xf32, #tpu.memory_space<vmem>>, vector<2x128xf32>,
    return
  }
  func.func @transform_0(%arg0: i32) -> (i32, i32) {
    %c0_i32 = arith.constant 0 : i32
    %c0_i32_0 = arith.constant 0 : i32
    %c0_i32_1 = arith.constant 0 : i32
    return %c0_i32, %c0_i32_0 : i32, i32
  }
  func.func @transform_1(%arg0: i32) -> (i32, i32) {
    %c0_i32 = arith.constant 0 : i32
    %c0_i32_0 = arith.constant 0 : i32
    %c0_i32_1 = arith.constant 0 : i32
    return %c0_i32, %c0_i32_0 : i32, i32
  }
  func.func @transform_2(%arg0: i32) -> (i32, i32) {
    %c0_i32 = arith.constant 0 : i32
    %c0_i32_0 = arith.constant 0 : i32
    %c0_i32_1 = arith.constant 0 : i32
    return %c0_i32, %c0_i32_0 : i32, i32
  }
  func.func @transform_3(%arg0: i32) -> (i32, i32) {
    %c0_i32 = arith.constant 0 : i32
    %c0_i32_0 = arith.constant 0 : i32
    %c0_i32_1 = arith.constant 0 : i32
    return %c0_i32, %c0_i32_0 : i32, i32
  }
  func.func @transform_4(%arg0: i32) -> (i32, i32) {
    %c0_i32 = arith.constant 0 : i32
    %c0_i32_0 = arith.constant 0 : i32
    %c0_i32_1 = arith.constant 0 : i32
    return %c0_i32, %c0_i32_0 : i32, i32
  }
  func.func @transform_5(%arg0: i32) -> (i32, i32) {
    %c0_i32 = arith.constant 0 : i32
    %c0_i32_0 = arith.constant 0 : i32
    %c0_i32_1 = arith.constant 0 : i32
    return %c0_i32, %c0_i32_0 : i32, i32
  }
}

</mosaic_0001>

<llo_original>
// kernel: _lambda_.2
$region0: #{_lambda_.2}
  #allocation0 [shape = 'u32[]', space=smem, size = 0x4, offset = 0x4, fixed_abs, tag = 'smem constant byte address 0x4 - core index']
  #allocation1 [shape = 'u32[144,128]{1,0:T(1,128)}', space=vmem, size = 0x12000, scoped, tag = 'internal scratch']
  #allocation2 [shape = 'bf16[128,384]{1,0:T(8,128)(2,1)}', space=vmem, size = 0x18000, scoped, tag = 'scratch operand']
  #allocation3 [shape = 'bf16[64,384]{1,0:T(8,128)(2,1)}', space=vmem, size = 0xc000, scoped, tag = 'scratch operand']
  %s0 = inlined_call_operand.vmem [shape: bf16[256,1024], index: 0, kind: input, shape index: {}]
  %s1 = inlined_call_operand.vmem [shape: bf16[32,256], index: 1, kind: input, shape index: {}]
  %s2 = inlined_call_operand.vmem [shape: f32[32,1], index: 2, kind: input, shape index: {}]
  %s3 = inlined_call_operand.vmem [shape: bf16[4,64,128], index: 3, kind: input, shape index: {}]
  %s4 = inlined_call_operand.vmem [shape: f32[64,1], index: 4, kind: input, shape index: {}]
  %s5 = inlined_call_operand.vmem [shape: bf16[9,64,64], index: 5, kind: input, shape index: {}]
  %s6 = inlined_call_operand.vmem [shape: f32[64,1], index: 6, kind: input, shape index: {}]
  %s7 = inlined_call_operand.vmem [shape: f32[64,256], index: 7, kind: output, shape index: {}]
  %s8 = sld [smem:[#allocation0]]
  $region38: #{_lambda_.2} parent=0
    _
  %s10 = ssub.s32 1, %s8
  %s11 = scalar_select 0, %s10, %s8
  // Predicated region
  $region2: #{_lambda_.2} parent=0 // pred_check
    _
  $region3: #{_lambda_.2} parent=0 // pred_check_branch
    %13 = sbr.rel (0) target = $region5
  $region4: #{_lambda_.2} parent=0 // pred_region
    _
  $region5: #{_lambda_.2} parent=0 // pred_fallthru
    _
  // Predicated region
  $region6: #{_lambda_.2} parent=0 // pred_check
    _
  $region7: #{_lambda_.2} parent=0 // pred_check_branch
    %15 = sbr.rel (0) target = $region9
  $region8: #{_lambda_.2} parent=0 // pred_region
    _
  $region9: #{_lambda_.2} parent=0 // pred_fallthru
    _
  // Predicated region
  $region10: #{_lambda_.2} parent=0 // pred_check
    _
  $region11: #{_lambda_.2} parent=0 // pred_check_branch
    %17 = sbr.rel (0) target = $region13
  $region12: #{_lambda_.2} parent=0 // pred_region
    _
  $region13: #{_lambda_.2} parent=0 // pred_fallthru
    _
  // Predicated region
  $region14: #{_lambda_.2} parent=0 // pred_check
    _
  $region15: #{_lambda_.2} parent=0 // pred_check_branch
    %19 = sbr.rel (0) target = $region17
  $region16: #{_lambda_.2} parent=0 // pred_region
    _
  $region17: #{_lambda_.2} parent=0 // pred_fallthru
    _
  // Predicated region
  $region18: #{_lambda_.2} parent=0 // pred_check
    _
  $region19: #{_lambda_.2} parent=0 // pred_check_branch
    %21 = sbr.rel (0) target = $region21
  $region20: #{_lambda_.2} parent=0 // pred_region
    _
  $region21: #{_lambda_.2} parent=0 // pred_fallthru
    _
  // Predicated region
  $region22: #{_lambda_.2} parent=0 // pred_check
    _
  $region23: #{_lambda_.2} parent=0 // pred_check_branch
    %23 = sbr.rel (0) target = $region25
  $region24: #{_lambda_.2} parent=0 // pred_region
    _
  $region25: #{_lambda_.2} parent=0 // pred_fallthru
    _
  // Predicated region
  $region26: #{_lambda_.2} parent=0 // pred_check
    _
  $region27: #{_lambda_.2} parent=0 // pred_check_branch
    %25 = sbr.rel (0) target = $region29
  $region28: #{_lambda_.2} parent=0 // pred_region
    _
  $region29: #{_lambda_.2} parent=0 // pred_fallthru
    _
  %27 = vst [vmem:[#allocation2] sm:$0xff] 0
  %28 = vst [vmem:[#allocation2 + $0x8] sm:$0xf] 0
  %29 = vst [vmem:[#allocation2 + $0xc] sm:$0xff] 0
  %30 = vst [vmem:[#allocation2 + $0x14] sm:$0xf] 0
  %31 = vst [vmem:[#allocation2 + $0x18] sm:$0xff] 0
  %32 = vst [vmem:[#allocation2 + $0x20] sm:$0xf] 0
  %33 = vst [vmem:[#allocation2 + $0x24] sm:$0xff] 0
  %34 = vst [vmem:[#allocation2 + $0x2c] sm:$0xf] 0
  %35 = vst [vmem:[#allocation2 + $0x30] sm:$0xff] 0
  %36 = vst [vmem:[#allocation2 + $0x38] sm:$0xf] 0
  %37 = vst [vmem:[#allocation2 + $0x3c] sm:$0xff] 0
  %38 = vst [vmem:[#allocation2 + $0x44] sm:$0xf] 0
  %39 = vst [vmem:[#allocation2 + $0x48] sm:$0xff] 0
  %40 = vst [vmem:[#allocation2 + $0x50] sm:$0xf] 0
  %41 = vst [vmem:[#allocation2 + $0x54] sm:$0xff] 0
  %42 = vst [vmem:[#allocation2 + $0x5c] sm:$0xf] 0
  %43 = vst [vmem:[#allocation2 + $0x60] sm:$0xff] 0
  %44 = vst [vmem:[#allocation2 + $0x68] sm:$0xf] 0
  %45 = vst [vmem:[#allocation2 + $0x6c] sm:$0xff] 0
  %46 = vst [vmem:[#allocation2 + $0x74] sm:$0xf] 0
  %47 = vst [vmem:[#allocation2 + $0x78] sm:$0xff] 0
  %48 = vst [vmem:[#allocation2 + $0x80] sm:$0xf] 0
  %49 = vst [vmem:[#allocation2 + $0x84] sm:$0xff] 0
  %50 = vst [vmem:[#allocation2 + $0x8c] sm:$0xf] 0
  %51 = vst [vmem:[#allocation2 + $0x90] sm:$0xff] 0
  %52 = vst [vmem:[#allocation2 + $0x98] sm:$0xf] 0
  %53 = vst [vmem:[#allocation2 + $0x9c] sm:$0xff] 0
  %54 = vst [vmem:[#allocation2 + $0xa4] sm:$0xf] 0
  %55 = vst [vmem:[#allocation2 + $0xa8] sm:$0xff] 0
  %56 = vst [vmem:[#allocation2 + $0xb0] sm:$0xf] 0
  %57 = vst [vmem:[#allocation2 + $0xb4] sm:$0xff] 0
  %58 = vst [vmem:[#allocation2 + $0xbc] sm:$0xf] 0
  %59 = vst [vmem:[#allocation3] sm:$0xff] 0
  %60 = vst [vmem:[#allocation3 + $0x8] sm:$0xf] 0
  %61 = vst [vmem:[#allocation3 + $0xc] sm:$0xff] 0
  %62 = vst [vmem:[#allocation3 + $0x14] sm:$0xf] 0
  %63 = vst [vmem:[#allocation3 + $0x18] sm:$0xff] 0
  %64 = vst [vmem:[#allocation3 + $0x20] sm:$0xf] 0
  %65 = vst [vmem:[#allocation3 + $0x24] sm:$0xff] 0
  %66 = vst [vmem:[#allocation3 + $0x2c] sm:$0xf] 0
  %67 = vst [vmem:[#allocation3 + $0x30] sm:$0xff] 0
  %68 = vst [vmem:[#allocation3 + $0x38] sm:$0xf] 0
  %69 = vst [vmem:[#allocation3 + $0x3c] sm:$0xff] 0
  %70 = vst [vmem:[#allocation3 + $0x44] sm:$0xf] 0
  %71 = vst [vmem:[#allocation3 + $0x48] sm:$0xff] 0
  %72 = vst [vmem:[#allocation3 + $0x50] sm:$0xf] 0
  %73 = vst [vmem:[#allocation3 + $0x54] sm:$0xff] 0
  %74 = vst [vmem:[#allocation3 + $0x5c] sm:$0xf] 0
  %v75 = vld [vmem:[%s1] sm:$0xff]
  %v76 = vld [vmem:[%s1 + $0x8] sm:$0xff]
  %v77 = vld [vmem:[%s1 + $0x10] sm:$0xff]
  %v78 = vld [vmem:[%s1 + $0x18] sm:$0xff]
  %v79 = vld [vmem:[%s0] sm:$0xff]
  %v80 = vld [vmem:[%s0 + $0x8] sm:$0xff]
  %v81 = vld [vmem:[%s0 + $0x10] sm:$0xff]
  %v82 = vld [vmem:[%s0 + $0x18] sm:$0xff]
  %v83 = vld [vmem:[%s0 + $0x20] sm:$0xff]
  %v84 = vld [vmem:[%s0 + $0x28] sm:$0xff]
  %v85 = vld [vmem:[%s0 + $0x30] sm:$0xff]
  %v86 = vld [vmem:[%s0 + $0x38] sm:$0xff]
  %v87 = vld [vmem:[%s0 + $0x40] sm:$0xff]
  %v88 = vld [vmem:[%s0 + $0x48] sm:$0xff]
  %v89 = vld [vmem:[%s0 + $0x50] sm:$0xff]
  %v90 = vld [vmem:[%s0 + $0x58] sm:$0xff]
  %v91 = vld [vmem:[%s0 + $0x60] sm:$0xff]
  %v92 = vld [vmem:[%s0 + $0x68] sm:$0xff]
  %v93 = vld [vmem:[%s0 + $0x70] sm:$0xff]
  %v94 = vld [vmem:[%s0 + $0x78] sm:$0xff]
  %v95 = vld [vmem:[%s0 + $0x80] sm:$0xff]
  %v96 = vld [vmem:[%s0 + $0x88] sm:$0xff]
  %v97 = vld [vmem:[%s0 + $0x90] sm:$0xff]
  %v98 = vld [vmem:[%s0 + $0x98] sm:$0xff]
  %v99 = vld [vmem:[%s0 + $0xa0] sm:$0xff]
  %v100 = vld [vmem:[%s0 + $0xa8] sm:$0xff]
  %v101 = vld [vmem:[%s0 + $0xb0] sm:$0xff]
  %v102 = vld [vmem:[%s0 + $0xb8] sm:$0xff]
  %v103 = vld [vmem:[%s0 + $0xc0] sm:$0xff]
  %v104 = vld [vmem:[%s0 + $0xc8] sm:$0xff]
  %v105 = vld [vmem:[%s0 + $0xd0] sm:$0xff]
  %v106 = vld [vmem:[%s0 + $0xd8] sm:$0xff]
  %v107 = vld [vmem:[%s0 + $0xe0] sm:$0xff]
  %v108 = vld [vmem:[%s0 + $0xe8] sm:$0xff]
  %v109 = vld [vmem:[%s0 + $0xf0] sm:$0xff]
  %v110 = vld [vmem:[%s0 + $0xf8] sm:$0xff]
  %v111 = vld [vmem:[%s0 + $0x100] sm:$0xff]
  %v112 = vld [vmem:[%s0 + $0x108] sm:$0xff]
  %v113 = vld [vmem:[%s0 + $0x110] sm:$0xff]
  %v114 = vld [vmem:[%s0 + $0x118] sm:$0xff]
  %v115 = vld [vmem:[%s0 + $0x120] sm:$0xff]
  %v116 = vld [vmem:[%s0 + $0x128] sm:$0xff]
  %v117 = vld [vmem:[%s0 + $0x130] sm:$0xff]
  %v118 = vld [vmem:[%s0 + $0x138] sm:$0xff]
  %v119 = vld [vmem:[%s0 + $0x140] sm:$0xff]
  %v120 = vld [vmem:[%s0 + $0x148] sm:$0xff]
  %v121 = vld [vmem:[%s0 + $0x150] sm:$0xff]
  %v122 = vld [vmem:[%s0 + $0x158] sm:$0xff]
  %v123 = vld [vmem:[%s0 + $0x160] sm:$0xff]
  %v124 = vld [vmem:[%s0 + $0x168] sm:$0xff]
  %v125 = vld [vmem:[%s0 + $0x170] sm:$0xff]
  %v126 = vld [vmem:[%s0 + $0x178] sm:$0xff]
  %v127 = vld [vmem:[%s0 + $0x180] sm:$0xff]
  %v128 = vld [vmem:[%s0 + $0x188] sm:$0xff]
  %v129 = vld [vmem:[%s0 + $0x190] sm:$0xff]
  %v130 = vld [vmem:[%s0 + $0x198] sm:$0xff]
  %v131 = vld [vmem:[%s0 + $0x1a0] sm:$0xff]
  %v132 = vld [vmem:[%s0 + $0x1a8] sm:$0xff]
  %v133 = vld [vmem:[%s0 + $0x1b0] sm:$0xff]
  %v134 = vld [vmem:[%s0 + $0x1b8] sm:$0xff]
  %v135 = vld [vmem:[%s0 + $0x1c0] sm:$0xff]
  %v136 = vld [vmem:[%s0 + $0x1c8] sm:$0xff]
  %v137 = vld [vmem:[%s0 + $0x1d0] sm:$0xff]
  %v138 = vld [vmem:[%s0 + $0x1d8] sm:$0xff]
  %v139 = vld [vmem:[%s0 + $0x1e0] sm:$0xff]
  %v140 = vld [vmem:[%s0 + $0x1e8] sm:$0xff]
  %v141 = vld [vmem:[%s0 + $0x1f0] sm:$0xff]
  %v142 = vld [vmem:[%s0 + $0x1f8] sm:$0xff]
  %v143 = vld [vmem:[%s0 + $0x200] sm:$0xff]
  %v144 = vld [vmem:[%s0 + $0x208] sm:$0xff]
  %v145 = vld [vmem:[%s0 + $0x210] sm:$0xff]
  %v146 = vld [vmem:[%s0 + $0x218] sm:$0xff]
  %v147 = vld [vmem:[%s0 + $0x220] sm:$0xff]
  %v148 = vld [vmem:[%s0 + $0x228] sm:$0xff]
  %v149 = vld [vmem:[%s0 + $0x230] sm:$0xff]
  %v150 = vld [vmem:[%s0 + $0x238] sm:$0xff]
  %v151 = vld [vmem:[%s0 + $0x240] sm:$0xff]
  %v152 = vld [vmem:[%s0 + $0x248] sm:$0xff]
  %v153 = vld [vmem:[%s0 + $0x250] sm:$0xff]
  %v154 = vld [vmem:[%s0 + $0x258] sm:$0xff]
  %v155 = vld [vmem:[%s0 + $0x260] sm:$0xff]
  %v156 = vld [vmem:[%s0 + $0x268] sm:$0xff]
  %v157 = vld [vmem:[%s0 + $0x270] sm:$0xff]
  %v158 = vld [vmem:[%s0 + $0x278] sm:$0xff]
  %v159 = vld [vmem:[%s0 + $0x280] sm:$0xff]
  %v160 = vld [vmem:[%s0 + $0x288] sm:$0xff]
  %v161 = vld [vmem:[%s0 + $0x290] sm:$0xff]
  %v162 = vld [vmem:[%s0 + $0x298] sm:$0xff]
  %v163 = vld [vmem:[%s0 + $0x2a0] sm:$0xff]
  %v164 = vld [vmem:[%s0 + $0x2a8] sm:$0xff]
  %v165 = vld [vmem:[%s0 + $0x2b0] sm:$0xff]
  %v166 = vld [vmem:[%s0 + $0x2b8] sm:$0xff]
  %v167 = vld [vmem:[%s0 + $0x2c0] sm:$0xff]
  %v168 = vld [vmem:[%s0 + $0x2c8] sm:$0xff]
  %v169 = vld [vmem:[%s0 + $0x2d0] sm:$0xff]
  %v170 = vld [vmem:[%s0 + $0x2d8] sm:$0xff]
  %v171 = vld [vmem:[%s0 + $0x2e0] sm:$0xff]
  %v172 = vld [vmem:[%s0 + $0x2e8] sm:$0xff]
  %v173 = vld [vmem:[%s0 + $0x2f0] sm:$0xff]
  %v174 = vld [vmem:[%s0 + $0x2f8] sm:$0xff]
  %v175 = vld [vmem:[%s0 + $0x300] sm:$0xff]
  %v176 = vld [vmem:[%s0 + $0x308] sm:$0xff]
  %v177 = vld [vmem:[%s0 + $0x310] sm:$0xff]
  %v178 = vld [vmem:[%s0 + $0x318] sm:$0xff]
  %v179 = vld [vmem:[%s0 + $0x320] sm:$0xff]
  %v180 = vld [vmem:[%s0 + $0x328] sm:$0xff]
  %v181 = vld [vmem:[%s0 + $0x330] sm:$0xff]
  %v182 = vld [vmem:[%s0 + $0x338] sm:$0xff]
  %v183 = vld [vmem:[%s0 + $0x340] sm:$0xff]
  %v184 = vld [vmem:[%s0 + $0x348] sm:$0xff]
  %v185 = vld [vmem:[%s0 + $0x350] sm:$0xff]
  %v186 = vld [vmem:[%s0 + $0x358] sm:$0xff]
  %v187 = vld [vmem:[%s0 + $0x360] sm:$0xff]
  %v188 = vld [vmem:[%s0 + $0x368] sm:$0xff]
  %v189 = vld [vmem:[%s0 + $0x370] sm:$0xff]
  %v190 = vld [vmem:[%s0 + $0x378] sm:$0xff]
  %v191 = vld [vmem:[%s0 + $0x380] sm:$0xff]
  %v192 = vld [vmem:[%s0 + $0x388] sm:$0xff]
  %v193 = vld [vmem:[%s0 + $0x390] sm:$0xff]
  %v194 = vld [vmem:[%s0 + $0x398] sm:$0xff]
  %v195 = vld [vmem:[%s0 + $0x3a0] sm:$0xff]
  %v196 = vld [vmem:[%s0 + $0x3a8] sm:$0xff]
  %v197 = vld [vmem:[%s0 + $0x3b0] sm:$0xff]
  %v198 = vld [vmem:[%s0 + $0x3b8] sm:$0xff]
  %v199 = vld [vmem:[%s0 + $0x3c0] sm:$0xff]
  %v200 = vld [vmem:[%s0 + $0x3c8] sm:$0xff]
  %v201 = vld [vmem:[%s0 + $0x3d0] sm:$0xff]
  %v202 = vld [vmem:[%s0 + $0x3d8] sm:$0xff]
  %v203 = vld [vmem:[%s0 + $0x3e0] sm:$0xff]
  %v204 = vld [vmem:[%s0 + $0x3e8] sm:$0xff]
  %v205 = vld [vmem:[%s0 + $0x3f0] sm:$0xff]
  %v206 = vld [vmem:[%s0 + $0x3f8] sm:$0xff]
  %v207 = vld [vmem:[%s2] sm:$0xff]
  %v208 = vld [vmem:[%s2 + $0x8] sm:$0xff]
  %v209 = vld [vmem:[%s2 + $0x10] sm:$0xff]
  %v210 = vld [vmem:[%s2 + $0x18] sm:$0xff]
  %212 = vset.pattern.permute.xlu0 0
  %213 = vperm.xlu0 %212, %v207
  %v214 = vpop.permute.xlu0 %213
  %217 = vset.pattern.permute.xlu0 0
  %218 = vperm.xlu0 %217, %v208
  %v219 = vpop.permute.xlu0 %218
  %222 = vset.pattern.permute.xlu0 0
  %223 = vperm.xlu0 %222, %v209
  %v224 = vpop.permute.xlu0 %223
  %227 = vset.pattern.permute.xlu0 0
  %228 = vperm.xlu0 %227, %v210
  %v229 = vpop.permute.xlu0 %228
  %v235 = vunpack.c.l.b16 %v75
  %v236 = vunpack.c.h.b16 %v75
  %v237 = vunpack.c.l.b16 %v76
  %v238 = vunpack.c.h.b16 %v76
  %v239 = vunpack.c.l.b16 %v77
  %v240 = vunpack.c.h.b16 %v77
  %v241 = vunpack.c.l.b16 %v78
  %v242 = vunpack.c.h.b16 %v78
  %v243 = vpack.c.b16 %v237, %v235
  %v244 = vpack.c.b16 %v238, %v236
  %v245 = vpack.c.b16 %v241, %v239
  %v246 = vpack.c.b16 %v242, %v240
  %v379 = vunpack.c.l.b16 %v79
  %v380 = vunpack.c.h.b16 %v79
  %v381 = vunpack.c.l.b16 %v80
  %v382 = vunpack.c.h.b16 %v80
  %v383 = vunpack.c.l.b16 %v81
  %v384 = vunpack.c.h.b16 %v81
  %v385 = vunpack.c.l.b16 %v82
  %v386 = vunpack.c.h.b16 %v82
  %v387 = vunpack.c.l.b16 %v83
  %v388 = vunpack.c.h.b16 %v83
  %v389 = vunpack.c.l.b16 %v84
  %v390 = vunpack.c.h.b16 %v84
  %v391 = vunpack.c.l.b16 %v85
  %v392 = vunpack.c.h.b16 %v85
  %v393 = vunpack.c.l.b16 %v86
  %v394 = vunpack.c.h.b16 %v86
  %v395 = vunpack.c.l.b16 %v87
  %v396 = vunpack.c.h.b16 %v87
  %v397 = vunpack.c.l.b16 %v88
  %v398 = vunpack.c.h.b16 %v88
  %v399 = vunpack.c.l.b16 %v89
  %v400 = vunpack.c.h.b16 %v89
  %v401 = vunpack.c.l.b16 %v90
  %v402 = vunpack.c.h.b16 %v90
  %v403 = vunpack.c.l.b16 %v91
  %v404 = vunpack.c.h.b16 %v91
  %v405 = vunpack.c.l.b16 %v92
  %v406 = vunpack.c.h.b16 %v92
  %v407 = vunpack.c.l.b16 %v93
  %v408 = vunpack.c.h.b16 %v93
  %v409 = vunpack.c.l.b16 %v94
  %v410 = vunpack.c.h.b16 %v94
  %v411 = vunpack.c.l.b16 %v95
  %v412 = vunpack.c.h.b16 %v95
  %v413 = vunpack.c.l.b16 %v96
  %v414 = vunpack.c.h.b16 %v96
  %v415 = vunpack.c.l.b16 %v97
  %v416 = vunpack.c.h.b16 %v97
  %v417 = vunpack.c.l.b16 %v98
  %v418 = vunpack.c.h.b16 %v98
  %v419 = vunpack.c.l.b16 %v99
  %v420 = vunpack.c.h.b16 %v99
  %v421 = vunpack.c.l.b16 %v100
  %v422 = vunpack.c.h.b16 %v100
  %v423 = vunpack.c.l.b16 %v101
  %v424 = vunpack.c.h.b16 %v101
  %v425 = vunpack.c.l.b16 %v102
  %v426 = vunpack.c.h.b16 %v102
  %v427 = vunpack.c.l.b16 %v103
  %v428 = vunpack.c.h.b16 %v103
  %v429 = vunpack.c.l.b16 %v104
  %v430 = vunpack.c.h.b16 %v104
  %v431 = vunpack.c.l.b16 %v105
  %v432 = vunpack.c.h.b16 %v105
  %v433 = vunpack.c.l.b16 %v106
  %v434 = vunpack.c.h.b16 %v106
  %v435 = vunpack.c.l.b16 %v107
  %v436 = vunpack.c.h.b16 %v107
  %v437 = vunpack.c.l.b16 %v108
  %v438 = vunpack.c.h.b16 %v108
  %v439 = vunpack.c.l.b16 %v109
  %v440 = vunpack.c.h.b16 %v109
  %v441 = vunpack.c.l.b16 %v110
  %v442 = vunpack.c.h.b16 %v110
  %v443 = vunpack.c.l.b16 %v111
  %v444 = vunpack.c.h.b16 %v111
  %v445 = vunpack.c.l.b16 %v112
  %v446 = vunpack.c.h.b16 %v112
  %v447 = vunpack.c.l.b16 %v113
  %v448 = vunpack.c.h.b16 %v113
  %v449 = vunpack.c.l.b16 %v114
  %v450 = vunpack.c.h.b16 %v114
  %v451 = vunpack.c.l.b16 %v115
  %v452 = vunpack.c.h.b16 %v115
  %v453 = vunpack.c.l.b16 %v116
  %v454 = vunpack.c.h.b16 %v116
  %v455 = vunpack.c.l.b16 %v117
  %v456 = vunpack.c.h.b16 %v117
  %v457 = vunpack.c.l.b16 %v118
  %v458 = vunpack.c.h.b16 %v118
  %v459 = vunpack.c.l.b16 %v119
  %v460 = vunpack.c.h.b16 %v119
  %v461 = vunpack.c.l.b16 %v120
  %v462 = vunpack.c.h.b16 %v120
  %v463 = vunpack.c.l.b16 %v121
  %v464 = vunpack.c.h.b16 %v121
  %v465 = vunpack.c.l.b16 %v122
  %v466 = vunpack.c.h.b16 %v122
  %v467 = vunpack.c.l.b16 %v123
  %v468 = vunpack.c.h.b16 %v123
  %v469 = vunpack.c.l.b16 %v124
  %v470 = vunpack.c.h.b16 %v124
  %v471 = vunpack.c.l.b16 %v125
  %v472 = vunpack.c.h.b16 %v125
  %v473 = vunpack.c.l.b16 %v126
  %v474 = vunpack.c.h.b16 %v126
  %v475 = vunpack.c.l.b16 %v127
  %v476 = vunpack.c.h.b16 %v127
  %v477 = vunpack.c.l.b16 %v128
  %v478 = vunpack.c.h.b16 %v128
  %v479 = vunpack.c.l.b16 %v129
  %v480 = vunpack.c.h.b16 %v129
  %v481 = vunpack.c.l.b16 %v130
  %v482 = vunpack.c.h.b16 %v130
  %v483 = vunpack.c.l.b16 %v131
  %v484 = vunpack.c.h.b16 %v131
  %v485 = vunpack.c.l.b16 %v132
  %v486 = vunpack.c.h.b16 %v132
  %v487 = vunpack.c.l.b16 %v133
  %v488 = vunpack.c.h.b16 %v133
  %v489 = vunpack.c.l.b16 %v134
  %v490 = vunpack.c.h.b16 %v134
  %v491 = vunpack.c.l.b16 %v135
  %v492 = vunpack.c.h.b16 %v135
  %v493 = vunpack.c.l.b16 %v136
  %v494 = vunpack.c.h.b16 %v136
  %v495 = vunpack.c.l.b16 %v137
  %v496 = vunpack.c.h.b16 %v137
  %v497 = vunpack.c.l.b16 %v138
  %v498 = vunpack.c.h.b16 %v138
  %v499 = vunpack.c.l.b16 %v139
  %v500 = vunpack.c.h.b16 %v139
  %v501 = vunpack.c.l.b16 %v140
  %v502 = vunpack.c.h.b16 %v140
  %v503 = vunpack.c.l.b16 %v141
  %v504 = vunpack.c.h.b16 %v141
  %v505 = vunpack.c.l.b16 %v142
  %v506 = vunpack.c.h.b16 %v142
  %v507 = vunpack.c.l.b16 %v143
  %v508 = vunpack.c.h.b16 %v143
  %v509 = vunpack.c.l.b16 %v144
  %v510 = vunpack.c.h.b16 %v144
  %v511 = vunpack.c.l.b16 %v145
  %v512 = vunpack.c.h.b16 %v145
  %v513 = vunpack.c.l.b16 %v146
  %v514 = vunpack.c.h.b16 %v146
  %v515 = vunpack.c.l.b16 %v147
  %v516 = vunpack.c.h.b16 %v147
  %v517 = vunpack.c.l.b16 %v148
  %v518 = vunpack.c.h.b16 %v148
  %v519 = vunpack.c.l.b16 %v149
  %v520 = vunpack.c.h.b16 %v149
  %v521 = vunpack.c.l.b16 %v150
  %v522 = vunpack.c.h.b16 %v150
  %v523 = vunpack.c.l.b16 %v151
  %v524 = vunpack.c.h.b16 %v151
  %v525 = vunpack.c.l.b16 %v152
  %v526 = vunpack.c.h.b16 %v152
  %v527 = vunpack.c.l.b16 %v153
  %v528 = vunpack.c.h.b16 %v153
  %v529 = vunpack.c.l.b16 %v154
  %v530 = vunpack.c.h.b16 %v154
  %v531 = vunpack.c.l.b16 %v155
  %v532 = vunpack.c.h.b16 %v155
  %v533 = vunpack.c.l.b16 %v156
  %v534 = vunpack.c.h.b16 %v156
  %v535 = vunpack.c.l.b16 %v157
  %v536 = vunpack.c.h.b16 %v157
  %v537 = vunpack.c.l.b16 %v158
  %v538 = vunpack.c.h.b16 %v158
  %v539 = vunpack.c.l.b16 %v159
  %v540 = vunpack.c.h.b16 %v159
  %v541 = vunpack.c.l.b16 %v160
  %v542 = vunpack.c.h.b16 %v160
  %v543 = vunpack.c.l.b16 %v161
  %v544 = vunpack.c.h.b16 %v161
  %v545 = vunpack.c.l.b16 %v162
  %v546 = vunpack.c.h.b16 %v162
  %v547 = vunpack.c.l.b16 %v163
  %v548 = vunpack.c.h.b16 %v163
  %v549 = vunpack.c.l.b16 %v164
  %v550 = vunpack.c.h.b16 %v164
  %v551 = vunpack.c.l.b16 %v165
  %v552 = vunpack.c.h.b16 %v165
  %v553 = vunpack.c.l.b16 %v166
  %v554 = vunpack.c.h.b16 %v166
  %v555 = vunpack.c.l.b16 %v167
  %v556 = vunpack.c.h.b16 %v167
  %v557 = vunpack.c.l.b16 %v168
  %v558 = vunpack.c.h.b16 %v168
  %v559 = vunpack.c.l.b16 %v169
  %v560 = vunpack.c.h.b16 %v169
  %v561 = vunpack.c.l.b16 %v170
  %v562 = vunpack.c.h.b16 %v170
  %v563 = vunpack.c.l.b16 %v171
  %v564 = vunpack.c.h.b16 %v171
  %v565 = vunpack.c.l.b16 %v172
  %v566 = vunpack.c.h.b16 %v172
  %v567 = vunpack.c.l.b16 %v173
  %v568 = vunpack.c.h.b16 %v173
  %v569 = vunpack.c.l.b16 %v174
  %v570 = vunpack.c.h.b16 %v174
  %v571 = vunpack.c.l.b16 %v175
  %v572 = vunpack.c.h.b16 %v175
  %v573 = vunpack.c.l.b16 %v176
  %v574 = vunpack.c.h.b16 %v176
  %v575 = vunpack.c.l.b16 %v177
  %v576 = vunpack.c.h.b16 %v177
  %v577 = vunpack.c.l.b16 %v178
  %v578 = vunpack.c.h.b16 %v178
  %v579 = vunpack.c.l.b16 %v179
  %v580 = vunpack.c.h.b16 %v179
  %v581 = vunpack.c.l.b16 %v180
  %v582 = vunpack.c.h.b16 %v180
  %v583 = vunpack.c.l.b16 %v181
  %v584 = vunpack.c.h.b16 %v181
  %v585 = vunpack.c.l.b16 %v182
  %v586 = vunpack.c.h.b16 %v182
  %v587 = vunpack.c.l.b16 %v183
  %v588 = vunpack.c.h.b16 %v183
  %v589 = vunpack.c.l.b16 %v184
  %v590 = vunpack.c.h.b16 %v184
  %v591 = vunpack.c.l.b16 %v185
  %v592 = vunpack.c.h.b16 %v185
  %v593 = vunpack.c.l.b16 %v186
  %v594 = vunpack.c.h.b16 %v186
  %v595 = vunpack.c.l.b16 %v187
  %v596 = vunpack.c.h.b16 %v187
  %v597 = vunpack.c.l.b16 %v188
  %v598 = vunpack.c.h.b16 %v188
  %v599 = vunpack.c.l.b16 %v189
  %v600 = vunpack.c.h.b16 %v189
  %v601 = vunpack.c.l.b16 %v190
  %v602 = vunpack.c.h.b16 %v190
  %v603 = vunpack.c.l.b16 %v191
  %v604 = vunpack.c.h.b16 %v191
  %v605 = vunpack.c.l.b16 %v192
  %v606 = vunpack.c.h.b16 %v192
  %v607 = vunpack.c.l.b16 %v193
  %v608 = vunpack.c.h.b16 %v193
  %v609 = vunpack.c.l.b16 %v194
  %v610 = vunpack.c.h.b16 %v194
  %v611 = vunpack.c.l.b16 %v195
  %v612 = vunpack.c.h.b16 %v195
  %v613 = vunpack.c.l.b16 %v196
  %v614 = vunpack.c.h.b16 %v196
  %v615 = vunpack.c.l.b16 %v197
  %v616 = vunpack.c.h.b16 %v197
  %v617 = vunpack.c.l.b16 %v198
  %v618 = vunpack.c.h.b16 %v198
  %v619 = vunpack.c.l.b16 %v199
  %v620 = vunpack.c.h.b16 %v199
  %v621 = vunpack.c.l.b16 %v200
  %v622 = vunpack.c.h.b16 %v200
  %v623 = vunpack.c.l.b16 %v201
  %v624 = vunpack.c.h.b16 %v201
  %v625 = vunpack.c.l.b16 %v202
  %v626 = vunpack.c.h.b16 %v202
  %v627 = vunpack.c.l.b16 %v203
  %v628 = vunpack.c.h.b16 %v203
  %v629 = vunpack.c.l.b16 %v204
  %v630 = vunpack.c.h.b16 %v204
  %v631 = vunpack.c.l.b16 %v205
  %v632 = vunpack.c.h.b16 %v205
  %v633 = vunpack.c.l.b16 %v206
  %v634 = vunpack.c.h.b16 %v206
  %v635 = vpack.c.b16 %v387, %v379
  %v636 = vpack.c.b16 %v388, %v380
  %v637 = vpack.c.b16 %v389, %v381
  %v638 = vpack.c.b16 %v390, %v382
  %v639 = vpack.c.b16 %v391, %v383
  %v640 = vpack.c.b16 %v392, %v384
  %v641 = vpack.c.b16 %v393, %v385
  %v642 = vpack.c.b16 %v394, %v386
  %v643 = vpack.c.b16 %v403, %v395
  %v644 = vpack.c.b16 %v404, %v396
  %v645 = vpack.c.b16 %v405, %v397
  %v646 = vpack.c.b16 %v406, %v398
  %v647 = vpack.c.b16 %v407, %v399
  %v648 = vpack.c.b16 %v408, %v400
  %v649 = vpack.c.b16 %v409, %v401
  %v650 = vpack.c.b16 %v410, %v402
  %v651 = vpack.c.b16 %v419, %v411
  %v652 = vpack.c.b16 %v420, %v412
  %v653 = vpack.c.b16 %v421, %v413
  %v654 = vpack.c.b16 %v422, %v414
  %v655 = vpack.c.b16 %v423, %v415
  %v656 = vpack.c.b16 %v424, %v416
  %v657 = vpack.c.b16 %v425, %v417
  %v658 = vpack.c.b16 %v426, %v418
  %v659 = vpack.c.b16 %v435, %v427
  %v660 = vpack.c.b16 %v436, %v428
  %v661 = vpack.c.b16 %v437, %v429
  %v662 = vpack.c.b16 %v438, %v430
  %v663 = vpack.c.b16 %v439, %v431
  %v664 = vpack.c.b16 %v440, %v432
  %v665 = vpack.c.b16 %v441, %v433
  %v666 = vpack.c.b16 %v442, %v434
  %v667 = vpack.c.b16 %v451, %v443
  %v668 = vpack.c.b16 %v452, %v444
  %v669 = vpack.c.b16 %v453, %v445
  %v670 = vpack.c.b16 %v454, %v446
  %v671 = vpack.c.b16 %v455, %v447
  %v672 = vpack.c.b16 %v456, %v448
  %v673 = vpack.c.b16 %v457, %v449
  %v674 = vpack.c.b16 %v458, %v450
  %v675 = vpack.c.b16 %v467, %v459
  %v676 = vpack.c.b16 %v468, %v460
  %v677 = vpack.c.b16 %v469, %v461
  %v678 = vpack.c.b16 %v470, %v462
  %v679 = vpack.c.b16 %v471, %v463
  %v680 = vpack.c.b16 %v472, %v464
  %v681 = vpack.c.b16 %v473, %v465
  %v682 = vpack.c.b16 %v474, %v466
  %v683 = vpack.c.b16 %v483, %v475
  %v684 = vpack.c.b16 %v484, %v476
  %v685 = vpack.c.b16 %v485, %v477
  %v686 = vpack.c.b16 %v486, %v478
  %v687 = vpack.c.b16 %v487, %v479
  %v688 = vpack.c.b16 %v488, %v480
  %v689 = vpack.c.b16 %v489, %v481
  %v690 = vpack.c.b16 %v490, %v482
  %v691 = vpack.c.b16 %v499, %v491
  %v692 = vpack.c.b16 %v500, %v492
  %v693 = vpack.c.b16 %v501, %v493
  %v694 = vpack.c.b16 %v502, %v494
  %v695 = vpack.c.b16 %v503, %v495
  %v696 = vpack.c.b16 %v504, %v496
  %v697 = vpack.c.b16 %v505, %v497
  %v698 = vpack.c.b16 %v506, %v498
  %v699 = vpack.c.b16 %v515, %v507
  %v700 = vpack.c.b16 %v516, %v508
  %v701 = vpack.c.b16 %v517, %v509
  %v702 = vpack.c.b16 %v518, %v510
  %v703 = vpack.c.b16 %v519, %v511
  %v704 = vpack.c.b16 %v520, %v512
  %v705 = vpack.c.b16 %v521, %v513
  %v706 = vpack.c.b16 %v522, %v514
  %v707 = vpack.c.b16 %v531, %v523
  %v708 = vpack.c.b16 %v532, %v524
  %v709 = vpack.c.b16 %v533, %v525
  %v710 = vpack.c.b16 %v534, %v526
  %v711 = vpack.c.b16 %v535, %v527
  %v712 = vpack.c.b16 %v536, %v528
  %v713 = vpack.c.b16 %v537, %v529
  %v714 = vpack.c.b16 %v538, %v530
  %v715 = vpack.c.b16 %v547, %v539
  %v716 = vpack.c.b16 %v548, %v540
  %v717 = vpack.c.b16 %v549, %v541
  %v718 = vpack.c.b16 %v550, %v542
  %v719 = vpack.c.b16 %v551, %v543
  %v720 = vpack.c.b16 %v552, %v544
  %v721 = vpack.c.b16 %v553, %v545
  %v722 = vpack.c.b16 %v554, %v546
  %v723 = vpack.c.b16 %v563, %v555
  %v724 = vpack.c.b16 %v564, %v556
  %v725 = vpack.c.b16 %v565, %v557
  %v726 = vpack.c.b16 %v566, %v558
  %v727 = vpack.c.b16 %v567, %v559
  %v728 = vpack.c.b16 %v568, %v560
  %v729 = vpack.c.b16 %v569, %v561
  %v730 = vpack.c.b16 %v570, %v562
  %v731 = vpack.c.b16 %v579, %v571
  %v732 = vpack.c.b16 %v580, %v572
  %v733 = vpack.c.b16 %v581, %v573
  %v734 = vpack.c.b16 %v582, %v574
  %v735 = vpack.c.b16 %v583, %v575
  %v736 = vpack.c.b16 %v584, %v576
  %v737 = vpack.c.b16 %v585, %v577
  %v738 = vpack.c.b16 %v586, %v578
  %v739 = vpack.c.b16 %v595, %v587
  %v740 = vpack.c.b16 %v596, %v588
  %v741 = vpack.c.b16 %v597, %v589
  %v742 = vpack.c.b16 %v598, %v590
  %v743 = vpack.c.b16 %v599, %v591
  %v744 = vpack.c.b16 %v600, %v592
  %v745 = vpack.c.b16 %v601, %v593
  %v746 = vpack.c.b16 %v602, %v594
  %v747 = vpack.c.b16 %v611, %v603
  %v748 = vpack.c.b16 %v612, %v604
  %v749 = vpack.c.b16 %v613, %v605
  %v750 = vpack.c.b16 %v614, %v606
  %v751 = vpack.c.b16 %v615, %v607
  %v752 = vpack.c.b16 %v616, %v608
  %v753 = vpack.c.b16 %v617, %v609
  %v754 = vpack.c.b16 %v618, %v610
  %v755 = vpack.c.b16 %v627, %v619
  %v756 = vpack.c.b16 %v628, %v620
  %v757 = vpack.c.b16 %v629, %v621
  %v758 = vpack.c.b16 %v630, %v622
  %v759 = vpack.c.b16 %v631, %v623
  %v760 = vpack.c.b16 %v632, %v624
  %v761 = vpack.c.b16 %v633, %v625
  %v762 = vpack.c.b16 %v634, %v626
  %891 = vmatprep.subr.bf16.mxu0 %v692
  %892 = vmatpush1.bf16.msra.mxu0 %v691
  %893 = vmatprep.subr.bf16.mxu0 %v684
  %894 = vmatpush1.bf16.msra.mxu0 %v683
  %895 = vmatprep.subr.bf16.mxu0 %v676
  %896 = vmatpush1.bf16.msra.mxu0 %v675
  %897 = vmatprep.subr.bf16.mxu0 %v668
  %898 = vmatpush1.bf16.msra.mxu0 %v667
  %899 = vmatprep.subr.bf16.mxu0 %v660
  %900 = vmatpush1.bf16.msra.mxu0 %v659
  %901 = vmatprep.subr.bf16.mxu0 %v652
  %902 = vmatpush1.bf16.msra.mxu0 %v651
  %903 = vmatprep.subr.bf16.mxu0 %v644
  %904 = vmatpush1.bf16.msra.mxu0 %v643
  %905 = vmatprep.subr.bf16.mxu0 %v636
  %906 = vmatpush1.bf16.msra.mxu0 %v635
  %907 = vmatprep.subr.bf16.mxu0 %v756
  %908 = vmatpush2.bf16.msra.mxu0 %v755
  %909 = vmatprep.subr.bf16.mxu0 %v748
  %910 = vmatpush2.bf16.msra.mxu0 %v747
  %911 = vmatprep.subr.bf16.mxu0 %v740
  %912 = vmatpush2.bf16.msra.mxu0 %v739
  %913 = vmatprep.subr.bf16.mxu0 %v732
  %914 = vmatpush2.bf16.msra.mxu0 %v731
  %915 = vmatprep.subr.bf16.mxu0 %v724
  %916 = vmatpush2.bf16.msra.mxu0 %v723
  %917 = vmatprep.subr.bf16.mxu0 %v716
  %918 = vmatpush2.bf16.msra.mxu0 %v715
  %919 = vmatprep.subr.bf16.mxu0 %v708
  %920 = vmatpush2.bf16.msra.mxu0 %v707
  %921 = vmatprep.subr.bf16.mxu0 %v700
  %922 = vmatpush2.bf16.msra.mxu0 %v699
  %923 = vmatprep.mubr.bf16.mxu0 %v244
  %924 = vmatmul.mubr.bf16.gmra.mxu0 %v243
  %v925 = vpop.f32.mrf.mxu0
  %v926 = vadd.f32 %v214, %v925
  %v927 = vpop.f32.mrf.mxu0
  %v928 = vadd.f32 %v214, %v927
  %v929 = vpop.f32.mrf.mxu0
  %v930 = vadd.f32 %v219, %v929
  %v931 = vpop.f32.mrf.mxu0
  %v932 = vadd.f32 %v219, %v931
  %933 = vmatprep.mubr.bf16.mxu0 %v246
  %934 = vmatmul.mubr.bf16.gmra.mxu0 %v245
  %v935 = vpop.f32.mrf.mxu0
  %v936 = vadd.f32 %v224, %v935
  %v937 = vpop.f32.mrf.mxu0
  %v938 = vadd.f32 %v224, %v937
  %v939 = vpop.f32.mrf.mxu0
  %v940 = vadd.f32 %v229, %v939
  %v941 = vpop.f32.mrf.mxu0
  %v942 = vadd.f32 %v229, %v941
  %943 = vdwg.mxu0
  %944 = vmatprep.subr.bf16.mxu0 %v694
  %945 = vmatpush1.bf16.msra.mxu0 %v693
  %946 = vmatprep.subr.bf16.mxu0 %v686
  %947 = vmatpush1.bf16.msra.mxu0 %v685
  %948 = vmatprep.subr.bf16.mxu0 %v678
  %949 = vmatpush1.bf16.msra.mxu0 %v677
  %950 = vmatprep.subr.bf16.mxu0 %v670
  %951 = vmatpush1.bf16.msra.mxu0 %v669
  %952 = vmatprep.subr.bf16.mxu0 %v662
  %953 = vmatpush1.bf16.msra.mxu0 %v661
  %954 = vmatprep.subr.bf16.mxu0 %v654
  %955 = vmatpush1.bf16.msra.mxu0 %v653
  %956 = vmatprep.subr.bf16.mxu0 %v646
  %957 = vmatpush1.bf16.msra.mxu0 %v645
  %958 = vmatprep.subr.bf16.mxu0 %v638
  %959 = vmatpush1.bf16.msra.mxu0 %v637
  %960 = vmatprep.subr.bf16.mxu0 %v758
  %961 = vmatpush2.bf16.msra.mxu0 %v757
  %962 = vmatprep.subr.bf16.mxu0 %v750
  %963 = vmatpush2.bf16.msra.mxu0 %v749
  %964 = vmatprep.subr.bf16.mxu0 %v742
  %965 = vmatpush2.bf16.msra.mxu0 %v741
  %966 = vmatprep.subr.bf16.mxu0 %v734
  %967 = vmatpush2.bf16.msra.mxu0 %v733
  %968 = vmatprep.subr.bf16.mxu0 %v726
  %969 = vmatpush2.bf16.msra.mxu0 %v725
  %970 = vmatprep.subr.bf16.mxu0 %v718
  %971 = vmatpush2.bf16.msra.mxu0 %v717
  %972 = vmatprep.subr.bf16.mxu0 %v710
  %973 = vmatpush2.bf16.msra.mxu0 %v709
  %974 = vmatprep.subr.bf16.mxu0 %v702
  %975 = vmatpush2.bf16.msra.mxu0 %v701
  %976 = vmatprep.mubr.bf16.mxu0 %v244
  %977 = vmatmul.mubr.bf16.gmra.mxu0 %v243
  %v978 = vpop.f32.mrf.mxu0
  %v979 = vadd.f32 %v214, %v978
  %v980 = vpop.f32.mrf.mxu0
  %v981 = vadd.f32 %v214, %v980
  %v982 = vpop.f32.mrf.mxu0
  %v983 = vadd.f32 %v219, %v982
  %v984 = vpop.f32.mrf.mxu0
  %v985 = vadd.f32 %v219, %v984
  %986 = vmatprep.mubr.bf16.mxu0 %v246
  %987 = vmatmul.mubr.bf16.gmra.mxu0 %v245
  %v988 = vpop.f32.mrf.mxu0
  %v989 = vadd.f32 %v224, %v988
  %v990 = vpop.f32.mrf.mxu0
  %v991 = vadd.f32 %v224, %v990
  %v992 = vpop.f32.mrf.mxu0
  %v993 = vadd.f32 %v229, %v992
  %v994 = vpop.f32.mrf.mxu0
  %v995 = vadd.f32 %v229, %v994
  %996 = vdwg.mxu0
  %997 = vmatprep.subr.bf16.mxu0 %v696
  %998 = vmatpush1.bf16.msra.mxu0 %v695
  %999 = vmatprep.subr.bf16.mxu0 %v688
  %1000 = vmatpush1.bf16.msra.mxu0 %v687
  %1001 = vmatprep.subr.bf16.mxu0 %v680
  %1002 = vmatpush1.bf16.msra.mxu0 %v679
  %1003 = vmatprep.subr.bf16.mxu0 %v672
  %1004 = vmatpush1.bf16.msra.mxu0 %v671
  %1005 = vmatprep.subr.bf16.mxu0 %v664
  %1006 = vmatpush1.bf16.msra.mxu0 %v663
  %1007 = vmatprep.subr.bf16.mxu0 %v656
  %1008 = vmatpush1.bf16.msra.mxu0 %v655
  %1009 = vmatprep.subr.bf16.mxu0 %v648
  %1010 = vmatpush1.bf16.msra.mxu0 %v647
  %1011 = vmatprep.subr.bf16.mxu0 %v640
  %1012 = vmatpush1.bf16.msra.mxu0 %v639
  %1013 = vmatprep.subr.bf16.mxu0 %v760
  %1014 = vmatpush2.bf16.msra.mxu0 %v759
  %1015 = vmatprep.subr.bf16.mxu0 %v752
  %1016 = vmatpush2.bf16.msra.mxu0 %v751
  %1017 = vmatprep.subr.bf16.mxu0 %v744
  %1018 = vmatpush2.bf16.msra.mxu0 %v743
  %1019 = vmatprep.subr.bf16.mxu0 %v736
  %1020 = vmatpush2.bf16.msra.mxu0 %v735
  %1021 = vmatprep.subr.bf16.mxu0 %v728
  %1022 = vmatpush2.bf16.msra.mxu0 %v727
  %1023 = vmatprep.subr.bf16.mxu0 %v720
  %1024 = vmatpush2.bf16.msra.mxu0 %v719
  %1025 = vmatprep.subr.bf16.mxu0 %v712
  %1026 = vmatpush2.bf16.msra.mxu0 %v711
  %1027 = vmatprep.subr.bf16.mxu0 %v704
  %1028 = vmatpush2.bf16.msra.mxu0 %v703
  %1029 = vmatprep.mubr.bf16.mxu0 %v244
  %1030 = vmatmul.mubr.bf16.gmra.mxu0 %v243
  %v1031 = vpop.f32.mrf.mxu0
  %v1032 = vadd.f32 %v214, %v1031
  %v1033 = vpop.f32.mrf.mxu0
  %v1034 = vadd.f32 %v214, %v1033
  %v1035 = vpop.f32.mrf.mxu0
  %v1036 = vadd.f32 %v219, %v1035
  %v1037 = vpop.f32.mrf.mxu0
  %v1038 = vadd.f32 %v219, %v1037
  %1039 = vmatprep.mubr.bf16.mxu0 %v246
  %1040 = vmatmul.mubr.bf16.gmra.mxu0 %v245
  %v1041 = vpop.f32.mrf.mxu0
  %v1042 = vadd.f32 %v224, %v1041
  %v1043 = vpop.f32.mrf.mxu0
  %v1044 = vadd.f32 %v224, %v1043
  %v1045 = vpop.f32.mrf.mxu0
  %v1046 = vadd.f32 %v229, %v1045
  %v1047 = vpop.f32.mrf.mxu0
  %v1048 = vadd.f32 %v229, %v1047
  %1049 = vdwg.mxu0
  %1050 = vmatprep.subr.bf16.mxu0 %v698
  %1051 = vmatpush1.bf16.msra.mxu0 %v697
  %1052 = vmatprep.subr.bf16.mxu0 %v690
  %1053 = vmatpush1.bf16.msra.mxu0 %v689
  %1054 = vmatprep.subr.bf16.mxu0 %v682
  %1055 = vmatpush1.bf16.msra.mxu0 %v681
  %1056 = vmatprep.subr.bf16.mxu0 %v674
  %1057 = vmatpush1.bf16.msra.mxu0 %v673
  %1058 = vmatprep.subr.bf16.mxu0 %v666
  %1059 = vmatpush1.bf16.msra.mxu0 %v665
  %1060 = vmatprep.subr.bf16.mxu0 %v658
  %1061 = vmatpush1.bf16.msra.mxu0 %v657
  %1062 = vmatprep.subr.bf16.mxu0 %v650
  %1063 = vmatpush1.bf16.msra.mxu0 %v649
  %1064 = vmatprep.subr.bf16.mxu0 %v642
  %1065 = vmatpush1.bf16.msra.mxu0 %v641
  %1066 = vmatprep.subr.bf16.mxu0 %v762
  %1067 = vmatpush2.bf16.msra.mxu0 %v761
  %1068 = vmatprep.subr.bf16.mxu0 %v754
  %1069 = vmatpush2.bf16.msra.mxu0 %v753
  %1070 = vmatprep.subr.bf16.mxu0 %v746
  %1071 = vmatpush2.bf16.msra.mxu0 %v745
  %1072 = vmatprep.subr.bf16.mxu0 %v738
  %1073 = vmatpush2.bf16.msra.mxu0 %v737
  %1074 = vmatprep.subr.bf16.mxu0 %v730
  %1075 = vmatpush2.bf16.msra.mxu0 %v729
  %1076 = vmatprep.subr.bf16.mxu0 %v722
  %1077 = vmatpush2.bf16.msra.mxu0 %v721
  %1078 = vmatprep.subr.bf16.mxu0 %v714
  %1079 = vmatpush2.bf16.msra.mxu0 %v713
  %1080 = vmatprep.subr.bf16.mxu0 %v706
  %1081 = vmatpush2.bf16.msra.mxu0 %v705
  %1082 = vmatprep.mubr.bf16.mxu0 %v244
  %1083 = vmatmul.mubr.bf16.gmra.mxu0 %v243
  %v1084 = vpop.f32.mrf.mxu0
  %v1085 = vadd.f32 %v214, %v1084
  %v1086 = vpop.f32.mrf.mxu0
  %v1087 = vadd.f32 %v214, %v1086
  %v1088 = vpop.f32.mrf.mxu0
  %v1089 = vadd.f32 %v219, %v1088
  %v1090 = vpop.f32.mrf.mxu0
  %v1091 = vadd.f32 %v219, %v1090
  %1092 = vmatprep.mubr.bf16.mxu0 %v246
  %1093 = vmatmul.mubr.bf16.gmra.mxu0 %v245
  %v1094 = vpop.f32.mrf.mxu0
  %v1095 = vadd.f32 %v224, %v1094
  %v1096 = vpop.f32.mrf.mxu0
  %v1097 = vadd.f32 %v224, %v1096
  %v1098 = vpop.f32.mrf.mxu0
  %v1099 = vadd.f32 %v229, %v1098
  %v1100 = vpop.f32.mrf.mxu0
  %v1101 = vadd.f32 %v229, %v1100
  %1102 = vdwg.mxu0
  %v1103 = vmax.f32 %v926, 0.0
  %v1104 = vmax.f32 %v928, 0.0
  %v1105 = vmax.f32 %v979, 0.0
  %v1106 = vmax.f32 %v981, 0.0
  %v1107 = vmax.f32 %v1032, 0.0
  %v1108 = vmax.f32 %v1034, 0.0
  %v1109 = vmax.f32 %v1085, 0.0
  %v1110 = vmax.f32 %v1087, 0.0
  %v1111 = vmax.f32 %v930, 0.0
  %v1112 = vmax.f32 %v932, 0.0
  %v1113 = vmax.f32 %v983, 0.0
  %v1114 = vmax.f32 %v985, 0.0
  %v1115 = vmax.f32 %v1036, 0.0
  %v1116 = vmax.f32 %v1038, 0.0
  %v1117 = vmax.f32 %v1089, 0.0
  %v1118 = vmax.f32 %v1091, 0.0
  %v1119 = vmax.f32 %v936, 0.0
  %v1120 = vmax.f32 %v938, 0.0
  %v1121 = vmax.f32 %v989, 0.0
  %v1122 = vmax.f32 %v991, 0.0
  %v1123 = vmax.f32 %v1042, 0.0
  %v1124 = vmax.f32 %v1044, 0.0
  %v1125 = vmax.f32 %v1095, 0.0
  %v1126 = vmax.f32 %v1097, 0.0
  %v1127 = vmax.f32 %v940, 0.0
  %v1128 = vmax.f32 %v942, 0.0
  %v1129 = vmax.f32 %v993, 0.0
  %v1130 = vmax.f32 %v995, 0.0
  %v1131 = vmax.f32 %v1046, 0.0
  %v1132 = vmax.f32 %v1048, 0.0
  %v1133 = vmax.f32 %v1099, 0.0
  %v1134 = vmax.f32 %v1101, 0.0
  %v1135 = vpack.c.bf16 %v1111, %v1103
  %v1136 = vpack.c.bf16 %v1112, %v1104
  %v1137 = vpack.c.bf16 %v1113, %v1105
  %v1138 = vpack.c.bf16 %v1114, %v1106
  %v1139 = vpack.c.bf16 %v1115, %v1107
  %v1140 = vpack.c.bf16 %v1116, %v1108
  %v1141 = vpack.c.bf16 %v1117, %v1109
  %v1142 = vpack.c.bf16 %v1118, %v1110
  %v1143 = vpack.c.bf16 %v1127, %v1119
  %v1144 = vpack.c.bf16 %v1128, %v1120
  %v1145 = vpack.c.bf16 %v1129, %v1121
  %v1146 = vpack.c.bf16 %v1130, %v1122
  %v1147 = vpack.c.bf16 %v1131, %v1123
  %v1148 = vpack.c.bf16 %v1132, %v1124
  %v1149 = vpack.c.bf16 %v1133, %v1125
  %v1150 = vpack.c.bf16 %v1134, %v1126
  %v1155 = vunpack.c.l.b16 %v1135
  %v1156 = vunpack.c.l.b16 %v1136
  %v1157 = vunpack.c.h.b16 %v1135
  %v1158 = vunpack.c.h.b16 %v1136
  %v1159 = vunpack.c.l.b16 %v1143
  %v1160 = vunpack.c.l.b16 %v1144
  %v1161 = vunpack.c.h.b16 %v1143
  %v1162 = vunpack.c.h.b16 %v1144
  %v1163 = vpack.c.b16 %v1156, %v1155
  %v1164 = vpack.c.b16 %v1158, %v1157
  %v1165 = vpack.c.b16 %v1160, %v1159
  %v1166 = vpack.c.b16 %v1162, %v1161
  %1171 = vst [vmem:[#allocation2] sm:$0xff] %v1163
  %1172 = vst [vmem:[#allocation2 + $0xc] sm:$0xff] %v1164
  %1173 = vst [vmem:[#allocation2 + $0x18] sm:$0xff] %v1165
  %1174 = vst [vmem:[#allocation2 + $0x24] sm:$0xff] %v1166
  %v1179 = vunpack.c.l.b16 %v1137
  %v1180 = vunpack.c.l.b16 %v1138
  %v1181 = vunpack.c.h.b16 %v1137
  %v1182 = vunpack.c.h.b16 %v1138
  %v1183 = vunpack.c.l.b16 %v1145
  %v1184 = vunpack.c.l.b16 %v1146
  %v1185 = vunpack.c.h.b16 %v1145
  %v1186 = vunpack.c.h.b16 %v1146
  %v1187 = vpack.c.b16 %v1180, %v1179
  %v1188 = vpack.c.b16 %v1182, %v1181
  %v1189 = vpack.c.b16 %v1184, %v1183
  %v1190 = vpack.c.b16 %v1186, %v1185
  %1195 = vst [vmem:[#allocation2 + $0x30] sm:$0xff] %v1187
  %1196 = vst [vmem:[#allocation2 + $0x3c] sm:$0xff] %v1188
  %1197 = vst [vmem:[#allocation2 + $0x48] sm:$0xff] %v1189
  %1198 = vst [vmem:[#allocation2 + $0x54] sm:$0xff] %v1190
  %v1203 = vunpack.c.l.b16 %v1139
  %v1204 = vunpack.c.l.b16 %v1140
  %v1205 = vunpack.c.h.b16 %v1139
  %v1206 = vunpack.c.h.b16 %v1140
  %v1207 = vunpack.c.l.b16 %v1147
  %v1208 = vunpack.c.l.b16 %v1148
  %v1209 = vunpack.c.h.b16 %v1147
  %v1210 = vunpack.c.h.b16 %v1148
  %v1211 = vpack.c.b16 %v1204, %v1203
  %v1212 = vpack.c.b16 %v1206, %v1205
  %v1213 = vpack.c.b16 %v1208, %v1207
  %v1214 = vpack.c.b16 %v1210, %v1209
  %1219 = vst [vmem:[#allocation2 + $0x60] sm:$0xff] %v1211
  %1220 = vst [vmem:[#allocation2 + $0x6c] sm:$0xff] %v1212
  %1221 = vst [vmem:[#allocation2 + $0x78] sm:$0xff] %v1213
  %1222 = vst [vmem:[#allocation2 + $0x84] sm:$0xff] %v1214
  %v1227 = vunpack.c.l.b16 %v1141
  %v1228 = vunpack.c.l.b16 %v1142
  %v1229 = vunpack.c.h.b16 %v1141
  %v1230 = vunpack.c.h.b16 %v1142
  %v1231 = vunpack.c.l.b16 %v1149
  %v1232 = vunpack.c.l.b16 %v1150
  %v1233 = vunpack.c.h.b16 %v1149
  %v1234 = vunpack.c.h.b16 %v1150
  %v1235 = vpack.c.b16 %v1228, %v1227
  %v1236 = vpack.c.b16 %v1230, %v1229
  %v1237 = vpack.c.b16 %v1232, %v1231
  %v1238 = vpack.c.b16 %v1234, %v1233
  %1243 = vst [vmem:[#allocation2 + $0x90] sm:$0xff] %v1235
  %1244 = vst [vmem:[#allocation2 + $0x9c] sm:$0xff] %v1236
  %1245 = vst [vmem:[#allocation2 + $0xa8] sm:$0xff] %v1237
  %1246 = vst [vmem:[#allocation2 + $0xb4] sm:$0xff] %v1238
  %v1247 = vld [vmem:[%s3] sm:$0xf]
  %v1248 = vld [vmem:[%s3 + $0x4] sm:$0xf]
  %v1249 = vld [vmem:[%s3 + $0x8] sm:$0xf]
  %v1250 = vld [vmem:[%s3 + $0xc] sm:$0xf]
  %v1251 = vld [vmem:[%s3 + $0x10] sm:$0xf]
  %v1252 = vld [vmem:[%s3 + $0x14] sm:$0xf]
  %v1253 = vld [vmem:[%s3 + $0x18] sm:$0xf]
  %v1254 = vld [vmem:[%s3 + $0x1c] sm:$0xf]
  %v1255 = vld [vmem:[#allocation2] sm:$0xff]
  %v1256 = vld [vmem:[#allocation2 + $0xc] sm:$0xff]
  %v1257 = vld [vmem:[#allocation2 + $0x18] sm:$0xff]
  %v1258 = vld [vmem:[#allocation2 + $0x24] sm:$0xff]
  %v1259 = vld [vmem:[#allocation2 + $0x30] sm:$0xff]
  %v1260 = vld [vmem:[#allocation2 + $0x3c] sm:$0xff]
  %v1261 = vld [vmem:[#allocation2 + $0x48] sm:$0xff]
  %v1262 = vld [vmem:[#allocation2 + $0x54] sm:$0xff]
  %v1263 = vld [vmem:[#allocation2 + $0x60] sm:$0xff]
  %v1264 = vld [vmem:[#allocation2 + $0x6c] sm:$0xff]
  %v1265 = vld [vmem:[#allocation2 + $0x78] sm:$0xff]
  %v1266 = vld [vmem:[#allocation2 + $0x84] sm:$0xff]
  %v1267 = vld [vmem:[#allocation2 + $0x90] sm:$0xff]
  %v1268 = vld [vmem:[#allocation2 + $0x9c] sm:$0xff]
  %v1269 = vld [vmem:[#allocation2 + $0xa8] sm:$0xff]
  %v1270 = vld [vmem:[#allocation2 + $0xb4] sm:$0xff]
  %s1271 = scalar_lea.vmem %s3, 32
  %v1272 = vld [vmem:[%s1271] sm:$0xf]
  %v1273 = vld [vmem:[%s1271 + $0x4] sm:$0xf]
  %v1274 = vld [vmem:[%s1271 + $0x8] sm:$0xf]
  %v1275 = vld [vmem:[%s1271 + $0xc] sm:$0xf]
  %v1276 = vld [vmem:[%s1271 + $0x10] sm:$0xf]
  %v1277 = vld [vmem:[%s1271 + $0x14] sm:$0xf]
  %v1278 = vld [vmem:[%s1271 + $0x18] sm:$0xf]
  %v1279 = vld [vmem:[%s1271 + $0x1c] sm:$0xf]
  %v1280 = vld [vmem:[#allocation2] sm:$0xff]
  %v1281 = vld [vmem:[#allocation2 + $0x8] sm:$0xf]
  %v1282 = vld [vmem:[#allocation2 + $0xc] sm:$0xff]
  %v1283 = vld [vmem:[#allocation2 + $0x14] sm:$0xf]
  %v1284 = vld [vmem:[#allocation2 + $0x18] sm:$0xff]
  %v1285 = vld [vmem:[#allocation2 + $0x20] sm:$0xf]
  %v1286 = vld [vmem:[#allocation2 + $0x24] sm:$0xff]
  %v1287 = vld [vmem:[#allocation2 + $0x2c] sm:$0xf]
  %v1288 = vld [vmem:[#allocation2 + $0x30] sm:$0xff]
  %v1289 = vld [vmem:[#allocation2 + $0x38] sm:$0xf]
  %v1290 = vld [vmem:[#allocation2 + $0x3c] sm:$0xff]
  %v1291 = vld [vmem:[#allocation2 + $0x44] sm:$0xf]
  %v1292 = vld [vmem:[#allocation2 + $0x48] sm:$0xff]
  %v1293 = vld [vmem:[#allocation2 + $0x50] sm:$0xf]
  %v1294 = vld [vmem:[#allocation2 + $0x54] sm:$0xff]
  %v1295 = vld [vmem:[#allocation2 + $0x5c] sm:$0xf]
  %v1296 = vld [vmem:[#allocation2 + $0x60] sm:$0xff]
  %v1297 = vld [vmem:[#allocation2 + $0x68] sm:$0xf]
  %v1298 = vld [vmem:[#allocation2 + $0x6c] sm:$0xff]
  %v1299 = vld [vmem:[#allocation2 + $0x74] sm:$0xf]
  %v1300 = vld [vmem:[#allocation2 + $0x78] sm:$0xff]
  %v1301 = vld [vmem:[#allocation2 + $0x80] sm:$0xf]
  %v1302 = vld [vmem:[#allocation2 + $0x84] sm:$0xff]
  %v1303 = vld [vmem:[#allocation2 + $0x8c] sm:$0xf]
  %v1304 = vld [vmem:[#allocation2 + $0x90] sm:$0xff]
  %v1305 = vld [vmem:[#allocation2 + $0x98] sm:$0xf]
  %v1306 = vld [vmem:[#allocation2 + $0x9c] sm:$0xff]
  %v1307 = vld [vmem:[#allocation2 + $0xa4] sm:$0xf]
  %v1308 = vld [vmem:[#allocation2 + $0xa8] sm:$0xff]
  %v1309 = vld [vmem:[#allocation2 + $0xb0] sm:$0xf]
  %v1310 = vld [vmem:[#allocation2 + $0xb4] sm:$0xff]
  %v1311 = vld [vmem:[#allocation2 + $0xbc] sm:$0xf]
  %v1320 = vunpack.c.l.b16 %v1272
  %v1321 = vunpack.c.l.b16 %v1273
  %v1322 = vunpack.c.l.b16 %v1274
  %v1323 = vunpack.c.l.b16 %v1275
  %v1324 = vunpack.c.l.b16 %v1276
  %v1325 = vunpack.c.l.b16 %v1277
  %v1326 = vunpack.c.l.b16 %v1278
  %v1327 = vunpack.c.l.b16 %v1279
  %v1328 = vpack.c.b16 %v1321, %v1320
  %v1329 = vpack.c.b16 %v1323, %v1322
  %v1330 = vpack.c.b16 %v1325, %v1324
  %v1331 = vpack.c.b16 %v1327, %v1326
  %v1368 = vunpack.c.l.b16 %v1280
  %v1369 = vunpack.c.h.b16 %v1280
  %v1370 = vunpack.c.l.b16 %v1281
  %v1371 = vunpack.c.l.b16 %v1282
  %v1372 = vunpack.c.h.b16 %v1282
  %v1373 = vunpack.c.l.b16 %v1283
  %v1374 = vunpack.c.l.b16 %v1284
  %v1375 = vunpack.c.h.b16 %v1284
  %v1376 = vunpack.c.l.b16 %v1285
  %v1377 = vunpack.c.l.b16 %v1286
  %v1378 = vunpack.c.h.b16 %v1286
  %v1379 = vunpack.c.l.b16 %v1287
  %v1380 = vunpack.c.l.b16 %v1288
  %v1381 = vunpack.c.h.b16 %v1288
  %v1382 = vunpack.c.l.b16 %v1289
  %v1383 = vunpack.c.l.b16 %v1290
  %v1384 = vunpack.c.h.b16 %v1290
  %v1385 = vunpack.c.l.b16 %v1291
  %v1386 = vunpack.c.l.b16 %v1292
  %v1387 = vunpack.c.h.b16 %v1292
  %v1388 = vunpack.c.l.b16 %v1293
  %v1389 = vunpack.c.l.b16 %v1294
  %v1390 = vunpack.c.h.b16 %v1294
  %v1391 = vunpack.c.l.b16 %v1295
  %v1392 = vunpack.c.l.b16 %v1296
  %v1393 = vunpack.c.h.b16 %v1296
  %v1394 = vunpack.c.l.b16 %v1297
  %v1395 = vunpack.c.l.b16 %v1298
  %v1396 = vunpack.c.h.b16 %v1298
  %v1397 = vunpack.c.l.b16 %v1299
  %v1398 = vunpack.c.l.b16 %v1300
  %v1399 = vunpack.c.h.b16 %v1300
  %v1400 = vunpack.c.l.b16 %v1301
  %v1401 = vunpack.c.l.b16 %v1302
  %v1402 = vunpack.c.h.b16 %v1302
  %v1403 = vunpack.c.l.b16 %v1303
  %v1404 = vunpack.c.l.b16 %v1304
  %v1405 = vunpack.c.h.b16 %v1304
  %v1406 = vunpack.c.l.b16 %v1305
  %v1407 = vunpack.c.l.b16 %v1306
  %v1408 = vunpack.c.h.b16 %v1306
  %v1409 = vunpack.c.l.b16 %v1307
  %v1410 = vunpack.c.l.b16 %v1308
  %v1411 = vunpack.c.h.b16 %v1308
  %v1412 = vunpack.c.l.b16 %v1309
  %v1413 = vunpack.c.l.b16 %v1310
  %v1414 = vunpack.c.h.b16 %v1310
  %v1415 = vunpack.c.l.b16 %v1311
  %v1416 = vpack.c.b16 %v1371, %v1368
  %v1417 = vpack.c.b16 %v1372, %v1369
  %v1418 = vpack.c.b16 %v1373, %v1370
  %v1419 = vpack.c.b16 %v1377, %v1374
  %v1420 = vpack.c.b16 %v1378, %v1375
  %v1421 = vpack.c.b16 %v1379, %v1376
  %v1422 = vpack.c.b16 %v1383, %v1380
  %v1423 = vpack.c.b16 %v1384, %v1381
  %v1424 = vpack.c.b16 %v1385, %v1382
  %v1425 = vpack.c.b16 %v1389, %v1386
  %v1426 = vpack.c.b16 %v1390, %v1387
  %v1427 = vpack.c.b16 %v1391, %v1388
  %v1428 = vpack.c.b16 %v1395, %v1392
  %v1429 = vpack.c.b16 %v1396, %v1393
  %v1430 = vpack.c.b16 %v1397, %v1394
  %v1431 = vpack.c.b16 %v1401, %v1398
  %v1432 = vpack.c.b16 %v1402, %v1399
  %v1433 = vpack.c.b16 %v1403, %v1400
  %v1434 = vpack.c.b16 %v1407, %v1404
  %v1435 = vpack.c.b16 %v1408, %v1405
  %v1436 = vpack.c.b16 %v1409, %v1406
  %v1437 = vpack.c.b16 %v1413, %v1410
  %v1438 = vpack.c.b16 %v1414, %v1411
  %v1439 = vpack.c.b16 %v1415, %v1412
  %1440 = vrot.lane.b32.xlu0 %v1416, 127
  %v1441 = vpop.permute.xlu0 %1440
  %1442 = vrot.lane.b32.xlu0 %v1417, 127
  %v1443 = vpop.permute.xlu0 %1442
  %1444 = vrot.lane.b32.xlu0 %v1418, 127
  %v1445 = vpop.permute.xlu0 %1444
  %1446 = vrot.lane.b32.xlu0 %v1419, 127
  %v1447 = vpop.permute.xlu0 %1446
  %1448 = vrot.lane.b32.xlu0 %v1420, 127
  %v1449 = vpop.permute.xlu0 %1448
  %1450 = vrot.lane.b32.xlu0 %v1421, 127
  %v1451 = vpop.permute.xlu0 %1450
  %1452 = vrot.lane.b32.xlu0 %v1422, 127
  %v1453 = vpop.permute.xlu0 %1452
  %1454 = vrot.lane.b32.xlu0 %v1423, 127
  %v1455 = vpop.permute.xlu0 %1454
  %1456 = vrot.lane.b32.xlu0 %v1424, 127
  %v1457 = vpop.permute.xlu0 %1456
  %1458 = vrot.lane.b32.xlu0 %v1425, 127
  %v1459 = vpop.permute.xlu0 %1458
  %1460 = vrot.lane.b32.xlu0 %v1426, 127
  %v1461 = vpop.permute.xlu0 %1460
  %1462 = vrot.lane.b32.xlu0 %v1427, 127
  %v1463 = vpop.permute.xlu0 %1462
  %1464 = vrot.lane.b32.xlu0 %v1428, 127
  %v1465 = vpop.permute.xlu0 %1464
  %1466 = vrot.lane.b32.xlu0 %v1429, 127
  %v1467 = vpop.permute.xlu0 %1466
  %1468 = vrot.lane.b32.xlu0 %v1430, 127
  %v1469 = vpop.permute.xlu0 %1468
  %1470 = vrot.lane.b32.xlu0 %v1431, 127
  %v1471 = vpop.permute.xlu0 %1470
  %1472 = vrot.lane.b32.xlu0 %v1432, 127
  %v1473 = vpop.permute.xlu0 %1472
  %1474 = vrot.lane.b32.xlu0 %v1433, 127
  %v1475 = vpop.permute.xlu0 %1474
  %1476 = vrot.lane.b32.xlu0 %v1434, 127
  %v1477 = vpop.permute.xlu0 %1476
  %1478 = vrot.lane.b32.xlu0 %v1435, 127
  %v1479 = vpop.permute.xlu0 %1478
  %1480 = vrot.lane.b32.xlu0 %v1436, 127
  %v1481 = vpop.permute.xlu0 %1480
  %1482 = vrot.lane.b32.xlu0 %v1437, 127
  %v1483 = vpop.permute.xlu0 %1482
  %1484 = vrot.lane.b32.xlu0 %v1438, 127
  %v1485 = vpop.permute.xlu0 %1484
  %1486 = vrot.lane.b32.xlu0 %v1439, 127
  %v1487 = vpop.permute.xlu0 %1486
  %vm1488 = vcmask 1039360
  %v1489 = vsel %vm1488, %v1441, %v1443
  %v1490 = vsel %vm1488, %v1443, %v1445
  %v1491 = vsel %vm1488, %v1447, %v1449
  %v1492 = vsel %vm1488, %v1449, %v1451
  %v1493 = vsel %vm1488, %v1453, %v1455
  %v1494 = vsel %vm1488, %v1455, %v1457
  %v1495 = vsel %vm1488, %v1459, %v1461
  %v1496 = vsel %vm1488, %v1461, %v1463
  %v1497 = vsel %vm1488, %v1465, %v1467
  %v1498 = vsel %vm1488, %v1467, %v1469
  %v1499 = vsel %vm1488, %v1471, %v1473
  %v1500 = vsel %vm1488, %v1473, %v1475
  %v1501 = vsel %vm1488, %v1477, %v1479
  %v1502 = vsel %vm1488, %v1479, %v1481
  %v1503 = vsel %vm1488, %v1483, %v1485
  %v1504 = vsel %vm1488, %v1485, %v1487
  %1521 = vmatprep.subr.bf16.mxu0 %v1504
  %1522 = vmatpush1.bf16.msra.mxu0 %v1503
  %1523 = vmatprep.subr.bf16.mxu0 %v1502
  %1524 = vmatpush1.bf16.msra.mxu0 %v1501
  %1525 = vmatprep.subr.bf16.mxu0 %v1500
  %1526 = vmatpush1.bf16.msra.mxu0 %v1499
  %1527 = vmatprep.subr.bf16.mxu0 %v1498
  %1528 = vmatpush1.bf16.msra.mxu0 %v1497
  %1529 = vmatprep.subr.bf16.mxu0 %v1496
  %1530 = vmatpush1.bf16.msra.mxu0 %v1495
  %1531 = vmatprep.subr.bf16.mxu0 %v1494
  %1532 = vmatpush1.bf16.msra.mxu0 %v1493
  %1533 = vmatprep.subr.bf16.mxu0 %v1492
  %1534 = vmatpush1.bf16.msra.mxu0 %v1491
  %1535 = vmatprep.subr.bf16.mxu0 %v1490
  %1536 = vmatpush1.bf16.msra.mxu0 %v1489
  %1537 = vmatprep.subr.bf16.mxu0 0
  %1538 = vmatpush2.bf16.msra.mxu0 0
  %1539 = vmatprep.subr.bf16.mxu0 0
  %1540 = vmatpush2.bf16.msra.mxu0 0
  %1541 = vmatprep.subr.bf16.mxu0 0
  %1542 = vmatpush2.bf16.msra.mxu0 0
  %1543 = vmatprep.subr.bf16.mxu0 0
  %1544 = vmatpush2.bf16.msra.mxu0 0
  %1545 = vmatprep.subr.bf16.mxu0 0
  %1546 = vmatpush2.bf16.msra.mxu0 0
  %1547 = vmatprep.subr.bf16.mxu0 0
  %1548 = vmatpush2.bf16.msra.mxu0 0
  %1549 = vmatprep.subr.bf16.mxu0 0
  %1550 = vmatpush2.bf16.msra.mxu0 0
  %1551 = vmatprep.subr.bf16.mxu0 0
  %1552 = vmatpush2.bf16.msra.mxu0 0
  %1553 = vmatprep.mubr.bf16.mxu0 0
  %1554 = vmatmul.mubr.bf16.gmra.mxu0 %v1328
  %v1555 = vpop.f32.mrf.mxu0
  %v1556 = vadd.f32 0.0, %v1555
  %v1557 = vpop.f32.mrf.mxu0
  %v1558 = vadd.f32 0.0, %v1557
  %v1559 = vpop.f32.mrf.mxu0
  %v1560 = vadd.f32 0.0, %v1559
  %v1561 = vpop.f32.mrf.mxu0
  %v1562 = vadd.f32 0.0, %v1561
  %1563 = vmatprep.mubr.bf16.mxu0 0
  %1564 = vmatmul.mubr.bf16.gmra.mxu0 %v1329
  %v1565 = vpop.f32.mrf.mxu0
  %v1566 = vadd.f32 0.0, %v1565
  %v1567 = vpop.f32.mrf.mxu0
  %v1568 = vadd.f32 0.0, %v1567
  %v1569 = vpop.f32.mrf.mxu0
  %v1570 = vadd.f32 0.0, %v1569
  %v1571 = vpop.f32.mrf.mxu0
  %v1572 = vadd.f32 0.0, %v1571
  %1573 = vmatprep.mubr.bf16.mxu0 0
  %1574 = vmatmul.mubr.bf16.gmra.mxu0 %v1330
  %v1575 = vpop.f32.mrf.mxu0
  %v1576 = vadd.f32 0.0, %v1575
  %v1577 = vpop.f32.mrf.mxu0
  %v1578 = vadd.f32 0.0, %v1577
  %v1579 = vpop.f32.mrf.mxu0
  %v1580 = vadd.f32 0.0, %v1579
  %v1581 = vpop.f32.mrf.mxu0
  %v1582 = vadd.f32 0.0, %v1581
  %1583 = vmatprep.mubr.bf16.mxu0 0
  %1584 = vmatmul.mubr.bf16.gmra.mxu0 %v1331
  %v1585 = vpop.f32.mrf.mxu0
  %v1586 = vadd.f32 0.0, %v1585
  %v1587 = vpop.f32.mrf.mxu0
  %v1588 = vadd.f32 0.0, %v1587
  %v1589 = vpop.f32.mrf.mxu0
  %v1590 = vadd.f32 0.0, %v1589
  %v1591 = vpop.f32.mrf.mxu0
  %v1592 = vadd.f32 0.0, %v1591
  %1593 = vdwg.mxu0
  %v1602 = vunpack.c.l.b16 %v1247
  %v1603 = vunpack.c.l.b16 %v1248
  %v1604 = vunpack.c.l.b16 %v1249
  %v1605 = vunpack.c.l.b16 %v1250
  %v1606 = vunpack.c.l.b16 %v1251
  %v1607 = vunpack.c.l.b16 %v1252
  %v1608 = vunpack.c.l.b16 %v1253
  %v1609 = vunpack.c.l.b16 %v1254
  %v1610 = vpack.c.b16 %v1603, %v1602
  %v1611 = vpack.c.b16 %v1605, %v1604
  %v1612 = vpack.c.b16 %v1607, %v1606
  %v1613 = vpack.c.b16 %v1609, %v1608
  %v1634 = vunpack.c.l.b16 %v1255
  %v1635 = vunpack.c.h.b16 %v1255
  %v1636 = vunpack.c.l.b16 %v1256
  %v1637 = vunpack.c.h.b16 %v1256
  %v1638 = vunpack.c.l.b16 %v1257
  %v1639 = vunpack.c.h.b16 %v1257
  %v1640 = vunpack.c.l.b16 %v1258
  %v1641 = vunpack.c.h.b16 %v1258
  %v1642 = vunpack.c.l.b16 %v1259
  %v1643 = vunpack.c.h.b16 %v1259
  %v1644 = vunpack.c.l.b16 %v1260
  %v1645 = vunpack.c.h.b16 %v1260
  %v1646 = vunpack.c.l.b16 %v1261
  %v1647 = vunpack.c.h.b16 %v1261
  %v1648 = vunpack.c.l.b16 %v1262
  %v1649 = vunpack.c.h.b16 %v1262
  %v1650 = vunpack.c.l.b16 %v1263
  %v1651 = vunpack.c.h.b16 %v1263
  %v1652 = vunpack.c.l.b16 %v1264
  %v1653 = vunpack.c.h.b16 %v1264
  %v1654 = vunpack.c.l.b16 %v1265
  %v1655 = vunpack.c.h.b16 %v1265
  %v1656 = vunpack.c.l.b16 %v1266
  %v1657 = vunpack.c.h.b16 %v1266
  %v1658 = vunpack.c.l.b16 %v1267
  %v1659 = vunpack.c.h.b16 %v1267
  %v1660 = vunpack.c.l.b16 %v1268
  %v1661 = vunpack.c.h.b16 %v1268
  %v1662 = vunpack.c.l.b16 %v1269
  %v1663 = vunpack.c.h.b16 %v1269
  %v1664 = vunpack.c.l.b16 %v1270
  %v1665 = vunpack.c.h.b16 %v1270
  %v1666 = vpack.c.b16 %v1636, %v1634
  %v1667 = vpack.c.b16 %v1637, %v1635
  %v1668 = vpack.c.b16 %v1640, %v1638
  %v1669 = vpack.c.b16 %v1641, %v1639
  %v1670 = vpack.c.b16 %v1644, %v1642
  %v1671 = vpack.c.b16 %v1645, %v1643
  %v1672 = vpack.c.b16 %v1648, %v1646
  %v1673 = vpack.c.b16 %v1649, %v1647
  %v1674 = vpack.c.b16 %v1652, %v1650
  %v1675 = vpack.c.b16 %v1653, %v1651
  %v1676 = vpack.c.b16 %v1656, %v1654
  %v1677 = vpack.c.b16 %v1657, %v1655
  %v1678 = vpack.c.b16 %v1660, %v1658
  %v1679 = vpack.c.b16 %v1661, %v1659
  %v1680 = vpack.c.b16 %v1664, %v1662
  %v1681 = vpack.c.b16 %v1665, %v1663
  %1698 = vmatprep.subr.bf16.mxu0 %v1681
  %1699 = vmatpush1.bf16.msra.mxu0 %v1680
  %1700 = vmatprep.subr.bf16.mxu0 %v1679
  %1701 = vmatpush1.bf16.msra.mxu0 %v1678
  %1702 = vmatprep.subr.bf16.mxu0 %v1677
  %1703 = vmatpush1.bf16.msra.mxu0 %v1676
  %1704 = vmatprep.subr.bf16.mxu0 %v1675
  %1705 = vmatpush1.bf16.msra.mxu0 %v1674
  %1706 = vmatprep.subr.bf16.mxu0 %v1673
  %1707 = vmatpush1.bf16.msra.mxu0 %v1672
  %1708 = vmatprep.subr.bf16.mxu0 %v1671
  %1709 = vmatpush1.bf16.msra.mxu0 %v1670
  %1710 = vmatprep.subr.bf16.mxu0 %v1669
  %1711 = vmatpush1.bf16.msra.mxu0 %v1668
  %1712 = vmatprep.subr.bf16.mxu0 %v1667
  %1713 = vmatpush1.bf16.msra.mxu0 %v1666
  %1714 = vmatprep.subr.bf16.mxu0 0
  %1715 = vmatpush2.bf16.msra.mxu0 0
  %1716 = vmatprep.subr.bf16.mxu0 0
  %1717 = vmatpush2.bf16.msra.mxu0 0
  %1718 = vmatprep.subr.bf16.mxu0 0
  %1719 = vmatpush2.bf16.msra.mxu0 0
  %1720 = vmatprep.subr.bf16.mxu0 0
  %1721 = vmatpush2.bf16.msra.mxu0 0
  %1722 = vmatprep.subr.bf16.mxu0 0
  %1723 = vmatpush2.bf16.msra.mxu0 0
  %1724 = vmatprep.subr.bf16.mxu0 0
  %1725 = vmatpush2.bf16.msra.mxu0 0
  %1726 = vmatprep.subr.bf16.mxu0 0
  %1727 = vmatpush2.bf16.msra.mxu0 0
  %1728 = vmatprep.subr.bf16.mxu0 0
  %1729 = vmatpush2.bf16.msra.mxu0 0
  %1730 = vmatprep.mubr.bf16.mxu0 0
  %1731 = vmatmul.mubr.bf16.gmra.mxu0 %v1610
  %v1732 = vpop.f32.mrf.mxu0
  %v1733 = vadd.f32 %v1556, %v1732
  %v1734 = vpop.f32.mrf.mxu0
  %v1735 = vadd.f32 %v1558, %v1734
  %v1736 = vpop.f32.mrf.mxu0
  %v1737 = vadd.f32 %v1560, %v1736
  %v1738 = vpop.f32.mrf.mxu0
  %v1739 = vadd.f32 %v1562, %v1738
  %1740 = vmatprep.mubr.bf16.mxu0 0
  %1741 = vmatmul.mubr.bf16.gmra.mxu0 %v1611
  %v1742 = vpop.f32.mrf.mxu0
  %v1743 = vadd.f32 %v1566, %v1742
  %v1744 = vpop.f32.mrf.mxu0
  %v1745 = vadd.f32 %v1568, %v1744
  %v1746 = vpop.f32.mrf.mxu0
  %v1747 = vadd.f32 %v1570, %v1746
  %v1748 = vpop.f32.mrf.mxu0
  %v1749 = vadd.f32 %v1572, %v1748
  %1750 = vmatprep.mubr.bf16.mxu0 0
  %1751 = vmatmul.mubr.bf16.gmra.mxu0 %v1612
  %v1752 = vpop.f32.mrf.mxu0
  %v1753 = vadd.f32 %v1576, %v1752
  %v1754 = vpop.f32.mrf.mxu0
  %v1755 = vadd.f32 %v1578, %v1754
  %v1756 = vpop.f32.mrf.mxu0
  %v1757 = vadd.f32 %v1580, %v1756
  %v1758 = vpop.f32.mrf.mxu0
  %v1759 = vadd.f32 %v1582, %v1758
  %1760 = vmatprep.mubr.bf16.mxu0 0
  %1761 = vmatmul.mubr.bf16.gmra.mxu0 %v1613
  %v1762 = vpop.f32.mrf.mxu0
  %v1763 = vadd.f32 %v1586, %v1762
  %v1764 = vpop.f32.mrf.mxu0
  %v1765 = vadd.f32 %v1588, %v1764
  %v1766 = vpop.f32.mrf.mxu0
  %v1767 = vadd.f32 %v1590, %v1766
  %v1768 = vpop.f32.mrf.mxu0
  %v1769 = vadd.f32 %v1592, %v1768
  %1770 = vdwg.mxu0
  %s1771 = scalar_lea.vmem %s3, 64
  %v1772 = vld [vmem:[%s1771] sm:$0xf]
  %v1773 = vld [vmem:[%s1771 + $0x4] sm:$0xf]
  %v1774 = vld [vmem:[%s1771 + $0x8] sm:$0xf]
  %v1775 = vld [vmem:[%s1771 + $0xc] sm:$0xf]
  %v1776 = vld [vmem:[%s1771 + $0x10] sm:$0xf]
  %v1777 = vld [vmem:[%s1771 + $0x14] sm:$0xf]
  %v1778 = vld [vmem:[%s1771 + $0x18] sm:$0xf]
  %v1779 = vld [vmem:[%s1771 + $0x1c] sm:$0xf]
  %v1788 = vunpack.c.l.b16 %v1772
  %v1789 = vunpack.c.l.b16 %v1773
  %v1790 = vunpack.c.l.b16 %v1774
  %v1791 = vunpack.c.l.b16 %v1775
  %v1792 = vunpack.c.l.b16 %v1776
  %v1793 = vunpack.c.l.b16 %v1777
  %v1794 = vunpack.c.l.b16 %v1778
  %v1795 = vunpack.c.l.b16 %v1779
  %v1796 = vpack.c.b16 %v1789, %v1788
  %v1797 = vpack.c.b16 %v1791, %v1790
  %v1798 = vpack.c.b16 %v1793, %v1792
  %v1799 = vpack.c.b16 %v1795, %v1794
  %1804 = vrot.lane.b32.xlu0 %v1416, 118
  %v1805 = vpop.permute.xlu0 %1804
  %1806 = vrot.lane.b32.xlu0 %v1417, 118
  %v1807 = vpop.permute.xlu0 %1806
  %1808 = vrot.lane.b32.xlu0 %v1418, 118
  %v1809 = vpop.permute.xlu0 %1808
  %1810 = vrot.lane.b32.xlu0 %v1419, 118
  %v1811 = vpop.permute.xlu0 %1810
  %1812 = vrot.lane.b32.xlu0 %v1420, 118
  %v1813 = vpop.permute.xlu0 %1812
  %1814 = vrot.lane.b32.xlu0 %v1421, 118
  %v1815 = vpop.permute.xlu0 %1814
  %1816 = vrot.lane.b32.xlu0 %v1422, 118
  %v1817 = vpop.permute.xlu0 %1816
  %1818 = vrot.lane.b32.xlu0 %v1423, 118
  %v1819 = vpop.permute.xlu0 %1818
  %1820 = vrot.lane.b32.xlu0 %v1424, 118
  %v1821 = vpop.permute.xlu0 %1820
  %1822 = vrot.lane.b32.xlu0 %v1425, 118
  %v1823 = vpop.permute.xlu0 %1822
  %1824 = vrot.lane.b32.xlu0 %v1426, 118
  %v1825 = vpop.permute.xlu0 %1824
  %1826 = vrot.lane.b32.xlu0 %v1427, 118
  %v1827 = vpop.permute.xlu0 %1826
  %1828 = vrot.lane.b32.xlu0 %v1428, 118
  %v1829 = vpop.permute.xlu0 %1828
  %1830 = vrot.lane.b32.xlu0 %v1429, 118
  %v1831 = vpop.permute.xlu0 %1830
  %1832 = vrot.lane.b32.xlu0 %v1430, 118
  %v1833 = vpop.permute.xlu0 %1832
  %1834 = vrot.lane.b32.xlu0 %v1431, 118
  %v1835 = vpop.permute.xlu0 %1834
  %1836 = vrot.lane.b32.xlu0 %v1432, 118
  %v1837 = vpop.permute.xlu0 %1836
  %1838 = vrot.lane.b32.xlu0 %v1433, 118
  %v1839 = vpop.permute.xlu0 %1838
  %1840 = vrot.lane.b32.xlu0 %v1434, 118
  %v1841 = vpop.permute.xlu0 %1840
  %1842 = vrot.lane.b32.xlu0 %v1435, 118
  %v1843 = vpop.permute.xlu0 %1842
  %1844 = vrot.lane.b32.xlu0 %v1436, 118
  %v1845 = vpop.permute.xlu0 %1844
  %1846 = vrot.lane.b32.xlu0 %v1437, 118
  %v1847 = vpop.permute.xlu0 %1846
  %1848 = vrot.lane.b32.xlu0 %v1438, 118
  %v1849 = vpop.permute.xlu0 %1848
  %1850 = vrot.lane.b32.xlu0 %v1439, 118
  %v1851 = vpop.permute.xlu0 %1850
  %vm1852 = vcmask 965632
  %v1853 = vsel %vm1852, %v1805, %v1807
  %v1854 = vsel %vm1852, %v1807, %v1809
  %v1855 = vsel %vm1852, %v1811, %v1813
  %v1856 = vsel %vm1852, %v1813, %v1815
  %v1857 = vsel %vm1852, %v1817, %v1819
  %v1858 = vsel %vm1852, %v1819, %v1821
  %v1859 = vsel %vm1852, %v1823, %v1825
  %v1860 = vsel %vm1852, %v1825, %v1827
  %v1861 = vsel %vm1852, %v1829, %v1831
  %v1862 = vsel %vm1852, %v1831, %v1833
  %v1863 = vsel %vm1852, %v1835, %v1837
  %v1864 = vsel %vm1852, %v1837, %v1839
  %v1865 = vsel %vm1852, %v1841, %v1843
  %v1866 = vsel %vm1852, %v1843, %v1845
  %v1867 = vsel %vm1852, %v1847, %v1849
  %v1868 = vsel %vm1852, %v1849, %v1851
  %1885 = vmatprep.subr.bf16.mxu0 %v1868
  %1886 = vmatpush1.bf16.msra.mxu0 %v1867
  %1887 = vmatprep.subr.bf16.mxu0 %v1866
  %1888 = vmatpush1.bf16.msra.mxu0 %v1865
  %1889 = vmatprep.subr.bf16.mxu0 %v1864
  %1890 = vmatpush1.bf16.msra.mxu0 %v1863
  %1891 = vmatprep.subr.bf16.mxu0 %v1862
  %1892 = vmatpush1.bf16.msra.mxu0 %v1861
  %1893 = vmatprep.subr.bf16.mxu0 %v1860
  %1894 = vmatpush1.bf16.msra.mxu0 %v1859
  %1895 = vmatprep.subr.bf16.mxu0 %v1858
  %1896 = vmatpush1.bf16.msra.mxu0 %v1857
  %1897 = vmatprep.subr.bf16.mxu0 %v1856
  %1898 = vmatpush1.bf16.msra.mxu0 %v1855
  %1899 = vmatprep.subr.bf16.mxu0 %v1854
  %1900 = vmatpush1.bf16.msra.mxu0 %v1853
  %1901 = vmatprep.subr.bf16.mxu0 0
  %1902 = vmatpush2.bf16.msra.mxu0 0
  %1903 = vmatprep.subr.bf16.mxu0 0
  %1904 = vmatpush2.bf16.msra.mxu0 0
  %1905 = vmatprep.subr.bf16.mxu0 0
  %1906 = vmatpush2.bf16.msra.mxu0 0
  %1907 = vmatprep.subr.bf16.mxu0 0
  %1908 = vmatpush2.bf16.msra.mxu0 0
  %1909 = vmatprep.subr.bf16.mxu0 0
  %1910 = vmatpush2.bf16.msra.mxu0 0
  %1911 = vmatprep.subr.bf16.mxu0 0
  %1912 = vmatpush2.bf16.msra.mxu0 0
  %1913 = vmatprep.subr.bf16.mxu0 0
  %1914 = vmatpush2.bf16.msra.mxu0 0
  %1915 = vmatprep.subr.bf16.mxu0 0
  %1916 = vmatpush2.bf16.msra.mxu0 0
  %1917 = vmatprep.mubr.bf16.mxu0 0
  %1918 = vmatmul.mubr.bf16.gmra.mxu0 %v1796
  %v1919 = vpop.f32.mrf.mxu0
  %v1920 = vadd.f32 0.0, %v1919
  %v1921 = vpop.f32.mrf.mxu0
  %v1922 = vadd.f32 0.0, %v1921
  %v1923 = vpop.f32.mrf.mxu0
  %v1924 = vadd.f32 0.0, %v1923
  %v1925 = vpop.f32.mrf.mxu0
  %v1926 = vadd.f32 0.0, %v1925
  %1927 = vmatprep.mubr.bf16.mxu0 0
  %1928 = vmatmul.mubr.bf16.gmra.mxu0 %v1797
  %v1929 = vpop.f32.mrf.mxu0
  %v1930 = vadd.f32 0.0, %v1929
  %v1931 = vpop.f32.mrf.mxu0
  %v1932 = vadd.f32 0.0, %v1931
  %v1933 = vpop.f32.mrf.mxu0
  %v1934 = vadd.f32 0.0, %v1933
  %v1935 = vpop.f32.mrf.mxu0
  %v1936 = vadd.f32 0.0, %v1935
  %1937 = vmatprep.mubr.bf16.mxu0 0
  %1938 = vmatmul.mubr.bf16.gmra.mxu0 %v1798
  %v1939 = vpop.f32.mrf.mxu0
  %v1940 = vadd.f32 0.0, %v1939
  %v1941 = vpop.f32.mrf.mxu0
  %v1942 = vadd.f32 0.0, %v1941
  %v1943 = vpop.f32.mrf.mxu0
  %v1944 = vadd.f32 0.0, %v1943
  %v1945 = vpop.f32.mrf.mxu0
  %v1946 = vadd.f32 0.0, %v1945
  %1947 = vmatprep.mubr.bf16.mxu0 0
  %1948 = vmatmul.mubr.bf16.gmra.mxu0 %v1799
  %v1949 = vpop.f32.mrf.mxu0
  %v1950 = vadd.f32 0.0, %v1949
  %v1951 = vpop.f32.mrf.mxu0
  %v1952 = vadd.f32 0.0, %v1951
  %v1953 = vpop.f32.mrf.mxu0
  %v1954 = vadd.f32 0.0, %v1953
  %v1955 = vpop.f32.mrf.mxu0
  %v1956 = vadd.f32 0.0, %v1955
  %1957 = vdwg.mxu0
  %v1958 = vadd.f32 %v1733, %v1920
  %v1959 = vadd.f32 %v1735, %v1922
  %v1960 = vadd.f32 %v1737, %v1924
  %v1961 = vadd.f32 %v1739, %v1926
  %v1962 = vadd.f32 %v1743, %v1930
  %v1963 = vadd.f32 %v1745, %v1932
  %v1964 = vadd.f32 %v1747, %v1934
  %v1965 = vadd.f32 %v1749, %v1936
  %v1966 = vadd.f32 %v1753, %v1940
  %v1967 = vadd.f32 %v1755, %v1942
  %v1968 = vadd.f32 %v1757, %v1944
  %v1969 = vadd.f32 %v1759, %v1946
  %v1970 = vadd.f32 %v1763, %v1950
  %v1971 = vadd.f32 %v1765, %v1952
  %v1972 = vadd.f32 %v1767, %v1954
  %v1973 = vadd.f32 %v1769, %v1956
  %s1974 = scalar_lea.vmem %s3, 96
  %v1975 = vld [vmem:[%s1974] sm:$0xf]
  %v1976 = vld [vmem:[%s1974 + $0x4] sm:$0xf]
  %v1977 = vld [vmem:[%s1974 + $0x8] sm:$0xf]
  %v1978 = vld [vmem:[%s1974 + $0xc] sm:$0xf]
  %v1979 = vld [vmem:[%s1974 + $0x10] sm:$0xf]
  %v1980 = vld [vmem:[%s1974 + $0x14] sm:$0xf]
  %v1981 = vld [vmem:[%s1974 + $0x18] sm:$0xf]
  %v1982 = vld [vmem:[%s1974 + $0x1c] sm:$0xf]
  %v1991 = vunpack.c.l.b16 %v1975
  %v1992 = vunpack.c.l.b16 %v1976
  %v1993 = vunpack.c.l.b16 %v1977
  %v1994 = vunpack.c.l.b16 %v1978
  %v1995 = vunpack.c.l.b16 %v1979
  %v1996 = vunpack.c.l.b16 %v1980
  %v1997 = vunpack.c.l.b16 %v1981
  %v1998 = vunpack.c.l.b16 %v1982
  %v1999 = vpack.c.b16 %v1992, %v1991
  %v2000 = vpack.c.b16 %v1994, %v1993
  %v2001 = vpack.c.b16 %v1996, %v1995
  %v2002 = vpack.c.b16 %v1998, %v1997
  %2007 = vrot.lane.b32.xlu0 %v1416, 117
  %v2008 = vpop.permute.xlu0 %2007
  %2009 = vrot.lane.b32.xlu0 %v1417, 117
  %v2010 = vpop.permute.xlu0 %2009
  %2011 = vrot.lane.b32.xlu0 %v1418, 117
  %v2012 = vpop.permute.xlu0 %2011
  %2013 = vrot.lane.b32.xlu0 %v1419, 117
  %v2014 = vpop.permute.xlu0 %2013
  %2015 = vrot.lane.b32.xlu0 %v1420, 117
  %v2016 = vpop.permute.xlu0 %2015
  %2017 = vrot.lane.b32.xlu0 %v1421, 117
  %v2018 = vpop.permute.xlu0 %2017
  %2019 = vrot.lane.b32.xlu0 %v1422, 117
  %v2020 = vpop.permute.xlu0 %2019
  %2021 = vrot.lane.b32.xlu0 %v1423, 117
  %v2022 = vpop.permute.xlu0 %2021
  %2023 = vrot.lane.b32.xlu0 %v1424, 117
  %v2024 = vpop.permute.xlu0 %2023
  %2025 = vrot.lane.b32.xlu0 %v1425, 117
  %v2026 = vpop.permute.xlu0 %2025
  %2027 = vrot.lane.b32.xlu0 %v1426, 117
  %v2028 = vpop.permute.xlu0 %2027
  %2029 = vrot.lane.b32.xlu0 %v1427, 117
  %v2030 = vpop.permute.xlu0 %2029
  %2031 = vrot.lane.b32.xlu0 %v1428, 117
  %v2032 = vpop.permute.xlu0 %2031
  %2033 = vrot.lane.b32.xlu0 %v1429, 117
  %v2034 = vpop.permute.xlu0 %2033
  %2035 = vrot.lane.b32.xlu0 %v1430, 117
  %v2036 = vpop.permute.xlu0 %2035
  %2037 = vrot.lane.b32.xlu0 %v1431, 117
  %v2038 = vpop.permute.xlu0 %2037
  %2039 = vrot.lane.b32.xlu0 %v1432, 117
  %v2040 = vpop.permute.xlu0 %2039
  %2041 = vrot.lane.b32.xlu0 %v1433, 117
  %v2042 = vpop.permute.xlu0 %2041
  %2043 = vrot.lane.b32.xlu0 %v1434, 117
  %v2044 = vpop.permute.xlu0 %2043
  %2045 = vrot.lane.b32.xlu0 %v1435, 117
  %v2046 = vpop.permute.xlu0 %2045
  %2047 = vrot.lane.b32.xlu0 %v1436, 117
  %v2048 = vpop.permute.xlu0 %2047
  %2049 = vrot.lane.b32.xlu0 %v1437, 117
  %v2050 = vpop.permute.xlu0 %2049
  %2051 = vrot.lane.b32.xlu0 %v1438, 117
  %v2052 = vpop.permute.xlu0 %2051
  %2053 = vrot.lane.b32.xlu0 %v1439, 117
  %v2054 = vpop.permute.xlu0 %2053
  %vm2055 = vcmask 957440
  %v2056 = vsel %vm2055, %v2008, %v2010
  %v2057 = vsel %vm2055, %v2010, %v2012
  %v2058 = vsel %vm2055, %v2014, %v2016
  %v2059 = vsel %vm2055, %v2016, %v2018
  %v2060 = vsel %vm2055, %v2020, %v2022
  %v2061 = vsel %vm2055, %v2022, %v2024
  %v2062 = vsel %vm2055, %v2026, %v2028
  %v2063 = vsel %vm2055, %v2028, %v2030
  %v2064 = vsel %vm2055, %v2032, %v2034
  %v2065 = vsel %vm2055, %v2034, %v2036
  %v2066 = vsel %vm2055, %v2038, %v2040
  %v2067 = vsel %vm2055, %v2040, %v2042
  %v2068 = vsel %vm2055, %v2044, %v2046
  %v2069 = vsel %vm2055, %v2046, %v2048
  %v2070 = vsel %vm2055, %v2050, %v2052
  %v2071 = vsel %vm2055, %v2052, %v2054
  %2088 = vmatprep.subr.bf16.mxu0 %v2071
  %2089 = vmatpush1.bf16.msra.mxu0 %v2070
  %2090 = vmatprep.subr.bf16.mxu0 %v2069
  %2091 = vmatpush1.bf16.msra.mxu0 %v2068
  %2092 = vmatprep.subr.bf16.mxu0 %v2067
  %2093 = vmatpush1.bf16.msra.mxu0 %v2066
  %2094 = vmatprep.subr.bf16.mxu0 %v2065
  %2095 = vmatpush1.bf16.msra.mxu0 %v2064
  %2096 = vmatprep.subr.bf16.mxu0 %v2063
  %2097 = vmatpush1.bf16.msra.mxu0 %v2062
  %2098 = vmatprep.subr.bf16.mxu0 %v2061
  %2099 = vmatpush1.bf16.msra.mxu0 %v2060
  %2100 = vmatprep.subr.bf16.mxu0 %v2059
  %2101 = vmatpush1.bf16.msra.mxu0 %v2058
  %2102 = vmatprep.subr.bf16.mxu0 %v2057
  %2103 = vmatpush1.bf16.msra.mxu0 %v2056
  %2104 = vmatprep.subr.bf16.mxu0 0
  %2105 = vmatpush2.bf16.msra.mxu0 0
  %2106 = vmatprep.subr.bf16.mxu0 0
  %2107 = vmatpush2.bf16.msra.mxu0 0
  %2108 = vmatprep.subr.bf16.mxu0 0
  %2109 = vmatpush2.bf16.msra.mxu0 0
  %2110 = vmatprep.subr.bf16.mxu0 0
  %2111 = vmatpush2.bf16.msra.mxu0 0
  %2112 = vmatprep.subr.bf16.mxu0 0
  %2113 = vmatpush2.bf16.msra.mxu0 0
  %2114 = vmatprep.subr.bf16.mxu0 0
  %2115 = vmatpush2.bf16.msra.mxu0 0
  %2116 = vmatprep.subr.bf16.mxu0 0
  %2117 = vmatpush2.bf16.msra.mxu0 0
  %2118 = vmatprep.subr.bf16.mxu0 0
  %2119 = vmatpush2.bf16.msra.mxu0 0
  %2120 = vmatprep.mubr.bf16.mxu0 0
  %2121 = vmatmul.mubr.bf16.gmra.mxu0 %v1999
  %v2122 = vpop.f32.mrf.mxu0
  %v2123 = vadd.f32 0.0, %v2122
  %v2124 = vpop.f32.mrf.mxu0
  %v2125 = vadd.f32 0.0, %v2124
  %v2126 = vpop.f32.mrf.mxu0
  %v2127 = vadd.f32 0.0, %v2126
  %v2128 = vpop.f32.mrf.mxu0
  %v2129 = vadd.f32 0.0, %v2128
  %2130 = vmatprep.mubr.bf16.mxu0 0
  %2131 = vmatmul.mubr.bf16.gmra.mxu0 %v2000
  %v2132 = vpop.f32.mrf.mxu0
  %v2133 = vadd.f32 0.0, %v2132
  %v2134 = vpop.f32.mrf.mxu0
  %v2135 = vadd.f32 0.0, %v2134
  %v2136 = vpop.f32.mrf.mxu0
  %v2137 = vadd.f32 0.0, %v2136
  %v2138 = vpop.f32.mrf.mxu0
  %v2139 = vadd.f32 0.0, %v2138
  %2140 = vmatprep.mubr.bf16.mxu0 0
  %2141 = vmatmul.mubr.bf16.gmra.mxu0 %v2001
  %v2142 = vpop.f32.mrf.mxu0
  %v2143 = vadd.f32 0.0, %v2142
  %v2144 = vpop.f32.mrf.mxu0
  %v2145 = vadd.f32 0.0, %v2144
  %v2146 = vpop.f32.mrf.mxu0
  %v2147 = vadd.f32 0.0, %v2146
  %v2148 = vpop.f32.mrf.mxu0
  %v2149 = vadd.f32 0.0, %v2148
  %2150 = vmatprep.mubr.bf16.mxu0 0
  %2151 = vmatmul.mubr.bf16.gmra.mxu0 %v2002
  %v2152 = vpop.f32.mrf.mxu0
  %v2153 = vadd.f32 0.0, %v2152
  %v2154 = vpop.f32.mrf.mxu0
  %v2155 = vadd.f32 0.0, %v2154
  %v2156 = vpop.f32.mrf.mxu0
  %v2157 = vadd.f32 0.0, %v2156
  %v2158 = vpop.f32.mrf.mxu0
  %v2159 = vadd.f32 0.0, %v2158
  %2160 = vdwg.mxu0
  %v2161 = vadd.f32 %v1958, %v2123
  %v2162 = vadd.f32 %v1959, %v2125
  %v2163 = vadd.f32 %v1960, %v2127
  %v2164 = vadd.f32 %v1961, %v2129
  %v2165 = vadd.f32 %v1962, %v2133
  %v2166 = vadd.f32 %v1963, %v2135
  %v2167 = vadd.f32 %v1964, %v2137
  %v2168 = vadd.f32 %v1965, %v2139
  %v2169 = vadd.f32 %v1966, %v2143
  %v2170 = vadd.f32 %v1967, %v2145
  %v2171 = vadd.f32 %v1968, %v2147
  %v2172 = vadd.f32 %v1969, %v2149
  %v2173 = vadd.f32 %v1970, %v2153
  %v2174 = vadd.f32 %v1971, %v2155
  %v2175 = vadd.f32 %v1972, %v2157
  %v2176 = vadd.f32 %v1973, %v2159
  %v2177 = vld [vmem:[%s4] sm:$0xff]
  %v2178 = vld [vmem:[%s4 + $0x8] sm:$0xff]
  %v2179 = vld [vmem:[%s4 + $0x10] sm:$0xff]
  %v2180 = vld [vmem:[%s4 + $0x18] sm:$0xff]
  %v2181 = vld [vmem:[%s4 + $0x20] sm:$0xff]
  %v2182 = vld [vmem:[%s4 + $0x28] sm:$0xff]
  %v2183 = vld [vmem:[%s4 + $0x30] sm:$0xff]
  %v2184 = vld [vmem:[%s4 + $0x38] sm:$0xff]
  %2186 = vset.pattern.permute.xlu0 0
  %2187 = vperm.xlu0 %2186, %v2177
  %v2188 = vpop.permute.xlu0 %2187
  %2191 = vset.pattern.permute.xlu0 0
  %2192 = vperm.xlu0 %2191, %v2178
  %v2193 = vpop.permute.xlu0 %2192
  %2196 = vset.pattern.permute.xlu0 0
  %2197 = vperm.xlu0 %2196, %v2179
  %v2198 = vpop.permute.xlu0 %2197
  %2201 = vset.pattern.permute.xlu0 0
  %2202 = vperm.xlu0 %2201, %v2180
  %v2203 = vpop.permute.xlu0 %2202
  %2206 = vset.pattern.permute.xlu0 0
  %2207 = vperm.xlu0 %2206, %v2181
  %v2208 = vpop.permute.xlu0 %2207
  %2211 = vset.pattern.permute.xlu0 0
  %2212 = vperm.xlu0 %2211, %v2182
  %v2213 = vpop.permute.xlu0 %2212
  %2216 = vset.pattern.permute.xlu0 0
  %2217 = vperm.xlu0 %2216, %v2183
  %v2218 = vpop.permute.xlu0 %2217
  %2221 = vset.pattern.permute.xlu0 0
  %2222 = vperm.xlu0 %2221, %v2184
  %v2223 = vpop.permute.xlu0 %2222
  %v2225 = vadd.f32 %v2161, %v2188
  %v2226 = vadd.f32 %v2162, %v2188
  %v2227 = vadd.f32 %v2163, %v2193
  %v2228 = vadd.f32 %v2164, %v2193
  %v2229 = vadd.f32 %v2165, %v2198
  %v2230 = vadd.f32 %v2166, %v2198
  %v2231 = vadd.f32 %v2167, %v2203
  %v2232 = vadd.f32 %v2168, %v2203
  %v2233 = vadd.f32 %v2169, %v2208
  %v2234 = vadd.f32 %v2170, %v2208
  %v2235 = vadd.f32 %v2171, %v2213
  %v2236 = vadd.f32 %v2172, %v2213
  %v2237 = vadd.f32 %v2173, %v2218
  %v2238 = vadd.f32 %v2174, %v2218
  %v2239 = vadd.f32 %v2175, %v2223
  %v2240 = vadd.f32 %v2176, %v2223
  %v2241 = vmax.f32 %v2225, 0.0
  %v2242 = vmax.f32 %v2226, 0.0
  %v2243 = vmax.f32 %v2227, 0.0
  %v2244 = vmax.f32 %v2228, 0.0
  %v2245 = vmax.f32 %v2229, 0.0
  %v2246 = vmax.f32 %v2230, 0.0
  %v2247 = vmax.f32 %v2231, 0.0
  %v2248 = vmax.f32 %v2232, 0.0
  %v2249 = vmax.f32 %v2233, 0.0
  %v2250 = vmax.f32 %v2234, 0.0
  %v2251 = vmax.f32 %v2235, 0.0
  %v2252 = vmax.f32 %v2236, 0.0
  %v2253 = vmax.f32 %v2237, 0.0
  %v2254 = vmax.f32 %v2238, 0.0
  %v2255 = vmax.f32 %v2239, 0.0
  %v2256 = vmax.f32 %v2240, 0.0
  %v2257 = vpack.c.bf16 %v2243, %v2241
  %v2258 = vpack.c.bf16 %v2244, %v2242
  %v2259 = vpack.c.bf16 %v2247, %v2245
  %v2260 = vpack.c.bf16 %v2248, %v2246
  %v2261 = vpack.c.bf16 %v2251, %v2249
  %v2262 = vpack.c.bf16 %v2252, %v2250
  %v2263 = vpack.c.bf16 %v2255, %v2253
  %v2264 = vpack.c.bf16 %v2256, %v2254
  %v2273 = vunpack.c.l.b16 %v2257
  %v2274 = vunpack.c.l.b16 %v2258
  %v2275 = vunpack.c.h.b16 %v2257
  %v2276 = vunpack.c.h.b16 %v2258
  %v2277 = vunpack.c.l.b16 %v2259
  %v2278 = vunpack.c.l.b16 %v2260
  %v2279 = vunpack.c.h.b16 %v2259
  %v2280 = vunpack.c.h.b16 %v2260
  %v2281 = vunpack.c.l.b16 %v2261
  %v2282 = vunpack.c.l.b16 %v2262
  %v2283 = vunpack.c.h.b16 %v2261
  %v2284 = vunpack.c.h.b16 %v2262
  %v2285 = vunpack.c.l.b16 %v2263
  %v2286 = vunpack.c.l.b16 %v2264
  %v2287 = vunpack.c.h.b16 %v2263
  %v2288 = vunpack.c.h.b16 %v2264
  %v2289 = vpack.c.b16 %v2274, %v2273
  %v2290 = vpack.c.b16 %v2276, %v2275
  %v2291 = vpack.c.b16 %v2278, %v2277
  %v2292 = vpack.c.b16 %v2280, %v2279
  %v2293 = vpack.c.b16 %v2282, %v2281
  %v2294 = vpack.c.b16 %v2284, %v2283
  %v2295 = vpack.c.b16 %v2286, %v2285
  %v2296 = vpack.c.b16 %v2288, %v2287
  %2305 = vst [vmem:[#allocation3] sm:$0xff] %v2289
  %2306 = vst [vmem:[#allocation3 + $0xc] sm:$0xff] %v2290
  %2307 = vst [vmem:[#allocation3 + $0x18] sm:$0xff] %v2291
  %2308 = vst [vmem:[#allocation3 + $0x24] sm:$0xff] %v2292
  %2309 = vst [vmem:[#allocation3 + $0x30] sm:$0xff] %v2293
  %2310 = vst [vmem:[#allocation3 + $0x3c] sm:$0xff] %v2294
  %2311 = vst [vmem:[#allocation3 + $0x48] sm:$0xff] %v2295
  %2312 = vst [vmem:[#allocation3 + $0x54] sm:$0xff] %v2296
  %v2313 = vld [vmem:[%s5] sm:$0xf]
  %v2314 = vld [vmem:[%s5 + $0x4] sm:$0xf]
  %v2315 = vld [vmem:[%s5 + $0x8] sm:$0xf]
  %v2316 = vld [vmem:[%s5 + $0xc] sm:$0xf]
  %v2317 = vld [vmem:[%s5 + $0x10] sm:$0xf]
  %v2318 = vld [vmem:[%s5 + $0x14] sm:$0xf]
  %v2319 = vld [vmem:[%s5 + $0x18] sm:$0xf]
  %v2320 = vld [vmem:[%s5 + $0x1c] sm:$0xf]
  %v2321 = vld [vmem:[#allocation3] sm:$0xff]
  %v2322 = vld [vmem:[#allocation3 + $0xc] sm:$0xff]
  %v2323 = vld [vmem:[#allocation3 + $0x18] sm:$0xff]
  %v2324 = vld [vmem:[#allocation3 + $0x24] sm:$0xff]
  %v2325 = vld [vmem:[#allocation3 + $0x30] sm:$0xff]
  %v2326 = vld [vmem:[#allocation3 + $0x3c] sm:$0xff]
  %v2327 = vld [vmem:[#allocation3 + $0x48] sm:$0xff]
  %v2328 = vld [vmem:[#allocation3 + $0x54] sm:$0xff]
  %s2329 = scalar_lea.vmem %s5, 32
  %v2330 = vld [vmem:[%s2329] sm:$0xf]
  %v2331 = vld [vmem:[%s2329 + $0x4] sm:$0xf]
  %v2332 = vld [vmem:[%s2329 + $0x8] sm:$0xf]
  %v2333 = vld [vmem:[%s2329 + $0xc] sm:$0xf]
  %v2334 = vld [vmem:[%s2329 + $0x10] sm:$0xf]
  %v2335 = vld [vmem:[%s2329 + $0x14] sm:$0xf]
  %v2336 = vld [vmem:[%s2329 + $0x18] sm:$0xf]
  %v2337 = vld [vmem:[%s2329 + $0x1c] sm:$0xf]
  %v2338 = vld [vmem:[#allocation3] sm:$0xff]
  %v2339 = vld [vmem:[#allocation3 + $0x8] sm:$0xf]
  %v2340 = vld [vmem:[#allocation3 + $0xc] sm:$0xff]
  %v2341 = vld [vmem:[#allocation3 + $0x14] sm:$0xf]
  %v2342 = vld [vmem:[#allocation3 + $0x18] sm:$0xff]
  %v2343 = vld [vmem:[#allocation3 + $0x20] sm:$0xf]
  %v2344 = vld [vmem:[#allocation3 + $0x24] sm:$0xff]
  %v2345 = vld [vmem:[#allocation3 + $0x2c] sm:$0xf]
  %v2346 = vld [vmem:[#allocation3 + $0x30] sm:$0xff]
  %v2347 = vld [vmem:[#allocation3 + $0x38] sm:$0xf]
  %v2348 = vld [vmem:[#allocation3 + $0x3c] sm:$0xff]
  %v2349 = vld [vmem:[#allocation3 + $0x44] sm:$0xf]
  %v2350 = vld [vmem:[#allocation3 + $0x48] sm:$0xff]
  %v2351 = vld [vmem:[#allocation3 + $0x50] sm:$0xf]
  %v2352 = vld [vmem:[#allocation3 + $0x54] sm:$0xff]
  %v2353 = vld [vmem:[#allocation3 + $0x5c] sm:$0xf]
  %v2362 = vunpack.c.l.b16 %v2330
  %v2363 = vunpack.c.l.b16 %v2331
  %v2364 = vunpack.c.l.b16 %v2332
  %v2365 = vunpack.c.l.b16 %v2333
  %v2366 = vunpack.c.l.b16 %v2334
  %v2367 = vunpack.c.l.b16 %v2335
  %v2368 = vunpack.c.l.b16 %v2336
  %v2369 = vunpack.c.l.b16 %v2337
  %v2370 = vpack.c.b16 %v2363, %v2362
  %v2371 = vpack.c.b16 %v2365, %v2364
  %v2372 = vpack.c.b16 %v2367, %v2366
  %v2373 = vpack.c.b16 %v2369, %v2368
  %v2390 = vunpack.c.l.b16 %v2338
  %v2391 = vunpack.c.h.b16 %v2338
  %v2392 = vunpack.c.l.b16 %v2339
  %v2393 = vunpack.c.l.b16 %v2340
  %v2394 = vunpack.c.h.b16 %v2340
  %v2395 = vunpack.c.l.b16 %v2341
  %v2396 = vunpack.c.l.b16 %v2342
  %v2397 = vunpack.c.h.b16 %v2342
  %v2398 = vunpack.c.l.b16 %v2343
  %v2399 = vunpack.c.l.b16 %v2344
  %v2400 = vunpack.c.h.b16 %v2344
  %v2401 = vunpack.c.l.b16 %v2345
  %v2402 = vunpack.c.l.b16 %v2346
  %v2403 = vunpack.c.h.b16 %v2346
  %v2404 = vunpack.c.l.b16 %v2347
  %v2405 = vunpack.c.l.b16 %v2348
  %v2406 = vunpack.c.h.b16 %v2348
  %v2407 = vunpack.c.l.b16 %v2349
  %v2408 = vunpack.c.l.b16 %v2350
  %v2409 = vunpack.c.h.b16 %v2350
  %v2410 = vunpack.c.l.b16 %v2351
  %v2411 = vunpack.c.l.b16 %v2352
  %v2412 = vunpack.c.h.b16 %v2352
  %v2413 = vunpack.c.l.b16 %v2353
  %v2414 = vpack.c.b16 %v2393, %v2390
  %v2415 = vpack.c.b16 %v2394, %v2391
  %v2416 = vpack.c.b16 %v2395, %v2392
  %v2417 = vpack.c.b16 %v2399, %v2396
  %v2418 = vpack.c.b16 %v2400, %v2397
  %v2419 = vpack.c.b16 %v2401, %v2398
  %v2420 = vpack.c.b16 %v2405, %v2402
  %v2421 = vpack.c.b16 %v2406, %v2403
  %v2422 = vpack.c.b16 %v2407, %v2404
  %v2423 = vpack.c.b16 %v2411, %v2408
  %v2424 = vpack.c.b16 %v2412, %v2409
  %v2425 = vpack.c.b16 %v2413, %v2410
  %2426 = vrot.lane.b32.xlu0 %v2414, 127
  %v2427 = vpop.permute.xlu0 %2426
  %2428 = vrot.lane.b32.xlu0 %v2415, 127
  %v2429 = vpop.permute.xlu0 %2428
  %2430 = vrot.lane.b32.xlu0 %v2416, 127
  %v2431 = vpop.permute.xlu0 %2430
  %2432 = vrot.lane.b32.xlu0 %v2417, 127
  %v2433 = vpop.permute.xlu0 %2432
  %2434 = vrot.lane.b32.xlu0 %v2418, 127
  %v2435 = vpop.permute.xlu0 %2434
  %2436 = vrot.lane.b32.xlu0 %v2419, 127
  %v2437 = vpop.permute.xlu0 %2436
  %2438 = vrot.lane.b32.xlu0 %v2420, 127
  %v2439 = vpop.permute.xlu0 %2438
  %2440 = vrot.lane.b32.xlu0 %v2421, 127
  %v2441 = vpop.permute.xlu0 %2440
  %2442 = vrot.lane.b32.xlu0 %v2422, 127
  %v2443 = vpop.permute.xlu0 %2442
  %2444 = vrot.lane.b32.xlu0 %v2423, 127
  %v2445 = vpop.permute.xlu0 %2444
  %2446 = vrot.lane.b32.xlu0 %v2424, 127
  %v2447 = vpop.permute.xlu0 %2446
  %2448 = vrot.lane.b32.xlu0 %v2425, 127
  %v2449 = vpop.permute.xlu0 %2448
  %v2450 = vsel %vm1488, %v2427, %v2429
  %v2451 = vsel %vm1488, %v2429, %v2431
  %v2452 = vsel %vm1488, %v2433, %v2435
  %v2453 = vsel %vm1488, %v2435, %v2437
  %v2454 = vsel %vm1488, %v2439, %v2441
  %v2455 = vsel %vm1488, %v2441, %v2443
  %v2456 = vsel %vm1488, %v2445, %v2447
  %v2457 = vsel %vm1488, %v2447, %v2449
  %vm2466 = vcmask 523264
  %v2468 = vsel %vm2466, %v2370, 0
  %v2471 = vsel %vm2466, %v2371, 0
  %v2474 = vsel %vm2466, %v2372, 0
  %v2477 = vsel %vm2466, %v2373, 0
  %2479 = vmatprep.subr.bf16.mxu0 0
  %2480 = vmatpush1.bf16.msra.mxu0 0
  %2481 = vmatprep.subr.bf16.mxu0 0
  %2482 = vmatpush1.bf16.msra.mxu0 0
  %2483 = vmatprep.subr.bf16.mxu0 0
  %2484 = vmatpush1.bf16.msra.mxu0 0
  %2485 = vmatprep.subr.bf16.mxu0 0
  %2486 = vmatpush1.bf16.msra.mxu0 0
  %2487 = vmatprep.subr.bf16.mxu0 %v2457
  %2488 = vmatpush1.bf16.msra.mxu0 %v2456
  %2489 = vmatprep.subr.bf16.mxu0 %v2455
  %2490 = vmatpush1.bf16.msra.mxu0 %v2454
  %2491 = vmatprep.subr.bf16.mxu0 %v2453
  %2492 = vmatpush1.bf16.msra.mxu0 %v2452
  %2493 = vmatprep.subr.bf16.mxu0 %v2451
  %2494 = vmatpush1.bf16.msra.mxu0 %v2450
  %2495 = vmatprep.subr.bf16.mxu0 0
  %2496 = vmatpush2.bf16.msra.mxu0 0
  %2497 = vmatprep.subr.bf16.mxu0 0
  %2498 = vmatpush2.bf16.msra.mxu0 0
  %2499 = vmatprep.subr.bf16.mxu0 0
  %2500 = vmatpush2.bf16.msra.mxu0 0
  %2501 = vmatprep.subr.bf16.mxu0 0
  %2502 = vmatpush2.bf16.msra.mxu0 0
  %2503 = vmatprep.subr.bf16.mxu0 0
  %2504 = vmatpush2.bf16.msra.mxu0 0
  %2505 = vmatprep.subr.bf16.mxu0 0
  %2506 = vmatpush2.bf16.msra.mxu0 0
  %2507 = vmatprep.subr.bf16.mxu0 0
  %2508 = vmatpush2.bf16.msra.mxu0 0
  %2509 = vmatprep.subr.bf16.mxu0 0
  %2510 = vmatpush2.bf16.msra.mxu0 0
  %2511 = vmatprep.mubr.bf16.mxu0 0
  %2512 = vmatmul.mubr.bf16.gmra.mxu0 %v2468
  %v2513 = vpop.f32.mrf.mxu0
  %v2514 = vadd.f32 0.0, %v2513
  %v2515 = vpop.f32.mrf.mxu0
  %v2516 = vadd.f32 0.0, %v2515
  %v2517 = vpop.f32.mrf.mxu0
  %v2518 = vadd.f32 0.0, %v2517
  %v2519 = vpop.f32.mrf.mxu0
  %v2520 = vadd.f32 0.0, %v2519
  %2521 = vmatprep.mubr.bf16.mxu0 0
  %2522 = vmatmul.mubr.bf16.gmra.mxu0 %v2471
  %v2523 = vpop.f32.mrf.mxu0
  %v2524 = vadd.f32 0.0, %v2523
  %v2525 = vpop.f32.mrf.mxu0
  %v2526 = vadd.f32 0.0, %v2525
  %v2527 = vpop.f32.mrf.mxu0
  %v2528 = vadd.f32 0.0, %v2527
  %v2529 = vpop.f32.mrf.mxu0
  %v2530 = vadd.f32 0.0, %v2529
  %2531 = vmatprep.mubr.bf16.mxu0 0
  %2532 = vmatmul.mubr.bf16.gmra.mxu0 %v2474
  %v2533 = vpop.f32.mrf.mxu0
  %v2534 = vadd.f32 0.0, %v2533
  %v2535 = vpop.f32.mrf.mxu0
  %v2536 = vadd.f32 0.0, %v2535
  %v2537 = vpop.f32.mrf.mxu0
  %v2538 = vadd.f32 0.0, %v2537
  %v2539 = vpop.f32.mrf.mxu0
  %v2540 = vadd.f32 0.0, %v2539
  %2541 = vmatprep.mubr.bf16.mxu0 0
  %2542 = vmatmul.mubr.bf16.gmra.mxu0 %v2477
  %v2543 = vpop.f32.mrf.mxu0
  %v2544 = vadd.f32 0.0, %v2543
  %v2545 = vpop.f32.mrf.mxu0
  %v2546 = vadd.f32 0.0, %v2545
  %v2547 = vpop.f32.mrf.mxu0
  %v2548 = vadd.f32 0.0, %v2547
  %v2549 = vpop.f32.mrf.mxu0
  %v2550 = vadd.f32 0.0, %v2549
  %2551 = vdwg.mxu0
  %v2560 = vunpack.c.l.b16 %v2313
  %v2561 = vunpack.c.l.b16 %v2314
  %v2562 = vunpack.c.l.b16 %v2315
  %v2563 = vunpack.c.l.b16 %v2316
  %v2564 = vunpack.c.l.b16 %v2317
  %v2565 = vunpack.c.l.b16 %v2318
  %v2566 = vunpack.c.l.b16 %v2319
  %v2567 = vunpack.c.l.b16 %v2320
  %v2568 = vpack.c.b16 %v2561, %v2560
  %v2569 = vpack.c.b16 %v2563, %v2562
  %v2570 = vpack.c.b16 %v2565, %v2564
  %v2571 = vpack.c.b16 %v2567, %v2566
  %v2580 = vunpack.c.l.b16 %v2321
  %v2581 = vunpack.c.h.b16 %v2321
  %v2582 = vunpack.c.l.b16 %v2322
  %v2583 = vunpack.c.h.b16 %v2322
  %v2584 = vunpack.c.l.b16 %v2323
  %v2585 = vunpack.c.h.b16 %v2323
  %v2586 = vunpack.c.l.b16 %v2324
  %v2587 = vunpack.c.h.b16 %v2324
  %v2588 = vunpack.c.l.b16 %v2325
  %v2589 = vunpack.c.h.b16 %v2325
  %v2590 = vunpack.c.l.b16 %v2326
  %v2591 = vunpack.c.h.b16 %v2326
  %v2592 = vunpack.c.l.b16 %v2327
  %v2593 = vunpack.c.h.b16 %v2327
  %v2594 = vunpack.c.l.b16 %v2328
  %v2595 = vunpack.c.h.b16 %v2328
  %v2596 = vpack.c.b16 %v2582, %v2580
  %v2597 = vpack.c.b16 %v2583, %v2581
  %v2598 = vpack.c.b16 %v2586, %v2584
  %v2599 = vpack.c.b16 %v2587, %v2585
  %v2600 = vpack.c.b16 %v2590, %v2588
  %v2601 = vpack.c.b16 %v2591, %v2589
  %v2602 = vpack.c.b16 %v2594, %v2592
  %v2603 = vpack.c.b16 %v2595, %v2593
  %v2613 = vsel %vm2466, %v2568, 0
  %v2616 = vsel %vm2466, %v2569, 0
  %v2619 = vsel %vm2466, %v2570, 0
  %v2622 = vsel %vm2466, %v2571, 0
  %2624 = vmatprep.subr.bf16.mxu0 0
  %2625 = vmatpush1.bf16.msra.mxu0 0
  %2626 = vmatprep.subr.bf16.mxu0 0
  %2627 = vmatpush1.bf16.msra.mxu0 0
  %2628 = vmatprep.subr.bf16.mxu0 0
  %2629 = vmatpush1.bf16.msra.mxu0 0
  %2630 = vmatprep.subr.bf16.mxu0 0
  %2631 = vmatpush1.bf16.msra.mxu0 0
  %2632 = vmatprep.subr.bf16.mxu0 %v2603
  %2633 = vmatpush1.bf16.msra.mxu0 %v2602
  %2634 = vmatprep.subr.bf16.mxu0 %v2601
  %2635 = vmatpush1.bf16.msra.mxu0 %v2600
  %2636 = vmatprep.subr.bf16.mxu0 %v2599
  %2637 = vmatpush1.bf16.msra.mxu0 %v2598
  %2638 = vmatprep.subr.bf16.mxu0 %v2597
  %2639 = vmatpush1.bf16.msra.mxu0 %v2596
  %2640 = vmatprep.subr.bf16.mxu0 0
  %2641 = vmatpush2.bf16.msra.mxu0 0
  %2642 = vmatprep.subr.bf16.mxu0 0
  %2643 = vmatpush2.bf16.msra.mxu0 0
  %2644 = vmatprep.subr.bf16.mxu0 0
  %2645 = vmatpush2.bf16.msra.mxu0 0
  %2646 = vmatprep.subr.bf16.mxu0 0
  %2647 = vmatpush2.bf16.msra.mxu0 0
  %2648 = vmatprep.subr.bf16.mxu0 0
  %2649 = vmatpush2.bf16.msra.mxu0 0
  %2650 = vmatprep.subr.bf16.mxu0 0
  %2651 = vmatpush2.bf16.msra.mxu0 0
  %2652 = vmatprep.subr.bf16.mxu0 0
  %2653 = vmatpush2.bf16.msra.mxu0 0
  %2654 = vmatprep.subr.bf16.mxu0 0
  %2655 = vmatpush2.bf16.msra.mxu0 0
  %2656 = vmatprep.mubr.bf16.mxu0 0
  %2657 = vmatmul.mubr.bf16.gmra.mxu0 %v2613
  %v2658 = vpop.f32.mrf.mxu0
  %v2659 = vadd.f32 %v2514, %v2658
  %v2660 = vpop.f32.mrf.mxu0
  %v2661 = vadd.f32 %v2516, %v2660
  %v2662 = vpop.f32.mrf.mxu0
  %v2663 = vadd.f32 %v2518, %v2662
  %v2664 = vpop.f32.mrf.mxu0
  %v2665 = vadd.f32 %v2520, %v2664
  %2666 = vmatprep.mubr.bf16.mxu0 0
  %2667 = vmatmul.mubr.bf16.gmra.mxu0 %v2616
  %v2668 = vpop.f32.mrf.mxu0
  %v2669 = vadd.f32 %v2524, %v2668
  %v2670 = vpop.f32.mrf.mxu0
  %v2671 = vadd.f32 %v2526, %v2670
  %v2672 = vpop.f32.mrf.mxu0
  %v2673 = vadd.f32 %v2528, %v2672
  %v2674 = vpop.f32.mrf.mxu0
  %v2675 = vadd.f32 %v2530, %v2674
  %2676 = vmatprep.mubr.bf16.mxu0 0
  %2677 = vmatmul.mubr.bf16.gmra.mxu0 %v2619
  %v2678 = vpop.f32.mrf.mxu0
  %v2679 = vadd.f32 %v2534, %v2678
  %v2680 = vpop.f32.mrf.mxu0
  %v2681 = vadd.f32 %v2536, %v2680
  %v2682 = vpop.f32.mrf.mxu0
  %v2683 = vadd.f32 %v2538, %v2682
  %v2684 = vpop.f32.mrf.mxu0
  %v2685 = vadd.f32 %v2540, %v2684
  %2686 = vmatprep.mubr.bf16.mxu0 0
  %2687 = vmatmul.mubr.bf16.gmra.mxu0 %v2622
  %v2688 = vpop.f32.mrf.mxu0
  %v2689 = vadd.f32 %v2544, %v2688
  %v2690 = vpop.f32.mrf.mxu0
  %v2691 = vadd.f32 %v2546, %v2690
  %v2692 = vpop.f32.mrf.mxu0
  %v2693 = vadd.f32 %v2548, %v2692
  %v2694 = vpop.f32.mrf.mxu0
  %v2695 = vadd.f32 %v2550, %v2694
  %2696 = vdwg.mxu0
  %s2697 = scalar_lea.vmem %s5, 64
  %v2698 = vld [vmem:[%s2697] sm:$0xf]
  %v2699 = vld [vmem:[%s2697 + $0x4] sm:$0xf]
  %v2700 = vld [vmem:[%s2697 + $0x8] sm:$0xf]
  %v2701 = vld [vmem:[%s2697 + $0xc] sm:$0xf]
  %v2702 = vld [vmem:[%s2697 + $0x10] sm:$0xf]
  %v2703 = vld [vmem:[%s2697 + $0x14] sm:$0xf]
  %v2704 = vld [vmem:[%s2697 + $0x18] sm:$0xf]
  %v2705 = vld [vmem:[%s2697 + $0x1c] sm:$0xf]
  %v2714 = vunpack.c.l.b16 %v2698
  %v2715 = vunpack.c.l.b16 %v2699
  %v2716 = vunpack.c.l.b16 %v2700
  %v2717 = vunpack.c.l.b16 %v2701
  %v2718 = vunpack.c.l.b16 %v2702
  %v2719 = vunpack.c.l.b16 %v2703
  %v2720 = vunpack.c.l.b16 %v2704
  %v2721 = vunpack.c.l.b16 %v2705
  %v2722 = vpack.c.b16 %v2715, %v2714
  %v2723 = vpack.c.b16 %v2717, %v2716
  %v2724 = vpack.c.b16 %v2719, %v2718
  %v2725 = vpack.c.b16 %v2721, %v2720
  %2726 = vrot.lane.b32.xlu0 %v2414, 126
  %v2727 = vpop.permute.xlu0 %2726
  %2728 = vrot.lane.b32.xlu0 %v2415, 126
  %v2729 = vpop.permute.xlu0 %2728
  %2730 = vrot.lane.b32.xlu0 %v2416, 126
  %v2731 = vpop.permute.xlu0 %2730
  %2732 = vrot.lane.b32.xlu0 %v2417, 126
  %v2733 = vpop.permute.xlu0 %2732
  %2734 = vrot.lane.b32.xlu0 %v2418, 126
  %v2735 = vpop.permute.xlu0 %2734
  %2736 = vrot.lane.b32.xlu0 %v2419, 126
  %v2737 = vpop.permute.xlu0 %2736
  %2738 = vrot.lane.b32.xlu0 %v2420, 126
  %v2739 = vpop.permute.xlu0 %2738
  %2740 = vrot.lane.b32.xlu0 %v2421, 126
  %v2741 = vpop.permute.xlu0 %2740
  %2742 = vrot.lane.b32.xlu0 %v2422, 126
  %v2743 = vpop.permute.xlu0 %2742
  %2744 = vrot.lane.b32.xlu0 %v2423, 126
  %v2745 = vpop.permute.xlu0 %2744
  %2746 = vrot.lane.b32.xlu0 %v2424, 126
  %v2747 = vpop.permute.xlu0 %2746
  %2748 = vrot.lane.b32.xlu0 %v2425, 126
  %v2749 = vpop.permute.xlu0 %2748
  %vm2750 = vcmask 1031168
  %v2751 = vsel %vm2750, %v2727, %v2729
  %v2752 = vsel %vm2750, %v2729, %v2731
  %v2753 = vsel %vm2750, %v2733, %v2735
  %v2754 = vsel %vm2750, %v2735, %v2737
  %v2755 = vsel %vm2750, %v2739, %v2741
  %v2756 = vsel %vm2750, %v2741, %v2743
  %v2757 = vsel %vm2750, %v2745, %v2747
  %v2758 = vsel %vm2750, %v2747, %v2749
  %v2768 = vsel %vm2466, %v2722, 0
  %v2771 = vsel %vm2466, %v2723, 0
  %v2774 = vsel %vm2466, %v2724, 0
  %v2777 = vsel %vm2466, %v2725, 0
  %2779 = vmatprep.subr.bf16.mxu0 0
  %2780 = vmatpush1.bf16.msra.mxu0 0
  %2781 = vmatprep.subr.bf16.mxu0 0
  %2782 = vmatpush1.bf16.msra.mxu0 0
  %2783 = vmatprep.subr.bf16.mxu0 0
  %2784 = vmatpush1.bf16.msra.mxu0 0
  %2785 = vmatprep.subr.bf16.mxu0 0
  %2786 = vmatpush1.bf16.msra.mxu0 0
  %2787 = vmatprep.subr.bf16.mxu0 %v2758
  %2788 = vmatpush1.bf16.msra.mxu0 %v2757
  %2789 = vmatprep.subr.bf16.mxu0 %v2756
  %2790 = vmatpush1.bf16.msra.mxu0 %v2755
  %2791 = vmatprep.subr.bf16.mxu0 %v2754
  %2792 = vmatpush1.bf16.msra.mxu0 %v2753
  %2793 = vmatprep.subr.bf16.mxu0 %v2752
  %2794 = vmatpush1.bf16.msra.mxu0 %v2751
  %2795 = vmatprep.subr.bf16.mxu0 0
  %2796 = vmatpush2.bf16.msra.mxu0 0
  %2797 = vmatprep.subr.bf16.mxu0 0
  %2798 = vmatpush2.bf16.msra.mxu0 0
  %2799 = vmatprep.subr.bf16.mxu0 0
  %2800 = vmatpush2.bf16.msra.mxu0 0
  %2801 = vmatprep.subr.bf16.mxu0 0
  %2802 = vmatpush2.bf16.msra.mxu0 0
  %2803 = vmatprep.subr.bf16.mxu0 0
  %2804 = vmatpush2.bf16.msra.mxu0 0
  %2805 = vmatprep.subr.bf16.mxu0 0
  %2806 = vmatpush2.bf16.msra.mxu0 0
  %2807 = vmatprep.subr.bf16.mxu0 0
  %2808 = vmatpush2.bf16.msra.mxu0 0
  %2809 = vmatprep.subr.bf16.mxu0 0
  %2810 = vmatpush2.bf16.msra.mxu0 0
  %2811 = vmatprep.mubr.bf16.mxu0 0
  %2812 = vmatmul.mubr.bf16.gmra.mxu0 %v2768
  %v2813 = vpop.f32.mrf.mxu0
  %v2814 = vadd.f32 0.0, %v2813
  %v2815 = vpop.f32.mrf.mxu0
  %v2816 = vadd.f32 0.0, %v2815
  %v2817 = vpop.f32.mrf.mxu0
  %v2818 = vadd.f32 0.0, %v2817
  %v2819 = vpop.f32.mrf.mxu0
  %v2820 = vadd.f32 0.0, %v2819
  %2821 = vmatprep.mubr.bf16.mxu0 0
  %2822 = vmatmul.mubr.bf16.gmra.mxu0 %v2771
  %v2823 = vpop.f32.mrf.mxu0
  %v2824 = vadd.f32 0.0, %v2823
  %v2825 = vpop.f32.mrf.mxu0
  %v2826 = vadd.f32 0.0, %v2825
  %v2827 = vpop.f32.mrf.mxu0
  %v2828 = vadd.f32 0.0, %v2827
  %v2829 = vpop.f32.mrf.mxu0
  %v2830 = vadd.f32 0.0, %v2829
  %2831 = vmatprep.mubr.bf16.mxu0 0
  %2832 = vmatmul.mubr.bf16.gmra.mxu0 %v2774
  %v2833 = vpop.f32.mrf.mxu0
  %v2834 = vadd.f32 0.0, %v2833
  %v2835 = vpop.f32.mrf.mxu0
  %v2836 = vadd.f32 0.0, %v2835
  %v2837 = vpop.f32.mrf.mxu0
  %v2838 = vadd.f32 0.0, %v2837
  %v2839 = vpop.f32.mrf.mxu0
  %v2840 = vadd.f32 0.0, %v2839
  %2841 = vmatprep.mubr.bf16.mxu0 0
  %2842 = vmatmul.mubr.bf16.gmra.mxu0 %v2777
  %v2843 = vpop.f32.mrf.mxu0
  %v2844 = vadd.f32 0.0, %v2843
  %v2845 = vpop.f32.mrf.mxu0
  %v2846 = vadd.f32 0.0, %v2845
  %v2847 = vpop.f32.mrf.mxu0
  %v2848 = vadd.f32 0.0, %v2847
  %v2849 = vpop.f32.mrf.mxu0
  %v2850 = vadd.f32 0.0, %v2849
  %2851 = vdwg.mxu0
  %v2852 = vadd.f32 %v2659, %v2814
  %v2853 = vadd.f32 %v2661, %v2816
  %v2854 = vadd.f32 %v2663, %v2818
  %v2855 = vadd.f32 %v2665, %v2820
  %v2856 = vadd.f32 %v2669, %v2824
  %v2857 = vadd.f32 %v2671, %v2826
  %v2858 = vadd.f32 %v2673, %v2828
  %v2859 = vadd.f32 %v2675, %v2830
  %v2860 = vadd.f32 %v2679, %v2834
  %v2861 = vadd.f32 %v2681, %v2836
  %v2862 = vadd.f32 %v2683, %v2838
  %v2863 = vadd.f32 %v2685, %v2840
  %v2864 = vadd.f32 %v2689, %v2844
  %v2865 = vadd.f32 %v2691, %v2846
  %v2866 = vadd.f32 %v2693, %v2848
  %v2867 = vadd.f32 %v2695, %v2850
  %s2868 = scalar_lea.vmem %s5, 96
  %v2869 = vld [vmem:[%s2868] sm:$0xf]
  %v2870 = vld [vmem:[%s2868 + $0x4] sm:$0xf]
  %v2871 = vld [vmem:[%s2868 + $0x8] sm:$0xf]
  %v2872 = vld [vmem:[%s2868 + $0xc] sm:$0xf]
  %v2873 = vld [vmem:[%s2868 + $0x10] sm:$0xf]
  %v2874 = vld [vmem:[%s2868 + $0x14] sm:$0xf]
  %v2875 = vld [vmem:[%s2868 + $0x18] sm:$0xf]
  %v2876 = vld [vmem:[%s2868 + $0x1c] sm:$0xf]
  %v2885 = vunpack.c.l.b16 %v2869
  %v2886 = vunpack.c.l.b16 %v2870
  %v2887 = vunpack.c.l.b16 %v2871
  %v2888 = vunpack.c.l.b16 %v2872
  %v2889 = vunpack.c.l.b16 %v2873
  %v2890 = vunpack.c.l.b16 %v2874
  %v2891 = vunpack.c.l.b16 %v2875
  %v2892 = vunpack.c.l.b16 %v2876
  %v2893 = vpack.c.b16 %v2886, %v2885
  %v2894 = vpack.c.b16 %v2888, %v2887
  %v2895 = vpack.c.b16 %v2890, %v2889
  %v2896 = vpack.c.b16 %v2892, %v2891
  %2897 = vrot.lane.b32.xlu0 %v2414, 118
  %v2898 = vpop.permute.xlu0 %2897
  %2899 = vrot.lane.b32.xlu0 %v2415, 118
  %v2900 = vpop.permute.xlu0 %2899
  %2901 = vrot.lane.b32.xlu0 %v2416, 118
  %v2902 = vpop.permute.xlu0 %2901
  %2903 = vrot.lane.b32.xlu0 %v2417, 118
  %v2904 = vpop.permute.xlu0 %2903
  %2905 = vrot.lane.b32.xlu0 %v2418, 118
  %v2906 = vpop.permute.xlu0 %2905
  %2907 = vrot.lane.b32.xlu0 %v2419, 118
  %v2908 = vpop.permute.xlu0 %2907
  %2909 = vrot.lane.b32.xlu0 %v2420, 118
  %v2910 = vpop.permute.xlu0 %2909
  %2911 = vrot.lane.b32.xlu0 %v2421, 118
  %v2912 = vpop.permute.xlu0 %2911
  %2913 = vrot.lane.b32.xlu0 %v2422, 118
  %v2914 = vpop.permute.xlu0 %2913
  %2915 = vrot.lane.b32.xlu0 %v2423, 118
  %v2916 = vpop.permute.xlu0 %2915
  %2917 = vrot.lane.b32.xlu0 %v2424, 118
  %v2918 = vpop.permute.xlu0 %2917
  %2919 = vrot.lane.b32.xlu0 %v2425, 118
  %v2920 = vpop.permute.xlu0 %2919
  %v2921 = vsel %vm1852, %v2898, %v2900
  %v2922 = vsel %vm1852, %v2900, %v2902
  %v2923 = vsel %vm1852, %v2904, %v2906
  %v2924 = vsel %vm1852, %v2906, %v2908
  %v2925 = vsel %vm1852, %v2910, %v2912
  %v2926 = vsel %vm1852, %v2912, %v2914
  %v2927 = vsel %vm1852, %v2916, %v2918
  %v2928 = vsel %vm1852, %v2918, %v2920
  %v2938 = vsel %vm2466, %v2893, 0
  %v2941 = vsel %vm2466, %v2894, 0
  %v2944 = vsel %vm2466, %v2895, 0
  %v2947 = vsel %vm2466, %v2896, 0
  %2949 = vmatprep.subr.bf16.mxu0 0
  %2950 = vmatpush1.bf16.msra.mxu0 0
  %2951 = vmatprep.subr.bf16.mxu0 0
  %2952 = vmatpush1.bf16.msra.mxu0 0
  %2953 = vmatprep.subr.bf16.mxu0 0
  %2954 = vmatpush1.bf16.msra.mxu0 0
  %2955 = vmatprep.subr.bf16.mxu0 0
  %2956 = vmatpush1.bf16.msra.mxu0 0
  %2957 = vmatprep.subr.bf16.mxu0 %v2928
  %2958 = vmatpush1.bf16.msra.mxu0 %v2927
  %2959 = vmatprep.subr.bf16.mxu0 %v2926
  %2960 = vmatpush1.bf16.msra.mxu0 %v2925
  %2961 = vmatprep.subr.bf16.mxu0 %v2924
  %2962 = vmatpush1.bf16.msra.mxu0 %v2923
  %2963 = vmatprep.subr.bf16.mxu0 %v2922
  %2964 = vmatpush1.bf16.msra.mxu0 %v2921
  %2965 = vmatprep.subr.bf16.mxu0 0
  %2966 = vmatpush2.bf16.msra.mxu0 0
  %2967 = vmatprep.subr.bf16.mxu0 0
  %2968 = vmatpush2.bf16.msra.mxu0 0
  %2969 = vmatprep.subr.bf16.mxu0 0
  %2970 = vmatpush2.bf16.msra.mxu0 0
  %2971 = vmatprep.subr.bf16.mxu0 0
  %2972 = vmatpush2.bf16.msra.mxu0 0
  %2973 = vmatprep.subr.bf16.mxu0 0
  %2974 = vmatpush2.bf16.msra.mxu0 0
  %2975 = vmatprep.subr.bf16.mxu0 0
  %2976 = vmatpush2.bf16.msra.mxu0 0
  %2977 = vmatprep.subr.bf16.mxu0 0
  %2978 = vmatpush2.bf16.msra.mxu0 0
  %2979 = vmatprep.subr.bf16.mxu0 0
  %2980 = vmatpush2.bf16.msra.mxu0 0
  %2981 = vmatprep.mubr.bf16.mxu0 0
  %2982 = vmatmul.mubr.bf16.gmra.mxu0 %v2938
  %v2983 = vpop.f32.mrf.mxu0
  %v2984 = vadd.f32 0.0, %v2983
  %v2985 = vpop.f32.mrf.mxu0
  %v2986 = vadd.f32 0.0, %v2985
  %v2987 = vpop.f32.mrf.mxu0
  %v2988 = vadd.f32 0.0, %v2987
  %v2989 = vpop.f32.mrf.mxu0
  %v2990 = vadd.f32 0.0, %v2989
  %2991 = vmatprep.mubr.bf16.mxu0 0
  %2992 = vmatmul.mubr.bf16.gmra.mxu0 %v2941
  %v2993 = vpop.f32.mrf.mxu0
  %v2994 = vadd.f32 0.0, %v2993
  %v2995 = vpop.f32.mrf.mxu0
  %v2996 = vadd.f32 0.0, %v2995
  %v2997 = vpop.f32.mrf.mxu0
  %v2998 = vadd.f32 0.0, %v2997
  %v2999 = vpop.f32.mrf.mxu0
  %v3000 = vadd.f32 0.0, %v2999
  %3001 = vmatprep.mubr.bf16.mxu0 0
  %3002 = vmatmul.mubr.bf16.gmra.mxu0 %v2944
  %v3003 = vpop.f32.mrf.mxu0
  %v3004 = vadd.f32 0.0, %v3003
  %v3005 = vpop.f32.mrf.mxu0
  %v3006 = vadd.f32 0.0, %v3005
  %v3007 = vpop.f32.mrf.mxu0
  %v3008 = vadd.f32 0.0, %v3007
  %v3009 = vpop.f32.mrf.mxu0
  %v3010 = vadd.f32 0.0, %v3009
  %3011 = vmatprep.mubr.bf16.mxu0 0
  %3012 = vmatmul.mubr.bf16.gmra.mxu0 %v2947
  %v3013 = vpop.f32.mrf.mxu0
  %v3014 = vadd.f32 0.0, %v3013
  %v3015 = vpop.f32.mrf.mxu0
  %v3016 = vadd.f32 0.0, %v3015
  %v3017 = vpop.f32.mrf.mxu0
  %v3018 = vadd.f32 0.0, %v3017
  %v3019 = vpop.f32.mrf.mxu0
  %v3020 = vadd.f32 0.0, %v3019
  %3021 = vdwg.mxu0
  %v3022 = vadd.f32 %v2852, %v2984
  %v3023 = vadd.f32 %v2853, %v2986
  %v3024 = vadd.f32 %v2854, %v2988
  %v3025 = vadd.f32 %v2855, %v2990
  %v3026 = vadd.f32 %v2856, %v2994
  %v3027 = vadd.f32 %v2857, %v2996
  %v3028 = vadd.f32 %v2858, %v2998
  %v3029 = vadd.f32 %v2859, %v3000
  %v3030 = vadd.f32 %v2860, %v3004
  %v3031 = vadd.f32 %v2861, %v3006
  %v3032 = vadd.f32 %v2862, %v3008
  %v3033 = vadd.f32 %v2863, %v3010
  %v3034 = vadd.f32 %v2864, %v3014
  %v3035 = vadd.f32 %v2865, %v3016
  %v3036 = vadd.f32 %v2866, %v3018
  %v3037 = vadd.f32 %v2867, %v3020
  %s3038 = scalar_lea.vmem %s5, 128
  %v3039 = vld [vmem:[%s3038] sm:$0xf]
  %v3040 = vld [vmem:[%s3038 + $0x4] sm:$0xf]
  %v3041 = vld [vmem:[%s3038 + $0x8] sm:$0xf]
  %v3042 = vld [vmem:[%s3038 + $0xc] sm:$0xf]
  %v3043 = vld [vmem:[%s3038 + $0x10] sm:$0xf]
  %v3044 = vld [vmem:[%s3038 + $0x14] sm:$0xf]
  %v3045 = vld [vmem:[%s3038 + $0x18] sm:$0xf]
  %v3046 = vld [vmem:[%s3038 + $0x1c] sm:$0xf]
  %v3055 = vunpack.c.l.b16 %v3039
  %v3056 = vunpack.c.l.b16 %v3040
  %v3057 = vunpack.c.l.b16 %v3041
  %v3058 = vunpack.c.l.b16 %v3042
  %v3059 = vunpack.c.l.b16 %v3043
  %v3060 = vunpack.c.l.b16 %v3044
  %v3061 = vunpack.c.l.b16 %v3045
  %v3062 = vunpack.c.l.b16 %v3046
  %v3063 = vpack.c.b16 %v3056, %v3055
  %v3064 = vpack.c.b16 %v3058, %v3057
  %v3065 = vpack.c.b16 %v3060, %v3059
  %v3066 = vpack.c.b16 %v3062, %v3061
  %3067 = vrot.lane.b32.xlu0 %v2414, 117
  %v3068 = vpop.permute.xlu0 %3067
  %3069 = vrot.lane.b32.xlu0 %v2415, 117
  %v3070 = vpop.permute.xlu0 %3069
  %3071 = vrot.lane.b32.xlu0 %v2416, 117
  %v3072 = vpop.permute.xlu0 %3071
  %3073 = vrot.lane.b32.xlu0 %v2417, 117
  %v3074 = vpop.permute.xlu0 %3073
  %3075 = vrot.lane.b32.xlu0 %v2418, 117
  %v3076 = vpop.permute.xlu0 %3075
  %3077 = vrot.lane.b32.xlu0 %v2419, 117
  %v3078 = vpop.permute.xlu0 %3077
  %3079 = vrot.lane.b32.xlu0 %v2420, 117
  %v3080 = vpop.permute.xlu0 %3079
  %3081 = vrot.lane.b32.xlu0 %v2421, 117
  %v3082 = vpop.permute.xlu0 %3081
  %3083 = vrot.lane.b32.xlu0 %v2422, 117
  %v3084 = vpop.permute.xlu0 %3083
  %3085 = vrot.lane.b32.xlu0 %v2423, 117
  %v3086 = vpop.permute.xlu0 %3085
  %3087 = vrot.lane.b32.xlu0 %v2424, 117
  %v3088 = vpop.permute.xlu0 %3087
  %3089 = vrot.lane.b32.xlu0 %v2425, 117
  %v3090 = vpop.permute.xlu0 %3089
  %v3091 = vsel %vm2055, %v3068, %v3070
  %v3092 = vsel %vm2055, %v3070, %v3072
  %v3093 = vsel %vm2055, %v3074, %v3076
  %v3094 = vsel %vm2055, %v3076, %v3078
  %v3095 = vsel %vm2055, %v3080, %v3082
  %v3096 = vsel %vm2055, %v3082, %v3084
  %v3097 = vsel %vm2055, %v3086, %v3088
  %v3098 = vsel %vm2055, %v3088, %v3090
  %v3108 = vsel %vm2466, %v3063, 0
  %v3111 = vsel %vm2466, %v3064, 0
  %v3114 = vsel %vm2466, %v3065, 0
  %v3117 = vsel %vm2466, %v3066, 0
  %3119 = vmatprep.subr.bf16.mxu0 0
  %3120 = vmatpush1.bf16.msra.mxu0 0
  %3121 = vmatprep.subr.bf16.mxu0 0
  %3122 = vmatpush1.bf16.msra.mxu0 0
  %3123 = vmatprep.subr.bf16.mxu0 0
  %3124 = vmatpush1.bf16.msra.mxu0 0
  %3125 = vmatprep.subr.bf16.mxu0 0
  %3126 = vmatpush1.bf16.msra.mxu0 0
  %3127 = vmatprep.subr.bf16.mxu0 %v3098
  %3128 = vmatpush1.bf16.msra.mxu0 %v3097
  %3129 = vmatprep.subr.bf16.mxu0 %v3096
  %3130 = vmatpush1.bf16.msra.mxu0 %v3095
  %3131 = vmatprep.subr.bf16.mxu0 %v3094
  %3132 = vmatpush1.bf16.msra.mxu0 %v3093
  %3133 = vmatprep.subr.bf16.mxu0 %v3092
  %3134 = vmatpush1.bf16.msra.mxu0 %v3091
  %3135 = vmatprep.subr.bf16.mxu0 0
  %3136 = vmatpush2.bf16.msra.mxu0 0
  %3137 = vmatprep.subr.bf16.mxu0 0
  %3138 = vmatpush2.bf16.msra.mxu0 0
  %3139 = vmatprep.subr.bf16.mxu0 0
  %3140 = vmatpush2.bf16.msra.mxu0 0
  %3141 = vmatprep.subr.bf16.mxu0 0
  %3142 = vmatpush2.bf16.msra.mxu0 0
  %3143 = vmatprep.subr.bf16.mxu0 0
  %3144 = vmatpush2.bf16.msra.mxu0 0
  %3145 = vmatprep.subr.bf16.mxu0 0
  %3146 = vmatpush2.bf16.msra.mxu0 0
  %3147 = vmatprep.subr.bf16.mxu0 0
  %3148 = vmatpush2.bf16.msra.mxu0 0
  %3149 = vmatprep.subr.bf16.mxu0 0
  %3150 = vmatpush2.bf16.msra.mxu0 0
  %3151 = vmatprep.mubr.bf16.mxu0 0
  %3152 = vmatmul.mubr.bf16.gmra.mxu0 %v3108
  %v3153 = vpop.f32.mrf.mxu0
  %v3154 = vadd.f32 0.0, %v3153
  %v3155 = vpop.f32.mrf.mxu0
  %v3156 = vadd.f32 0.0, %v3155
  %v3157 = vpop.f32.mrf.mxu0
  %v3158 = vadd.f32 0.0, %v3157
  %v3159 = vpop.f32.mrf.mxu0
  %v3160 = vadd.f32 0.0, %v3159
  %3161 = vmatprep.mubr.bf16.mxu0 0
  %3162 = vmatmul.mubr.bf16.gmra.mxu0 %v3111
  %v3163 = vpop.f32.mrf.mxu0
  %v3164 = vadd.f32 0.0, %v3163
  %v3165 = vpop.f32.mrf.mxu0
  %v3166 = vadd.f32 0.0, %v3165
  %v3167 = vpop.f32.mrf.mxu0
  %v3168 = vadd.f32 0.0, %v3167
  %v3169 = vpop.f32.mrf.mxu0
  %v3170 = vadd.f32 0.0, %v3169
  %3171 = vmatprep.mubr.bf16.mxu0 0
  %3172 = vmatmul.mubr.bf16.gmra.mxu0 %v3114
  %v3173 = vpop.f32.mrf.mxu0
  %v3174 = vadd.f32 0.0, %v3173
  %v3175 = vpop.f32.mrf.mxu0
  %v3176 = vadd.f32 0.0, %v3175
  %v3177 = vpop.f32.mrf.mxu0
  %v3178 = vadd.f32 0.0, %v3177
  %v3179 = vpop.f32.mrf.mxu0
  %v3180 = vadd.f32 0.0, %v3179
  %3181 = vmatprep.mubr.bf16.mxu0 0
  %3182 = vmatmul.mubr.bf16.gmra.mxu0 %v3117
  %v3183 = vpop.f32.mrf.mxu0
  %v3184 = vadd.f32 0.0, %v3183
  %v3185 = vpop.f32.mrf.mxu0
  %v3186 = vadd.f32 0.0, %v3185
  %v3187 = vpop.f32.mrf.mxu0
  %v3188 = vadd.f32 0.0, %v3187
  %v3189 = vpop.f32.mrf.mxu0
  %v3190 = vadd.f32 0.0, %v3189
  %3191 = vdwg.mxu0
  %v3192 = vadd.f32 %v3022, %v3154
  %v3193 = vadd.f32 %v3023, %v3156
  %v3194 = vadd.f32 %v3024, %v3158
  %v3195 = vadd.f32 %v3025, %v3160
  %v3196 = vadd.f32 %v3026, %v3164
  %v3197 = vadd.f32 %v3027, %v3166
  %v3198 = vadd.f32 %v3028, %v3168
  %v3199 = vadd.f32 %v3029, %v3170
  %v3200 = vadd.f32 %v3030, %v3174
  %v3201 = vadd.f32 %v3031, %v3176
  %v3202 = vadd.f32 %v3032, %v3178
  %v3203 = vadd.f32 %v3033, %v3180
  %v3204 = vadd.f32 %v3034, %v3184
  %v3205 = vadd.f32 %v3035, %v3186
  %v3206 = vadd.f32 %v3036, %v3188
  %v3207 = vadd.f32 %v3037, %v3190
  %s3208 = scalar_lea.vmem %s5, 160
  %v3209 = vld [vmem:[%s3208] sm:$0xf]
  %v3210 = vld [vmem:[%s3208 + $0x4] sm:$0xf]
  %v3211 = vld [vmem:[%s3208 + $0x8] sm:$0xf]
  %v3212 = vld [vmem:[%s3208 + $0xc] sm:$0xf]
  %v3213 = vld [vmem:[%s3208 + $0x10] sm:$0xf]
  %v3214 = vld [vmem:[%s3208 + $0x14] sm:$0xf]
  %v3215 = vld [vmem:[%s3208 + $0x18] sm:$0xf]
  %v3216 = vld [vmem:[%s3208 + $0x1c] sm:$0xf]
  %v3225 = vunpack.c.l.b16 %v3209
  %v3226 = vunpack.c.l.b16 %v3210
  %v3227 = vunpack.c.l.b16 %v3211
  %v3228 = vunpack.c.l.b16 %v3212
  %v3229 = vunpack.c.l.b16 %v3213
  %v3230 = vunpack.c.l.b16 %v3214
  %v3231 = vunpack.c.l.b16 %v3215
  %v3232 = vunpack.c.l.b16 %v3216
  %v3233 = vpack.c.b16 %v3226, %v3225
  %v3234 = vpack.c.b16 %v3228, %v3227
  %v3235 = vpack.c.b16 %v3230, %v3229
  %v3236 = vpack.c.b16 %v3232, %v3231
  %3237 = vrot.lane.b32.xlu0 %v2414, 116
  %v3238 = vpop.permute.xlu0 %3237
  %3239 = vrot.lane.b32.xlu0 %v2415, 116
  %v3240 = vpop.permute.xlu0 %3239
  %3241 = vrot.lane.b32.xlu0 %v2416, 116
  %v3242 = vpop.permute.xlu0 %3241
  %3243 = vrot.lane.b32.xlu0 %v2417, 116
  %v3244 = vpop.permute.xlu0 %3243
  %3245 = vrot.lane.b32.xlu0 %v2418, 116
  %v3246 = vpop.permute.xlu0 %3245
  %3247 = vrot.lane.b32.xlu0 %v2419, 116
  %v3248 = vpop.permute.xlu0 %3247
  %3249 = vrot.lane.b32.xlu0 %v2420, 116
  %v3250 = vpop.permute.xlu0 %3249
  %3251 = vrot.lane.b32.xlu0 %v2421, 116
  %v3252 = vpop.permute.xlu0 %3251
  %3253 = vrot.lane.b32.xlu0 %v2422, 116
  %v3254 = vpop.permute.xlu0 %3253
  %3255 = vrot.lane.b32.xlu0 %v2423, 116
  %v3256 = vpop.permute.xlu0 %3255
  %3257 = vrot.lane.b32.xlu0 %v2424, 116
  %v3258 = vpop.permute.xlu0 %3257
  %3259 = vrot.lane.b32.xlu0 %v2425, 116
  %v3260 = vpop.permute.xlu0 %3259
  %vm3261 = vcmask 949248
  %v3262 = vsel %vm3261, %v3238, %v3240
  %v3263 = vsel %vm3261, %v3240, %v3242
  %v3264 = vsel %vm3261, %v3244, %v3246
  %v3265 = vsel %vm3261, %v3246, %v3248
  %v3266 = vsel %vm3261, %v3250, %v3252
  %v3267 = vsel %vm3261, %v3252, %v3254
  %v3268 = vsel %vm3261, %v3256, %v3258
  %v3269 = vsel %vm3261, %v3258, %v3260
  %v3279 = vsel %vm2466, %v3233, 0
  %v3282 = vsel %vm2466, %v3234, 0
  %v3285 = vsel %vm2466, %v3235, 0
  %v3288 = vsel %vm2466, %v3236, 0
  %3290 = vmatprep.subr.bf16.mxu0 0
  %3291 = vmatpush1.bf16.msra.mxu0 0
  %3292 = vmatprep.subr.bf16.mxu0 0
  %3293 = vmatpush1.bf16.msra.mxu0 0
  %3294 = vmatprep.subr.bf16.mxu0 0
  %3295 = vmatpush1.bf16.msra.mxu0 0
  %3296 = vmatprep.subr.bf16.mxu0 0
  %3297 = vmatpush1.bf16.msra.mxu0 0
  %3298 = vmatprep.subr.bf16.mxu0 %v3269
  %3299 = vmatpush1.bf16.msra.mxu0 %v3268
  %3300 = vmatprep.subr.bf16.mxu0 %v3267
  %3301 = vmatpush1.bf16.msra.mxu0 %v3266
  %3302 = vmatprep.subr.bf16.mxu0 %v3265
  %3303 = vmatpush1.bf16.msra.mxu0 %v3264
  %3304 = vmatprep.subr.bf16.mxu0 %v3263
  %3305 = vmatpush1.bf16.msra.mxu0 %v3262
  %3306 = vmatprep.subr.bf16.mxu0 0
  %3307 = vmatpush2.bf16.msra.mxu0 0
  %3308 = vmatprep.subr.bf16.mxu0 0
  %3309 = vmatpush2.bf16.msra.mxu0 0
  %3310 = vmatprep.subr.bf16.mxu0 0
  %3311 = vmatpush2.bf16.msra.mxu0 0
  %3312 = vmatprep.subr.bf16.mxu0 0
  %3313 = vmatpush2.bf16.msra.mxu0 0
  %3314 = vmatprep.subr.bf16.mxu0 0
  %3315 = vmatpush2.bf16.msra.mxu0 0
  %3316 = vmatprep.subr.bf16.mxu0 0
  %3317 = vmatpush2.bf16.msra.mxu0 0
  %3318 = vmatprep.subr.bf16.mxu0 0
  %3319 = vmatpush2.bf16.msra.mxu0 0
  %3320 = vmatprep.subr.bf16.mxu0 0
  %3321 = vmatpush2.bf16.msra.mxu0 0
  %3322 = vmatprep.mubr.bf16.mxu0 0
  %3323 = vmatmul.mubr.bf16.gmra.mxu0 %v3279
  %v3324 = vpop.f32.mrf.mxu0
  %v3325 = vadd.f32 0.0, %v3324
  %v3326 = vpop.f32.mrf.mxu0
  %v3327 = vadd.f32 0.0, %v3326
  %v3328 = vpop.f32.mrf.mxu0
  %v3329 = vadd.f32 0.0, %v3328
  %v3330 = vpop.f32.mrf.mxu0
  %v3331 = vadd.f32 0.0, %v3330
  %3332 = vmatprep.mubr.bf16.mxu0 0
  %3333 = vmatmul.mubr.bf16.gmra.mxu0 %v3282
  %v3334 = vpop.f32.mrf.mxu0
  %v3335 = vadd.f32 0.0, %v3334
  %v3336 = vpop.f32.mrf.mxu0
  %v3337 = vadd.f32 0.0, %v3336
  %v3338 = vpop.f32.mrf.mxu0
  %v3339 = vadd.f32 0.0, %v3338
  %v3340 = vpop.f32.mrf.mxu0
  %v3341 = vadd.f32 0.0, %v3340
  %3342 = vmatprep.mubr.bf16.mxu0 0
  %3343 = vmatmul.mubr.bf16.gmra.mxu0 %v3285
  %v3344 = vpop.f32.mrf.mxu0
  %v3345 = vadd.f32 0.0, %v3344
  %v3346 = vpop.f32.mrf.mxu0
  %v3347 = vadd.f32 0.0, %v3346
  %v3348 = vpop.f32.mrf.mxu0
  %v3349 = vadd.f32 0.0, %v3348
  %v3350 = vpop.f32.mrf.mxu0
  %v3351 = vadd.f32 0.0, %v3350
  %3352 = vmatprep.mubr.bf16.mxu0 0
  %3353 = vmatmul.mubr.bf16.gmra.mxu0 %v3288
  %v3354 = vpop.f32.mrf.mxu0
  %v3355 = vadd.f32 0.0, %v3354
  %v3356 = vpop.f32.mrf.mxu0
  %v3357 = vadd.f32 0.0, %v3356
  %v3358 = vpop.f32.mrf.mxu0
  %v3359 = vadd.f32 0.0, %v3358
  %v3360 = vpop.f32.mrf.mxu0
  %v3361 = vadd.f32 0.0, %v3360
  %3362 = vdwg.mxu0
  %v3363 = vadd.f32 %v3192, %v3325
  %v3364 = vadd.f32 %v3193, %v3327
  %v3365 = vadd.f32 %v3194, %v3329
  %v3366 = vadd.f32 %v3195, %v3331
  %v3367 = vadd.f32 %v3196, %v3335
  %v3368 = vadd.f32 %v3197, %v3337
  %v3369 = vadd.f32 %v3198, %v3339
  %v3370 = vadd.f32 %v3199, %v3341
  %v3371 = vadd.f32 %v3200, %v3345
  %v3372 = vadd.f32 %v3201, %v3347
  %v3373 = vadd.f32 %v3202, %v3349
  %v3374 = vadd.f32 %v3203, %v3351
  %v3375 = vadd.f32 %v3204, %v3355
  %v3376 = vadd.f32 %v3205, %v3357
  %v3377 = vadd.f32 %v3206, %v3359
  %v3378 = vadd.f32 %v3207, %v3361
  %s3379 = scalar_lea.vmem %s5, 192
  %v3380 = vld [vmem:[%s3379] sm:$0xf]
  %v3381 = vld [vmem:[%s3379 + $0x4] sm:$0xf]
  %v3382 = vld [vmem:[%s3379 + $0x8] sm:$0xf]
  %v3383 = vld [vmem:[%s3379 + $0xc] sm:$0xf]
  %v3384 = vld [vmem:[%s3379 + $0x10] sm:$0xf]
  %v3385 = vld [vmem:[%s3379 + $0x14] sm:$0xf]
  %v3386 = vld [vmem:[%s3379 + $0x18] sm:$0xf]
  %v3387 = vld [vmem:[%s3379 + $0x1c] sm:$0xf]
  %v3396 = vunpack.c.l.b16 %v3380
  %v3397 = vunpack.c.l.b16 %v3381
  %v3398 = vunpack.c.l.b16 %v3382
  %v3399 = vunpack.c.l.b16 %v3383
  %v3400 = vunpack.c.l.b16 %v3384
  %v3401 = vunpack.c.l.b16 %v3385
  %v3402 = vunpack.c.l.b16 %v3386
  %v3403 = vunpack.c.l.b16 %v3387
  %v3404 = vpack.c.b16 %v3397, %v3396
  %v3405 = vpack.c.b16 %v3399, %v3398
  %v3406 = vpack.c.b16 %v3401, %v3400
  %v3407 = vpack.c.b16 %v3403, %v3402
  %3408 = vrot.lane.b32.xlu0 %v2414, 108
  %v3409 = vpop.permute.xlu0 %3408
  %3410 = vrot.lane.b32.xlu0 %v2415, 108
  %v3411 = vpop.permute.xlu0 %3410
  %3412 = vrot.lane.b32.xlu0 %v2416, 108
  %v3413 = vpop.permute.xlu0 %3412
  %3414 = vrot.lane.b32.xlu0 %v2417, 108
  %v3415 = vpop.permute.xlu0 %3414
  %3416 = vrot.lane.b32.xlu0 %v2418, 108
  %v3417 = vpop.permute.xlu0 %3416
  %3418 = vrot.lane.b32.xlu0 %v2419, 108
  %v3419 = vpop.permute.xlu0 %3418
  %3420 = vrot.lane.b32.xlu0 %v2420, 108
  %v3421 = vpop.permute.xlu0 %3420
  %3422 = vrot.lane.b32.xlu0 %v2421, 108
  %v3423 = vpop.permute.xlu0 %3422
  %3424 = vrot.lane.b32.xlu0 %v2422, 108
  %v3425 = vpop.permute.xlu0 %3424
  %3426 = vrot.lane.b32.xlu0 %v2423, 108
  %v3427 = vpop.permute.xlu0 %3426
  %3428 = vrot.lane.b32.xlu0 %v2424, 108
  %v3429 = vpop.permute.xlu0 %3428
  %3430 = vrot.lane.b32.xlu0 %v2425, 108
  %v3431 = vpop.permute.xlu0 %3430
  %vm3432 = vcmask 883712
  %v3433 = vsel %vm3432, %v3409, %v3411
  %v3434 = vsel %vm3432, %v3411, %v3413
  %v3435 = vsel %vm3432, %v3415, %v3417
  %v3436 = vsel %vm3432, %v3417, %v3419
  %v3437 = vsel %vm3432, %v3421, %v3423
  %v3438 = vsel %vm3432, %v3423, %v3425
  %v3439 = vsel %vm3432, %v3427, %v3429
  %v3440 = vsel %vm3432, %v3429, %v3431
  %v3450 = vsel %vm2466, %v3404, 0
  %v3453 = vsel %vm2466, %v3405, 0
  %v3456 = vsel %vm2466, %v3406, 0
  %v3459 = vsel %vm2466, %v3407, 0
  %3461 = vmatprep.subr.bf16.mxu0 0
  %3462 = vmatpush1.bf16.msra.mxu0 0
  %3463 = vmatprep.subr.bf16.mxu0 0
  %3464 = vmatpush1.bf16.msra.mxu0 0
  %3465 = vmatprep.subr.bf16.mxu0 0
  %3466 = vmatpush1.bf16.msra.mxu0 0
  %3467 = vmatprep.subr.bf16.mxu0 0
  %3468 = vmatpush1.bf16.msra.mxu0 0
  %3469 = vmatprep.subr.bf16.mxu0 %v3440
  %3470 = vmatpush1.bf16.msra.mxu0 %v3439
  %3471 = vmatprep.subr.bf16.mxu0 %v3438
  %3472 = vmatpush1.bf16.msra.mxu0 %v3437
  %3473 = vmatprep.subr.bf16.mxu0 %v3436
  %3474 = vmatpush1.bf16.msra.mxu0 %v3435
  %3475 = vmatprep.subr.bf16.mxu0 %v3434
  %3476 = vmatpush1.bf16.msra.mxu0 %v3433
  %3477 = vmatprep.subr.bf16.mxu0 0
  %3478 = vmatpush2.bf16.msra.mxu0 0
  %3479 = vmatprep.subr.bf16.mxu0 0
  %3480 = vmatpush2.bf16.msra.mxu0 0
  %3481 = vmatprep.subr.bf16.mxu0 0
  %3482 = vmatpush2.bf16.msra.mxu0 0
  %3483 = vmatprep.subr.bf16.mxu0 0
  %3484 = vmatpush2.bf16.msra.mxu0 0
  %3485 = vmatprep.subr.bf16.mxu0 0
  %3486 = vmatpush2.bf16.msra.mxu0 0
  %3487 = vmatprep.subr.bf16.mxu0 0
  %3488 = vmatpush2.bf16.msra.mxu0 0
  %3489 = vmatprep.subr.bf16.mxu0 0
  %3490 = vmatpush2.bf16.msra.mxu0 0
  %3491 = vmatprep.subr.bf16.mxu0 0
  %3492 = vmatpush2.bf16.msra.mxu0 0
  %3493 = vmatprep.mubr.bf16.mxu0 0
  %3494 = vmatmul.mubr.bf16.gmra.mxu0 %v3450
  %v3495 = vpop.f32.mrf.mxu0
  %v3496 = vadd.f32 0.0, %v3495
  %v3497 = vpop.f32.mrf.mxu0
  %v3498 = vadd.f32 0.0, %v3497
  %v3499 = vpop.f32.mrf.mxu0
  %v3500 = vadd.f32 0.0, %v3499
  %v3501 = vpop.f32.mrf.mxu0
  %v3502 = vadd.f32 0.0, %v3501
  %3503 = vmatprep.mubr.bf16.mxu0 0
  %3504 = vmatmul.mubr.bf16.gmra.mxu0 %v3453
  %v3505 = vpop.f32.mrf.mxu0
  %v3506 = vadd.f32 0.0, %v3505
  %v3507 = vpop.f32.mrf.mxu0
  %v3508 = vadd.f32 0.0, %v3507
  %v3509 = vpop.f32.mrf.mxu0
  %v3510 = vadd.f32 0.0, %v3509
  %v3511 = vpop.f32.mrf.mxu0
  %v3512 = vadd.f32 0.0, %v3511
  %3513 = vmatprep.mubr.bf16.mxu0 0
  %3514 = vmatmul.mubr.bf16.gmra.mxu0 %v3456
  %v3515 = vpop.f32.mrf.mxu0
  %v3516 = vadd.f32 0.0, %v3515
  %v3517 = vpop.f32.mrf.mxu0
  %v3518 = vadd.f32 0.0, %v3517
  %v3519 = vpop.f32.mrf.mxu0
  %v3520 = vadd.f32 0.0, %v3519
  %v3521 = vpop.f32.mrf.mxu0
  %v3522 = vadd.f32 0.0, %v3521
  %3523 = vmatprep.mubr.bf16.mxu0 0
  %3524 = vmatmul.mubr.bf16.gmra.mxu0 %v3459
  %v3525 = vpop.f32.mrf.mxu0
  %v3526 = vadd.f32 0.0, %v3525
  %v3527 = vpop.f32.mrf.mxu0
  %v3528 = vadd.f32 0.0, %v3527
  %v3529 = vpop.f32.mrf.mxu0
  %v3530 = vadd.f32 0.0, %v3529
  %v3531 = vpop.f32.mrf.mxu0
  %v3532 = vadd.f32 0.0, %v3531
  %3533 = vdwg.mxu0
  %v3534 = vadd.f32 %v3363, %v3496
  %v3535 = vadd.f32 %v3364, %v3498
  %v3536 = vadd.f32 %v3365, %v3500
  %v3537 = vadd.f32 %v3366, %v3502
  %v3538 = vadd.f32 %v3367, %v3506
  %v3539 = vadd.f32 %v3368, %v3508
  %v3540 = vadd.f32 %v3369, %v3510
  %v3541 = vadd.f32 %v3370, %v3512
  %v3542 = vadd.f32 %v3371, %v3516
  %v3543 = vadd.f32 %v3372, %v3518
  %v3544 = vadd.f32 %v3373, %v3520
  %v3545 = vadd.f32 %v3374, %v3522
  %v3546 = vadd.f32 %v3375, %v3526
  %v3547 = vadd.f32 %v3376, %v3528
  %v3548 = vadd.f32 %v3377, %v3530
  %v3549 = vadd.f32 %v3378, %v3532
  %s3550 = scalar_lea.vmem %s5, 224
  %v3551 = vld [vmem:[%s3550] sm:$0xf]
  %v3552 = vld [vmem:[%s3550 + $0x4] sm:$0xf]
  %v3553 = vld [vmem:[%s3550 + $0x8] sm:$0xf]
  %v3554 = vld [vmem:[%s3550 + $0xc] sm:$0xf]
  %v3555 = vld [vmem:[%s3550 + $0x10] sm:$0xf]
  %v3556 = vld [vmem:[%s3550 + $0x14] sm:$0xf]
  %v3557 = vld [vmem:[%s3550 + $0x18] sm:$0xf]
  %v3558 = vld [vmem:[%s3550 + $0x1c] sm:$0xf]
  %v3567 = vunpack.c.l.b16 %v3551
  %v3568 = vunpack.c.l.b16 %v3552
  %v3569 = vunpack.c.l.b16 %v3553
  %v3570 = vunpack.c.l.b16 %v3554
  %v3571 = vunpack.c.l.b16 %v3555
  %v3572 = vunpack.c.l.b16 %v3556
  %v3573 = vunpack.c.l.b16 %v3557
  %v3574 = vunpack.c.l.b16 %v3558
  %v3575 = vpack.c.b16 %v3568, %v3567
  %v3576 = vpack.c.b16 %v3570, %v3569
  %v3577 = vpack.c.b16 %v3572, %v3571
  %v3578 = vpack.c.b16 %v3574, %v3573
  %3579 = vrot.lane.b32.xlu0 %v2414, 107
  %v3580 = vpop.permute.xlu0 %3579
  %3581 = vrot.lane.b32.xlu0 %v2415, 107
  %v3582 = vpop.permute.xlu0 %3581
  %3583 = vrot.lane.b32.xlu0 %v2416, 107
  %v3584 = vpop.permute.xlu0 %3583
  %3585 = vrot.lane.b32.xlu0 %v2417, 107
  %v3586 = vpop.permute.xlu0 %3585
  %3587 = vrot.lane.b32.xlu0 %v2418, 107
  %v3588 = vpop.permute.xlu0 %3587
  %3589 = vrot.lane.b32.xlu0 %v2419, 107
  %v3590 = vpop.permute.xlu0 %3589
  %3591 = vrot.lane.b32.xlu0 %v2420, 107
  %v3592 = vpop.permute.xlu0 %3591
  %3593 = vrot.lane.b32.xlu0 %v2421, 107
  %v3594 = vpop.permute.xlu0 %3593
  %3595 = vrot.lane.b32.xlu0 %v2422, 107
  %v3596 = vpop.permute.xlu0 %3595
  %3597 = vrot.lane.b32.xlu0 %v2423, 107
  %v3598 = vpop.permute.xlu0 %3597
  %3599 = vrot.lane.b32.xlu0 %v2424, 107
  %v3600 = vpop.permute.xlu0 %3599
  %3601 = vrot.lane.b32.xlu0 %v2425, 107
  %v3602 = vpop.permute.xlu0 %3601
  %vm3603 = vcmask 875520
  %v3604 = vsel %vm3603, %v3580, %v3582
  %v3605 = vsel %vm3603, %v3582, %v3584
  %v3606 = vsel %vm3603, %v3586, %v3588
  %v3607 = vsel %vm3603, %v3588, %v3590
  %v3608 = vsel %vm3603, %v3592, %v3594
  %v3609 = vsel %vm3603, %v3594, %v3596
  %v3610 = vsel %vm3603, %v3598, %v3600
  %v3611 = vsel %vm3603, %v3600, %v3602
  %v3621 = vsel %vm2466, %v3575, 0
  %v3624 = vsel %vm2466, %v3576, 0
  %v3627 = vsel %vm2466, %v3577, 0
  %v3630 = vsel %vm2466, %v3578, 0
  %3632 = vmatprep.subr.bf16.mxu0 0
  %3633 = vmatpush1.bf16.msra.mxu0 0
  %3634 = vmatprep.subr.bf16.mxu0 0
  %3635 = vmatpush1.bf16.msra.mxu0 0
  %3636 = vmatprep.subr.bf16.mxu0 0
  %3637 = vmatpush1.bf16.msra.mxu0 0
  %3638 = vmatprep.subr.bf16.mxu0 0
  %3639 = vmatpush1.bf16.msra.mxu0 0
  %3640 = vmatprep.subr.bf16.mxu0 %v3611
  %3641 = vmatpush1.bf16.msra.mxu0 %v3610
  %3642 = vmatprep.subr.bf16.mxu0 %v3609
  %3643 = vmatpush1.bf16.msra.mxu0 %v3608
  %3644 = vmatprep.subr.bf16.mxu0 %v3607
  %3645 = vmatpush1.bf16.msra.mxu0 %v3606
  %3646 = vmatprep.subr.bf16.mxu0 %v3605
  %3647 = vmatpush1.bf16.msra.mxu0 %v3604
  %3648 = vmatprep.subr.bf16.mxu0 0
  %3649 = vmatpush2.bf16.msra.mxu0 0
  %3650 = vmatprep.subr.bf16.mxu0 0
  %3651 = vmatpush2.bf16.msra.mxu0 0
  %3652 = vmatprep.subr.bf16.mxu0 0
  %3653 = vmatpush2.bf16.msra.mxu0 0
  %3654 = vmatprep.subr.bf16.mxu0 0
  %3655 = vmatpush2.bf16.msra.mxu0 0
  %3656 = vmatprep.subr.bf16.mxu0 0
  %3657 = vmatpush2.bf16.msra.mxu0 0
  %3658 = vmatprep.subr.bf16.mxu0 0
  %3659 = vmatpush2.bf16.msra.mxu0 0
  %3660 = vmatprep.subr.bf16.mxu0 0
  %3661 = vmatpush2.bf16.msra.mxu0 0
  %3662 = vmatprep.subr.bf16.mxu0 0
  %3663 = vmatpush2.bf16.msra.mxu0 0
  %3664 = vmatprep.mubr.bf16.mxu0 0
  %3665 = vmatmul.mubr.bf16.gmra.mxu0 %v3621
  %v3666 = vpop.f32.mrf.mxu0
  %v3667 = vadd.f32 0.0, %v3666
  %v3668 = vpop.f32.mrf.mxu0
  %v3669 = vadd.f32 0.0, %v3668
  %v3670 = vpop.f32.mrf.mxu0
  %v3671 = vadd.f32 0.0, %v3670
  %v3672 = vpop.f32.mrf.mxu0
  %v3673 = vadd.f32 0.0, %v3672
  %3674 = vmatprep.mubr.bf16.mxu0 0
  %3675 = vmatmul.mubr.bf16.gmra.mxu0 %v3624
  %v3676 = vpop.f32.mrf.mxu0
  %v3677 = vadd.f32 0.0, %v3676
  %v3678 = vpop.f32.mrf.mxu0
  %v3679 = vadd.f32 0.0, %v3678
  %v3680 = vpop.f32.mrf.mxu0
  %v3681 = vadd.f32 0.0, %v3680
  %v3682 = vpop.f32.mrf.mxu0
  %v3683 = vadd.f32 0.0, %v3682
  %3684 = vmatprep.mubr.bf16.mxu0 0
  %3685 = vmatmul.mubr.bf16.gmra.mxu0 %v3627
  %v3686 = vpop.f32.mrf.mxu0
  %v3687 = vadd.f32 0.0, %v3686
  %v3688 = vpop.f32.mrf.mxu0
  %v3689 = vadd.f32 0.0, %v3688
  %v3690 = vpop.f32.mrf.mxu0
  %v3691 = vadd.f32 0.0, %v3690
  %v3692 = vpop.f32.mrf.mxu0
  %v3693 = vadd.f32 0.0, %v3692
  %3694 = vmatprep.mubr.bf16.mxu0 0
  %3695 = vmatmul.mubr.bf16.gmra.mxu0 %v3630
  %v3696 = vpop.f32.mrf.mxu0
  %v3697 = vadd.f32 0.0, %v3696
  %v3698 = vpop.f32.mrf.mxu0
  %v3699 = vadd.f32 0.0, %v3698
  %v3700 = vpop.f32.mrf.mxu0
  %v3701 = vadd.f32 0.0, %v3700
  %v3702 = vpop.f32.mrf.mxu0
  %v3703 = vadd.f32 0.0, %v3702
  %3704 = vdwg.mxu0
  %v3705 = vadd.f32 %v3534, %v3667
  %v3706 = vadd.f32 %v3535, %v3669
  %v3707 = vadd.f32 %v3536, %v3671
  %v3708 = vadd.f32 %v3537, %v3673
  %v3709 = vadd.f32 %v3538, %v3677
  %v3710 = vadd.f32 %v3539, %v3679
  %v3711 = vadd.f32 %v3540, %v3681
  %v3712 = vadd.f32 %v3541, %v3683
  %v3713 = vadd.f32 %v3542, %v3687
  %v3714 = vadd.f32 %v3543, %v3689
  %v3715 = vadd.f32 %v3544, %v3691
  %v3716 = vadd.f32 %v3545, %v3693
  %v3717 = vadd.f32 %v3546, %v3697
  %v3718 = vadd.f32 %v3547, %v3699
  %v3719 = vadd.f32 %v3548, %v3701
  %v3720 = vadd.f32 %v3549, %v3703
  %s3721 = scalar_lea.vmem %s5, 256
  %v3722 = vld [vmem:[%s3721] sm:$0xf]
  %v3723 = vld [vmem:[%s3721 + $0x4] sm:$0xf]
  %v3724 = vld [vmem:[%s3721 + $0x8] sm:$0xf]
  %v3725 = vld [vmem:[%s3721 + $0xc] sm:$0xf]
  %v3726 = vld [vmem:[%s3721 + $0x10] sm:$0xf]
  %v3727 = vld [vmem:[%s3721 + $0x14] sm:$0xf]
  %v3728 = vld [vmem:[%s3721 + $0x18] sm:$0xf]
  %v3729 = vld [vmem:[%s3721 + $0x1c] sm:$0xf]
  %v3738 = vunpack.c.l.b16 %v3722
  %v3739 = vunpack.c.l.b16 %v3723
  %v3740 = vunpack.c.l.b16 %v3724
  %v3741 = vunpack.c.l.b16 %v3725
  %v3742 = vunpack.c.l.b16 %v3726
  %v3743 = vunpack.c.l.b16 %v3727
  %v3744 = vunpack.c.l.b16 %v3728
  %v3745 = vunpack.c.l.b16 %v3729
  %v3746 = vpack.c.b16 %v3739, %v3738
  %v3747 = vpack.c.b16 %v3741, %v3740
  %v3748 = vpack.c.b16 %v3743, %v3742
  %v3749 = vpack.c.b16 %v3745, %v3744
  %3750 = vrot.lane.b32.xlu0 %v2414, 106
  %v3751 = vpop.permute.xlu0 %3750
  %3752 = vrot.lane.b32.xlu0 %v2415, 106
  %v3753 = vpop.permute.xlu0 %3752
  %3754 = vrot.lane.b32.xlu0 %v2416, 106
  %v3755 = vpop.permute.xlu0 %3754
  %3756 = vrot.lane.b32.xlu0 %v2417, 106
  %v3757 = vpop.permute.xlu0 %3756
  %3758 = vrot.lane.b32.xlu0 %v2418, 106
  %v3759 = vpop.permute.xlu0 %3758
  %3760 = vrot.lane.b32.xlu0 %v2419, 106
  %v3761 = vpop.permute.xlu0 %3760
  %3762 = vrot.lane.b32.xlu0 %v2420, 106
  %v3763 = vpop.permute.xlu0 %3762
  %3764 = vrot.lane.b32.xlu0 %v2421, 106
  %v3765 = vpop.permute.xlu0 %3764
  %3766 = vrot.lane.b32.xlu0 %v2422, 106
  %v3767 = vpop.permute.xlu0 %3766
  %3768 = vrot.lane.b32.xlu0 %v2423, 106
  %v3769 = vpop.permute.xlu0 %3768
  %3770 = vrot.lane.b32.xlu0 %v2424, 106
  %v3771 = vpop.permute.xlu0 %3770
  %3772 = vrot.lane.b32.xlu0 %v2425, 106
  %v3773 = vpop.permute.xlu0 %3772
  %vm3774 = vcmask 867328
  %v3775 = vsel %vm3774, %v3751, %v3753
  %v3776 = vsel %vm3774, %v3753, %v3755
  %v3777 = vsel %vm3774, %v3757, %v3759
  %v3778 = vsel %vm3774, %v3759, %v3761
  %v3779 = vsel %vm3774, %v3763, %v3765
  %v3780 = vsel %vm3774, %v3765, %v3767
  %v3781 = vsel %vm3774, %v3769, %v3771
  %v3782 = vsel %vm3774, %v3771, %v3773
  %v3792 = vsel %vm2466, %v3746, 0
  %v3795 = vsel %vm2466, %v3747, 0
  %v3798 = vsel %vm2466, %v3748, 0
  %v3801 = vsel %vm2466, %v3749, 0
  %3803 = vmatprep.subr.bf16.mxu0 0
  %3804 = vmatpush1.bf16.msra.mxu0 0
  %3805 = vmatprep.subr.bf16.mxu0 0
  %3806 = vmatpush1.bf16.msra.mxu0 0
  %3807 = vmatprep.subr.bf16.mxu0 0
  %3808 = vmatpush1.bf16.msra.mxu0 0
  %3809 = vmatprep.subr.bf16.mxu0 0
  %3810 = vmatpush1.bf16.msra.mxu0 0
  %3811 = vmatprep.subr.bf16.mxu0 %v3782
  %3812 = vmatpush1.bf16.msra.mxu0 %v3781
  %3813 = vmatprep.subr.bf16.mxu0 %v3780
  %3814 = vmatpush1.bf16.msra.mxu0 %v3779
  %3815 = vmatprep.subr.bf16.mxu0 %v3778
  %3816 = vmatpush1.bf16.msra.mxu0 %v3777
  %3817 = vmatprep.subr.bf16.mxu0 %v3776
  %3818 = vmatpush1.bf16.msra.mxu0 %v3775
  %3819 = vmatprep.subr.bf16.mxu0 0
  %3820 = vmatpush2.bf16.msra.mxu0 0
  %3821 = vmatprep.subr.bf16.mxu0 0
  %3822 = vmatpush2.bf16.msra.mxu0 0
  %3823 = vmatprep.subr.bf16.mxu0 0
  %3824 = vmatpush2.bf16.msra.mxu0 0
  %3825 = vmatprep.subr.bf16.mxu0 0
  %3826 = vmatpush2.bf16.msra.mxu0 0
  %3827 = vmatprep.subr.bf16.mxu0 0
  %3828 = vmatpush2.bf16.msra.mxu0 0
  %3829 = vmatprep.subr.bf16.mxu0 0
  %3830 = vmatpush2.bf16.msra.mxu0 0
  %3831 = vmatprep.subr.bf16.mxu0 0
  %3832 = vmatpush2.bf16.msra.mxu0 0
  %3833 = vmatprep.subr.bf16.mxu0 0
  %3834 = vmatpush2.bf16.msra.mxu0 0
  %3835 = vmatprep.mubr.bf16.mxu0 0
  %3836 = vmatmul.mubr.bf16.gmra.mxu0 %v3792
  %v3837 = vpop.f32.mrf.mxu0
  %v3838 = vadd.f32 0.0, %v3837
  %v3839 = vpop.f32.mrf.mxu0
  %v3840 = vadd.f32 0.0, %v3839
  %v3841 = vpop.f32.mrf.mxu0
  %v3842 = vadd.f32 0.0, %v3841
  %v3843 = vpop.f32.mrf.mxu0
  %v3844 = vadd.f32 0.0, %v3843
  %3845 = vmatprep.mubr.bf16.mxu0 0
  %3846 = vmatmul.mubr.bf16.gmra.mxu0 %v3795
  %v3847 = vpop.f32.mrf.mxu0
  %v3848 = vadd.f32 0.0, %v3847
  %v3849 = vpop.f32.mrf.mxu0
  %v3850 = vadd.f32 0.0, %v3849
  %v3851 = vpop.f32.mrf.mxu0
  %v3852 = vadd.f32 0.0, %v3851
  %v3853 = vpop.f32.mrf.mxu0
  %v3854 = vadd.f32 0.0, %v3853
  %3855 = vmatprep.mubr.bf16.mxu0 0
  %3856 = vmatmul.mubr.bf16.gmra.mxu0 %v3798
  %v3857 = vpop.f32.mrf.mxu0
  %v3858 = vadd.f32 0.0, %v3857
  %v3859 = vpop.f32.mrf.mxu0
  %v3860 = vadd.f32 0.0, %v3859
  %v3861 = vpop.f32.mrf.mxu0
  %v3862 = vadd.f32 0.0, %v3861
  %v3863 = vpop.f32.mrf.mxu0
  %v3864 = vadd.f32 0.0, %v3863
  %3865 = vmatprep.mubr.bf16.mxu0 0
  %3866 = vmatmul.mubr.bf16.gmra.mxu0 %v3801
  %v3867 = vpop.f32.mrf.mxu0
  %v3868 = vadd.f32 0.0, %v3867
  %v3869 = vpop.f32.mrf.mxu0
  %v3870 = vadd.f32 0.0, %v3869
  %v3871 = vpop.f32.mrf.mxu0
  %v3872 = vadd.f32 0.0, %v3871
  %v3873 = vpop.f32.mrf.mxu0
  %v3874 = vadd.f32 0.0, %v3873
  %3875 = vdwg.mxu0
  %v3876 = vadd.f32 %v3705, %v3838
  %v3877 = vadd.f32 %v3706, %v3840
  %v3878 = vadd.f32 %v3707, %v3842
  %v3879 = vadd.f32 %v3708, %v3844
  %v3880 = vadd.f32 %v3709, %v3848
  %v3881 = vadd.f32 %v3710, %v3850
  %v3882 = vadd.f32 %v3711, %v3852
  %v3883 = vadd.f32 %v3712, %v3854
  %v3884 = vadd.f32 %v3713, %v3858
  %v3885 = vadd.f32 %v3714, %v3860
  %v3886 = vadd.f32 %v3715, %v3862
  %v3887 = vadd.f32 %v3716, %v3864
  %v3888 = vadd.f32 %v3717, %v3868
  %v3889 = vadd.f32 %v3718, %v3870
  %v3890 = vadd.f32 %v3719, %v3872
  %v3891 = vadd.f32 %v3720, %v3874
  %v3892 = vld [vmem:[%s6] sm:$0xff]
  %v3893 = vld [vmem:[%s6 + $0x8] sm:$0xff]
  %v3894 = vld [vmem:[%s6 + $0x10] sm:$0xff]
  %v3895 = vld [vmem:[%s6 + $0x18] sm:$0xff]
  %v3896 = vld [vmem:[%s6 + $0x20] sm:$0xff]
  %v3897 = vld [vmem:[%s6 + $0x28] sm:$0xff]
  %v3898 = vld [vmem:[%s6 + $0x30] sm:$0xff]
  %v3899 = vld [vmem:[%s6 + $0x38] sm:$0xff]
  %3901 = vset.pattern.permute.xlu0 0
  %3902 = vperm.xlu0 %3901, %v3892
  %v3903 = vpop.permute.xlu0 %3902
  %3906 = vset.pattern.permute.xlu0 0
  %3907 = vperm.xlu0 %3906, %v3893
  %v3908 = vpop.permute.xlu0 %3907
  %3911 = vset.pattern.permute.xlu0 0
  %3912 = vperm.xlu0 %3911, %v3894
  %v3913 = vpop.permute.xlu0 %3912
  %3916 = vset.pattern.permute.xlu0 0
  %3917 = vperm.xlu0 %3916, %v3895
  %v3918 = vpop.permute.xlu0 %3917
  %3921 = vset.pattern.permute.xlu0 0
  %3922 = vperm.xlu0 %3921, %v3896
  %v3923 = vpop.permute.xlu0 %3922
  %3926 = vset.pattern.permute.xlu0 0
  %3927 = vperm.xlu0 %3926, %v3897
  %v3928 = vpop.permute.xlu0 %3927
  %3931 = vset.pattern.permute.xlu0 0
  %3932 = vperm.xlu0 %3931, %v3898
  %v3933 = vpop.permute.xlu0 %3932
  %3936 = vset.pattern.permute.xlu0 0
  %3937 = vperm.xlu0 %3936, %v3899
  %v3938 = vpop.permute.xlu0 %3937
  %v3940 = vadd.f32 %v3876, %v3903
  %v3941 = vadd.f32 %v3877, %v3903
  %v3942 = vadd.f32 %v3878, %v3908
  %v3943 = vadd.f32 %v3879, %v3908
  %v3944 = vadd.f32 %v3880, %v3913
  %v3945 = vadd.f32 %v3881, %v3913
  %v3946 = vadd.f32 %v3882, %v3918
  %v3947 = vadd.f32 %v3883, %v3918
  %v3948 = vadd.f32 %v3884, %v3923
  %v3949 = vadd.f32 %v3885, %v3923
  %v3950 = vadd.f32 %v3886, %v3928
  %v3951 = vadd.f32 %v3887, %v3928
  %v3952 = vadd.f32 %v3888, %v3933
  %v3953 = vadd.f32 %v3889, %v3933
  %v3954 = vadd.f32 %v3890, %v3938
  %v3955 = vadd.f32 %v3891, %v3938
  %v3956 = vmax.f32 %v3940, 0.0
  %v3957 = vmax.f32 %v3941, 0.0
  %v3958 = vmax.f32 %v3942, 0.0
  %v3959 = vmax.f32 %v3943, 0.0
  %v3960 = vmax.f32 %v3944, 0.0
  %v3961 = vmax.f32 %v3945, 0.0
  %v3962 = vmax.f32 %v3946, 0.0
  %v3963 = vmax.f32 %v3947, 0.0
  %v3964 = vmax.f32 %v3948, 0.0
  %v3965 = vmax.f32 %v3949, 0.0
  %v3966 = vmax.f32 %v3950, 0.0
  %v3967 = vmax.f32 %v3951, 0.0
  %v3968 = vmax.f32 %v3952, 0.0
  %v3969 = vmax.f32 %v3953, 0.0
  %v3970 = vmax.f32 %v3954, 0.0
  %v3971 = vmax.f32 %v3955, 0.0
  %3972 = vst [vmem:[%s7] sm:$0xff] %v3956
  %3973 = vst [vmem:[%s7 + $0x8] sm:$0xff] %v3957
  %3974 = vst [vmem:[%s7 + $0x10] sm:$0xff] %v3958
  %3975 = vst [vmem:[%s7 + $0x18] sm:$0xff] %v3959
  %3976 = vst [vmem:[%s7 + $0x20] sm:$0xff] %v3960
  %3977 = vst [vmem:[%s7 + $0x28] sm:$0xff] %v3961
  %3978 = vst [vmem:[%s7 + $0x30] sm:$0xff] %v3962
  %3979 = vst [vmem:[%s7 + $0x38] sm:$0xff] %v3963
  %3980 = vst [vmem:[%s7 + $0x40] sm:$0xff] %v3964
  %3981 = vst [vmem:[%s7 + $0x48] sm:$0xff] %v3965
  %3982 = vst [vmem:[%s7 + $0x50] sm:$0xff] %v3966
  %3983 = vst [vmem:[%s7 + $0x58] sm:$0xff] %v3967
  %3984 = vst [vmem:[%s7 + $0x60] sm:$0xff] %v3968
  %3985 = vst [vmem:[%s7 + $0x68] sm:$0xff] %v3969
  %3986 = vst [vmem:[%s7 + $0x70] sm:$0xff] %v3970
  %3987 = vst [vmem:[%s7 + $0x78] sm:$0xff] %v3971
  // Predicated region
  $region30: #{_lambda_.2} parent=0 // pred_check
    _
  $region31: #{_lambda_.2} parent=0 // pred_check_branch
    %3989 = sbr.rel (0) target = $region33
  $region32: #{_lambda_.2} parent=0 // pred_region
    _
  $region33: #{_lambda_.2} parent=0 // pred_fallthru
    _
  // Predicated region
  $region34: #{_lambda_.2} parent=0 // pred_check
    _
  $region35: #{_lambda_.2} parent=0 // pred_check_branch
    %3991 = sbr.rel (0) target = $region37
  $region36: #{_lambda_.2} parent=0 // pred_region
    _
  $region37: #{_lambda_.2} parent=0 // pred_fallthru
    _

// kernel: _lambda_.3
$region0: #{_lambda_.3}
  #allocation0 [shape = 'u32[]', space=smem, size = 0x4, offset = 0x4, fixed_abs, tag = 'smem constant byte address 0x4 - core index']
  #allocation1 [shape = 'u32[144,128]{1,0:T(1,128)}', space=vmem, size = 0x12000, scoped, tag = 'internal scratch']
  %s0 = inlined_call_operand.vmem [shape: bf16[2,3200], index: 0, kind: input, shape index: {}]
  %s1 = inlined_call_operand.vmem [shape: bf16[3200,512], index: 1, kind: input, shape index: {}]
  %s2 = inlined_call_operand.vmem [shape: f32[1,512], index: 2, kind: input, shape index: {}]
  %s3 = inlined_call_operand.vmem [shape: bf16[512,128], index: 3, kind: input, shape index: {}]
  %s4 = inlined_call_operand.vmem [shape: f32[1,128], index: 4, kind: input, shape index: {}]
  %s5 = inlined_call_operand.hbm [shape: f32[2,128], index: 5, kind: output, shape index: {}]
  %s6 = sld [smem:[#allocation0]]
  $region30: #{_lambda_.3} parent=0
    _
  %s8 = ssub.s32 1, %s6
  %s9 = scalar_select 0, %s8, %s6
  $region1: #{_lambda_.3} parent=0
    #allocation2 [shape = 'u8[1024]{0}', space=vmem, size = 0x400, scoped, tag = 'output window, operand 0, single buffered']
    #allocation3 [shape = 's32[1]{0}', space=sflag, size = 0x4, scoped, tag = 'scoped memory for _lambda_.3']
    %10 = vsyncpa [#allocation3], 0
    // Predicated region
    $region2: #{_lambda_.3} parent=1 // pred_check
      _
    $region3: #{_lambda_.3} parent=1 // pred_check_branch
      %12 = sbr.rel (0) target = $region5
    $region4: #{_lambda_.3} parent=1 // pred_region
      _
    $region5: #{_lambda_.3} parent=1 // pred_fallthru
      _
    // Predicated region
    $region6: #{_lambda_.3} parent=1 // pred_check
      _
    $region7: #{_lambda_.3} parent=1 // pred_check_branch
      %14 = sbr.rel (0) target = $region9
    $region8: #{_lambda_.3} parent=1 // pred_region
      _
    $region9: #{_lambda_.3} parent=1 // pred_fallthru
      _
    // Predicated region
    $region10: #{_lambda_.3} parent=1 // pred_check
      _
    $region11: #{_lambda_.3} parent=1 // pred_check_branch
      %16 = sbr.rel (0) target = $region13
    $region12: #{_lambda_.3} parent=1 // pred_region
      _
    $region13: #{_lambda_.3} parent=1 // pred_fallthru
      _
    // Predicated region
    $region14: #{_lambda_.3} parent=1 // pred_check
      _
    $region15: #{_lambda_.3} parent=1 // pred_check_branch
      %18 = sbr.rel (0) target = $region17
    $region16: #{_lambda_.3} parent=1 // pred_region
      _
    $region17: #{_lambda_.3} parent=1 // pred_fallthru
      _
    // Predicated region
    $region18: #{_lambda_.3} parent=1 // pred_check
      _
    $region19: #{_lambda_.3} parent=1 // pred_check_branch
      %20 = sbr.rel (0) target = $region21
    $region20: #{_lambda_.3} parent=1 // pred_region
      _
    $region21: #{_lambda_.3} parent=1 // pred_fallthru
      _
    %v22 = vld [vmem:[%s0] sm:$0xff]
    %v23 = vld [vmem:[%s0 + $0x8] sm:$0xff]
    %v24 = vld [vmem:[%s0 + $0x10] sm:$0xff]
    %v25 = vld [vmem:[%s0 + $0x18] sm:$0x1]
    %v26 = vld [vmem:[%s1] sm:$0xff]
    %v27 = vld [vmem:[%s1 + $0x8] sm:$0xff]
    %v28 = vld [vmem:[%s1 + $0x10] sm:$0xff]
    %v29 = vld [vmem:[%s1 + $0x18] sm:$0xff]
    %v30 = vld [vmem:[%s1 + $0x20] sm:$0xff]
    %v31 = vld [vmem:[%s1 + $0x28] sm:$0xff]
    %v32 = vld [vmem:[%s1 + $0x30] sm:$0xff]
    %v33 = vld [vmem:[%s1 + $0x38] sm:$0xff]
    %v34 = vld [vmem:[%s1 + $0x40] sm:$0xff]
    %v35 = vld [vmem:[%s1 + $0x48] sm:$0xff]
    %v36 = vld [vmem:[%s1 + $0x50] sm:$0xff]
    %v37 = vld [vmem:[%s1 + $0x58] sm:$0xff]
    %v38 = vld [vmem:[%s1 + $0x60] sm:$0xff]
    %v39 = vld [vmem:[%s1 + $0x68] sm:$0xff]
    %v40 = vld [vmem:[%s1 + $0x70] sm:$0xff]
    %v41 = vld [vmem:[%s1 + $0x78] sm:$0xff]
    %v42 = vld [vmem:[%s1 + $0x80] sm:$0xff]
    %v43 = vld [vmem:[%s1 + $0x88] sm:$0xff]
    %v44 = vld [vmem:[%s1 + $0x90] sm:$0xff]
    %v45 = vld [vmem:[%s1 + $0x98] sm:$0xff]
    %v46 = vld [vmem:[%s1 + $0xa0] sm:$0xff]
    %v47 = vld [vmem:[%s1 + $0xa8] sm:$0xff]
    %v48 = vld [vmem:[%s1 + $0xb0] sm:$0xff]
    %v49 = vld [vmem:[%s1 + $0xb8] sm:$0xff]
    %v50 = vld [vmem:[%s1 + $0xc0] sm:$0xff]
    %v51 = vld [vmem:[%s1 + $0xc8] sm:$0xff]
    %v52 = vld [vmem:[%s1 + $0xd0] sm:$0xff]
    %v53 = vld [vmem:[%s1 + $0xd8] sm:$0xff]
    %v54 = vld [vmem:[%s1 + $0xe0] sm:$0xff]
    %v55 = vld [vmem:[%s1 + $0xe8] sm:$0xff]
    %v56 = vld [vmem:[%s1 + $0xf0] sm:$0xff]
    %v57 = vld [vmem:[%s1 + $0xf8] sm:$0xff]
    %v58 = vld [vmem:[%s1 + $0x100] sm:$0xff]
    %v59 = vld [vmem:[%s1 + $0x108] sm:$0xff]
    %v60 = vld [vmem:[%s1 + $0x110] sm:$0xff]
    %v61 = vld [vmem:[%s1 + $0x118] sm:$0xff]
    %v62 = vld [vmem:[%s1 + $0x120] sm:$0xff]
    %v63 = vld [vmem:[%s1 + $0x128] sm:$0xff]
    %v64 = vld [vmem:[%s1 + $0x130] sm:$0xff]
    %v65 = vld [vmem:[%s1 + $0x138] sm:$0xff]
    %v66 = vld [vmem:[%s1 + $0x140] sm:$0xff]
    %v67 = vld [vmem:[%s1 + $0x148] sm:$0xff]
    %v68 = vld [vmem:[%s1 + $0x150] sm:$0xff]
    %v69 = vld [vmem:[%s1 + $0x158] sm:$0xff]
    %v70 = vld [vmem:[%s1 + $0x160] sm:$0xff]
    %v71 = vld [vmem:[%s1 + $0x168] sm:$0xff]
    %v72 = vld [vmem:[%s1 + $0x170] sm:$0xff]
    %v73 = vld [vmem:[%s1 + $0x178] sm:$0xff]
    %v74 = vld [vmem:[%s1 + $0x180] sm:$0xff]
    %v75 = vld [vmem:[%s1 + $0x188] sm:$0xff]
    %v76 = vld [vmem:[%s1 + $0x190] sm:$0xff]
    %v77 = vld [vmem:[%s1 + $0x198] sm:$0xff]
    %v78 = vld [vmem:[%s1 + $0x1a0] sm:$0xff]
    %v79 = vld [vmem:[%s1 + $0x1a8] sm:$0xff]
    %v80 = vld [vmem:[%s1 + $0x1b0] sm:$0xff]
    %v81 = vld [vmem:[%s1 + $0x1b8] sm:$0xff]
    %v82 = vld [vmem:[%s1 + $0x1c0] sm:$0xff]
    %v83 = vld [vmem:[%s1 + $0x1c8] sm:$0xff]
    %v84 = vld [vmem:[%s1 + $0x1d0] sm:$0xff]
    %v85 = vld [vmem:[%s1 + $0x1d8] sm:$0xff]
    %v86 = vld [vmem:[%s1 + $0x1e0] sm:$0xff]
    %v87 = vld [vmem:[%s1 + $0x1e8] sm:$0xff]
    %v88 = vld [vmem:[%s1 + $0x1f0] sm:$0xff]
    %v89 = vld [vmem:[%s1 + $0x1f8] sm:$0xff]
    %v90 = vld [vmem:[%s1 + $0x200] sm:$0xff]
    %v91 = vld [vmem:[%s1 + $0x208] sm:$0xff]
    %v92 = vld [vmem:[%s1 + $0x210] sm:$0xff]
    %v93 = vld [vmem:[%s1 + $0x218] sm:$0xff]
    %v94 = vld [vmem:[%s1 + $0x220] sm:$0xff]
    %v95 = vld [vmem:[%s1 + $0x228] sm:$0xff]
    %v96 = vld [vmem:[%s1 + $0x230] sm:$0xff]
    %v97 = vld [vmem:[%s1 + $0x238] sm:$0xff]
    %v98 = vld [vmem:[%s1 + $0x240] sm:$0xff]
    %v99 = vld [vmem:[%s1 + $0x248] sm:$0xff]
    %v100 = vld [vmem:[%s1 + $0x250] sm:$0xff]
    %v101 = vld [vmem:[%s1 + $0x258] sm:$0xff]
    %v102 = vld [vmem:[%s1 + $0x260] sm:$0xff]
    %v103 = vld [vmem:[%s1 + $0x268] sm:$0xff]
    %v104 = vld [vmem:[%s1 + $0x270] sm:$0xff]
    %v105 = vld [vmem:[%s1 + $0x278] sm:$0xff]
    %v106 = vld [vmem:[%s1 + $0x280] sm:$0xff]
    %v107 = vld [vmem:[%s1 + $0x288] sm:$0xff]
    %v108 = vld [vmem:[%s1 + $0x290] sm:$0xff]
    %v109 = vld [vmem:[%s1 + $0x298] sm:$0xff]
    %v110 = vld [vmem:[%s1 + $0x2a0] sm:$0xff]
    %v111 = vld [vmem:[%s1 + $0x2a8] sm:$0xff]
    %v112 = vld [vmem:[%s1 + $0x2b0] sm:$0xff]
    %v113 = vld [vmem:[%s1 + $0x2b8] sm:$0xff]
    %v114 = vld [vmem:[%s1 + $0x2c0] sm:$0xff]
    %v115 = vld [vmem:[%s1 + $0x2c8] sm:$0xff]
    %v116 = vld [vmem:[%s1 + $0x2d0] sm:$0xff]
    %v117 = vld [vmem:[%s1 + $0x2d8] sm:$0xff]
    %v118 = vld [vmem:[%s1 + $0x2e0] sm:$0xff]
    %v119 = vld [vmem:[%s1 + $0x2e8] sm:$0xff]
    %v120 = vld [vmem:[%s1 + $0x2f0] sm:$0xff]
    %v121 = vld [vmem:[%s1 + $0x2f8] sm:$0xff]
    %v122 = vld [vmem:[%s1 + $0x300] sm:$0xff]
    %v123 = vld [vmem:[%s1 + $0x308] sm:$0xff]
    %v124 = vld [vmem:[%s1 + $0x310] sm:$0xff]
    %v125 = vld [vmem:[%s1 + $0x318] sm:$0xff]
    %v126 = vld [vmem:[%s1 + $0x320] sm:$0xff]
    %v127 = vld [vmem:[%s1 + $0x328] sm:$0xff]
    %v128 = vld [vmem:[%s1 + $0x330] sm:$0xff]
    %v129 = vld [vmem:[%s1 + $0x338] sm:$0xff]
    %v130 = vld [vmem:[%s1 + $0x340] sm:$0xff]
    %v131 = vld [vmem:[%s1 + $0x348] sm:$0xff]
    %v132 = vld [vmem:[%s1 + $0x350] sm:$0xff]
    %v133 = vld [vmem:[%s1 + $0x358] sm:$0xff]
    %v134 = vld [vmem:[%s1 + $0x360] sm:$0xff]
    %v135 = vld [vmem:[%s1 + $0x368] sm:$0xff]
    %v136 = vld [vmem:[%s1 + $0x370] sm:$0xff]
    %v137 = vld [vmem:[%s1 + $0x378] sm:$0xff]
    %v138 = vld [vmem:[%s1 + $0x380] sm:$0xff]
    %v139 = vld [vmem:[%s1 + $0x388] sm:$0xff]
    %v140 = vld [vmem:[%s1 + $0x390] sm:$0xff]
    %v141 = vld [vmem:[%s1 + $0x398] sm:$0xff]
    %v142 = vld [vmem:[%s1 + $0x3a0] sm:$0xff]
    %v143 = vld [vmem:[%s1 + $0x3a8] sm:$0xff]
    %v144 = vld [vmem:[%s1 + $0x3b0] sm:$0xff]
    %v145 = vld [vmem:[%s1 + $0x3b8] sm:$0xff]
    %v146 = vld [vmem:[%s1 + $0x3c0] sm:$0xff]
    %v147 = vld [vmem:[%s1 + $0x3c8] sm:$0xff]
    %v148 = vld [vmem:[%s1 + $0x3d0] sm:$0xff]
    %v149 = vld [vmem:[%s1 + $0x3d8] sm:$0xff]
    %v150 = vld [vmem:[%s1 + $0x3e0] sm:$0xff]
    %v151 = vld [vmem:[%s1 + $0x3e8] sm:$0xff]
    %v152 = vld [vmem:[%s1 + $0x3f0] sm:$0xff]
    %v153 = vld [vmem:[%s1 + $0x3f8] sm:$0xff]
    %v154 = vld [vmem:[%s1 + $0x400] sm:$0xff]
    %v155 = vld [vmem:[%s1 + $0x408] sm:$0xff]
    %v156 = vld [vmem:[%s1 + $0x410] sm:$0xff]
    %v157 = vld [vmem:[%s1 + $0x418] sm:$0xff]
    %v158 = vld [vmem:[%s1 + $0x420] sm:$0xff]
    %v159 = vld [vmem:[%s1 + $0x428] sm:$0xff]
    %v160 = vld [vmem:[%s1 + $0x430] sm:$0xff]
    %v161 = vld [vmem:[%s1 + $0x438] sm:$0xff]
    %v162 = vld [vmem:[%s1 + $0x440] sm:$0xff]
    %v163 = vld [vmem:[%s1 + $0x448] sm:$0xff]
    %v164 = vld [vmem:[%s1 + $0x450] sm:$0xff]
    %v165 = vld [vmem:[%s1 + $0x458] sm:$0xff]
    %v166 = vld [vmem:[%s1 + $0x460] sm:$0xff]
    %v167 = vld [vmem:[%s1 + $0x468] sm:$0xff]
    %v168 = vld [vmem:[%s1 + $0x470] sm:$0xff]
    %v169 = vld [vmem:[%s1 + $0x478] sm:$0xff]
    %v170 = vld [vmem:[%s1 + $0x480] sm:$0xff]
    %v171 = vld [vmem:[%s1 + $0x488] sm:$0xff]
    %v172 = vld [vmem:[%s1 + $0x490] sm:$0xff]
    %v173 = vld [vmem:[%s1 + $0x498] sm:$0xff]
    %v174 = vld [vmem:[%s1 + $0x4a0] sm:$0xff]
    %v175 = vld [vmem:[%s1 + $0x4a8] sm:$0xff]
    %v176 = vld [vmem:[%s1 + $0x4b0] sm:$0xff]
    %v177 = vld [vmem:[%s1 + $0x4b8] sm:$0xff]
    %v178 = vld [vmem:[%s1 + $0x4c0] sm:$0xff]
    %v179 = vld [vmem:[%s1 + $0x4c8] sm:$0xff]
    %v180 = vld [vmem:[%s1 + $0x4d0] sm:$0xff]
    %v181 = vld [vmem:[%s1 + $0x4d8] sm:$0xff]
    %v182 = vld [vmem:[%s1 + $0x4e0] sm:$0xff]
    %v183 = vld [vmem:[%s1 + $0x4e8] sm:$0xff]
    %v184 = vld [vmem:[%s1 + $0x4f0] sm:$0xff]
    %v185 = vld [vmem:[%s1 + $0x4f8] sm:$0xff]
    %v186 = vld [vmem:[%s1 + $0x500] sm:$0xff]
    %v187 = vld [vmem:[%s1 + $0x508] sm:$0xff]
    %v188 = vld [vmem:[%s1 + $0x510] sm:$0xff]
    %v189 = vld [vmem:[%s1 + $0x518] sm:$0xff]
    %v190 = vld [vmem:[%s1 + $0x520] sm:$0xff]
    %v191 = vld [vmem:[%s1 + $0x528] sm:$0xff]
    %v192 = vld [vmem:[%s1 + $0x530] sm:$0xff]
    %v193 = vld [vmem:[%s1 + $0x538] sm:$0xff]
    %v194 = vld [vmem:[%s1 + $0x540] sm:$0xff]
    %v195 = vld [vmem:[%s1 + $0x548] sm:$0xff]
    %v196 = vld [vmem:[%s1 + $0x550] sm:$0xff]
    %v197 = vld [vmem:[%s1 + $0x558] sm:$0xff]
    %v198 = vld [vmem:[%s1 + $0x560] sm:$0xff]
    %v199 = vld [vmem:[%s1 + $0x568] sm:$0xff]
    %v200 = vld [vmem:[%s1 + $0x570] sm:$0xff]
    %v201 = vld [vmem:[%s1 + $0x578] sm:$0xff]
    %v202 = vld [vmem:[%s1 + $0x580] sm:$0xff]
    %v203 = vld [vmem:[%s1 + $0x588] sm:$0xff]
    %v204 = vld [vmem:[%s1 + $0x590] sm:$0xff]
    %v205 = vld [vmem:[%s1 + $0x598] sm:$0xff]
    %v206 = vld [vmem:[%s1 + $0x5a0] sm:$0xff]
    %v207 = vld [vmem:[%s1 + $0x5a8] sm:$0xff]
    %v208 = vld [vmem:[%s1 + $0x5b0] sm:$0xff]
    %v209 = vld [vmem:[%s1 + $0x5b8] sm:$0xff]
    %v210 = vld [vmem:[%s1 + $0x5c0] sm:$0xff]
    %v211 = vld [vmem:[%s1 + $0x5c8] sm:$0xff]
    %v212 = vld [vmem:[%s1 + $0x5d0] sm:$0xff]
    %v213 = vld [vmem:[%s1 + $0x5d8] sm:$0xff]
    %v214 = vld [vmem:[%s1 + $0x5e0] sm:$0xff]
    %v215 = vld [vmem:[%s1 + $0x5e8] sm:$0xff]
    %v216 = vld [vmem:[%s1 + $0x5f0] sm:$0xff]
    %v217 = vld [vmem:[%s1 + $0x5f8] sm:$0xff]
    %v218 = vld [vmem:[%s1 + $0x600] sm:$0xff]
    %v219 = vld [vmem:[%s1 + $0x608] sm:$0xff]
    %v220 = vld [vmem:[%s1 + $0x610] sm:$0xff]
    %v221 = vld [vmem:[%s1 + $0x618] sm:$0xff]
    %v222 = vld [vmem:[%s1 + $0x620] sm:$0xff]
    %v223 = vld [vmem:[%s1 + $0x628] sm:$0xff]
    %v224 = vld [vmem:[%s1 + $0x630] sm:$0xff]
    %v225 = vld [vmem:[%s1 + $0x638] sm:$0xff]
    %v226 = vld [vmem:[%s1 + $0x640] sm:$0xff]
    %v227 = vld [vmem:[%s1 + $0x648] sm:$0xff]
    %v228 = vld [vmem:[%s1 + $0x650] sm:$0xff]
    %v229 = vld [vmem:[%s1 + $0x658] sm:$0xff]
    %v230 = vld [vmem:[%s1 + $0x660] sm:$0xff]
    %v231 = vld [vmem:[%s1 + $0x668] sm:$0xff]
    %v232 = vld [vmem:[%s1 + $0x670] sm:$0xff]
    %v233 = vld [vmem:[%s1 + $0x678] sm:$0xff]
    %v234 = vld [vmem:[%s1 + $0x680] sm:$0xff]
    %v235 = vld [vmem:[%s1 + $0x688] sm:$0xff]
    %v236 = vld [vmem:[%s1 + $0x690] sm:$0xff]
    %v237 = vld [vmem:[%s1 + $0x698] sm:$0xff]
    %v238 = vld [vmem:[%s1 + $0x6a0] sm:$0xff]
    %v239 = vld [vmem:[%s1 + $0x6a8] sm:$0xff]
    %v240 = vld [vmem:[%s1 + $0x6b0] sm:$0xff]
    %v241 = vld [vmem:[%s1 + $0x6b8] sm:$0xff]
    %v242 = vld [vmem:[%s1 + $0x6c0] sm:$0xff]
    %v243 = vld [vmem:[%s1 + $0x6c8] sm:$0xff]
    %v244 = vld [vmem:[%s1 + $0x6d0] sm:$0xff]
    %v245 = vld [vmem:[%s1 + $0x6d8] sm:$0xff]
    %v246 = vld [vmem:[%s1 + $0x6e0] sm:$0xff]
    %v247 = vld [vmem:[%s1 + $0x6e8] sm:$0xff]
    %v248 = vld [vmem:[%s1 + $0x6f0] sm:$0xff]
    %v249 = vld [vmem:[%s1 + $0x6f8] sm:$0xff]
    %v250 = vld [vmem:[%s1 + $0x700] sm:$0xff]
    %v251 = vld [vmem:[%s1 + $0x708] sm:$0xff]
    %v252 = vld [vmem:[%s1 + $0x710] sm:$0xff]
    %v253 = vld [vmem:[%s1 + $0x718] sm:$0xff]
    %v254 = vld [vmem:[%s1 + $0x720] sm:$0xff]
    %v255 = vld [vmem:[%s1 + $0x728] sm:$0xff]
    %v256 = vld [vmem:[%s1 + $0x730] sm:$0xff]
    %v257 = vld [vmem:[%s1 + $0x738] sm:$0xff]
    %v258 = vld [vmem:[%s1 + $0x740] sm:$0xff]
    %v259 = vld [vmem:[%s1 + $0x748] sm:$0xff]
    %v260 = vld [vmem:[%s1 + $0x750] sm:$0xff]
    %v261 = vld [vmem:[%s1 + $0x758] sm:$0xff]
    %v262 = vld [vmem:[%s1 + $0x760] sm:$0xff]
    %v263 = vld [vmem:[%s1 + $0x768] sm:$0xff]
    %v264 = vld [vmem:[%s1 + $0x770] sm:$0xff]
    %v265 = vld [vmem:[%s1 + $0x778] sm:$0xff]
    %v266 = vld [vmem:[%s1 + $0x780] sm:$0xff]
    %v267 = vld [vmem:[%s1 + $0x788] sm:$0xff]
    %v268 = vld [vmem:[%s1 + $0x790] sm:$0xff]
    %v269 = vld [vmem:[%s1 + $0x798] sm:$0xff]
    %v270 = vld [vmem:[%s1 + $0x7a0] sm:$0xff]
    %v271 = vld [vmem:[%s1 + $0x7a8] sm:$0xff]
    %v272 = vld [vmem:[%s1 + $0x7b0] sm:$0xff]
    %v273 = vld [vmem:[%s1 + $0x7b8] sm:$0xff]
    %v274 = vld [vmem:[%s1 + $0x7c0] sm:$0xff]
    %v275 = vld [vmem:[%s1 + $0x7c8] sm:$0xff]
    %v276 = vld [vmem:[%s1 + $0x7d0] sm:$0xff]
    %v277 = vld [vmem:[%s1 + $0x7d8] sm:$0xff]
    %v278 = vld [vmem:[%s1 + $0x7e0] sm:$0xff]
    %v279 = vld [vmem:[%s1 + $0x7e8] sm:$0xff]
    %v280 = vld [vmem:[%s1 + $0x7f0] sm:$0xff]
    %v281 = vld [vmem:[%s1 + $0x7f8] sm:$0xff]
    %v282 = vld [vmem:[%s1 + $0x800] sm:$0xff]
    %v283 = vld [vmem:[%s1 + $0x808] sm:$0xff]
    %v284 = vld [vmem:[%s1 + $0x810] sm:$0xff]
    %v285 = vld [vmem:[%s1 + $0x818] sm:$0xff]
    %v286 = vld [vmem:[%s1 + $0x820] sm:$0xff]
    %v287 = vld [vmem:[%s1 + $0x828] sm:$0xff]
    %v288 = vld [vmem:[%s1 + $0x830] sm:$0xff]
    %v289 = vld [vmem:[%s1 + $0x838] sm:$0xff]
    %v290 = vld [vmem:[%s1 + $0x840] sm:$0xff]
    %v291 = vld [vmem:[%s1 + $0x848] sm:$0xff]
    %v292 = vld [vmem:[%s1 + $0x850] sm:$0xff]
    %v293 = vld [vmem:[%s1 + $0x858] sm:$0xff]
    %v294 = vld [vmem:[%s1 + $0x860] sm:$0xff]
    %v295 = vld [vmem:[%s1 + $0x868] sm:$0xff]
    %v296 = vld [vmem:[%s1 + $0x870] sm:$0xff]
    %v297 = vld [vmem:[%s1 + $0x878] sm:$0xff]
    %v298 = vld [vmem:[%s1 + $0x880] sm:$0xff]
    %v299 = vld [vmem:[%s1 + $0x888] sm:$0xff]
    %v300 = vld [vmem:[%s1 + $0x890] sm:$0xff]
    %v301 = vld [vmem:[%s1 + $0x898] sm:$0xff]
    %v302 = vld [vmem:[%s1 + $0x8a0] sm:$0xff]
    %v303 = vld [vmem:[%s1 + $0x8a8] sm:$0xff]
    %v304 = vld [vmem:[%s1 + $0x8b0] sm:$0xff]
    %v305 = vld [vmem:[%s1 + $0x8b8] sm:$0xff]
    %v306 = vld [vmem:[%s1 + $0x8c0] sm:$0xff]
    %v307 = vld [vmem:[%s1 + $0x8c8] sm:$0xff]
    %v308 = vld [vmem:[%s1 + $0x8d0] sm:$0xff]
    %v309 = vld [vmem:[%s1 + $0x8d8] sm:$0xff]
    %v310 = vld [vmem:[%s1 + $0x8e0] sm:$0xff]
    %v311 = vld [vmem:[%s1 + $0x8e8] sm:$0xff]
    %v312 = vld [vmem:[%s1 + $0x8f0] sm:$0xff]
    %v313 = vld [vmem:[%s1 + $0x8f8] sm:$0xff]
    %v314 = vld [vmem:[%s1 + $0x900] sm:$0xff]
    %v315 = vld [vmem:[%s1 + $0x908] sm:$0xff]
    %v316 = vld [vmem:[%s1 + $0x910] sm:$0xff]
    %v317 = vld [vmem:[%s1 + $0x918] sm:$0xff]
    %v318 = vld [vmem:[%s1 + $0x920] sm:$0xff]
    %v319 = vld [vmem:[%s1 + $0x928] sm:$0xff]
    %v320 = vld [vmem:[%s1 + $0x930] sm:$0xff]
    %v321 = vld [vmem:[%s1 + $0x938] sm:$0xff]
    %v322 = vld [vmem:[%s1 + $0x940] sm:$0xff]
    %v323 = vld [vmem:[%s1 + $0x948] sm:$0xff]
    %v324 = vld [vmem:[%s1 + $0x950] sm:$0xff]
    %v325 = vld [vmem:[%s1 + $0x958] sm:$0xff]
    %v326 = vld [vmem:[%s1 + $0x960] sm:$0xff]
    %v327 = vld [vmem:[%s1 + $0x968] sm:$0xff]
    %v328 = vld [vmem:[%s1 + $0x970] sm:$0xff]
    %v329 = vld [vmem:[%s1 + $0x978] sm:$0xff]
    %v330 = vld [vmem:[%s1 + $0x980] sm:$0xff]
    %v331 = vld [vmem:[%s1 + $0x988] sm:$0xff]
    %v332 = vld [vmem:[%s1 + $0x990] sm:$0xff]
    %v333 = vld [vmem:[%s1 + $0x998] sm:$0xff]
    %v334 = vld [vmem:[%s1 + $0x9a0] sm:$0xff]
    %v335 = vld [vmem:[%s1 + $0x9a8] sm:$0xff]
    %v336 = vld [vmem:[%s1 + $0x9b0] sm:$0xff]
    %v337 = vld [vmem:[%s1 + $0x9b8] sm:$0xff]
    %v338 = vld [vmem:[%s1 + $0x9c0] sm:$0xff]
    %v339 = vld [vmem:[%s1 + $0x9c8] sm:$0xff]
    %v340 = vld [vmem:[%s1 + $0x9d0] sm:$0xff]
    %v341 = vld [vmem:[%s1 + $0x9d8] sm:$0xff]
    %v342 = vld [vmem:[%s1 + $0x9e0] sm:$0xff]
    %v343 = vld [vmem:[%s1 + $0x9e8] sm:$0xff]
    %v344 = vld [vmem:[%s1 + $0x9f0] sm:$0xff]
    %v345 = vld [vmem:[%s1 + $0x9f8] sm:$0xff]
    %v346 = vld [vmem:[%s1 + $0xa00] sm:$0xff]
    %v347 = vld [vmem:[%s1 + $0xa08] sm:$0xff]
    %v348 = vld [vmem:[%s1 + $0xa10] sm:$0xff]
    %v349 = vld [vmem:[%s1 + $0xa18] sm:$0xff]
    %v350 = vld [vmem:[%s1 + $0xa20] sm:$0xff]
    %v351 = vld [vmem:[%s1 + $0xa28] sm:$0xff]
    %v352 = vld [vmem:[%s1 + $0xa30] sm:$0xff]
    %v353 = vld [vmem:[%s1 + $0xa38] sm:$0xff]
    %v354 = vld [vmem:[%s1 + $0xa40] sm:$0xff]
    %v355 = vld [vmem:[%s1 + $0xa48] sm:$0xff]
    %v356 = vld [vmem:[%s1 + $0xa50] sm:$0xff]
    %v357 = vld [vmem:[%s1 + $0xa58] sm:$0xff]
    %v358 = vld [vmem:[%s1 + $0xa60] sm:$0xff]
    %v359 = vld [vmem:[%s1 + $0xa68] sm:$0xff]
    %v360 = vld [vmem:[%s1 + $0xa70] sm:$0xff]
    %v361 = vld [vmem:[%s1 + $0xa78] sm:$0xff]
    %v362 = vld [vmem:[%s1 + $0xa80] sm:$0xff]
    %v363 = vld [vmem:[%s1 + $0xa88] sm:$0xff]
    %v364 = vld [vmem:[%s1 + $0xa90] sm:$0xff]
    %v365 = vld [vmem:[%s1 + $0xa98] sm:$0xff]
    %v366 = vld [vmem:[%s1 + $0xaa0] sm:$0xff]
    %v367 = vld [vmem:[%s1 + $0xaa8] sm:$0xff]
    %v368 = vld [vmem:[%s1 + $0xab0] sm:$0xff]
    %v369 = vld [vmem:[%s1 + $0xab8] sm:$0xff]
    %v370 = vld [vmem:[%s1 + $0xac0] sm:$0xff]
    %v371 = vld [vmem:[%s1 + $0xac8] sm:$0xff]
    %v372 = vld [vmem:[%s1 + $0xad0] sm:$0xff]
    %v373 = vld [vmem:[%s1 + $0xad8] sm:$0xff]
    %v374 = vld [vmem:[%s1 + $0xae0] sm:$0xff]
    %v375 = vld [vmem:[%s1 + $0xae8] sm:$0xff]
    %v376 = vld [vmem:[%s1 + $0xaf0] sm:$0xff]
    %v377 = vld [vmem:[%s1 + $0xaf8] sm:$0xff]
    %v378 = vld [vmem:[%s1 + $0xb00] sm:$0xff]
    %v379 = vld [vmem:[%s1 + $0xb08] sm:$0xff]
    %v380 = vld [vmem:[%s1 + $0xb10] sm:$0xff]
    %v381 = vld [vmem:[%s1 + $0xb18] sm:$0xff]
    %v382 = vld [vmem:[%s1 + $0xb20] sm:$0xff]
    %v383 = vld [vmem:[%s1 + $0xb28] sm:$0xff]
    %v384 = vld [vmem:[%s1 + $0xb30] sm:$0xff]
    %v385 = vld [vmem:[%s1 + $0xb38] sm:$0xff]
    %v386 = vld [vmem:[%s1 + $0xb40] sm:$0xff]
    %v387 = vld [vmem:[%s1 + $0xb48] sm:$0xff]
    %v388 = vld [vmem:[%s1 + $0xb50] sm:$0xff]
    %v389 = vld [vmem:[%s1 + $0xb58] sm:$0xff]
    %v390 = vld [vmem:[%s1 + $0xb60] sm:$0xff]
    %v391 = vld [vmem:[%s1 + $0xb68] sm:$0xff]
    %v392 = vld [vmem:[%s1 + $0xb70] sm:$0xff]
    %v393 = vld [vmem:[%s1 + $0xb78] sm:$0xff]
    %v394 = vld [vmem:[%s1 + $0xb80] sm:$0xff]
    %v395 = vld [vmem:[%s1 + $0xb88] sm:$0xff]
    %v396 = vld [vmem:[%s1 + $0xb90] sm:$0xff]
    %v397 = vld [vmem:[%s1 + $0xb98] sm:$0xff]
    %v398 = vld [vmem:[%s1 + $0xba0] sm:$0xff]
    %v399 = vld [vmem:[%s1 + $0xba8] sm:$0xff]
    %v400 = vld [vmem:[%s1 + $0xbb0] sm:$0xff]
    %v401 = vld [vmem:[%s1 + $0xbb8] sm:$0xff]
    %v402 = vld [vmem:[%s1 + $0xbc0] sm:$0xff]
    %v403 = vld [vmem:[%s1 + $0xbc8] sm:$0xff]
    %v404 = vld [vmem:[%s1 + $0xbd0] sm:$0xff]
    %v405 = vld [vmem:[%s1 + $0xbd8] sm:$0xff]
    %v406 = vld [vmem:[%s1 + $0xbe0] sm:$0xff]
    %v407 = vld [vmem:[%s1 + $0xbe8] sm:$0xff]
    %v408 = vld [vmem:[%s1 + $0xbf0] sm:$0xff]
    %v409 = vld [vmem:[%s1 + $0xbf8] sm:$0xff]
    %v410 = vld [vmem:[%s1 + $0xc00] sm:$0xff]
    %v411 = vld [vmem:[%s1 + $0xc08] sm:$0xff]
    %v412 = vld [vmem:[%s1 + $0xc10] sm:$0xff]
    %v413 = vld [vmem:[%s1 + $0xc18] sm:$0xff]
    %v414 = vld [vmem:[%s1 + $0xc20] sm:$0xff]
    %v415 = vld [vmem:[%s1 + $0xc28] sm:$0xff]
    %v416 = vld [vmem:[%s1 + $0xc30] sm:$0xff]
    %v417 = vld [vmem:[%s1 + $0xc38] sm:$0xff]
    %v418 = vld [vmem:[%s1 + $0xc40] sm:$0xff]
    %v419 = vld [vmem:[%s1 + $0xc48] sm:$0xff]
    %v420 = vld [vmem:[%s1 + $0xc50] sm:$0xff]
    %v421 = vld [vmem:[%s1 + $0xc58] sm:$0xff]
    %v422 = vld [vmem:[%s1 + $0xc60] sm:$0xff]
    %v423 = vld [vmem:[%s1 + $0xc68] sm:$0xff]
    %v424 = vld [vmem:[%s1 + $0xc70] sm:$0xff]
    %v425 = vld [vmem:[%s1 + $0xc78] sm:$0xff]
    %v426 = vld [vmem:[%s1 + $0xc80] sm:$0xff]
    %v427 = vld [vmem:[%s1 + $0xc88] sm:$0xff]
    %v428 = vld [vmem:[%s1 + $0xc90] sm:$0xff]
    %v429 = vld [vmem:[%s1 + $0xc98] sm:$0xff]
    %v430 = vld [vmem:[%s1 + $0xca0] sm:$0xff]
    %v431 = vld [vmem:[%s1 + $0xca8] sm:$0xff]
    %v432 = vld [vmem:[%s1 + $0xcb0] sm:$0xff]
    %v433 = vld [vmem:[%s1 + $0xcb8] sm:$0xff]
    %v434 = vld [vmem:[%s1 + $0xcc0] sm:$0xff]
    %v435 = vld [vmem:[%s1 + $0xcc8] sm:$0xff]
    %v436 = vld [vmem:[%s1 + $0xcd0] sm:$0xff]
    %v437 = vld [vmem:[%s1 + $0xcd8] sm:$0xff]
    %v438 = vld [vmem:[%s1 + $0xce0] sm:$0xff]
    %v439 = vld [vmem:[%s1 + $0xce8] sm:$0xff]
    %v440 = vld [vmem:[%s1 + $0xcf0] sm:$0xff]
    %v441 = vld [vmem:[%s1 + $0xcf8] sm:$0xff]
    %v442 = vld [vmem:[%s1 + $0xd00] sm:$0xff]
    %v443 = vld [vmem:[%s1 + $0xd08] sm:$0xff]
    %v444 = vld [vmem:[%s1 + $0xd10] sm:$0xff]
    %v445 = vld [vmem:[%s1 + $0xd18] sm:$0xff]
    %v446 = vld [vmem:[%s1 + $0xd20] sm:$0xff]
    %v447 = vld [vmem:[%s1 + $0xd28] sm:$0xff]
    %v448 = vld [vmem:[%s1 + $0xd30] sm:$0xff]
    %v449 = vld [vmem:[%s1 + $0xd38] sm:$0xff]
    %v450 = vld [vmem:[%s1 + $0xd40] sm:$0xff]
    %v451 = vld [vmem:[%s1 + $0xd48] sm:$0xff]
    %v452 = vld [vmem:[%s1 + $0xd50] sm:$0xff]
    %v453 = vld [vmem:[%s1 + $0xd58] sm:$0xff]
    %v454 = vld [vmem:[%s1 + $0xd60] sm:$0xff]
    %v455 = vld [vmem:[%s1 + $0xd68] sm:$0xff]
    %v456 = vld [vmem:[%s1 + $0xd70] sm:$0xff]
    %v457 = vld [vmem:[%s1 + $0xd78] sm:$0xff]
    %v458 = vld [vmem:[%s1 + $0xd80] sm:$0xff]
    %v459 = vld [vmem:[%s1 + $0xd88] sm:$0xff]
    %v460 = vld [vmem:[%s1 + $0xd90] sm:$0xff]
    %v461 = vld [vmem:[%s1 + $0xd98] sm:$0xff]
    %v462 = vld [vmem:[%s1 + $0xda0] sm:$0xff]
    %v463 = vld [vmem:[%s1 + $0xda8] sm:$0xff]
    %v464 = vld [vmem:[%s1 + $0xdb0] sm:$0xff]
    %v465 = vld [vmem:[%s1 + $0xdb8] sm:$0xff]
    %v466 = vld [vmem:[%s1 + $0xdc0] sm:$0xff]
    %v467 = vld [vmem:[%s1 + $0xdc8] sm:$0xff]
    %v468 = vld [vmem:[%s1 + $0xdd0] sm:$0xff]
    %v469 = vld [vmem:[%s1 + $0xdd8] sm:$0xff]
    %v470 = vld [vmem:[%s1 + $0xde0] sm:$0xff]
    %v471 = vld [vmem:[%s1 + $0xde8] sm:$0xff]
    %v472 = vld [vmem:[%s1 + $0xdf0] sm:$0xff]
    %v473 = vld [vmem:[%s1 + $0xdf8] sm:$0xff]
    %v474 = vld [vmem:[%s1 + $0xe00] sm:$0xff]
    %v475 = vld [vmem:[%s1 + $0xe08] sm:$0xff]
    %v476 = vld [vmem:[%s1 + $0xe10] sm:$0xff]
    %v477 = vld [vmem:[%s1 + $0xe18] sm:$0xff]
    %v478 = vld [vmem:[%s1 + $0xe20] sm:$0xff]
    %v479 = vld [vmem:[%s1 + $0xe28] sm:$0xff]
    %v480 = vld [vmem:[%s1 + $0xe30] sm:$0xff]
    %v481 = vld [vmem:[%s1 + $0xe38] sm:$0xff]
    %v482 = vld [vmem:[%s1 + $0xe40] sm:$0xff]
    %v483 = vld [vmem:[%s1 + $0xe48] sm:$0xff]
    %v484 = vld [vmem:[%s1 + $0xe50] sm:$0xff]
    %v485 = vld [vmem:[%s1 + $0xe58] sm:$0xff]
    %v486 = vld [vmem:[%s1 + $0xe60] sm:$0xff]
    %v487 = vld [vmem:[%s1 + $0xe68] sm:$0xff]
    %v488 = vld [vmem:[%s1 + $0xe70] sm:$0xff]
    %v489 = vld [vmem:[%s1 + $0xe78] sm:$0xff]
    %v490 = vld [vmem:[%s1 + $0xe80] sm:$0xff]
    %v491 = vld [vmem:[%s1 + $0xe88] sm:$0xff]
    %v492 = vld [vmem:[%s1 + $0xe90] sm:$0xff]
    %v493 = vld [vmem:[%s1 + $0xe98] sm:$0xff]
    %v494 = vld [vmem:[%s1 + $0xea0] sm:$0xff]
    %v495 = vld [vmem:[%s1 + $0xea8] sm:$0xff]
    %v496 = vld [vmem:[%s1 + $0xeb0] sm:$0xff]
    %v497 = vld [vmem:[%s1 + $0xeb8] sm:$0xff]
    %v498 = vld [vmem:[%s1 + $0xec0] sm:$0xff]
    %v499 = vld [vmem:[%s1 + $0xec8] sm:$0xff]
    %v500 = vld [vmem:[%s1 + $0xed0] sm:$0xff]
    %v501 = vld [vmem:[%s1 + $0xed8] sm:$0xff]
    %v502 = vld [vmem:[%s1 + $0xee0] sm:$0xff]
    %v503 = vld [vmem:[%s1 + $0xee8] sm:$0xff]
    %v504 = vld [vmem:[%s1 + $0xef0] sm:$0xff]
    %v505 = vld [vmem:[%s1 + $0xef8] sm:$0xff]
    %v506 = vld [vmem:[%s1 + $0xf00] sm:$0xff]
    %v507 = vld [vmem:[%s1 + $0xf08] sm:$0xff]
    %v508 = vld [vmem:[%s1 + $0xf10] sm:$0xff]
    %v509 = vld [vmem:[%s1 + $0xf18] sm:$0xff]
    %v510 = vld [vmem:[%s1 + $0xf20] sm:$0xff]
    %v511 = vld [vmem:[%s1 + $0xf28] sm:$0xff]
    %v512 = vld [vmem:[%s1 + $0xf30] sm:$0xff]
    %v513 = vld [vmem:[%s1 + $0xf38] sm:$0xff]
    %v514 = vld [vmem:[%s1 + $0xf40] sm:$0xff]
    %v515 = vld [vmem:[%s1 + $0xf48] sm:$0xff]
    %v516 = vld [vmem:[%s1 + $0xf50] sm:$0xff]
    %v517 = vld [vmem:[%s1 + $0xf58] sm:$0xff]
    %v518 = vld [vmem:[%s1 + $0xf60] sm:$0xff]
    %v519 = vld [vmem:[%s1 + $0xf68] sm:$0xff]
    %v520 = vld [vmem:[%s1 + $0xf70] sm:$0xff]
    %v521 = vld [vmem:[%s1 + $0xf78] sm:$0xff]
    %v522 = vld [vmem:[%s1 + $0xf80] sm:$0xff]
    %v523 = vld [vmem:[%s1 + $0xf88] sm:$0xff]
    %v524 = vld [vmem:[%s1 + $0xf90] sm:$0xff]
    %v525 = vld [vmem:[%s1 + $0xf98] sm:$0xff]
    %v526 = vld [vmem:[%s1 + $0xfa0] sm:$0xff]
    %v527 = vld [vmem:[%s1 + $0xfa8] sm:$0xff]
    %v528 = vld [vmem:[%s1 + $0xfb0] sm:$0xff]
    %v529 = vld [vmem:[%s1 + $0xfb8] sm:$0xff]
    %v530 = vld [vmem:[%s1 + $0xfc0] sm:$0xff]
    %v531 = vld [vmem:[%s1 + $0xfc8] sm:$0xff]
    %v532 = vld [vmem:[%s1 + $0xfd0] sm:$0xff]
    %v533 = vld [vmem:[%s1 + $0xfd8] sm:$0xff]
    %v534 = vld [vmem:[%s1 + $0xfe0] sm:$0xff]
    %v535 = vld [vmem:[%s1 + $0xfe8] sm:$0xff]
    %v536 = vld [vmem:[%s1 + $0xff0] sm:$0xff]
    %v537 = vld [vmem:[%s1 + $0xff8] sm:$0xff]
    %v538 = vld [vmem:[%s1 + $0x1000] sm:$0xff]
    %v539 = vld [vmem:[%s1 + $0x1008] sm:$0xff]
    %v540 = vld [vmem:[%s1 + $0x1010] sm:$0xff]
    %v541 = vld [vmem:[%s1 + $0x1018] sm:$0xff]
    %v542 = vld [vmem:[%s1 + $0x1020] sm:$0xff]
    %v543 = vld [vmem:[%s1 + $0x1028] sm:$0xff]
    %v544 = vld [vmem:[%s1 + $0x1030] sm:$0xff]
    %v545 = vld [vmem:[%s1 + $0x1038] sm:$0xff]
    %v546 = vld [vmem:[%s1 + $0x1040] sm:$0xff]
    %v547 = vld [vmem:[%s1 + $0x1048] sm:$0xff]
    %v548 = vld [vmem:[%s1 + $0x1050] sm:$0xff]
    %v549 = vld [vmem:[%s1 + $0x1058] sm:$0xff]
    %v550 = vld [vmem:[%s1 + $0x1060] sm:$0xff]
    %v551 = vld [vmem:[%s1 + $0x1068] sm:$0xff]
    %v552 = vld [vmem:[%s1 + $0x1070] sm:$0xff]
    %v553 = vld [vmem:[%s1 + $0x1078] sm:$0xff]
    %v554 = vld [vmem:[%s1 + $0x1080] sm:$0xff]
    %v555 = vld [vmem:[%s1 + $0x1088] sm:$0xff]
    %v556 = vld [vmem:[%s1 + $0x1090] sm:$0xff]
    %v557 = vld [vmem:[%s1 + $0x1098] sm:$0xff]
    %v558 = vld [vmem:[%s1 + $0x10a0] sm:$0xff]
    %v559 = vld [vmem:[%s1 + $0x10a8] sm:$0xff]
    %v560 = vld [vmem:[%s1 + $0x10b0] sm:$0xff]
    %v561 = vld [vmem:[%s1 + $0x10b8] sm:$0xff]
    %v562 = vld [vmem:[%s1 + $0x10c0] sm:$0xff]
    %v563 = vld [vmem:[%s1 + $0x10c8] sm:$0xff]
    %v564 = vld [vmem:[%s1 + $0x10d0] sm:$0xff]
    %v565 = vld [vmem:[%s1 + $0x10d8] sm:$0xff]
    %v566 = vld [vmem:[%s1 + $0x10e0] sm:$0xff]
    %v567 = vld [vmem:[%s1 + $0x10e8] sm:$0xff]
    %v568 = vld [vmem:[%s1 + $0x10f0] sm:$0xff]
    %v569 = vld [vmem:[%s1 + $0x10f8] sm:$0xff]
    %v570 = vld [vmem:[%s1 + $0x1100] sm:$0xff]
    %v571 = vld [vmem:[%s1 + $0x1108] sm:$0xff]
    %v572 = vld [vmem:[%s1 + $0x1110] sm:$0xff]
    %v573 = vld [vmem:[%s1 + $0x1118] sm:$0xff]
    %v574 = vld [vmem:[%s1 + $0x1120] sm:$0xff]
    %v575 = vld [vmem:[%s1 + $0x1128] sm:$0xff]
    %v576 = vld [vmem:[%s1 + $0x1130] sm:$0xff]
    %v577 = vld [vmem:[%s1 + $0x1138] sm:$0xff]
    %v578 = vld [vmem:[%s1 + $0x1140] sm:$0xff]
    %v579 = vld [vmem:[%s1 + $0x1148] sm:$0xff]
    %v580 = vld [vmem:[%s1 + $0x1150] sm:$0xff]
    %v581 = vld [vmem:[%s1 + $0x1158] sm:$0xff]
    %v582 = vld [vmem:[%s1 + $0x1160] sm:$0xff]
    %v583 = vld [vmem:[%s1 + $0x1168] sm:$0xff]
    %v584 = vld [vmem:[%s1 + $0x1170] sm:$0xff]
    %v585 = vld [vmem:[%s1 + $0x1178] sm:$0xff]
    %v586 = vld [vmem:[%s1 + $0x1180] sm:$0xff]
    %v587 = vld [vmem:[%s1 + $0x1188] sm:$0xff]
    %v588 = vld [vmem:[%s1 + $0x1190] sm:$0xff]
    %v589 = vld [vmem:[%s1 + $0x1198] sm:$0xff]
    %v590 = vld [vmem:[%s1 + $0x11a0] sm:$0xff]
    %v591 = vld [vmem:[%s1 + $0x11a8] sm:$0xff]
    %v592 = vld [vmem:[%s1 + $0x11b0] sm:$0xff]
    %v593 = vld [vmem:[%s1 + $0x11b8] sm:$0xff]
    %v594 = vld [vmem:[%s1 + $0x11c0] sm:$0xff]
    %v595 = vld [vmem:[%s1 + $0x11c8] sm:$0xff]
    %v596 = vld [vmem:[%s1 + $0x11d0] sm:$0xff]
    %v597 = vld [vmem:[%s1 + $0x11d8] sm:$0xff]
    %v598 = vld [vmem:[%s1 + $0x11e0] sm:$0xff]
    %v599 = vld [vmem:[%s1 + $0x11e8] sm:$0xff]
    %v600 = vld [vmem:[%s1 + $0x11f0] sm:$0xff]
    %v601 = vld [vmem:[%s1 + $0x11f8] sm:$0xff]
    %v602 = vld [vmem:[%s1 + $0x1200] sm:$0xff]
    %v603 = vld [vmem:[%s1 + $0x1208] sm:$0xff]
    %v604 = vld [vmem:[%s1 + $0x1210] sm:$0xff]
    %v605 = vld [vmem:[%s1 + $0x1218] sm:$0xff]
    %v606 = vld [vmem:[%s1 + $0x1220] sm:$0xff]
    %v607 = vld [vmem:[%s1 + $0x1228] sm:$0xff]
    %v608 = vld [vmem:[%s1 + $0x1230] sm:$0xff]
    %v609 = vld [vmem:[%s1 + $0x1238] sm:$0xff]
    %v610 = vld [vmem:[%s1 + $0x1240] sm:$0xff]
    %v611 = vld [vmem:[%s1 + $0x1248] sm:$0xff]
    %v612 = vld [vmem:[%s1 + $0x1250] sm:$0xff]
    %v613 = vld [vmem:[%s1 + $0x1258] sm:$0xff]
    %v614 = vld [vmem:[%s1 + $0x1260] sm:$0xff]
    %v615 = vld [vmem:[%s1 + $0x1268] sm:$0xff]
    %v616 = vld [vmem:[%s1 + $0x1270] sm:$0xff]
    %v617 = vld [vmem:[%s1 + $0x1278] sm:$0xff]
    %v618 = vld [vmem:[%s1 + $0x1280] sm:$0xff]
    %v619 = vld [vmem:[%s1 + $0x1288] sm:$0xff]
    %v620 = vld [vmem:[%s1 + $0x1290] sm:$0xff]
    %v621 = vld [vmem:[%s1 + $0x1298] sm:$0xff]
    %v622 = vld [vmem:[%s1 + $0x12a0] sm:$0xff]
    %v623 = vld [vmem:[%s1 + $0x12a8] sm:$0xff]
    %v624 = vld [vmem:[%s1 + $0x12b0] sm:$0xff]
    %v625 = vld [vmem:[%s1 + $0x12b8] sm:$0xff]
    %v626 = vld [vmem:[%s1 + $0x12c0] sm:$0xff]
    %v627 = vld [vmem:[%s1 + $0x12c8] sm:$0xff]
    %v628 = vld [vmem:[%s1 + $0x12d0] sm:$0xff]
    %v629 = vld [vmem:[%s1 + $0x12d8] sm:$0xff]
    %v630 = vld [vmem:[%s1 + $0x12e0] sm:$0xff]
    %v631 = vld [vmem:[%s1 + $0x12e8] sm:$0xff]
    %v632 = vld [vmem:[%s1 + $0x12f0] sm:$0xff]
    %v633 = vld [vmem:[%s1 + $0x12f8] sm:$0xff]
    %v634 = vld [vmem:[%s1 + $0x1300] sm:$0xff]
    %v635 = vld [vmem:[%s1 + $0x1308] sm:$0xff]
    %v636 = vld [vmem:[%s1 + $0x1310] sm:$0xff]
    %v637 = vld [vmem:[%s1 + $0x1318] sm:$0xff]
    %v638 = vld [vmem:[%s1 + $0x1320] sm:$0xff]
    %v639 = vld [vmem:[%s1 + $0x1328] sm:$0xff]
    %v640 = vld [vmem:[%s1 + $0x1330] sm:$0xff]
    %v641 = vld [vmem:[%s1 + $0x1338] sm:$0xff]
    %v642 = vld [vmem:[%s1 + $0x1340] sm:$0xff]
    %v643 = vld [vmem:[%s1 + $0x1348] sm:$0xff]
    %v644 = vld [vmem:[%s1 + $0x1350] sm:$0xff]
    %v645 = vld [vmem:[%s1 + $0x1358] sm:$0xff]
    %v646 = vld [vmem:[%s1 + $0x1360] sm:$0xff]
    %v647 = vld [vmem:[%s1 + $0x1368] sm:$0xff]
    %v648 = vld [vmem:[%s1 + $0x1370] sm:$0xff]
    %v649 = vld [vmem:[%s1 + $0x1378] sm:$0xff]
    %v650 = vld [vmem:[%s1 + $0x1380] sm:$0xff]
    %v651 = vld [vmem:[%s1 + $0x1388] sm:$0xff]
    %v652 = vld [vmem:[%s1 + $0x1390] sm:$0xff]
    %v653 = vld [vmem:[%s1 + $0x1398] sm:$0xff]
    %v654 = vld [vmem:[%s1 + $0x13a0] sm:$0xff]
    %v655 = vld [vmem:[%s1 + $0x13a8] sm:$0xff]
    %v656 = vld [vmem:[%s1 + $0x13b0] sm:$0xff]
    %v657 = vld [vmem:[%s1 + $0x13b8] sm:$0xff]
    %v658 = vld [vmem:[%s1 + $0x13c0] sm:$0xff]
    %v659 = vld [vmem:[%s1 + $0x13c8] sm:$0xff]
    %v660 = vld [vmem:[%s1 + $0x13d0] sm:$0xff]
    %v661 = vld [vmem:[%s1 + $0x13d8] sm:$0xff]
    %v662 = vld [vmem:[%s1 + $0x13e0] sm:$0xff]
    %v663 = vld [vmem:[%s1 + $0x13e8] sm:$0xff]
    %v664 = vld [vmem:[%s1 + $0x13f0] sm:$0xff]
    %v665 = vld [vmem:[%s1 + $0x13f8] sm:$0xff]
    %v666 = vld [vmem:[%s1 + $0x1400] sm:$0xff]
    %v667 = vld [vmem:[%s1 + $0x1408] sm:$0xff]
    %v668 = vld [vmem:[%s1 + $0x1410] sm:$0xff]
    %v669 = vld [vmem:[%s1 + $0x1418] sm:$0xff]
    %v670 = vld [vmem:[%s1 + $0x1420] sm:$0xff]
    %v671 = vld [vmem:[%s1 + $0x1428] sm:$0xff]
    %v672 = vld [vmem:[%s1 + $0x1430] sm:$0xff]
    %v673 = vld [vmem:[%s1 + $0x1438] sm:$0xff]
    %v674 = vld [vmem:[%s1 + $0x1440] sm:$0xff]
    %v675 = vld [vmem:[%s1 + $0x1448] sm:$0xff]
    %v676 = vld [vmem:[%s1 + $0x1450] sm:$0xff]
    %v677 = vld [vmem:[%s1 + $0x1458] sm:$0xff]
    %v678 = vld [vmem:[%s1 + $0x1460] sm:$0xff]
    %v679 = vld [vmem:[%s1 + $0x1468] sm:$0xff]
    %v680 = vld [vmem:[%s1 + $0x1470] sm:$0xff]
    %v681 = vld [vmem:[%s1 + $0x1478] sm:$0xff]
    %v682 = vld [vmem:[%s1 + $0x1480] sm:$0xff]
    %v683 = vld [vmem:[%s1 + $0x1488] sm:$0xff]
    %v684 = vld [vmem:[%s1 + $0x1490] sm:$0xff]
    %v685 = vld [vmem:[%s1 + $0x1498] sm:$0xff]
    %v686 = vld [vmem:[%s1 + $0x14a0] sm:$0xff]
    %v687 = vld [vmem:[%s1 + $0x14a8] sm:$0xff]
    %v688 = vld [vmem:[%s1 + $0x14b0] sm:$0xff]
    %v689 = vld [vmem:[%s1 + $0x14b8] sm:$0xff]
    %v690 = vld [vmem:[%s1 + $0x14c0] sm:$0xff]
    %v691 = vld [vmem:[%s1 + $0x14c8] sm:$0xff]
    %v692 = vld [vmem:[%s1 + $0x14d0] sm:$0xff]
    %v693 = vld [vmem:[%s1 + $0x14d8] sm:$0xff]
    %v694 = vld [vmem:[%s1 + $0x14e0] sm:$0xff]
    %v695 = vld [vmem:[%s1 + $0x14e8] sm:$0xff]
    %v696 = vld [vmem:[%s1 + $0x14f0] sm:$0xff]
    %v697 = vld [vmem:[%s1 + $0x14f8] sm:$0xff]
    %v698 = vld [vmem:[%s1 + $0x1500] sm:$0xff]
    %v699 = vld [vmem:[%s1 + $0x1508] sm:$0xff]
    %v700 = vld [vmem:[%s1 + $0x1510] sm:$0xff]
    %v701 = vld [vmem:[%s1 + $0x1518] sm:$0xff]
    %v702 = vld [vmem:[%s1 + $0x1520] sm:$0xff]
    %v703 = vld [vmem:[%s1 + $0x1528] sm:$0xff]
    %v704 = vld [vmem:[%s1 + $0x1530] sm:$0xff]
    %v705 = vld [vmem:[%s1 + $0x1538] sm:$0xff]
    %v706 = vld [vmem:[%s1 + $0x1540] sm:$0xff]
    %v707 = vld [vmem:[%s1 + $0x1548] sm:$0xff]
    %v708 = vld [vmem:[%s1 + $0x1550] sm:$0xff]
    %v709 = vld [vmem:[%s1 + $0x1558] sm:$0xff]
    %v710 = vld [vmem:[%s1 + $0x1560] sm:$0xff]
    %v711 = vld [vmem:[%s1 + $0x1568] sm:$0xff]
    %v712 = vld [vmem:[%s1 + $0x1570] sm:$0xff]
    %v713 = vld [vmem:[%s1 + $0x1578] sm:$0xff]
    %v714 = vld [vmem:[%s1 + $0x1580] sm:$0xff]
    %v715 = vld [vmem:[%s1 + $0x1588] sm:$0xff]
    %v716 = vld [vmem:[%s1 + $0x1590] sm:$0xff]
    %v717 = vld [vmem:[%s1 + $0x1598] sm:$0xff]
    %v718 = vld [vmem:[%s1 + $0x15a0] sm:$0xff]
    %v719 = vld [vmem:[%s1 + $0x15a8] sm:$0xff]
    %v720 = vld [vmem:[%s1 + $0x15b0] sm:$0xff]
    %v721 = vld [vmem:[%s1 + $0x15b8] sm:$0xff]
    %v722 = vld [vmem:[%s1 + $0x15c0] sm:$0xff]
    %v723 = vld [vmem:[%s1 + $0x15c8] sm:$0xff]
    %v724 = vld [vmem:[%s1 + $0x15d0] sm:$0xff]
    %v725 = vld [vmem:[%s1 + $0x15d8] sm:$0xff]
    %v726 = vld [vmem:[%s1 + $0x15e0] sm:$0xff]
    %v727 = vld [vmem:[%s1 + $0x15e8] sm:$0xff]
    %v728 = vld [vmem:[%s1 + $0x15f0] sm:$0xff]
    %v729 = vld [vmem:[%s1 + $0x15f8] sm:$0xff]
    %v730 = vld [vmem:[%s1 + $0x1600] sm:$0xff]
    %v731 = vld [vmem:[%s1 + $0x1608] sm:$0xff]
    %v732 = vld [vmem:[%s1 + $0x1610] sm:$0xff]
    %v733 = vld [vmem:[%s1 + $0x1618] sm:$0xff]
    %v734 = vld [vmem:[%s1 + $0x1620] sm:$0xff]
    %v735 = vld [vmem:[%s1 + $0x1628] sm:$0xff]
    %v736 = vld [vmem:[%s1 + $0x1630] sm:$0xff]
    %v737 = vld [vmem:[%s1 + $0x1638] sm:$0xff]
    %v738 = vld [vmem:[%s1 + $0x1640] sm:$0xff]
    %v739 = vld [vmem:[%s1 + $0x1648] sm:$0xff]
    %v740 = vld [vmem:[%s1 + $0x1650] sm:$0xff]
    %v741 = vld [vmem:[%s1 + $0x1658] sm:$0xff]
    %v742 = vld [vmem:[%s1 + $0x1660] sm:$0xff]
    %v743 = vld [vmem:[%s1 + $0x1668] sm:$0xff]
    %v744 = vld [vmem:[%s1 + $0x1670] sm:$0xff]
    %v745 = vld [vmem:[%s1 + $0x1678] sm:$0xff]
    %v746 = vld [vmem:[%s1 + $0x1680] sm:$0xff]
    %v747 = vld [vmem:[%s1 + $0x1688] sm:$0xff]
    %v748 = vld [vmem:[%s1 + $0x1690] sm:$0xff]
    %v749 = vld [vmem:[%s1 + $0x1698] sm:$0xff]
    %v750 = vld [vmem:[%s1 + $0x16a0] sm:$0xff]
    %v751 = vld [vmem:[%s1 + $0x16a8] sm:$0xff]
    %v752 = vld [vmem:[%s1 + $0x16b0] sm:$0xff]
    %v753 = vld [vmem:[%s1 + $0x16b8] sm:$0xff]
    %v754 = vld [vmem:[%s1 + $0x16c0] sm:$0xff]
    %v755 = vld [vmem:[%s1 + $0x16c8] sm:$0xff]
    %v756 = vld [vmem:[%s1 + $0x16d0] sm:$0xff]
    %v757 = vld [vmem:[%s1 + $0x16d8] sm:$0xff]
    %v758 = vld [vmem:[%s1 + $0x16e0] sm:$0xff]
    %v759 = vld [vmem:[%s1 + $0x16e8] sm:$0xff]
    %v760 = vld [vmem:[%s1 + $0x16f0] sm:$0xff]
    %v761 = vld [vmem:[%s1 + $0x16f8] sm:$0xff]
    %v762 = vld [vmem:[%s1 + $0x1700] sm:$0xff]
    %v763 = vld [vmem:[%s1 + $0x1708] sm:$0xff]
    %v764 = vld [vmem:[%s1 + $0x1710] sm:$0xff]
    %v765 = vld [vmem:[%s1 + $0x1718] sm:$0xff]
    %v766 = vld [vmem:[%s1 + $0x1720] sm:$0xff]
    %v767 = vld [vmem:[%s1 + $0x1728] sm:$0xff]
    %v768 = vld [vmem:[%s1 + $0x1730] sm:$0xff]
    %v769 = vld [vmem:[%s1 + $0x1738] sm:$0xff]
    %v770 = vld [vmem:[%s1 + $0x1740] sm:$0xff]
    %v771 = vld [vmem:[%s1 + $0x1748] sm:$0xff]
    %v772 = vld [vmem:[%s1 + $0x1750] sm:$0xff]
    %v773 = vld [vmem:[%s1 + $0x1758] sm:$0xff]
    %v774 = vld [vmem:[%s1 + $0x1760] sm:$0xff]
    %v775 = vld [vmem:[%s1 + $0x1768] sm:$0xff]
    %v776 = vld [vmem:[%s1 + $0x1770] sm:$0xff]
    %v777 = vld [vmem:[%s1 + $0x1778] sm:$0xff]
    %v778 = vld [vmem:[%s1 + $0x1780] sm:$0xff]
    %v779 = vld [vmem:[%s1 + $0x1788] sm:$0xff]
    %v780 = vld [vmem:[%s1 + $0x1790] sm:$0xff]
    %v781 = vld [vmem:[%s1 + $0x1798] sm:$0xff]
    %v782 = vld [vmem:[%s1 + $0x17a0] sm:$0xff]
    %v783 = vld [vmem:[%s1 + $0x17a8] sm:$0xff]
    %v784 = vld [vmem:[%s1 + $0x17b0] sm:$0xff]
    %v785 = vld [vmem:[%s1 + $0x17b8] sm:$0xff]
    %v786 = vld [vmem:[%s1 + $0x17c0] sm:$0xff]
    %v787 = vld [vmem:[%s1 + $0x17c8] sm:$0xff]
    %v788 = vld [vmem:[%s1 + $0x17d0] sm:$0xff]
    %v789 = vld [vmem:[%s1 + $0x17d8] sm:$0xff]
    %v790 = vld [vmem:[%s1 + $0x17e0] sm:$0xff]
    %v791 = vld [vmem:[%s1 + $0x17e8] sm:$0xff]
    %v792 = vld [vmem:[%s1 + $0x17f0] sm:$0xff]
    %v793 = vld [vmem:[%s1 + $0x17f8] sm:$0xff]
    %v794 = vld [vmem:[%s1 + $0x1800] sm:$0xff]
    %v795 = vld [vmem:[%s1 + $0x1808] sm:$0xff]
    %v796 = vld [vmem:[%s1 + $0x1810] sm:$0xff]
    %v797 = vld [vmem:[%s1 + $0x1818] sm:$0xff]
    %v798 = vld [vmem:[%s1 + $0x1820] sm:$0xff]
    %v799 = vld [vmem:[%s1 + $0x1828] sm:$0xff]
    %v800 = vld [vmem:[%s1 + $0x1830] sm:$0xff]
    %v801 = vld [vmem:[%s1 + $0x1838] sm:$0xff]
    %v802 = vld [vmem:[%s1 + $0x1840] sm:$0xff]
    %v803 = vld [vmem:[%s1 + $0x1848] sm:$0xff]
    %v804 = vld [vmem:[%s1 + $0x1850] sm:$0xff]
    %v805 = vld [vmem:[%s1 + $0x1858] sm:$0xff]
    %v806 = vld [vmem:[%s1 + $0x1860] sm:$0xff]
    %v807 = vld [vmem:[%s1 + $0x1868] sm:$0xff]
    %v808 = vld [vmem:[%s1 + $0x1870] sm:$0xff]
    %v809 = vld [vmem:[%s1 + $0x1878] sm:$0xff]
    %v810 = vld [vmem:[%s1 + $0x1880] sm:$0xff]
    %v811 = vld [vmem:[%s1 + $0x1888] sm:$0xff]
    %v812 = vld [vmem:[%s1 + $0x1890] sm:$0xff]
    %v813 = vld [vmem:[%s1 + $0x1898] sm:$0xff]
    %v814 = vld [vmem:[%s1 + $0x18a0] sm:$0xff]
    %v815 = vld [vmem:[%s1 + $0x18a8] sm:$0xff]
    %v816 = vld [vmem:[%s1 + $0x18b0] sm:$0xff]
    %v817 = vld [vmem:[%s1 + $0x18b8] sm:$0xff]
    %v818 = vld [vmem:[%s1 + $0x18c0] sm:$0xff]
    %v819 = vld [vmem:[%s1 + $0x18c8] sm:$0xff]
    %v820 = vld [vmem:[%s1 + $0x18d0] sm:$0xff]
    %v821 = vld [vmem:[%s1 + $0x18d8] sm:$0xff]
    %v822 = vld [vmem:[%s1 + $0x18e0] sm:$0xff]
    %v823 = vld [vmem:[%s1 + $0x18e8] sm:$0xff]
    %v824 = vld [vmem:[%s1 + $0x18f0] sm:$0xff]
    %v825 = vld [vmem:[%s1 + $0x18f8] sm:$0xff]
    %v826 = vld [vmem:[%s2] sm:$0xf]
    %v828 = vlaneseq
    %v829 = vshrl.u32 %v828, 7
    %v830 = vsub.s32 0, %v829
    %v831 = vrot.slane %v826, %v830
    %v832 = vlaneseq
    %v833 = vshrl.u32 %v832, 7
    %v834 = vsub.s32 1, %v833
    %v835 = vrot.slane %v826, %v834
    %v836 = vlaneseq
    %v837 = vshrl.u32 %v836, 7
    %v838 = vsub.s32 2, %v837
    %v839 = vrot.slane %v826, %v838
    %v840 = vlaneseq
    %v841 = vshrl.u32 %v840, 7
    %v842 = vsub.s32 3, %v841
    %v843 = vrot.slane %v826, %v842
    %v852 = vcombine.high %v22, %v22
    %v854 = vunpack.c.l.s4 1966171168
    %v855 = vunpack.c.0.s8 %v854
    %v856 = vlaneseq
    %v857 = vshrl.u32 %v856, 7
    %v858 = vsub.s32 %v855, %v857
    %v859 = vrot.slane %v22, %v858
    %v861 = vunpack.c.l.s4 1966171168
    %v862 = vunpack.c.0.s8 %v861
    %v863 = vlaneseq
    %v864 = vshrl.u32 %v863, 7
    %v865 = vsub.s32 %v862, %v864
    %v866 = vrot.slane %v852, %v865
    %v867 = vcombine.high %v859, %v859
    %v868 = vcombine.high %v866, %v866
    %v870 = vunpack.c.l.s4 1966171168
    %v871 = vunpack.c.0.s8 %v870
    %v872 = vlaneseq
    %v873 = vshrl.u32 %v872, 7
    %v874 = vsub.s32 %v871, %v873
    %v875 = vrot.slane %v859, %v874
    %v877 = vunpack.c.l.s4 1966171168
    %v878 = vunpack.c.0.s8 %v877
    %v879 = vlaneseq
    %v880 = vshrl.u32 %v879, 7
    %v881 = vsub.s32 %v878, %v880
    %v882 = vrot.slane %v866, %v881
    %v884 = vunpack.c.l.s4 1966171168
    %v885 = vunpack.c.0.s8 %v884
    %v886 = vlaneseq
    %v887 = vshrl.u32 %v886, 7
    %v888 = vsub.s32 %v885, %v887
    %v889 = vrot.slane %v867, %v888
    %v891 = vunpack.c.l.s4 1966171168
    %v892 = vunpack.c.0.s8 %v891
    %v893 = vlaneseq
    %v894 = vshrl.u32 %v893, 7
    %v895 = vsub.s32 %v892, %v894
    %v896 = vrot.slane %v868, %v895
    %v897 = vcombine.high %v875, %v875
    %v898 = vcombine.high %v882, %v882
    %v899 = vcombine.high %v889, %v889
    %v900 = vcombine.high %v896, %v896
    %v901 = vcombine.high %v23, %v23
    %v903 = vunpack.c.l.s4 1966171168
    %v904 = vunpack.c.0.s8 %v903
    %v905 = vlaneseq
    %v906 = vshrl.u32 %v905, 7
    %v907 = vsub.s32 %v904, %v906
    %v908 = vrot.slane %v23, %v907
    %v910 = vunpack.c.l.s4 1966171168
    %v911 = vunpack.c.0.s8 %v910
    %v912 = vlaneseq
    %v913 = vshrl.u32 %v912, 7
    %v914 = vsub.s32 %v911, %v913
    %v915 = vrot.slane %v901, %v914
    %v916 = vcombine.high %v908, %v908
    %v917 = vcombine.high %v915, %v915
    %v919 = vunpack.c.l.s4 1966171168
    %v920 = vunpack.c.0.s8 %v919
    %v921 = vlaneseq
    %v922 = vshrl.u32 %v921, 7
    %v923 = vsub.s32 %v920, %v922
    %v924 = vrot.slane %v908, %v923
    %v926 = vunpack.c.l.s4 1966171168
    %v927 = vunpack.c.0.s8 %v926
    %v928 = vlaneseq
    %v929 = vshrl.u32 %v928, 7
    %v930 = vsub.s32 %v927, %v929
    %v931 = vrot.slane %v915, %v930
    %v933 = vunpack.c.l.s4 1966171168
    %v934 = vunpack.c.0.s8 %v933
    %v935 = vlaneseq
    %v936 = vshrl.u32 %v935, 7
    %v937 = vsub.s32 %v934, %v936
    %v938 = vrot.slane %v916, %v937
    %v940 = vunpack.c.l.s4 1966171168
    %v941 = vunpack.c.0.s8 %v940
    %v942 = vlaneseq
    %v943 = vshrl.u32 %v942, 7
    %v944 = vsub.s32 %v941, %v943
    %v945 = vrot.slane %v917, %v944
    %v946 = vcombine.high %v924, %v924
    %v947 = vcombine.high %v931, %v931
    %v948 = vcombine.high %v938, %v938
    %v949 = vcombine.high %v945, %v945
    %v950 = vcombine.high %v24, %v24
    %v952 = vunpack.c.l.s4 1966171168
    %v953 = vunpack.c.0.s8 %v952
    %v954 = vlaneseq
    %v955 = vshrl.u32 %v954, 7
    %v956 = vsub.s32 %v953, %v955
    %v957 = vrot.slane %v24, %v956
    %v959 = vunpack.c.l.s4 1966171168
    %v960 = vunpack.c.0.s8 %v959
    %v961 = vlaneseq
    %v962 = vshrl.u32 %v961, 7
    %v963 = vsub.s32 %v960, %v962
    %v964 = vrot.slane %v950, %v963
    %v965 = vcombine.high %v957, %v957
    %v966 = vcombine.high %v964, %v964
    %v968 = vunpack.c.l.s4 1966171168
    %v969 = vunpack.c.0.s8 %v968
    %v970 = vlaneseq
    %v971 = vshrl.u32 %v970, 7
    %v972 = vsub.s32 %v969, %v971
    %v973 = vrot.slane %v957, %v972
    %v975 = vunpack.c.l.s4 1966171168
    %v976 = vunpack.c.0.s8 %v975
    %v977 = vlaneseq
    %v978 = vshrl.u32 %v977, 7
    %v979 = vsub.s32 %v976, %v978
    %v980 = vrot.slane %v964, %v979
    %v982 = vunpack.c.l.s4 1966171168
    %v983 = vunpack.c.0.s8 %v982
    %v984 = vlaneseq
    %v985 = vshrl.u32 %v984, 7
    %v986 = vsub.s32 %v983, %v985
    %v987 = vrot.slane %v965, %v986
    %v989 = vunpack.c.l.s4 1966171168
    %v990 = vunpack.c.0.s8 %v989
    %v991 = vlaneseq
    %v992 = vshrl.u32 %v991, 7
    %v993 = vsub.s32 %v990, %v992
    %v994 = vrot.slane %v966, %v993
    %v995 = vcombine.high %v973, %v973
    %v996 = vcombine.high %v980, %v980
    %v997 = vcombine.high %v987, %v987
    %v998 = vcombine.high %v994, %v994
    %v1000 = vunpack.c.l.s4 1966171168
    %v1001 = vunpack.c.0.s8 %v1000
    %v1002 = vlaneseq
    %v1003 = vshrl.u32 %v1002, 7
    %v1004 = vsub.s32 %v1001, %v1003
    %v1005 = vrot.slane %v25, %v1004
    %v1007 = vunpack.c.l.s4 1966171168
    %v1008 = vunpack.c.0.s8 %v1007
    %v1009 = vlaneseq
    %v1010 = vshrl.u32 %v1009, 7
    %v1011 = vsub.s32 %v1008, %v1010
    %v1012 = vrot.slane %v1005, %v1011
    %v1838 = vunpack.c.l.b16 %v26
    %v1839 = vunpack.c.h.b16 %v26
    %v1840 = vunpack.c.l.b16 %v27
    %v1841 = vunpack.c.h.b16 %v27
    %v1842 = vunpack.c.l.b16 %v28
    %v1843 = vunpack.c.h.b16 %v28
    %v1844 = vunpack.c.l.b16 %v29
    %v1845 = vunpack.c.h.b16 %v29
    %v1846 = vunpack.c.l.b16 %v30
    %v1847 = vunpack.c.h.b16 %v30
    %v1848 = vunpack.c.l.b16 %v31
    %v1849 = vunpack.c.h.b16 %v31
    %v1850 = vunpack.c.l.b16 %v32
    %v1851 = vunpack.c.h.b16 %v32
    %v1852 = vunpack.c.l.b16 %v33
    %v1853 = vunpack.c.h.b16 %v33
    %v1854 = vunpack.c.l.b16 %v34
    %v1855 = vunpack.c.h.b16 %v34
    %v1856 = vunpack.c.l.b16 %v35
    %v1857 = vunpack.c.h.b16 %v35
    %v1858 = vunpack.c.l.b16 %v36
    %v1859 = vunpack.c.h.b16 %v36
    %v1860 = vunpack.c.l.b16 %v37
    %v1861 = vunpack.c.h.b16 %v37
    %v1862 = vunpack.c.l.b16 %v38
    %v1863 = vunpack.c.h.b16 %v38
    %v1864 = vunpack.c.l.b16 %v39
    %v1865 = vunpack.c.h.b16 %v39
    %v1866 = vunpack.c.l.b16 %v40
    %v1867 = vunpack.c.h.b16 %v40
    %v1868 = vunpack.c.l.b16 %v41
    %v1869 = vunpack.c.h.b16 %v41
    %v1870 = vunpack.c.l.b16 %v42
    %v1871 = vunpack.c.h.b16 %v42
    %v1872 = vunpack.c.l.b16 %v43
    %v1873 = vunpack.c.h.b16 %v43
    %v1874 = vunpack.c.l.b16 %v44
    %v1875 = vunpack.c.h.b16 %v44
    %v1876 = vunpack.c.l.b16 %v45
    %v1877 = vunpack.c.h.b16 %v45
    %v1878 = vunpack.c.l.b16 %v46
    %v1879 = vunpack.c.h.b16 %v46
    %v1880 = vunpack.c.l.b16 %v47
    %v1881 = vunpack.c.h.b16 %v47
    %v1882 = vunpack.c.l.b16 %v48
    %v1883 = vunpack.c.h.b16 %v48
    %v1884 = vunpack.c.l.b16 %v49
    %v1885 = vunpack.c.h.b16 %v49
    %v1886 = vunpack.c.l.b16 %v50
    %v1887 = vunpack.c.h.b16 %v50
    %v1888 = vunpack.c.l.b16 %v51
    %v1889 = vunpack.c.h.b16 %v51
    %v1890 = vunpack.c.l.b16 %v52
    %v1891 = vunpack.c.h.b16 %v52
    %v1892 = vunpack.c.l.b16 %v53
    %v1893 = vunpack.c.h.b16 %v53
    %v1894 = vunpack.c.l.b16 %v54
    %v1895 = vunpack.c.h.b16 %v54
    %v1896 = vunpack.c.l.b16 %v55
    %v1897 = vunpack.c.h.b16 %v55
    %v1898 = vunpack.c.l.b16 %v56
    %v1899 = vunpack.c.h.b16 %v56
    %v1900 = vunpack.c.l.b16 %v57
    %v1901 = vunpack.c.h.b16 %v57
    %v1902 = vunpack.c.l.b16 %v58
    %v1903 = vunpack.c.h.b16 %v58
    %v1904 = vunpack.c.l.b16 %v59
    %v1905 = vunpack.c.h.b16 %v59
    %v1906 = vunpack.c.l.b16 %v60
    %v1907 = vunpack.c.h.b16 %v60
    %v1908 = vunpack.c.l.b16 %v61
    %v1909 = vunpack.c.h.b16 %v61
    %v1910 = vunpack.c.l.b16 %v62
    %v1911 = vunpack.c.h.b16 %v62
    %v1912 = vunpack.c.l.b16 %v63
    %v1913 = vunpack.c.h.b16 %v63
    %v1914 = vunpack.c.l.b16 %v64
    %v1915 = vunpack.c.h.b16 %v64
    %v1916 = vunpack.c.l.b16 %v65
    %v1917 = vunpack.c.h.b16 %v65
    %v1918 = vunpack.c.l.b16 %v66
    %v1919 = vunpack.c.h.b16 %v66
    %v1920 = vunpack.c.l.b16 %v67
    %v1921 = vunpack.c.h.b16 %v67
    %v1922 = vunpack.c.l.b16 %v68
    %v1923 = vunpack.c.h.b16 %v68
    %v1924 = vunpack.c.l.b16 %v69
    %v1925 = vunpack.c.h.b16 %v69
    %v1926 = vunpack.c.l.b16 %v70
    %v1927 = vunpack.c.h.b16 %v70
    %v1928 = vunpack.c.l.b16 %v71
    %v1929 = vunpack.c.h.b16 %v71
    %v1930 = vunpack.c.l.b16 %v72
    %v1931 = vunpack.c.h.b16 %v72
    %v1932 = vunpack.c.l.b16 %v73
    %v1933 = vunpack.c.h.b16 %v73
    %v1934 = vunpack.c.l.b16 %v74
    %v1935 = vunpack.c.h.b16 %v74
    %v1936 = vunpack.c.l.b16 %v75
    %v1937 = vunpack.c.h.b16 %v75
    %v1938 = vunpack.c.l.b16 %v76
    %v1939 = vunpack.c.h.b16 %v76
    %v1940 = vunpack.c.l.b16 %v77
    %v1941 = vunpack.c.h.b16 %v77
    %v1942 = vunpack.c.l.b16 %v78
    %v1943 = vunpack.c.h.b16 %v78
    %v1944 = vunpack.c.l.b16 %v79
    %v1945 = vunpack.c.h.b16 %v79
    %v1946 = vunpack.c.l.b16 %v80
    %v1947 = vunpack.c.h.b16 %v80
    %v1948 = vunpack.c.l.b16 %v81
    %v1949 = vunpack.c.h.b16 %v81
    %v1950 = vunpack.c.l.b16 %v82
    %v1951 = vunpack.c.h.b16 %v82
    %v1952 = vunpack.c.l.b16 %v83
    %v1953 = vunpack.c.h.b16 %v83
    %v1954 = vunpack.c.l.b16 %v84
    %v1955 = vunpack.c.h.b16 %v84
    %v1956 = vunpack.c.l.b16 %v85
    %v1957 = vunpack.c.h.b16 %v85
    %v1958 = vunpack.c.l.b16 %v86
    %v1959 = vunpack.c.h.b16 %v86
    %v1960 = vunpack.c.l.b16 %v87
    %v1961 = vunpack.c.h.b16 %v87
    %v1962 = vunpack.c.l.b16 %v88
    %v1963 = vunpack.c.h.b16 %v88
    %v1964 = vunpack.c.l.b16 %v89
    %v1965 = vunpack.c.h.b16 %v89
    %v1966 = vunpack.c.l.b16 %v90
    %v1967 = vunpack.c.h.b16 %v90
    %v1968 = vunpack.c.l.b16 %v91
    %v1969 = vunpack.c.h.b16 %v91
    %v1970 = vunpack.c.l.b16 %v92
    %v1971 = vunpack.c.h.b16 %v92
    %v1972 = vunpack.c.l.b16 %v93
    %v1973 = vunpack.c.h.b16 %v93
    %v1974 = vunpack.c.l.b16 %v94
    %v1975 = vunpack.c.h.b16 %v94
    %v1976 = vunpack.c.l.b16 %v95
    %v1977 = vunpack.c.h.b16 %v95
    %v1978 = vunpack.c.l.b16 %v96
    %v1979 = vunpack.c.h.b16 %v96
    %v1980 = vunpack.c.l.b16 %v97
    %v1981 = vunpack.c.h.b16 %v97
    %v1982 = vunpack.c.l.b16 %v98
    %v1983 = vunpack.c.h.b16 %v98
    %v1984 = vunpack.c.l.b16 %v99
    %v1985 = vunpack.c.h.b16 %v99
    %v1986 = vunpack.c.l.b16 %v100
    %v1987 = vunpack.c.h.b16 %v100
    %v1988 = vunpack.c.l.b16 %v101
    %v1989 = vunpack.c.h.b16 %v101
    %v1990 = vunpack.c.l.b16 %v102
    %v1991 = vunpack.c.h.b16 %v102
    %v1992 = vunpack.c.l.b16 %v103
    %v1993 = vunpack.c.h.b16 %v103
    %v1994 = vunpack.c.l.b16 %v104
    %v1995 = vunpack.c.h.b16 %v104
    %v1996 = vunpack.c.l.b16 %v105
    %v1997 = vunpack.c.h.b16 %v105
    %v1998 = vunpack.c.l.b16 %v106
    %v1999 = vunpack.c.h.b16 %v106
    %v2000 = vunpack.c.l.b16 %v107
    %v2001 = vunpack.c.h.b16 %v107
    %v2002 = vunpack.c.l.b16 %v108
    %v2003 = vunpack.c.h.b16 %v108
    %v2004 = vunpack.c.l.b16 %v109
    %v2005 = vunpack.c.h.b16 %v109
    %v2006 = vunpack.c.l.b16 %v110
    %v2007 = vunpack.c.h.b16 %v110
    %v2008 = vunpack.c.l.b16 %v111
    %v2009 = vunpack.c.h.b16 %v111
    %v2010 = vunpack.c.l.b16 %v112
    %v2011 = vunpack.c.h.b16 %v112
    %v2012 = vunpack.c.l.b16 %v113
    %v2013 = vunpack.c.h.b16 %v113
    %v2014 = vunpack.c.l.b16 %v114
    %v2015 = vunpack.c.h.b16 %v114
    %v2016 = vunpack.c.l.b16 %v115
    %v2017 = vunpack.c.h.b16 %v115
    %v2018 = vunpack.c.l.b16 %v116
    %v2019 = vunpack.c.h.b16 %v116
    %v2020 = vunpack.c.l.b16 %v117
    %v2021 = vunpack.c.h.b16 %v117
    %v2022 = vunpack.c.l.b16 %v118
    %v2023 = vunpack.c.h.b16 %v118
    %v2024 = vunpack.c.l.b16 %v119
    %v2025 = vunpack.c.h.b16 %v119
    %v2026 = vunpack.c.l.b16 %v120
    %v2027 = vunpack.c.h.b16 %v120
    %v2028 = vunpack.c.l.b16 %v121
    %v2029 = vunpack.c.h.b16 %v121
    %v2030 = vunpack.c.l.b16 %v122
    %v2031 = vunpack.c.h.b16 %v122
    %v2032 = vunpack.c.l.b16 %v123
    %v2033 = vunpack.c.h.b16 %v123
    %v2034 = vunpack.c.l.b16 %v124
    %v2035 = vunpack.c.h.b16 %v124
    %v2036 = vunpack.c.l.b16 %v125
    %v2037 = vunpack.c.h.b16 %v125
    %v2038 = vunpack.c.l.b16 %v126
    %v2039 = vunpack.c.h.b16 %v126
    %v2040 = vunpack.c.l.b16 %v127
    %v2041 = vunpack.c.h.b16 %v127
    %v2042 = vunpack.c.l.b16 %v128
    %v2043 = vunpack.c.h.b16 %v128
    %v2044 = vunpack.c.l.b16 %v129
    %v2045 = vunpack.c.h.b16 %v129
    %v2046 = vunpack.c.l.b16 %v130
    %v2047 = vunpack.c.h.b16 %v130
    %v2048 = vunpack.c.l.b16 %v131
    %v2049 = vunpack.c.h.b16 %v131
    %v2050 = vunpack.c.l.b16 %v132
    %v2051 = vunpack.c.h.b16 %v132
    %v2052 = vunpack.c.l.b16 %v133
    %v2053 = vunpack.c.h.b16 %v133
    %v2054 = vunpack.c.l.b16 %v134
    %v2055 = vunpack.c.h.b16 %v134
    %v2056 = vunpack.c.l.b16 %v135
    %v2057 = vunpack.c.h.b16 %v135
    %v2058 = vunpack.c.l.b16 %v136
    %v2059 = vunpack.c.h.b16 %v136
    %v2060 = vunpack.c.l.b16 %v137
    %v2061 = vunpack.c.h.b16 %v137
    %v2062 = vunpack.c.l.b16 %v138
    %v2063 = vunpack.c.h.b16 %v138
    %v2064 = vunpack.c.l.b16 %v139
    %v2065 = vunpack.c.h.b16 %v139
    %v2066 = vunpack.c.l.b16 %v140
    %v2067 = vunpack.c.h.b16 %v140
    %v2068 = vunpack.c.l.b16 %v141
    %v2069 = vunpack.c.h.b16 %v141
    %v2070 = vunpack.c.l.b16 %v142
    %v2071 = vunpack.c.h.b16 %v142
    %v2072 = vunpack.c.l.b16 %v143
    %v2073 = vunpack.c.h.b16 %v143
    %v2074 = vunpack.c.l.b16 %v144
    %v2075 = vunpack.c.h.b16 %v144
    %v2076 = vunpack.c.l.b16 %v145
    %v2077 = vunpack.c.h.b16 %v145
    %v2078 = vunpack.c.l.b16 %v146
    %v2079 = vunpack.c.h.b16 %v146
    %v2080 = vunpack.c.l.b16 %v147
    %v2081 = vunpack.c.h.b16 %v147
    %v2082 = vunpack.c.l.b16 %v148
    %v2083 = vunpack.c.h.b16 %v148
    %v2084 = vunpack.c.l.b16 %v149
    %v2085 = vunpack.c.h.b16 %v149
    %v2086 = vunpack.c.l.b16 %v150
    %v2087 = vunpack.c.h.b16 %v150
    %v2088 = vunpack.c.l.b16 %v151
    %v2089 = vunpack.c.h.b16 %v151
    %v2090 = vunpack.c.l.b16 %v152
    %v2091 = vunpack.c.h.b16 %v152
    %v2092 = vunpack.c.l.b16 %v153
    %v2093 = vunpack.c.h.b16 %v153
    %v2094 = vunpack.c.l.b16 %v154
    %v2095 = vunpack.c.h.b16 %v154
    %v2096 = vunpack.c.l.b16 %v155
    %v2097 = vunpack.c.h.b16 %v155
    %v2098 = vunpack.c.l.b16 %v156
    %v2099 = vunpack.c.h.b16 %v156
    %v2100 = vunpack.c.l.b16 %v157
    %v2101 = vunpack.c.h.b16 %v157
    %v2102 = vunpack.c.l.b16 %v158
    %v2103 = vunpack.c.h.b16 %v158
    %v2104 = vunpack.c.l.b16 %v159
    %v2105 = vunpack.c.h.b16 %v159
    %v2106 = vunpack.c.l.b16 %v160
    %v2107 = vunpack.c.h.b16 %v160
    %v2108 = vunpack.c.l.b16 %v161
    %v2109 = vunpack.c.h.b16 %v161
    %v2110 = vunpack.c.l.b16 %v162
    %v2111 = vunpack.c.h.b16 %v162
    %v2112 = vunpack.c.l.b16 %v163
    %v2113 = vunpack.c.h.b16 %v163
    %v2114 = vunpack.c.l.b16 %v164
    %v2115 = vunpack.c.h.b16 %v164
    %v2116 = vunpack.c.l.b16 %v165
    %v2117 = vunpack.c.h.b16 %v165
    %v2118 = vunpack.c.l.b16 %v166
    %v2119 = vunpack.c.h.b16 %v166
    %v2120 = vunpack.c.l.b16 %v167
    %v2121 = vunpack.c.h.b16 %v167
    %v2122 = vunpack.c.l.b16 %v168
    %v2123 = vunpack.c.h.b16 %v168
    %v2124 = vunpack.c.l.b16 %v169
    %v2125 = vunpack.c.h.b16 %v169
    %v2126 = vunpack.c.l.b16 %v170
    %v2127 = vunpack.c.h.b16 %v170
    %v2128 = vunpack.c.l.b16 %v171
    %v2129 = vunpack.c.h.b16 %v171
    %v2130 = vunpack.c.l.b16 %v172
    %v2131 = vunpack.c.h.b16 %v172
    %v2132 = vunpack.c.l.b16 %v173
    %v2133 = vunpack.c.h.b16 %v173
    %v2134 = vunpack.c.l.b16 %v174
    %v2135 = vunpack.c.h.b16 %v174
    %v2136 = vunpack.c.l.b16 %v175
    %v2137 = vunpack.c.h.b16 %v175
    %v2138 = vunpack.c.l.b16 %v176
    %v2139 = vunpack.c.h.b16 %v176
    %v2140 = vunpack.c.l.b16 %v177
    %v2141 = vunpack.c.h.b16 %v177
    %v2142 = vunpack.c.l.b16 %v178
    %v2143 = vunpack.c.h.b16 %v178
    %v2144 = vunpack.c.l.b16 %v179
    %v2145 = vunpack.c.h.b16 %v179
    %v2146 = vunpack.c.l.b16 %v180
    %v2147 = vunpack.c.h.b16 %v180
    %v2148 = vunpack.c.l.b16 %v181
    %v2149 = vunpack.c.h.b16 %v181
    %v2150 = vunpack.c.l.b16 %v182
    %v2151 = vunpack.c.h.b16 %v182
    %v2152 = vunpack.c.l.b16 %v183
    %v2153 = vunpack.c.h.b16 %v183
    %v2154 = vunpack.c.l.b16 %v184
    %v2155 = vunpack.c.h.b16 %v184
    %v2156 = vunpack.c.l.b16 %v185
    %v2157 = vunpack.c.h.b16 %v185
    %v2158 = vunpack.c.l.b16 %v186
    %v2159 = vunpack.c.h.b16 %v186
    %v2160 = vunpack.c.l.b16 %v187
    %v2161 = vunpack.c.h.b16 %v187
    %v2162 = vunpack.c.l.b16 %v188
    %v2163 = vunpack.c.h.b16 %v188
    %v2164 = vunpack.c.l.b16 %v189
    %v2165 = vunpack.c.h.b16 %v189
    %v2166 = vunpack.c.l.b16 %v190
    %v2167 = vunpack.c.h.b16 %v190
    %v2168 = vunpack.c.l.b16 %v191
    %v2169 = vunpack.c.h.b16 %v191
    %v2170 = vunpack.c.l.b16 %v192
    %v2171 = vunpack.c.h.b16 %v192
    %v2172 = vunpack.c.l.b16 %v193
    %v2173 = vunpack.c.h.b16 %v193
    %v2174 = vunpack.c.l.b16 %v194
    %v2175 = vunpack.c.h.b16 %v194
    %v2176 = vunpack.c.l.b16 %v195
    %v2177 = vunpack.c.h.b16 %v195
    %v2178 = vunpack.c.l.b16 %v196
    %v2179 = vunpack.c.h.b16 %v196
    %v2180 = vunpack.c.l.b16 %v197
    %v2181 = vunpack.c.h.b16 %v197
    %v2182 = vunpack.c.l.b16 %v198
    %v2183 = vunpack.c.h.b16 %v198
    %v2184 = vunpack.c.l.b16 %v199
    %v2185 = vunpack.c.h.b16 %v199
    %v2186 = vunpack.c.l.b16 %v200
    %v2187 = vunpack.c.h.b16 %v200
    %v2188 = vunpack.c.l.b16 %v201
    %v2189 = vunpack.c.h.b16 %v201
    %v2190 = vunpack.c.l.b16 %v202
    %v2191 = vunpack.c.h.b16 %v202
    %v2192 = vunpack.c.l.b16 %v203
    %v2193 = vunpack.c.h.b16 %v203
    %v2194 = vunpack.c.l.b16 %v204
    %v2195 = vunpack.c.h.b16 %v204
    %v2196 = vunpack.c.l.b16 %v205
    %v2197 = vunpack.c.h.b16 %v205
    %v2198 = vunpack.c.l.b16 %v206
    %v2199 = vunpack.c.h.b16 %v206
    %v2200 = vunpack.c.l.b16 %v207
    %v2201 = vunpack.c.h.b16 %v207
    %v2202 = vunpack.c.l.b16 %v208
    %v2203 = vunpack.c.h.b16 %v208
    %v2204 = vunpack.c.l.b16 %v209
    %v2205 = vunpack.c.h.b16 %v209
    %v2206 = vunpack.c.l.b16 %v210
    %v2207 = vunpack.c.h.b16 %v210
    %v2208 = vunpack.c.l.b16 %v211
    %v2209 = vunpack.c.h.b16 %v211
    %v2210 = vunpack.c.l.b16 %v212
    %v2211 = vunpack.c.h.b16 %v212
    %v2212 = vunpack.c.l.b16 %v213
    %v2213 = vunpack.c.h.b16 %v213
    %v2214 = vunpack.c.l.b16 %v214
    %v2215 = vunpack.c.h.b16 %v214
    %v2216 = vunpack.c.l.b16 %v215
    %v2217 = vunpack.c.h.b16 %v215
    %v2218 = vunpack.c.l.b16 %v216
    %v2219 = vunpack.c.h.b16 %v216
    %v2220 = vunpack.c.l.b16 %v217
    %v2221 = vunpack.c.h.b16 %v217
    %v2222 = vunpack.c.l.b16 %v218
    %v2223 = vunpack.c.h.b16 %v218
    %v2224 = vunpack.c.l.b16 %v219
    %v2225 = vunpack.c.h.b16 %v219
    %v2226 = vunpack.c.l.b16 %v220
    %v2227 = vunpack.c.h.b16 %v220
    %v2228 = vunpack.c.l.b16 %v221
    %v2229 = vunpack.c.h.b16 %v221
    %v2230 = vunpack.c.l.b16 %v222
    %v2231 = vunpack.c.h.b16 %v222
    %v2232 = vunpack.c.l.b16 %v223
    %v2233 = vunpack.c.h.b16 %v223
    %v2234 = vunpack.c.l.b16 %v224
    %v2235 = vunpack.c.h.b16 %v224
    %v2236 = vunpack.c.l.b16 %v225
    %v2237 = vunpack.c.h.b16 %v225
    %v2238 = vunpack.c.l.b16 %v226
    %v2239 = vunpack.c.h.b16 %v226
    %v2240 = vunpack.c.l.b16 %v227
    %v2241 = vunpack.c.h.b16 %v227
    %v2242 = vunpack.c.l.b16 %v228
    %v2243 = vunpack.c.h.b16 %v228
    %v2244 = vunpack.c.l.b16 %v229
    %v2245 = vunpack.c.h.b16 %v229
    %v2246 = vunpack.c.l.b16 %v230
    %v2247 = vunpack.c.h.b16 %v230
    %v2248 = vunpack.c.l.b16 %v231
    %v2249 = vunpack.c.h.b16 %v231
    %v2250 = vunpack.c.l.b16 %v232
    %v2251 = vunpack.c.h.b16 %v232
    %v2252 = vunpack.c.l.b16 %v233
    %v2253 = vunpack.c.h.b16 %v233
    %v2254 = vunpack.c.l.b16 %v234
    %v2255 = vunpack.c.h.b16 %v234
    %v2256 = vunpack.c.l.b16 %v235
    %v2257 = vunpack.c.h.b16 %v235
    %v2258 = vunpack.c.l.b16 %v236
    %v2259 = vunpack.c.h.b16 %v236
    %v2260 = vunpack.c.l.b16 %v237
    %v2261 = vunpack.c.h.b16 %v237
    %v2262 = vunpack.c.l.b16 %v238
    %v2263 = vunpack.c.h.b16 %v238
    %v2264 = vunpack.c.l.b16 %v239
    %v2265 = vunpack.c.h.b16 %v239
    %v2266 = vunpack.c.l.b16 %v240
    %v2267 = vunpack.c.h.b16 %v240
    %v2268 = vunpack.c.l.b16 %v241
    %v2269 = vunpack.c.h.b16 %v241
    %v2270 = vunpack.c.l.b16 %v242
    %v2271 = vunpack.c.h.b16 %v242
    %v2272 = vunpack.c.l.b16 %v243
    %v2273 = vunpack.c.h.b16 %v243
    %v2274 = vunpack.c.l.b16 %v244
    %v2275 = vunpack.c.h.b16 %v244
    %v2276 = vunpack.c.l.b16 %v245
    %v2277 = vunpack.c.h.b16 %v245
    %v2278 = vunpack.c.l.b16 %v246
    %v2279 = vunpack.c.h.b16 %v246
    %v2280 = vunpack.c.l.b16 %v247
    %v2281 = vunpack.c.h.b16 %v247
    %v2282 = vunpack.c.l.b16 %v248
    %v2283 = vunpack.c.h.b16 %v248
    %v2284 = vunpack.c.l.b16 %v249
    %v2285 = vunpack.c.h.b16 %v249
    %v2286 = vunpack.c.l.b16 %v250
    %v2287 = vunpack.c.h.b16 %v250
    %v2288 = vunpack.c.l.b16 %v251
    %v2289 = vunpack.c.h.b16 %v251
    %v2290 = vunpack.c.l.b16 %v252
    %v2291 = vunpack.c.h.b16 %v252
    %v2292 = vunpack.c.l.b16 %v253
    %v2293 = vunpack.c.h.b16 %v253
    %v2294 = vunpack.c.l.b16 %v254
    %v2295 = vunpack.c.h.b16 %v254
    %v2296 = vunpack.c.l.b16 %v255
    %v2297 = vunpack.c.h.b16 %v255
    %v2298 = vunpack.c.l.b16 %v256
    %v2299 = vunpack.c.h.b16 %v256
    %v2300 = vunpack.c.l.b16 %v257
    %v2301 = vunpack.c.h.b16 %v257
    %v2302 = vunpack.c.l.b16 %v258
    %v2303 = vunpack.c.h.b16 %v258
    %v2304 = vunpack.c.l.b16 %v259
    %v2305 = vunpack.c.h.b16 %v259
    %v2306 = vunpack.c.l.b16 %v260
    %v2307 = vunpack.c.h.b16 %v260
    %v2308 = vunpack.c.l.b16 %v261
    %v2309 = vunpack.c.h.b16 %v261
    %v2310 = vunpack.c.l.b16 %v262
    %v2311 = vunpack.c.h.b16 %v262
    %v2312 = vunpack.c.l.b16 %v263
    %v2313 = vunpack.c.h.b16 %v263
    %v2314 = vunpack.c.l.b16 %v264
    %v2315 = vunpack.c.h.b16 %v264
    %v2316 = vunpack.c.l.b16 %v265
    %v2317 = vunpack.c.h.b16 %v265
    %v2318 = vunpack.c.l.b16 %v266
    %v2319 = vunpack.c.h.b16 %v266
    %v2320 = vunpack.c.l.b16 %v267
    %v2321 = vunpack.c.h.b16 %v267
    %v2322 = vunpack.c.l.b16 %v268
    %v2323 = vunpack.c.h.b16 %v268
    %v2324 = vunpack.c.l.b16 %v269
    %v2325 = vunpack.c.h.b16 %v269
    %v2326 = vunpack.c.l.b16 %v270
    %v2327 = vunpack.c.h.b16 %v270
    %v2328 = vunpack.c.l.b16 %v271
    %v2329 = vunpack.c.h.b16 %v271
    %v2330 = vunpack.c.l.b16 %v272
    %v2331 = vunpack.c.h.b16 %v272
    %v2332 = vunpack.c.l.b16 %v273
    %v2333 = vunpack.c.h.b16 %v273
    %v2334 = vunpack.c.l.b16 %v274
    %v2335 = vunpack.c.h.b16 %v274
    %v2336 = vunpack.c.l.b16 %v275
    %v2337 = vunpack.c.h.b16 %v275
    %v2338 = vunpack.c.l.b16 %v276
    %v2339 = vunpack.c.h.b16 %v276
    %v2340 = vunpack.c.l.b16 %v277
    %v2341 = vunpack.c.h.b16 %v277
    %v2342 = vunpack.c.l.b16 %v278
    %v2343 = vunpack.c.h.b16 %v278
    %v2344 = vunpack.c.l.b16 %v279
    %v2345 = vunpack.c.h.b16 %v279
    %v2346 = vunpack.c.l.b16 %v280
    %v2347 = vunpack.c.h.b16 %v280
    %v2348 = vunpack.c.l.b16 %v281
    %v2349 = vunpack.c.h.b16 %v281
    %v2350 = vunpack.c.l.b16 %v282
    %v2351 = vunpack.c.h.b16 %v282
    %v2352 = vunpack.c.l.b16 %v283
    %v2353 = vunpack.c.h.b16 %v283
    %v2354 = vunpack.c.l.b16 %v284
    %v2355 = vunpack.c.h.b16 %v284
    %v2356 = vunpack.c.l.b16 %v285
    %v2357 = vunpack.c.h.b16 %v285
    %v2358 = vunpack.c.l.b16 %v286
    %v2359 = vunpack.c.h.b16 %v286
    %v2360 = vunpack.c.l.b16 %v287
    %v2361 = vunpack.c.h.b16 %v287
    %v2362 = vunpack.c.l.b16 %v288
    %v2363 = vunpack.c.h.b16 %v288
    %v2364 = vunpack.c.l.b16 %v289
    %v2365 = vunpack.c.h.b16 %v289
    %v2366 = vunpack.c.l.b16 %v290
    %v2367 = vunpack.c.h.b16 %v290
    %v2368 = vunpack.c.l.b16 %v291
    %v2369 = vunpack.c.h.b16 %v291
    %v2370 = vunpack.c.l.b16 %v292
    %v2371 = vunpack.c.h.b16 %v292
    %v2372 = vunpack.c.l.b16 %v293
    %v2373 = vunpack.c.h.b16 %v293
    %v2374 = vunpack.c.l.b16 %v294
    %v2375 = vunpack.c.h.b16 %v294
    %v2376 = vunpack.c.l.b16 %v295
    %v2377 = vunpack.c.h.b16 %v295
    %v2378 = vunpack.c.l.b16 %v296
    %v2379 = vunpack.c.h.b16 %v296
    %v2380 = vunpack.c.l.b16 %v297
    %v2381 = vunpack.c.h.b16 %v297
    %v2382 = vunpack.c.l.b16 %v298
    %v2383 = vunpack.c.h.b16 %v298
    %v2384 = vunpack.c.l.b16 %v299
    %v2385 = vunpack.c.h.b16 %v299
    %v2386 = vunpack.c.l.b16 %v300
    %v2387 = vunpack.c.h.b16 %v300
    %v2388 = vunpack.c.l.b16 %v301
    %v2389 = vunpack.c.h.b16 %v301
    %v2390 = vunpack.c.l.b16 %v302
    %v2391 = vunpack.c.h.b16 %v302
    %v2392 = vunpack.c.l.b16 %v303
    %v2393 = vunpack.c.h.b16 %v303
    %v2394 = vunpack.c.l.b16 %v304
    %v2395 = vunpack.c.h.b16 %v304
    %v2396 = vunpack.c.l.b16 %v305
    %v2397 = vunpack.c.h.b16 %v305
    %v2398 = vunpack.c.l.b16 %v306
    %v2399 = vunpack.c.h.b16 %v306
    %v2400 = vunpack.c.l.b16 %v307
    %v2401 = vunpack.c.h.b16 %v307
    %v2402 = vunpack.c.l.b16 %v308
    %v2403 = vunpack.c.h.b16 %v308
    %v2404 = vunpack.c.l.b16 %v309
    %v2405 = vunpack.c.h.b16 %v309
    %v2406 = vunpack.c.l.b16 %v310
    %v2407 = vunpack.c.h.b16 %v310
    %v2408 = vunpack.c.l.b16 %v311
    %v2409 = vunpack.c.h.b16 %v311
    %v2410 = vunpack.c.l.b16 %v312
    %v2411 = vunpack.c.h.b16 %v312
    %v2412 = vunpack.c.l.b16 %v313
    %v2413 = vunpack.c.h.b16 %v313
    %v2414 = vunpack.c.l.b16 %v314
    %v2415 = vunpack.c.h.b16 %v314
    %v2416 = vunpack.c.l.b16 %v315
    %v2417 = vunpack.c.h.b16 %v315
    %v2418 = vunpack.c.l.b16 %v316
    %v2419 = vunpack.c.h.b16 %v316
    %v2420 = vunpack.c.l.b16 %v317
    %v2421 = vunpack.c.h.b16 %v317
    %v2422 = vunpack.c.l.b16 %v318
    %v2423 = vunpack.c.h.b16 %v318
    %v2424 = vunpack.c.l.b16 %v319
    %v2425 = vunpack.c.h.b16 %v319
    %v2426 = vunpack.c.l.b16 %v320
    %v2427 = vunpack.c.h.b16 %v320
    %v2428 = vunpack.c.l.b16 %v321
    %v2429 = vunpack.c.h.b16 %v321
    %v2430 = vunpack.c.l.b16 %v322
    %v2431 = vunpack.c.h.b16 %v322
    %v2432 = vunpack.c.l.b16 %v323
    %v2433 = vunpack.c.h.b16 %v323
    %v2434 = vunpack.c.l.b16 %v324
    %v2435 = vunpack.c.h.b16 %v324
    %v2436 = vunpack.c.l.b16 %v325
    %v2437 = vunpack.c.h.b16 %v325
    %v2438 = vunpack.c.l.b16 %v326
    %v2439 = vunpack.c.h.b16 %v326
    %v2440 = vunpack.c.l.b16 %v327
    %v2441 = vunpack.c.h.b16 %v327
    %v2442 = vunpack.c.l.b16 %v328
    %v2443 = vunpack.c.h.b16 %v328
    %v2444 = vunpack.c.l.b16 %v329
    %v2445 = vunpack.c.h.b16 %v329
    %v2446 = vunpack.c.l.b16 %v330
    %v2447 = vunpack.c.h.b16 %v330
    %v2448 = vunpack.c.l.b16 %v331
    %v2449 = vunpack.c.h.b16 %v331
    %v2450 = vunpack.c.l.b16 %v332
    %v2451 = vunpack.c.h.b16 %v332
    %v2452 = vunpack.c.l.b16 %v333
    %v2453 = vunpack.c.h.b16 %v333
    %v2454 = vunpack.c.l.b16 %v334
    %v2455 = vunpack.c.h.b16 %v334
    %v2456 = vunpack.c.l.b16 %v335
    %v2457 = vunpack.c.h.b16 %v335
    %v2458 = vunpack.c.l.b16 %v336
    %v2459 = vunpack.c.h.b16 %v336
    %v2460 = vunpack.c.l.b16 %v337
    %v2461 = vunpack.c.h.b16 %v337
    %v2462 = vunpack.c.l.b16 %v338
    %v2463 = vunpack.c.h.b16 %v338
    %v2464 = vunpack.c.l.b16 %v339
    %v2465 = vunpack.c.h.b16 %v339
    %v2466 = vunpack.c.l.b16 %v340
    %v2467 = vunpack.c.h.b16 %v340
    %v2468 = vunpack.c.l.b16 %v341
    %v2469 = vunpack.c.h.b16 %v341
    %v2470 = vunpack.c.l.b16 %v342
    %v2471 = vunpack.c.h.b16 %v342
    %v2472 = vunpack.c.l.b16 %v343
    %v2473 = vunpack.c.h.b16 %v343
    %v2474 = vunpack.c.l.b16 %v344
    %v2475 = vunpack.c.h.b16 %v344
    %v2476 = vunpack.c.l.b16 %v345
    %v2477 = vunpack.c.h.b16 %v345
    %v2478 = vunpack.c.l.b16 %v346
    %v2479 = vunpack.c.h.b16 %v346
    %v2480 = vunpack.c.l.b16 %v347
    %v2481 = vunpack.c.h.b16 %v347
    %v2482 = vunpack.c.l.b16 %v348
    %v2483 = vunpack.c.h.b16 %v348
    %v2484 = vunpack.c.l.b16 %v349
    %v2485 = vunpack.c.h.b16 %v349
    %v2486 = vunpack.c.l.b16 %v350
    %v2487 = vunpack.c.h.b16 %v350
    %v2488 = vunpack.c.l.b16 %v351
    %v2489 = vunpack.c.h.b16 %v351
    %v2490 = vunpack.c.l.b16 %v352
    %v2491 = vunpack.c.h.b16 %v352
    %v2492 = vunpack.c.l.b16 %v353
    %v2493 = vunpack.c.h.b16 %v353
    %v2494 = vunpack.c.l.b16 %v354
    %v2495 = vunpack.c.h.b16 %v354
    %v2496 = vunpack.c.l.b16 %v355
    %v2497 = vunpack.c.h.b16 %v355
    %v2498 = vunpack.c.l.b16 %v356
    %v2499 = vunpack.c.h.b16 %v356
    %v2500 = vunpack.c.l.b16 %v357
    %v2501 = vunpack.c.h.b16 %v357
    %v2502 = vunpack.c.l.b16 %v358
    %v2503 = vunpack.c.h.b16 %v358
    %v2504 = vunpack.c.l.b16 %v359
    %v2505 = vunpack.c.h.b16 %v359
    %v2506 = vunpack.c.l.b16 %v360
    %v2507 = vunpack.c.h.b16 %v360
    %v2508 = vunpack.c.l.b16 %v361
    %v2509 = vunpack.c.h.b16 %v361
    %v2510 = vunpack.c.l.b16 %v362
    %v2511 = vunpack.c.h.b16 %v362
    %v2512 = vunpack.c.l.b16 %v363
    %v2513 = vunpack.c.h.b16 %v363
    %v2514 = vunpack.c.l.b16 %v364
    %v2515 = vunpack.c.h.b16 %v364
    %v2516 = vunpack.c.l.b16 %v365
    %v2517 = vunpack.c.h.b16 %v365
    %v2518 = vunpack.c.l.b16 %v366
    %v2519 = vunpack.c.h.b16 %v366
    %v2520 = vunpack.c.l.b16 %v367
    %v2521 = vunpack.c.h.b16 %v367
    %v2522 = vunpack.c.l.b16 %v368
    %v2523 = vunpack.c.h.b16 %v368
    %v2524 = vunpack.c.l.b16 %v369
    %v2525 = vunpack.c.h.b16 %v369
    %v2526 = vunpack.c.l.b16 %v370
    %v2527 = vunpack.c.h.b16 %v370
    %v2528 = vunpack.c.l.b16 %v371
    %v2529 = vunpack.c.h.b16 %v371
    %v2530 = vunpack.c.l.b16 %v372
    %v2531 = vunpack.c.h.b16 %v372
    %v2532 = vunpack.c.l.b16 %v373
    %v2533 = vunpack.c.h.b16 %v373
    %v2534 = vunpack.c.l.b16 %v374
    %v2535 = vunpack.c.h.b16 %v374
    %v2536 = vunpack.c.l.b16 %v375
    %v2537 = vunpack.c.h.b16 %v375
    %v2538 = vunpack.c.l.b16 %v376
    %v2539 = vunpack.c.h.b16 %v376
    %v2540 = vunpack.c.l.b16 %v377
    %v2541 = vunpack.c.h.b16 %v377
    %v2542 = vunpack.c.l.b16 %v378
    %v2543 = vunpack.c.h.b16 %v378
    %v2544 = vunpack.c.l.b16 %v379
    %v2545 = vunpack.c.h.b16 %v379
    %v2546 = vunpack.c.l.b16 %v380
    %v2547 = vunpack.c.h.b16 %v380
    %v2548 = vunpack.c.l.b16 %v381
    %v2549 = vunpack.c.h.b16 %v381
    %v2550 = vunpack.c.l.b16 %v382
    %v2551 = vunpack.c.h.b16 %v382
    %v2552 = vunpack.c.l.b16 %v383
    %v2553 = vunpack.c.h.b16 %v383
    %v2554 = vunpack.c.l.b16 %v384
    %v2555 = vunpack.c.h.b16 %v384
    %v2556 = vunpack.c.l.b16 %v385
    %v2557 = vunpack.c.h.b16 %v385
    %v2558 = vunpack.c.l.b16 %v386
    %v2559 = vunpack.c.h.b16 %v386
    %v2560 = vunpack.c.l.b16 %v387
    %v2561 = vunpack.c.h.b16 %v387
    %v2562 = vunpack.c.l.b16 %v388
    %v2563 = vunpack.c.h.b16 %v388
    %v2564 = vunpack.c.l.b16 %v389
    %v2565 = vunpack.c.h.b16 %v389
    %v2566 = vunpack.c.l.b16 %v390
    %v2567 = vunpack.c.h.b16 %v390
    %v2568 = vunpack.c.l.b16 %v391
    %v2569 = vunpack.c.h.b16 %v391
    %v2570 = vunpack.c.l.b16 %v392
    %v2571 = vunpack.c.h.b16 %v392
    %v2572 = vunpack.c.l.b16 %v393
    %v2573 = vunpack.c.h.b16 %v393
    %v2574 = vunpack.c.l.b16 %v394
    %v2575 = vunpack.c.h.b16 %v394
    %v2576 = vunpack.c.l.b16 %v395
    %v2577 = vunpack.c.h.b16 %v395
    %v2578 = vunpack.c.l.b16 %v396
    %v2579 = vunpack.c.h.b16 %v396
    %v2580 = vunpack.c.l.b16 %v397
    %v2581 = vunpack.c.h.b16 %v397
    %v2582 = vunpack.c.l.b16 %v398
    %v2583 = vunpack.c.h.b16 %v398
    %v2584 = vunpack.c.l.b16 %v399
    %v2585 = vunpack.c.h.b16 %v399
    %v2586 = vunpack.c.l.b16 %v400
    %v2587 = vunpack.c.h.b16 %v400
    %v2588 = vunpack.c.l.b16 %v401
    %v2589 = vunpack.c.h.b16 %v401
    %v2590 = vunpack.c.l.b16 %v402
    %v2591 = vunpack.c.h.b16 %v402
    %v2592 = vunpack.c.l.b16 %v403
    %v2593 = vunpack.c.h.b16 %v403
    %v2594 = vunpack.c.l.b16 %v404
    %v2595 = vunpack.c.h.b16 %v404
    %v2596 = vunpack.c.l.b16 %v405
    %v2597 = vunpack.c.h.b16 %v405
    %v2598 = vunpack.c.l.b16 %v406
    %v2599 = vunpack.c.h.b16 %v406
    %v2600 = vunpack.c.l.b16 %v407
    %v2601 = vunpack.c.h.b16 %v407
    %v2602 = vunpack.c.l.b16 %v408
    %v2603 = vunpack.c.h.b16 %v408
    %v2604 = vunpack.c.l.b16 %v409
    %v2605 = vunpack.c.h.b16 %v409
    %v2606 = vunpack.c.l.b16 %v410
    %v2607 = vunpack.c.h.b16 %v410
    %v2608 = vunpack.c.l.b16 %v411
    %v2609 = vunpack.c.h.b16 %v411
    %v2610 = vunpack.c.l.b16 %v412
    %v2611 = vunpack.c.h.b16 %v412
    %v2612 = vunpack.c.l.b16 %v413
    %v2613 = vunpack.c.h.b16 %v413
    %v2614 = vunpack.c.l.b16 %v414
    %v2615 = vunpack.c.h.b16 %v414
    %v2616 = vunpack.c.l.b16 %v415
    %v2617 = vunpack.c.h.b16 %v415
    %v2618 = vunpack.c.l.b16 %v416
    %v2619 = vunpack.c.h.b16 %v416
    %v2620 = vunpack.c.l.b16 %v417
    %v2621 = vunpack.c.h.b16 %v417
    %v2622 = vunpack.c.l.b16 %v418
    %v2623 = vunpack.c.h.b16 %v418
    %v2624 = vunpack.c.l.b16 %v419
    %v2625 = vunpack.c.h.b16 %v419
    %v2626 = vunpack.c.l.b16 %v420
    %v2627 = vunpack.c.h.b16 %v420
    %v2628 = vunpack.c.l.b16 %v421
    %v2629 = vunpack.c.h.b16 %v421
    %v2630 = vunpack.c.l.b16 %v422
    %v2631 = vunpack.c.h.b16 %v422
    %v2632 = vunpack.c.l.b16 %v423
    %v2633 = vunpack.c.h.b16 %v423
    %v2634 = vunpack.c.l.b16 %v424
    %v2635 = vunpack.c.h.b16 %v424
    %v2636 = vunpack.c.l.b16 %v425
    %v2637 = vunpack.c.h.b16 %v425
    %v2638 = vunpack.c.l.b16 %v426
    %v2639 = vunpack.c.h.b16 %v426
    %v2640 = vunpack.c.l.b16 %v427
    %v2641 = vunpack.c.h.b16 %v427
    %v2642 = vunpack.c.l.b16 %v428
    %v2643 = vunpack.c.h.b16 %v428
    %v2644 = vunpack.c.l.b16 %v429
    %v2645 = vunpack.c.h.b16 %v429
    %v2646 = vunpack.c.l.b16 %v430
    %v2647 = vunpack.c.h.b16 %v430
    %v2648 = vunpack.c.l.b16 %v431
    %v2649 = vunpack.c.h.b16 %v431
    %v2650 = vunpack.c.l.b16 %v432
    %v2651 = vunpack.c.h.b16 %v432
    %v2652 = vunpack.c.l.b16 %v433
    %v2653 = vunpack.c.h.b16 %v433
    %v2654 = vunpack.c.l.b16 %v434
    %v2655 = vunpack.c.h.b16 %v434
    %v2656 = vunpack.c.l.b16 %v435
    %v2657 = vunpack.c.h.b16 %v435
    %v2658 = vunpack.c.l.b16 %v436
    %v2659 = vunpack.c.h.b16 %v436
    %v2660 = vunpack.c.l.b16 %v437
    %v2661 = vunpack.c.h.b16 %v437
    %v2662 = vunpack.c.l.b16 %v438
    %v2663 = vunpack.c.h.b16 %v438
    %v2664 = vunpack.c.l.b16 %v439
    %v2665 = vunpack.c.h.b16 %v439
    %v2666 = vunpack.c.l.b16 %v440
    %v2667 = vunpack.c.h.b16 %v440
    %v2668 = vunpack.c.l.b16 %v441
    %v2669 = vunpack.c.h.b16 %v441
    %v2670 = vunpack.c.l.b16 %v442
    %v2671 = vunpack.c.h.b16 %v442
    %v2672 = vunpack.c.l.b16 %v443
    %v2673 = vunpack.c.h.b16 %v443
    %v2674 = vunpack.c.l.b16 %v444
    %v2675 = vunpack.c.h.b16 %v444
    %v2676 = vunpack.c.l.b16 %v445
    %v2677 = vunpack.c.h.b16 %v445
    %v2678 = vunpack.c.l.b16 %v446
    %v2679 = vunpack.c.h.b16 %v446
    %v2680 = vunpack.c.l.b16 %v447
    %v2681 = vunpack.c.h.b16 %v447
    %v2682 = vunpack.c.l.b16 %v448
    %v2683 = vunpack.c.h.b16 %v448
    %v2684 = vunpack.c.l.b16 %v449
    %v2685 = vunpack.c.h.b16 %v449
    %v2686 = vunpack.c.l.b16 %v450
    %v2687 = vunpack.c.h.b16 %v450
    %v2688 = vunpack.c.l.b16 %v451
    %v2689 = vunpack.c.h.b16 %v451
    %v2690 = vunpack.c.l.b16 %v452
    %v2691 = vunpack.c.h.b16 %v452
    %v2692 = vunpack.c.l.b16 %v453
    %v2693 = vunpack.c.h.b16 %v453
    %v2694 = vunpack.c.l.b16 %v454
    %v2695 = vunpack.c.h.b16 %v454
    %v2696 = vunpack.c.l.b16 %v455
    %v2697 = vunpack.c.h.b16 %v455
    %v2698 = vunpack.c.l.b16 %v456
    %v2699 = vunpack.c.h.b16 %v456
    %v2700 = vunpack.c.l.b16 %v457
    %v2701 = vunpack.c.h.b16 %v457
    %v2702 = vunpack.c.l.b16 %v458
    %v2703 = vunpack.c.h.b16 %v458
    %v2704 = vunpack.c.l.b16 %v459
    %v2705 = vunpack.c.h.b16 %v459
    %v2706 = vunpack.c.l.b16 %v460
    %v2707 = vunpack.c.h.b16 %v460
    %v2708 = vunpack.c.l.b16 %v461
    %v2709 = vunpack.c.h.b16 %v461
    %v2710 = vunpack.c.l.b16 %v462
    %v2711 = vunpack.c.h.b16 %v462
    %v2712 = vunpack.c.l.b16 %v463
    %v2713 = vunpack.c.h.b16 %v463
    %v2714 = vunpack.c.l.b16 %v464
    %v2715 = vunpack.c.h.b16 %v464
    %v2716 = vunpack.c.l.b16 %v465
    %v2717 = vunpack.c.h.b16 %v465
    %v2718 = vunpack.c.l.b16 %v466
    %v2719 = vunpack.c.h.b16 %v466
    %v2720 = vunpack.c.l.b16 %v467
    %v2721 = vunpack.c.h.b16 %v467
    %v2722 = vunpack.c.l.b16 %v468
    %v2723 = vunpack.c.h.b16 %v468
    %v2724 = vunpack.c.l.b16 %v469
    %v2725 = vunpack.c.h.b16 %v469
    %v2726 = vunpack.c.l.b16 %v470
    %v2727 = vunpack.c.h.b16 %v470
    %v2728 = vunpack.c.l.b16 %v471
    %v2729 = vunpack.c.h.b16 %v471
    %v2730 = vunpack.c.l.b16 %v472
    %v2731 = vunpack.c.h.b16 %v472
    %v2732 = vunpack.c.l.b16 %v473
    %v2733 = vunpack.c.h.b16 %v473
    %v2734 = vunpack.c.l.b16 %v474
    %v2735 = vunpack.c.h.b16 %v474
    %v2736 = vunpack.c.l.b16 %v475
    %v2737 = vunpack.c.h.b16 %v475
    %v2738 = vunpack.c.l.b16 %v476
    %v2739 = vunpack.c.h.b16 %v476
    %v2740 = vunpack.c.l.b16 %v477
    %v2741 = vunpack.c.h.b16 %v477
    %v2742 = vunpack.c.l.b16 %v478
    %v2743 = vunpack.c.h.b16 %v478
    %v2744 = vunpack.c.l.b16 %v479
    %v2745 = vunpack.c.h.b16 %v479
    %v2746 = vunpack.c.l.b16 %v480
    %v2747 = vunpack.c.h.b16 %v480
    %v2748 = vunpack.c.l.b16 %v481
    %v2749 = vunpack.c.h.b16 %v481
    %v2750 = vunpack.c.l.b16 %v482
    %v2751 = vunpack.c.h.b16 %v482
    %v2752 = vunpack.c.l.b16 %v483
    %v2753 = vunpack.c.h.b16 %v483
    %v2754 = vunpack.c.l.b16 %v484
    %v2755 = vunpack.c.h.b16 %v484
    %v2756 = vunpack.c.l.b16 %v485
    %v2757 = vunpack.c.h.b16 %v485
    %v2758 = vunpack.c.l.b16 %v486
    %v2759 = vunpack.c.h.b16 %v486
    %v2760 = vunpack.c.l.b16 %v487
    %v2761 = vunpack.c.h.b16 %v487
    %v2762 = vunpack.c.l.b16 %v488
    %v2763 = vunpack.c.h.b16 %v488
    %v2764 = vunpack.c.l.b16 %v489
    %v2765 = vunpack.c.h.b16 %v489
    %v2766 = vunpack.c.l.b16 %v490
    %v2767 = vunpack.c.h.b16 %v490
    %v2768 = vunpack.c.l.b16 %v491
    %v2769 = vunpack.c.h.b16 %v491
    %v2770 = vunpack.c.l.b16 %v492
    %v2771 = vunpack.c.h.b16 %v492
    %v2772 = vunpack.c.l.b16 %v493
    %v2773 = vunpack.c.h.b16 %v493
    %v2774 = vunpack.c.l.b16 %v494
    %v2775 = vunpack.c.h.b16 %v494
    %v2776 = vunpack.c.l.b16 %v495
    %v2777 = vunpack.c.h.b16 %v495
    %v2778 = vunpack.c.l.b16 %v496
    %v2779 = vunpack.c.h.b16 %v496
    %v2780 = vunpack.c.l.b16 %v497
    %v2781 = vunpack.c.h.b16 %v497
    %v2782 = vunpack.c.l.b16 %v498
    %v2783 = vunpack.c.h.b16 %v498
    %v2784 = vunpack.c.l.b16 %v499
    %v2785 = vunpack.c.h.b16 %v499
    %v2786 = vunpack.c.l.b16 %v500
    %v2787 = vunpack.c.h.b16 %v500
    %v2788 = vunpack.c.l.b16 %v501
    %v2789 = vunpack.c.h.b16 %v501
    %v2790 = vunpack.c.l.b16 %v502
    %v2791 = vunpack.c.h.b16 %v502
    %v2792 = vunpack.c.l.b16 %v503
    %v2793 = vunpack.c.h.b16 %v503
    %v2794 = vunpack.c.l.b16 %v504
    %v2795 = vunpack.c.h.b16 %v504
    %v2796 = vunpack.c.l.b16 %v505
    %v2797 = vunpack.c.h.b16 %v505
    %v2798 = vunpack.c.l.b16 %v506
    %v2799 = vunpack.c.h.b16 %v506
    %v2800 = vunpack.c.l.b16 %v507
    %v2801 = vunpack.c.h.b16 %v507
    %v2802 = vunpack.c.l.b16 %v508
    %v2803 = vunpack.c.h.b16 %v508
    %v2804 = vunpack.c.l.b16 %v509
    %v2805 = vunpack.c.h.b16 %v509
    %v2806 = vunpack.c.l.b16 %v510
    %v2807 = vunpack.c.h.b16 %v510
    %v2808 = vunpack.c.l.b16 %v511
    %v2809 = vunpack.c.h.b16 %v511
    %v2810 = vunpack.c.l.b16 %v512
    %v2811 = vunpack.c.h.b16 %v512
    %v2812 = vunpack.c.l.b16 %v513
    %v2813 = vunpack.c.h.b16 %v513
    %v2814 = vunpack.c.l.b16 %v514
    %v2815 = vunpack.c.h.b16 %v514
    %v2816 = vunpack.c.l.b16 %v515
    %v2817 = vunpack.c.h.b16 %v515
    %v2818 = vunpack.c.l.b16 %v516
    %v2819 = vunpack.c.h.b16 %v516
    %v2820 = vunpack.c.l.b16 %v517
    %v2821 = vunpack.c.h.b16 %v517
    %v2822 = vunpack.c.l.b16 %v518
    %v2823 = vunpack.c.h.b16 %v518
    %v2824 = vunpack.c.l.b16 %v519
    %v2825 = vunpack.c.h.b16 %v519
    %v2826 = vunpack.c.l.b16 %v520
    %v2827 = vunpack.c.h.b16 %v520
    %v2828 = vunpack.c.l.b16 %v521
    %v2829 = vunpack.c.h.b16 %v521
    %v2830 = vunpack.c.l.b16 %v522
    %v2831 = vunpack.c.h.b16 %v522
    %v2832 = vunpack.c.l.b16 %v523
    %v2833 = vunpack.c.h.b16 %v523
    %v2834 = vunpack.c.l.b16 %v524
    %v2835 = vunpack.c.h.b16 %v524
    %v2836 = vunpack.c.l.b16 %v525
    %v2837 = vunpack.c.h.b16 %v525
    %v2838 = vunpack.c.l.b16 %v526
    %v2839 = vunpack.c.h.b16 %v526
    %v2840 = vunpack.c.l.b16 %v527
    %v2841 = vunpack.c.h.b16 %v527
    %v2842 = vunpack.c.l.b16 %v528
    %v2843 = vunpack.c.h.b16 %v528
    %v2844 = vunpack.c.l.b16 %v529
    %v2845 = vunpack.c.h.b16 %v529
    %v2846 = vunpack.c.l.b16 %v530
    %v2847 = vunpack.c.h.b16 %v530
    %v2848 = vunpack.c.l.b16 %v531
    %v2849 = vunpack.c.h.b16 %v531
    %v2850 = vunpack.c.l.b16 %v532
    %v2851 = vunpack.c.h.b16 %v532
    %v2852 = vunpack.c.l.b16 %v533
    %v2853 = vunpack.c.h.b16 %v533
    %v2854 = vunpack.c.l.b16 %v534
    %v2855 = vunpack.c.h.b16 %v534
    %v2856 = vunpack.c.l.b16 %v535
    %v2857 = vunpack.c.h.b16 %v535
    %v2858 = vunpack.c.l.b16 %v536
    %v2859 = vunpack.c.h.b16 %v536
    %v2860 = vunpack.c.l.b16 %v537
    %v2861 = vunpack.c.h.b16 %v537
    %v2862 = vunpack.c.l.b16 %v538
    %v2863 = vunpack.c.h.b16 %v538
    %v2864 = vunpack.c.l.b16 %v539
    %v2865 = vunpack.c.h.b16 %v539
    %v2866 = vunpack.c.l.b16 %v540
    %v2867 = vunpack.c.h.b16 %v540
    %v2868 = vunpack.c.l.b16 %v541
    %v2869 = vunpack.c.h.b16 %v541
    %v2870 = vunpack.c.l.b16 %v542
    %v2871 = vunpack.c.h.b16 %v542
    %v2872 = vunpack.c.l.b16 %v543
    %v2873 = vunpack.c.h.b16 %v543
    %v2874 = vunpack.c.l.b16 %v544
    %v2875 = vunpack.c.h.b16 %v544
    %v2876 = vunpack.c.l.b16 %v545
    %v2877 = vunpack.c.h.b16 %v545
    %v2878 = vunpack.c.l.b16 %v546
    %v2879 = vunpack.c.h.b16 %v546
    %v2880 = vunpack.c.l.b16 %v547
    %v2881 = vunpack.c.h.b16 %v547
    %v2882 = vunpack.c.l.b16 %v548
    %v2883 = vunpack.c.h.b16 %v548
    %v2884 = vunpack.c.l.b16 %v549
    %v2885 = vunpack.c.h.b16 %v549
    %v2886 = vunpack.c.l.b16 %v550
    %v2887 = vunpack.c.h.b16 %v550
    %v2888 = vunpack.c.l.b16 %v551
    %v2889 = vunpack.c.h.b16 %v551
    %v2890 = vunpack.c.l.b16 %v552
    %v2891 = vunpack.c.h.b16 %v552
    %v2892 = vunpack.c.l.b16 %v553
    %v2893 = vunpack.c.h.b16 %v553
    %v2894 = vunpack.c.l.b16 %v554
    %v2895 = vunpack.c.h.b16 %v554
    %v2896 = vunpack.c.l.b16 %v555
    %v2897 = vunpack.c.h.b16 %v555
    %v2898 = vunpack.c.l.b16 %v556
    %v2899 = vunpack.c.h.b16 %v556
    %v2900 = vunpack.c.l.b16 %v557
    %v2901 = vunpack.c.h.b16 %v557
    %v2902 = vunpack.c.l.b16 %v558
    %v2903 = vunpack.c.h.b16 %v558
    %v2904 = vunpack.c.l.b16 %v559
    %v2905 = vunpack.c.h.b16 %v559
    %v2906 = vunpack.c.l.b16 %v560
    %v2907 = vunpack.c.h.b16 %v560
    %v2908 = vunpack.c.l.b16 %v561
    %v2909 = vunpack.c.h.b16 %v561
    %v2910 = vunpack.c.l.b16 %v562
    %v2911 = vunpack.c.h.b16 %v562
    %v2912 = vunpack.c.l.b16 %v563
    %v2913 = vunpack.c.h.b16 %v563
    %v2914 = vunpack.c.l.b16 %v564
    %v2915 = vunpack.c.h.b16 %v564
    %v2916 = vunpack.c.l.b16 %v565
    %v2917 = vunpack.c.h.b16 %v565
    %v2918 = vunpack.c.l.b16 %v566
    %v2919 = vunpack.c.h.b16 %v566
    %v2920 = vunpack.c.l.b16 %v567
    %v2921 = vunpack.c.h.b16 %v567
    %v2922 = vunpack.c.l.b16 %v568
    %v2923 = vunpack.c.h.b16 %v568
    %v2924 = vunpack.c.l.b16 %v569
    %v2925 = vunpack.c.h.b16 %v569
    %v2926 = vunpack.c.l.b16 %v570
    %v2927 = vunpack.c.h.b16 %v570
    %v2928 = vunpack.c.l.b16 %v571
    %v2929 = vunpack.c.h.b16 %v571
    %v2930 = vunpack.c.l.b16 %v572
    %v2931 = vunpack.c.h.b16 %v572
    %v2932 = vunpack.c.l.b16 %v573
    %v2933 = vunpack.c.h.b16 %v573
    %v2934 = vunpack.c.l.b16 %v574
    %v2935 = vunpack.c.h.b16 %v574
    %v2936 = vunpack.c.l.b16 %v575
    %v2937 = vunpack.c.h.b16 %v575
    %v2938 = vunpack.c.l.b16 %v576
    %v2939 = vunpack.c.h.b16 %v576
    %v2940 = vunpack.c.l.b16 %v577
    %v2941 = vunpack.c.h.b16 %v577
    %v2942 = vunpack.c.l.b16 %v578
    %v2943 = vunpack.c.h.b16 %v578
    %v2944 = vunpack.c.l.b16 %v579
    %v2945 = vunpack.c.h.b16 %v579
    %v2946 = vunpack.c.l.b16 %v580
    %v2947 = vunpack.c.h.b16 %v580
    %v2948 = vunpack.c.l.b16 %v581
    %v2949 = vunpack.c.h.b16 %v581
    %v2950 = vunpack.c.l.b16 %v582
    %v2951 = vunpack.c.h.b16 %v582
    %v2952 = vunpack.c.l.b16 %v583
    %v2953 = vunpack.c.h.b16 %v583
    %v2954 = vunpack.c.l.b16 %v584
    %v2955 = vunpack.c.h.b16 %v584
    %v2956 = vunpack.c.l.b16 %v585
    %v2957 = vunpack.c.h.b16 %v585
    %v2958 = vunpack.c.l.b16 %v586
    %v2959 = vunpack.c.h.b16 %v586
    %v2960 = vunpack.c.l.b16 %v587
    %v2961 = vunpack.c.h.b16 %v587
    %v2962 = vunpack.c.l.b16 %v588
    %v2963 = vunpack.c.h.b16 %v588
    %v2964 = vunpack.c.l.b16 %v589
    %v2965 = vunpack.c.h.b16 %v589
    %v2966 = vunpack.c.l.b16 %v590
    %v2967 = vunpack.c.h.b16 %v590
    %v2968 = vunpack.c.l.b16 %v591
    %v2969 = vunpack.c.h.b16 %v591
    %v2970 = vunpack.c.l.b16 %v592
    %v2971 = vunpack.c.h.b16 %v592
    %v2972 = vunpack.c.l.b16 %v593
    %v2973 = vunpack.c.h.b16 %v593
    %v2974 = vunpack.c.l.b16 %v594
    %v2975 = vunpack.c.h.b16 %v594
    %v2976 = vunpack.c.l.b16 %v595
    %v2977 = vunpack.c.h.b16 %v595
    %v2978 = vunpack.c.l.b16 %v596
    %v2979 = vunpack.c.h.b16 %v596
    %v2980 = vunpack.c.l.b16 %v597
    %v2981 = vunpack.c.h.b16 %v597
    %v2982 = vunpack.c.l.b16 %v598
    %v2983 = vunpack.c.h.b16 %v598
    %v2984 = vunpack.c.l.b16 %v599
    %v2985 = vunpack.c.h.b16 %v599
    %v2986 = vunpack.c.l.b16 %v600
    %v2987 = vunpack.c.h.b16 %v600
    %v2988 = vunpack.c.l.b16 %v601
    %v2989 = vunpack.c.h.b16 %v601
    %v2990 = vunpack.c.l.b16 %v602
    %v2991 = vunpack.c.h.b16 %v602
    %v2992 = vunpack.c.l.b16 %v603
    %v2993 = vunpack.c.h.b16 %v603
    %v2994 = vunpack.c.l.b16 %v604
    %v2995 = vunpack.c.h.b16 %v604
    %v2996 = vunpack.c.l.b16 %v605
    %v2997 = vunpack.c.h.b16 %v605
    %v2998 = vunpack.c.l.b16 %v606
    %v2999 = vunpack.c.h.b16 %v606
    %v3000 = vunpack.c.l.b16 %v607
    %v3001 = vunpack.c.h.b16 %v607
    %v3002 = vunpack.c.l.b16 %v608
    %v3003 = vunpack.c.h.b16 %v608
    %v3004 = vunpack.c.l.b16 %v609
    %v3005 = vunpack.c.h.b16 %v609
    %v3006 = vunpack.c.l.b16 %v610
    %v3007 = vunpack.c.h.b16 %v610
    %v3008 = vunpack.c.l.b16 %v611
    %v3009 = vunpack.c.h.b16 %v611
    %v3010 = vunpack.c.l.b16 %v612
    %v3011 = vunpack.c.h.b16 %v612
    %v3012 = vunpack.c.l.b16 %v613
    %v3013 = vunpack.c.h.b16 %v613
    %v3014 = vunpack.c.l.b16 %v614
    %v3015 = vunpack.c.h.b16 %v614
    %v3016 = vunpack.c.l.b16 %v615
    %v3017 = vunpack.c.h.b16 %v615
    %v3018 = vunpack.c.l.b16 %v616
    %v3019 = vunpack.c.h.b16 %v616
    %v3020 = vunpack.c.l.b16 %v617
    %v3021 = vunpack.c.h.b16 %v617
    %v3022 = vunpack.c.l.b16 %v618
    %v3023 = vunpack.c.h.b16 %v618
    %v3024 = vunpack.c.l.b16 %v619
    %v3025 = vunpack.c.h.b16 %v619
    %v3026 = vunpack.c.l.b16 %v620
    %v3027 = vunpack.c.h.b16 %v620
    %v3028 = vunpack.c.l.b16 %v621
    %v3029 = vunpack.c.h.b16 %v621
    %v3030 = vunpack.c.l.b16 %v622
    %v3031 = vunpack.c.h.b16 %v622
    %v3032 = vunpack.c.l.b16 %v623
    %v3033 = vunpack.c.h.b16 %v623
    %v3034 = vunpack.c.l.b16 %v624
    %v3035 = vunpack.c.h.b16 %v624
    %v3036 = vunpack.c.l.b16 %v625
    %v3037 = vunpack.c.h.b16 %v625
    %v3038 = vunpack.c.l.b16 %v626
    %v3039 = vunpack.c.h.b16 %v626
    %v3040 = vunpack.c.l.b16 %v627
    %v3041 = vunpack.c.h.b16 %v627
    %v3042 = vunpack.c.l.b16 %v628
    %v3043 = vunpack.c.h.b16 %v628
    %v3044 = vunpack.c.l.b16 %v629
    %v3045 = vunpack.c.h.b16 %v629
    %v3046 = vunpack.c.l.b16 %v630
    %v3047 = vunpack.c.h.b16 %v630
    %v3048 = vunpack.c.l.b16 %v631
    %v3049 = vunpack.c.h.b16 %v631
    %v3050 = vunpack.c.l.b16 %v632
    %v3051 = vunpack.c.h.b16 %v632
    %v3052 = vunpack.c.l.b16 %v633
    %v3053 = vunpack.c.h.b16 %v633
    %v3054 = vunpack.c.l.b16 %v634
    %v3055 = vunpack.c.h.b16 %v634
    %v3056 = vunpack.c.l.b16 %v635
    %v3057 = vunpack.c.h.b16 %v635
    %v3058 = vunpack.c.l.b16 %v636
    %v3059 = vunpack.c.h.b16 %v636
    %v3060 = vunpack.c.l.b16 %v637
    %v3061 = vunpack.c.h.b16 %v637
    %v3062 = vunpack.c.l.b16 %v638
    %v3063 = vunpack.c.h.b16 %v638
    %v3064 = vunpack.c.l.b16 %v639
    %v3065 = vunpack.c.h.b16 %v639
    %v3066 = vunpack.c.l.b16 %v640
    %v3067 = vunpack.c.h.b16 %v640
    %v3068 = vunpack.c.l.b16 %v641
    %v3069 = vunpack.c.h.b16 %v641
    %v3070 = vunpack.c.l.b16 %v642
    %v3071 = vunpack.c.h.b16 %v642
    %v3072 = vunpack.c.l.b16 %v643
    %v3073 = vunpack.c.h.b16 %v643
    %v3074 = vunpack.c.l.b16 %v644
    %v3075 = vunpack.c.h.b16 %v644
    %v3076 = vunpack.c.l.b16 %v645
    %v3077 = vunpack.c.h.b16 %v645
    %v3078 = vunpack.c.l.b16 %v646
    %v3079 = vunpack.c.h.b16 %v646
    %v3080 = vunpack.c.l.b16 %v647
    %v3081 = vunpack.c.h.b16 %v647
    %v3082 = vunpack.c.l.b16 %v648
    %v3083 = vunpack.c.h.b16 %v648
    %v3084 = vunpack.c.l.b16 %v649
    %v3085 = vunpack.c.h.b16 %v649
    %v3086 = vunpack.c.l.b16 %v650
    %v3087 = vunpack.c.h.b16 %v650
    %v3088 = vunpack.c.l.b16 %v651
    %v3089 = vunpack.c.h.b16 %v651
    %v3090 = vunpack.c.l.b16 %v652
    %v3091 = vunpack.c.h.b16 %v652
    %v3092 = vunpack.c.l.b16 %v653
    %v3093 = vunpack.c.h.b16 %v653
    %v3094 = vunpack.c.l.b16 %v654
    %v3095 = vunpack.c.h.b16 %v654
    %v3096 = vunpack.c.l.b16 %v655
    %v3097 = vunpack.c.h.b16 %v655
    %v3098 = vunpack.c.l.b16 %v656
    %v3099 = vunpack.c.h.b16 %v656
    %v3100 = vunpack.c.l.b16 %v657
    %v3101 = vunpack.c.h.b16 %v657
    %v3102 = vunpack.c.l.b16 %v658
    %v3103 = vunpack.c.h.b16 %v658
    %v3104 = vunpack.c.l.b16 %v659
    %v3105 = vunpack.c.h.b16 %v659
    %v3106 = vunpack.c.l.b16 %v660
    %v3107 = vunpack.c.h.b16 %v660
    %v3108 = vunpack.c.l.b16 %v661
    %v3109 = vunpack.c.h.b16 %v661
    %v3110 = vunpack.c.l.b16 %v662
    %v3111 = vunpack.c.h.b16 %v662
    %v3112 = vunpack.c.l.b16 %v663
    %v3113 = vunpack.c.h.b16 %v663
    %v3114 = vunpack.c.l.b16 %v664
    %v3115 = vunpack.c.h.b16 %v664
    %v3116 = vunpack.c.l.b16 %v665
    %v3117 = vunpack.c.h.b16 %v665
    %v3118 = vunpack.c.l.b16 %v666
    %v3119 = vunpack.c.h.b16 %v666
    %v3120 = vunpack.c.l.b16 %v667
    %v3121 = vunpack.c.h.b16 %v667
    %v3122 = vunpack.c.l.b16 %v668
    %v3123 = vunpack.c.h.b16 %v668
    %v3124 = vunpack.c.l.b16 %v669
    %v3125 = vunpack.c.h.b16 %v669
    %v3126 = vunpack.c.l.b16 %v670
    %v3127 = vunpack.c.h.b16 %v670
    %v3128 = vunpack.c.l.b16 %v671
    %v3129 = vunpack.c.h.b16 %v671
    %v3130 = vunpack.c.l.b16 %v672
    %v3131 = vunpack.c.h.b16 %v672
    %v3132 = vunpack.c.l.b16 %v673
    %v3133 = vunpack.c.h.b16 %v673
    %v3134 = vunpack.c.l.b16 %v674
    %v3135 = vunpack.c.h.b16 %v674
    %v3136 = vunpack.c.l.b16 %v675
    %v3137 = vunpack.c.h.b16 %v675
    %v3138 = vunpack.c.l.b16 %v676
    %v3139 = vunpack.c.h.b16 %v676
    %v3140 = vunpack.c.l.b16 %v677
    %v3141 = vunpack.c.h.b16 %v677
    %v3142 = vunpack.c.l.b16 %v678
    %v3143 = vunpack.c.h.b16 %v678
    %v3144 = vunpack.c.l.b16 %v679
    %v3145 = vunpack.c.h.b16 %v679
    %v3146 = vunpack.c.l.b16 %v680
    %v3147 = vunpack.c.h.b16 %v680
    %v3148 = vunpack.c.l.b16 %v681
    %v3149 = vunpack.c.h.b16 %v681
    %v3150 = vunpack.c.l.b16 %v682
    %v3151 = vunpack.c.h.b16 %v682
    %v3152 = vunpack.c.l.b16 %v683
    %v3153 = vunpack.c.h.b16 %v683
    %v3154 = vunpack.c.l.b16 %v684
    %v3155 = vunpack.c.h.b16 %v684
    %v3156 = vunpack.c.l.b16 %v685
    %v3157 = vunpack.c.h.b16 %v685
    %v3158 = vunpack.c.l.b16 %v686
    %v3159 = vunpack.c.h.b16 %v686
    %v3160 = vunpack.c.l.b16 %v687
    %v3161 = vunpack.c.h.b16 %v687
    %v3162 = vunpack.c.l.b16 %v688
    %v3163 = vunpack.c.h.b16 %v688
    %v3164 = vunpack.c.l.b16 %v689
    %v3165 = vunpack.c.h.b16 %v689
    %v3166 = vunpack.c.l.b16 %v690
    %v3167 = vunpack.c.h.b16 %v690
    %v3168 = vunpack.c.l.b16 %v691
    %v3169 = vunpack.c.h.b16 %v691
    %v3170 = vunpack.c.l.b16 %v692
    %v3171 = vunpack.c.h.b16 %v692
    %v3172 = vunpack.c.l.b16 %v693
    %v3173 = vunpack.c.h.b16 %v693
    %v3174 = vunpack.c.l.b16 %v694
    %v3175 = vunpack.c.h.b16 %v694
    %v3176 = vunpack.c.l.b16 %v695
    %v3177 = vunpack.c.h.b16 %v695
    %v3178 = vunpack.c.l.b16 %v696
    %v3179 = vunpack.c.h.b16 %v696
    %v3180 = vunpack.c.l.b16 %v697
    %v3181 = vunpack.c.h.b16 %v697
    %v3182 = vunpack.c.l.b16 %v698
    %v3183 = vunpack.c.h.b16 %v698
    %v3184 = vunpack.c.l.b16 %v699
    %v3185 = vunpack.c.h.b16 %v699
    %v3186 = vunpack.c.l.b16 %v700
    %v3187 = vunpack.c.h.b16 %v700
    %v3188 = vunpack.c.l.b16 %v701
    %v3189 = vunpack.c.h.b16 %v701
    %v3190 = vunpack.c.l.b16 %v702
    %v3191 = vunpack.c.h.b16 %v702
    %v3192 = vunpack.c.l.b16 %v703
    %v3193 = vunpack.c.h.b16 %v703
    %v3194 = vunpack.c.l.b16 %v704
    %v3195 = vunpack.c.h.b16 %v704
    %v3196 = vunpack.c.l.b16 %v705
    %v3197 = vunpack.c.h.b16 %v705
    %v3198 = vunpack.c.l.b16 %v706
    %v3199 = vunpack.c.h.b16 %v706
    %v3200 = vunpack.c.l.b16 %v707
    %v3201 = vunpack.c.h.b16 %v707
    %v3202 = vunpack.c.l.b16 %v708
    %v3203 = vunpack.c.h.b16 %v708
    %v3204 = vunpack.c.l.b16 %v709
    %v3205 = vunpack.c.h.b16 %v709
    %v3206 = vunpack.c.l.b16 %v710
    %v3207 = vunpack.c.h.b16 %v710
    %v3208 = vunpack.c.l.b16 %v711
    %v3209 = vunpack.c.h.b16 %v711
    %v3210 = vunpack.c.l.b16 %v712
    %v3211 = vunpack.c.h.b16 %v712
    %v3212 = vunpack.c.l.b16 %v713
    %v3213 = vunpack.c.h.b16 %v713
    %v3214 = vunpack.c.l.b16 %v714
    %v3215 = vunpack.c.h.b16 %v714
    %v3216 = vunpack.c.l.b16 %v715
    %v3217 = vunpack.c.h.b16 %v715
    %v3218 = vunpack.c.l.b16 %v716
    %v3219 = vunpack.c.h.b16 %v716
    %v3220 = vunpack.c.l.b16 %v717
    %v3221 = vunpack.c.h.b16 %v717
    %v3222 = vunpack.c.l.b16 %v718
    %v3223 = vunpack.c.h.b16 %v718
    %v3224 = vunpack.c.l.b16 %v719
    %v3225 = vunpack.c.h.b16 %v719
    %v3226 = vunpack.c.l.b16 %v720
    %v3227 = vunpack.c.h.b16 %v720
    %v3228 = vunpack.c.l.b16 %v721
    %v3229 = vunpack.c.h.b16 %v721
    %v3230 = vunpack.c.l.b16 %v722
    %v3231 = vunpack.c.h.b16 %v722
    %v3232 = vunpack.c.l.b16 %v723
    %v3233 = vunpack.c.h.b16 %v723
    %v3234 = vunpack.c.l.b16 %v724
    %v3235 = vunpack.c.h.b16 %v724
    %v3236 = vunpack.c.l.b16 %v725
    %v3237 = vunpack.c.h.b16 %v725
    %v3238 = vunpack.c.l.b16 %v726
    %v3239 = vunpack.c.h.b16 %v726
    %v3240 = vunpack.c.l.b16 %v727
    %v3241 = vunpack.c.h.b16 %v727
    %v3242 = vunpack.c.l.b16 %v728
    %v3243 = vunpack.c.h.b16 %v728
    %v3244 = vunpack.c.l.b16 %v729
    %v3245 = vunpack.c.h.b16 %v729
    %v3246 = vunpack.c.l.b16 %v730
    %v3247 = vunpack.c.h.b16 %v730
    %v3248 = vunpack.c.l.b16 %v731
    %v3249 = vunpack.c.h.b16 %v731
    %v3250 = vunpack.c.l.b16 %v732
    %v3251 = vunpack.c.h.b16 %v732
    %v3252 = vunpack.c.l.b16 %v733
    %v3253 = vunpack.c.h.b16 %v733
    %v3254 = vunpack.c.l.b16 %v734
    %v3255 = vunpack.c.h.b16 %v734
    %v3256 = vunpack.c.l.b16 %v735
    %v3257 = vunpack.c.h.b16 %v735
    %v3258 = vunpack.c.l.b16 %v736
    %v3259 = vunpack.c.h.b16 %v736
    %v3260 = vunpack.c.l.b16 %v737
    %v3261 = vunpack.c.h.b16 %v737
    %v3262 = vunpack.c.l.b16 %v738
    %v3263 = vunpack.c.h.b16 %v738
    %v3264 = vunpack.c.l.b16 %v739
    %v3265 = vunpack.c.h.b16 %v739
    %v3266 = vunpack.c.l.b16 %v740
    %v3267 = vunpack.c.h.b16 %v740
    %v3268 = vunpack.c.l.b16 %v741
    %v3269 = vunpack.c.h.b16 %v741
    %v3270 = vunpack.c.l.b16 %v742
    %v3271 = vunpack.c.h.b16 %v742
    %v3272 = vunpack.c.l.b16 %v743
    %v3273 = vunpack.c.h.b16 %v743
    %v3274 = vunpack.c.l.b16 %v744
    %v3275 = vunpack.c.h.b16 %v744
    %v3276 = vunpack.c.l.b16 %v745
    %v3277 = vunpack.c.h.b16 %v745
    %v3278 = vunpack.c.l.b16 %v746
    %v3279 = vunpack.c.h.b16 %v746
    %v3280 = vunpack.c.l.b16 %v747
    %v3281 = vunpack.c.h.b16 %v747
    %v3282 = vunpack.c.l.b16 %v748
    %v3283 = vunpack.c.h.b16 %v748
    %v3284 = vunpack.c.l.b16 %v749
    %v3285 = vunpack.c.h.b16 %v749
    %v3286 = vunpack.c.l.b16 %v750
    %v3287 = vunpack.c.h.b16 %v750
    %v3288 = vunpack.c.l.b16 %v751
    %v3289 = vunpack.c.h.b16 %v751
    %v3290 = vunpack.c.l.b16 %v752
    %v3291 = vunpack.c.h.b16 %v752
    %v3292 = vunpack.c.l.b16 %v753
    %v3293 = vunpack.c.h.b16 %v753
    %v3294 = vunpack.c.l.b16 %v754
    %v3295 = vunpack.c.h.b16 %v754
    %v3296 = vunpack.c.l.b16 %v755
    %v3297 = vunpack.c.h.b16 %v755
    %v3298 = vunpack.c.l.b16 %v756
    %v3299 = vunpack.c.h.b16 %v756
    %v3300 = vunpack.c.l.b16 %v757
    %v3301 = vunpack.c.h.b16 %v757
    %v3302 = vunpack.c.l.b16 %v758
    %v3303 = vunpack.c.h.b16 %v758
    %v3304 = vunpack.c.l.b16 %v759
    %v3305 = vunpack.c.h.b16 %v759
    %v3306 = vunpack.c.l.b16 %v760
    %v3307 = vunpack.c.h.b16 %v760
    %v3308 = vunpack.c.l.b16 %v761
    %v3309 = vunpack.c.h.b16 %v761
    %v3310 = vunpack.c.l.b16 %v762
    %v3311 = vunpack.c.h.b16 %v762
    %v3312 = vunpack.c.l.b16 %v763
    %v3313 = vunpack.c.h.b16 %v763
    %v3314 = vunpack.c.l.b16 %v764
    %v3315 = vunpack.c.h.b16 %v764
    %v3316 = vunpack.c.l.b16 %v765
    %v3317 = vunpack.c.h.b16 %v765
    %v3318 = vunpack.c.l.b16 %v766
    %v3319 = vunpack.c.h.b16 %v766
    %v3320 = vunpack.c.l.b16 %v767
    %v3321 = vunpack.c.h.b16 %v767
    %v3322 = vunpack.c.l.b16 %v768
    %v3323 = vunpack.c.h.b16 %v768
    %v3324 = vunpack.c.l.b16 %v769
    %v3325 = vunpack.c.h.b16 %v769
    %v3326 = vunpack.c.l.b16 %v770
    %v3327 = vunpack.c.h.b16 %v770
    %v3328 = vunpack.c.l.b16 %v771
    %v3329 = vunpack.c.h.b16 %v771
    %v3330 = vunpack.c.l.b16 %v772
    %v3331 = vunpack.c.h.b16 %v772
    %v3332 = vunpack.c.l.b16 %v773
    %v3333 = vunpack.c.h.b16 %v773
    %v3334 = vunpack.c.l.b16 %v774
    %v3335 = vunpack.c.h.b16 %v774
    %v3336 = vunpack.c.l.b16 %v775
    %v3337 = vunpack.c.h.b16 %v775
    %v3338 = vunpack.c.l.b16 %v776
    %v3339 = vunpack.c.h.b16 %v776
    %v3340 = vunpack.c.l.b16 %v777
    %v3341 = vunpack.c.h.b16 %v777
    %v3342 = vunpack.c.l.b16 %v778
    %v3343 = vunpack.c.h.b16 %v778
    %v3344 = vunpack.c.l.b16 %v779
    %v3345 = vunpack.c.h.b16 %v779
    %v3346 = vunpack.c.l.b16 %v780
    %v3347 = vunpack.c.h.b16 %v780
    %v3348 = vunpack.c.l.b16 %v781
    %v3349 = vunpack.c.h.b16 %v781
    %v3350 = vunpack.c.l.b16 %v782
    %v3351 = vunpack.c.h.b16 %v782
    %v3352 = vunpack.c.l.b16 %v783
    %v3353 = vunpack.c.h.b16 %v783
    %v3354 = vunpack.c.l.b16 %v784
    %v3355 = vunpack.c.h.b16 %v784
    %v3356 = vunpack.c.l.b16 %v785
    %v3357 = vunpack.c.h.b16 %v785
    %v3358 = vunpack.c.l.b16 %v786
    %v3359 = vunpack.c.h.b16 %v786
    %v3360 = vunpack.c.l.b16 %v787
    %v3361 = vunpack.c.h.b16 %v787
    %v3362 = vunpack.c.l.b16 %v788
    %v3363 = vunpack.c.h.b16 %v788
    %v3364 = vunpack.c.l.b16 %v789
    %v3365 = vunpack.c.h.b16 %v789
    %v3366 = vunpack.c.l.b16 %v790
    %v3367 = vunpack.c.h.b16 %v790
    %v3368 = vunpack.c.l.b16 %v791
    %v3369 = vunpack.c.h.b16 %v791
    %v3370 = vunpack.c.l.b16 %v792
    %v3371 = vunpack.c.h.b16 %v792
    %v3372 = vunpack.c.l.b16 %v793
    %v3373 = vunpack.c.h.b16 %v793
    %v3374 = vunpack.c.l.b16 %v794
    %v3375 = vunpack.c.h.b16 %v794
    %v3376 = vunpack.c.l.b16 %v795
    %v3377 = vunpack.c.h.b16 %v795
    %v3378 = vunpack.c.l.b16 %v796
    %v3379 = vunpack.c.h.b16 %v796
    %v3380 = vunpack.c.l.b16 %v797
    %v3381 = vunpack.c.h.b16 %v797
    %v3382 = vunpack.c.l.b16 %v798
    %v3383 = vunpack.c.h.b16 %v798
    %v3384 = vunpack.c.l.b16 %v799
    %v3385 = vunpack.c.h.b16 %v799
    %v3386 = vunpack.c.l.b16 %v800
    %v3387 = vunpack.c.h.b16 %v800
    %v3388 = vunpack.c.l.b16 %v801
    %v3389 = vunpack.c.h.b16 %v801
    %v3390 = vunpack.c.l.b16 %v802
    %v3391 = vunpack.c.h.b16 %v802
    %v3392 = vunpack.c.l.b16 %v803
    %v3393 = vunpack.c.h.b16 %v803
    %v3394 = vunpack.c.l.b16 %v804
    %v3395 = vunpack.c.h.b16 %v804
    %v3396 = vunpack.c.l.b16 %v805
    %v3397 = vunpack.c.h.b16 %v805
    %v3398 = vunpack.c.l.b16 %v806
    %v3399 = vunpack.c.h.b16 %v806
    %v3400 = vunpack.c.l.b16 %v807
    %v3401 = vunpack.c.h.b16 %v807
    %v3402 = vunpack.c.l.b16 %v808
    %v3403 = vunpack.c.h.b16 %v808
    %v3404 = vunpack.c.l.b16 %v809
    %v3405 = vunpack.c.h.b16 %v809
    %v3406 = vunpack.c.l.b16 %v810
    %v3407 = vunpack.c.h.b16 %v810
    %v3408 = vunpack.c.l.b16 %v811
    %v3409 = vunpack.c.h.b16 %v811
    %v3410 = vunpack.c.l.b16 %v812
    %v3411 = vunpack.c.h.b16 %v812
    %v3412 = vunpack.c.l.b16 %v813
    %v3413 = vunpack.c.h.b16 %v813
    %v3414 = vunpack.c.l.b16 %v814
    %v3415 = vunpack.c.h.b16 %v814
    %v3416 = vunpack.c.l.b16 %v815
    %v3417 = vunpack.c.h.b16 %v815
    %v3418 = vunpack.c.l.b16 %v816
    %v3419 = vunpack.c.h.b16 %v816
    %v3420 = vunpack.c.l.b16 %v817
    %v3421 = vunpack.c.h.b16 %v817
    %v3422 = vunpack.c.l.b16 %v818
    %v3423 = vunpack.c.h.b16 %v818
    %v3424 = vunpack.c.l.b16 %v819
    %v3425 = vunpack.c.h.b16 %v819
    %v3426 = vunpack.c.l.b16 %v820
    %v3427 = vunpack.c.h.b16 %v820
    %v3428 = vunpack.c.l.b16 %v821
    %v3429 = vunpack.c.h.b16 %v821
    %v3430 = vunpack.c.l.b16 %v822
    %v3431 = vunpack.c.h.b16 %v822
    %v3432 = vunpack.c.l.b16 %v823
    %v3433 = vunpack.c.h.b16 %v823
    %v3434 = vunpack.c.l.b16 %v824
    %v3435 = vunpack.c.h.b16 %v824
    %v3436 = vunpack.c.l.b16 %v825
    %v3437 = vunpack.c.h.b16 %v825
    %v3438 = vpack.c.b16 %v1842, %v1838
    %v3439 = vpack.c.b16 %v1843, %v1839
    %v3440 = vpack.c.b16 %v1844, %v1840
    %v3441 = vpack.c.b16 %v1845, %v1841
    %v3442 = vpack.c.b16 %v1850, %v1846
    %v3443 = vpack.c.b16 %v1851, %v1847
    %v3444 = vpack.c.b16 %v1852, %v1848
    %v3445 = vpack.c.b16 %v1853, %v1849
    %v3446 = vpack.c.b16 %v1858, %v1854
    %v3447 = vpack.c.b16 %v1859, %v1855
    %v3448 = vpack.c.b16 %v1860, %v1856
    %v3449 = vpack.c.b16 %v1861, %v1857
    %v3450 = vpack.c.b16 %v1866, %v1862
    %v3451 = vpack.c.b16 %v1867, %v1863
    %v3452 = vpack.c.b16 %v1868, %v1864
    %v3453 = vpack.c.b16 %v1869, %v1865
    %v3454 = vpack.c.b16 %v1874, %v1870
    %v3455 = vpack.c.b16 %v1875, %v1871
    %v3456 = vpack.c.b16 %v1876, %v1872
    %v3457 = vpack.c.b16 %v1877, %v1873
    %v3458 = vpack.c.b16 %v1882, %v1878
    %v3459 = vpack.c.b16 %v1883, %v1879
    %v3460 = vpack.c.b16 %v1884, %v1880
    %v3461 = vpack.c.b16 %v1885, %v1881
    %v3462 = vpack.c.b16 %v1890, %v1886
    %v3463 = vpack.c.b16 %v1891, %v1887
    %v3464 = vpack.c.b16 %v1892, %v1888
    %v3465 = vpack.c.b16 %v1893, %v1889
    %v3466 = vpack.c.b16 %v1898, %v1894
    %v3467 = vpack.c.b16 %v1899, %v1895
    %v3468 = vpack.c.b16 %v1900, %v1896
    %v3469 = vpack.c.b16 %v1901, %v1897
    %v3470 = vpack.c.b16 %v1906, %v1902
    %v3471 = vpack.c.b16 %v1907, %v1903
    %v3472 = vpack.c.b16 %v1908, %v1904
    %v3473 = vpack.c.b16 %v1909, %v1905
    %v3474 = vpack.c.b16 %v1914, %v1910
    %v3475 = vpack.c.b16 %v1915, %v1911
    %v3476 = vpack.c.b16 %v1916, %v1912
    %v3477 = vpack.c.b16 %v1917, %v1913
    %v3478 = vpack.c.b16 %v1922, %v1918
    %v3479 = vpack.c.b16 %v1923, %v1919
    %v3480 = vpack.c.b16 %v1924, %v1920
    %v3481 = vpack.c.b16 %v1925, %v1921
    %v3482 = vpack.c.b16 %v1930, %v1926
    %v3483 = vpack.c.b16 %v1931, %v1927
    %v3484 = vpack.c.b16 %v1932, %v1928
    %v3485 = vpack.c.b16 %v1933, %v1929
    %v3486 = vpack.c.b16 %v1938, %v1934
    %v3487 = vpack.c.b16 %v1939, %v1935
    %v3488 = vpack.c.b16 %v1940, %v1936
    %v3489 = vpack.c.b16 %v1941, %v1937
    %v3490 = vpack.c.b16 %v1946, %v1942
    %v3491 = vpack.c.b16 %v1947, %v1943
    %v3492 = vpack.c.b16 %v1948, %v1944
    %v3493 = vpack.c.b16 %v1949, %v1945
    %v3494 = vpack.c.b16 %v1954, %v1950
    %v3495 = vpack.c.b16 %v1955, %v1951
    %v3496 = vpack.c.b16 %v1956, %v1952
    %v3497 = vpack.c.b16 %v1957, %v1953
    %v3498 = vpack.c.b16 %v1962, %v1958
    %v3499 = vpack.c.b16 %v1963, %v1959
    %v3500 = vpack.c.b16 %v1964, %v1960
    %v3501 = vpack.c.b16 %v1965, %v1961
    %v3502 = vpack.c.b16 %v1970, %v1966
    %v3503 = vpack.c.b16 %v1971, %v1967
    %v3504 = vpack.c.b16 %v1972, %v1968
    %v3505 = vpack.c.b16 %v1973, %v1969
    %v3506 = vpack.c.b16 %v1978, %v1974
    %v3507 = vpack.c.b16 %v1979, %v1975
    %v3508 = vpack.c.b16 %v1980, %v1976
    %v3509 = vpack.c.b16 %v1981, %v1977
    %v3510 = vpack.c.b16 %v1986, %v1982
    %v3511 = vpack.c.b16 %v1987, %v1983
    %v3512 = vpack.c.b16 %v1988, %v1984
    %v3513 = vpack.c.b16 %v1989, %v1985
    %v3514 = vpack.c.b16 %v1994, %v1990
    %v3515 = vpack.c.b16 %v1995, %v1991
    %v3516 = vpack.c.b16 %v1996, %v1992
    %v3517 = vpack.c.b16 %v1997, %v1993
    %v3518 = vpack.c.b16 %v2002, %v1998
    %v3519 = vpack.c.b16 %v2003, %v1999
    %v3520 = vpack.c.b16 %v2004, %v2000
    %v3521 = vpack.c.b16 %v2005, %v2001
    %v3522 = vpack.c.b16 %v2010, %v2006
    %v3523 = vpack.c.b16 %v2011, %v2007
    %v3524 = vpack.c.b16 %v2012, %v2008
    %v3525 = vpack.c.b16 %v2013, %v2009
    %v3526 = vpack.c.b16 %v2018, %v2014
    %v3527 = vpack.c.b16 %v2019, %v2015
    %v3528 = vpack.c.b16 %v2020, %v2016
    %v3529 = vpack.c.b16 %v2021, %v2017
    %v3530 = vpack.c.b16 %v2026, %v2022
    %v3531 = vpack.c.b16 %v2027, %v2023
    %v3532 = vpack.c.b16 %v2028, %v2024
    %v3533 = vpack.c.b16 %v2029, %v2025
    %v3534 = vpack.c.b16 %v2034, %v2030
    %v3535 = vpack.c.b16 %v2035, %v2031
    %v3536 = vpack.c.b16 %v2036, %v2032
    %v3537 = vpack.c.b16 %v2037, %v2033
    %v3538 = vpack.c.b16 %v2042, %v2038
    %v3539 = vpack.c.b16 %v2043, %v2039
    %v3540 = vpack.c.b16 %v2044, %v2040
    %v3541 = vpack.c.b16 %v2045, %v2041
    %v3542 = vpack.c.b16 %v2050, %v2046
    %v3543 = vpack.c.b16 %v2051, %v2047
    %v3544 = vpack.c.b16 %v2052, %v2048
    %v3545 = vpack.c.b16 %v2053, %v2049
    %v3546 = vpack.c.b16 %v2058, %v2054
    %v3547 = vpack.c.b16 %v2059, %v2055
    %v3548 = vpack.c.b16 %v2060, %v2056
    %v3549 = vpack.c.b16 %v2061, %v2057
    %v3550 = vpack.c.b16 %v2066, %v2062
    %v3551 = vpack.c.b16 %v2067, %v2063
    %v3552 = vpack.c.b16 %v2068, %v2064
    %v3553 = vpack.c.b16 %v2069, %v2065
    %v3554 = vpack.c.b16 %v2074, %v2070
    %v3555 = vpack.c.b16 %v2075, %v2071
    %v3556 = vpack.c.b16 %v2076, %v2072
    %v3557 = vpack.c.b16 %v2077, %v2073
    %v3558 = vpack.c.b16 %v2082, %v2078
    %v3559 = vpack.c.b16 %v2083, %v2079
    %v3560 = vpack.c.b16 %v2084, %v2080
    %v3561 = vpack.c.b16 %v2085, %v2081
    %v3562 = vpack.c.b16 %v2090, %v2086
    %v3563 = vpack.c.b16 %v2091, %v2087
    %v3564 = vpack.c.b16 %v2092, %v2088
    %v3565 = vpack.c.b16 %v2093, %v2089
    %v3566 = vpack.c.b16 %v2098, %v2094
    %v3567 = vpack.c.b16 %v2099, %v2095
    %v3568 = vpack.c.b16 %v2100, %v2096
    %v3569 = vpack.c.b16 %v2101, %v2097
    %v3570 = vpack.c.b16 %v2106, %v2102
    %v3571 = vpack.c.b16 %v2107, %v2103
    %v3572 = vpack.c.b16 %v2108, %v2104
    %v3573 = vpack.c.b16 %v2109, %v2105
    %v3574 = vpack.c.b16 %v2114, %v2110
    %v3575 = vpack.c.b16 %v2115, %v2111
    %v3576 = vpack.c.b16 %v2116, %v2112
    %v3577 = vpack.c.b16 %v2117, %v2113
    %v3578 = vpack.c.b16 %v2122, %v2118
    %v3579 = vpack.c.b16 %v2123, %v2119
    %v3580 = vpack.c.b16 %v2124, %v2120
    %v3581 = vpack.c.b16 %v2125, %v2121
    %v3582 = vpack.c.b16 %v2130, %v2126
    %v3583 = vpack.c.b16 %v2131, %v2127
    %v3584 = vpack.c.b16 %v2132, %v2128
    %v3585 = vpack.c.b16 %v2133, %v2129
    %v3586 = vpack.c.b16 %v2138, %v2134
    %v3587 = vpack.c.b16 %v2139, %v2135
    %v3588 = vpack.c.b16 %v2140, %v2136
    %v3589 = vpack.c.b16 %v2141, %v2137
    %v3590 = vpack.c.b16 %v2146, %v2142
    %v3591 = vpack.c.b16 %v2147, %v2143
    %v3592 = vpack.c.b16 %v2148, %v2144
    %v3593 = vpack.c.b16 %v2149, %v2145
    %v3594 = vpack.c.b16 %v2154, %v2150
    %v3595 = vpack.c.b16 %v2155, %v2151
    %v3596 = vpack.c.b16 %v2156, %v2152
    %v3597 = vpack.c.b16 %v2157, %v2153
    %v3598 = vpack.c.b16 %v2162, %v2158
    %v3599 = vpack.c.b16 %v2163, %v2159
    %v3600 = vpack.c.b16 %v2164, %v2160
    %v3601 = vpack.c.b16 %v2165, %v2161
    %v3602 = vpack.c.b16 %v2170, %v2166
    %v3603 = vpack.c.b16 %v2171, %v2167
    %v3604 = vpack.c.b16 %v2172, %v2168
    %v3605 = vpack.c.b16 %v2173, %v2169
    %v3606 = vpack.c.b16 %v2178, %v2174
    %v3607 = vpack.c.b16 %v2179, %v2175
    %v3608 = vpack.c.b16 %v2180, %v2176
    %v3609 = vpack.c.b16 %v2181, %v2177
    %v3610 = vpack.c.b16 %v2186, %v2182
    %v3611 = vpack.c.b16 %v2187, %v2183
    %v3612 = vpack.c.b16 %v2188, %v2184
    %v3613 = vpack.c.b16 %v2189, %v2185
    %v3614 = vpack.c.b16 %v2194, %v2190
    %v3615 = vpack.c.b16 %v2195, %v2191
    %v3616 = vpack.c.b16 %v2196, %v2192
    %v3617 = vpack.c.b16 %v2197, %v2193
    %v3618 = vpack.c.b16 %v2202, %v2198
    %v3619 = vpack.c.b16 %v2203, %v2199
    %v3620 = vpack.c.b16 %v2204, %v2200
    %v3621 = vpack.c.b16 %v2205, %v2201
    %v3622 = vpack.c.b16 %v2210, %v2206
    %v3623 = vpack.c.b16 %v2211, %v2207
    %v3624 = vpack.c.b16 %v2212, %v2208
    %v3625 = vpack.c.b16 %v2213, %v2209
    %v3626 = vpack.c.b16 %v2218, %v2214
    %v3627 = vpack.c.b16 %v2219, %v2215
    %v3628 = vpack.c.b16 %v2220, %v2216
    %v3629 = vpack.c.b16 %v2221, %v2217
    %v3630 = vpack.c.b16 %v2226, %v2222
    %v3631 = vpack.c.b16 %v2227, %v2223
    %v3632 = vpack.c.b16 %v2228, %v2224
    %v3633 = vpack.c.b16 %v2229, %v2225
    %v3634 = vpack.c.b16 %v2234, %v2230
    %v3635 = vpack.c.b16 %v2235, %v2231
    %v3636 = vpack.c.b16 %v2236, %v2232
    %v3637 = vpack.c.b16 %v2237, %v2233
    %v3638 = vpack.c.b16 %v2242, %v2238
    %v3639 = vpack.c.b16 %v2243, %v2239
    %v3640 = vpack.c.b16 %v2244, %v2240
    %v3641 = vpack.c.b16 %v2245, %v2241
    %v3642 = vpack.c.b16 %v2250, %v2246
    %v3643 = vpack.c.b16 %v2251, %v2247
    %v3644 = vpack.c.b16 %v2252, %v2248
    %v3645 = vpack.c.b16 %v2253, %v2249
    %v3646 = vpack.c.b16 %v2258, %v2254
    %v3647 = vpack.c.b16 %v2259, %v2255
    %v3648 = vpack.c.b16 %v2260, %v2256
    %v3649 = vpack.c.b16 %v2261, %v2257
    %v3650 = vpack.c.b16 %v2266, %v2262
    %v3651 = vpack.c.b16 %v2267, %v2263
    %v3652 = vpack.c.b16 %v2268, %v2264
    %v3653 = vpack.c.b16 %v2269, %v2265
    %v3654 = vpack.c.b16 %v2274, %v2270
    %v3655 = vpack.c.b16 %v2275, %v2271
    %v3656 = vpack.c.b16 %v2276, %v2272
    %v3657 = vpack.c.b16 %v2277, %v2273
    %v3658 = vpack.c.b16 %v2282, %v2278
    %v3659 = vpack.c.b16 %v2283, %v2279
    %v3660 = vpack.c.b16 %v2284, %v2280
    %v3661 = vpack.c.b16 %v2285, %v2281
    %v3662 = vpack.c.b16 %v2290, %v2286
    %v3663 = vpack.c.b16 %v2291, %v2287
    %v3664 = vpack.c.b16 %v2292, %v2288
    %v3665 = vpack.c.b16 %v2293, %v2289
    %v3666 = vpack.c.b16 %v2298, %v2294
    %v3667 = vpack.c.b16 %v2299, %v2295
    %v3668 = vpack.c.b16 %v2300, %v2296
    %v3669 = vpack.c.b16 %v2301, %v2297
    %v3670 = vpack.c.b16 %v2306, %v2302
    %v3671 = vpack.c.b16 %v2307, %v2303
    %v3672 = vpack.c.b16 %v2308, %v2304
    %v3673 = vpack.c.b16 %v2309, %v2305
    %v3674 = vpack.c.b16 %v2314, %v2310
    %v3675 = vpack.c.b16 %v2315, %v2311
    %v3676 = vpack.c.b16 %v2316, %v2312
    %v3677 = vpack.c.b16 %v2317, %v2313
    %v3678 = vpack.c.b16 %v2322, %v2318
    %v3679 = vpack.c.b16 %v2323, %v2319
    %v3680 = vpack.c.b16 %v2324, %v2320
    %v3681 = vpack.c.b16 %v2325, %v2321
    %v3682 = vpack.c.b16 %v2330, %v2326
    %v3683 = vpack.c.b16 %v2331, %v2327
    %v3684 = vpack.c.b16 %v2332, %v2328
    %v3685 = vpack.c.b16 %v2333, %v2329
    %v3686 = vpack.c.b16 %v2338, %v2334
    %v3687 = vpack.c.b16 %v2339, %v2335
    %v3688 = vpack.c.b16 %v2340, %v2336
    %v3689 = vpack.c.b16 %v2341, %v2337
    %v3690 = vpack.c.b16 %v2346, %v2342
    %v3691 = vpack.c.b16 %v2347, %v2343
    %v3692 = vpack.c.b16 %v2348, %v2344
    %v3693 = vpack.c.b16 %v2349, %v2345
    %v3694 = vpack.c.b16 %v2354, %v2350
    %v3695 = vpack.c.b16 %v2355, %v2351
    %v3696 = vpack.c.b16 %v2356, %v2352
    %v3697 = vpack.c.b16 %v2357, %v2353
    %v3698 = vpack.c.b16 %v2362, %v2358
    %v3699 = vpack.c.b16 %v2363, %v2359
    %v3700 = vpack.c.b16 %v2364, %v2360
    %v3701 = vpack.c.b16 %v2365, %v2361
    %v3702 = vpack.c.b16 %v2370, %v2366
    %v3703 = vpack.c.b16 %v2371, %v2367
    %v3704 = vpack.c.b16 %v2372, %v2368
    %v3705 = vpack.c.b16 %v2373, %v2369
    %v3706 = vpack.c.b16 %v2378, %v2374
    %v3707 = vpack.c.b16 %v2379, %v2375
    %v3708 = vpack.c.b16 %v2380, %v2376
    %v3709 = vpack.c.b16 %v2381, %v2377
    %v3710 = vpack.c.b16 %v2386, %v2382
    %v3711 = vpack.c.b16 %v2387, %v2383
    %v3712 = vpack.c.b16 %v2388, %v2384
    %v3713 = vpack.c.b16 %v2389, %v2385
    %v3714 = vpack.c.b16 %v2394, %v2390
    %v3715 = vpack.c.b16 %v2395, %v2391
    %v3716 = vpack.c.b16 %v2396, %v2392
    %v3717 = vpack.c.b16 %v2397, %v2393
    %v3718 = vpack.c.b16 %v2402, %v2398
    %v3719 = vpack.c.b16 %v2403, %v2399
    %v3720 = vpack.c.b16 %v2404, %v2400
    %v3721 = vpack.c.b16 %v2405, %v2401
    %v3722 = vpack.c.b16 %v2410, %v2406
    %v3723 = vpack.c.b16 %v2411, %v2407
    %v3724 = vpack.c.b16 %v2412, %v2408
    %v3725 = vpack.c.b16 %v2413, %v2409
    %v3726 = vpack.c.b16 %v2418, %v2414
    %v3727 = vpack.c.b16 %v2419, %v2415
    %v3728 = vpack.c.b16 %v2420, %v2416
    %v3729 = vpack.c.b16 %v2421, %v2417
    %v3730 = vpack.c.b16 %v2426, %v2422
    %v3731 = vpack.c.b16 %v2427, %v2423
    %v3732 = vpack.c.b16 %v2428, %v2424
    %v3733 = vpack.c.b16 %v2429, %v2425
    %v3734 = vpack.c.b16 %v2434, %v2430
    %v3735 = vpack.c.b16 %v2435, %v2431
    %v3736 = vpack.c.b16 %v2436, %v2432
    %v3737 = vpack.c.b16 %v2437, %v2433
    %v3738 = vpack.c.b16 %v2442, %v2438
    %v3739 = vpack.c.b16 %v2443, %v2439
    %v3740 = vpack.c.b16 %v2444, %v2440
    %v3741 = vpack.c.b16 %v2445, %v2441
    %v3742 = vpack.c.b16 %v2450, %v2446
    %v3743 = vpack.c.b16 %v2451, %v2447
    %v3744 = vpack.c.b16 %v2452, %v2448
    %v3745 = vpack.c.b16 %v2453, %v2449
    %v3746 = vpack.c.b16 %v2458, %v2454
    %v3747 = vpack.c.b16 %v2459, %v2455
    %v3748 = vpack.c.b16 %v2460, %v2456
    %v3749 = vpack.c.b16 %v2461, %v2457
    %v3750 = vpack.c.b16 %v2466, %v2462
    %v3751 = vpack.c.b16 %v2467, %v2463
    %v3752 = vpack.c.b16 %v2468, %v2464
    %v3753 = vpack.c.b16 %v2469, %v2465
    %v3754 = vpack.c.b16 %v2474, %v2470
    %v3755 = vpack.c.b16 %v2475, %v2471
    %v3756 = vpack.c.b16 %v2476, %v2472
    %v3757 = vpack.c.b16 %v2477, %v2473
    %v3758 = vpack.c.b16 %v2482, %v2478
    %v3759 = vpack.c.b16 %v2483, %v2479
    %v3760 = vpack.c.b16 %v2484, %v2480
    %v3761 = vpack.c.b16 %v2485, %v2481
    %v3762 = vpack.c.b16 %v2490, %v2486
    %v3763 = vpack.c.b16 %v2491, %v2487
    %v3764 = vpack.c.b16 %v2492, %v2488
    %v3765 = vpack.c.b16 %v2493, %v2489
    %v3766 = vpack.c.b16 %v2498, %v2494
    %v3767 = vpack.c.b16 %v2499, %v2495
    %v3768 = vpack.c.b16 %v2500, %v2496
    %v3769 = vpack.c.b16 %v2501, %v2497
    %v3770 = vpack.c.b16 %v2506, %v2502
    %v3771 = vpack.c.b16 %v2507, %v2503
    %v3772 = vpack.c.b16 %v2508, %v2504
    %v3773 = vpack.c.b16 %v2509, %v2505
    %v3774 = vpack.c.b16 %v2514, %v2510
    %v3775 = vpack.c.b16 %v2515, %v2511
    %v3776 = vpack.c.b16 %v2516, %v2512
    %v3777 = vpack.c.b16 %v2517, %v2513
    %v3778 = vpack.c.b16 %v2522, %v2518
    %v3779 = vpack.c.b16 %v2523, %v2519
    %v3780 = vpack.c.b16 %v2524, %v2520
    %v3781 = vpack.c.b16 %v2525, %v2521
    %v3782 = vpack.c.b16 %v2530, %v2526
    %v3783 = vpack.c.b16 %v2531, %v2527
    %v3784 = vpack.c.b16 %v2532, %v2528
    %v3785 = vpack.c.b16 %v2533, %v2529
    %v3786 = vpack.c.b16 %v2538, %v2534
    %v3787 = vpack.c.b16 %v2539, %v2535
    %v3788 = vpack.c.b16 %v2540, %v2536
    %v3789 = vpack.c.b16 %v2541, %v2537
    %v3790 = vpack.c.b16 %v2546, %v2542
    %v3791 = vpack.c.b16 %v2547, %v2543
    %v3792 = vpack.c.b16 %v2548, %v2544
    %v3793 = vpack.c.b16 %v2549, %v2545
    %v3794 = vpack.c.b16 %v2554, %v2550
    %v3795 = vpack.c.b16 %v2555, %v2551
    %v3796 = vpack.c.b16 %v2556, %v2552
    %v3797 = vpack.c.b16 %v2557, %v2553
    %v3798 = vpack.c.b16 %v2562, %v2558
    %v3799 = vpack.c.b16 %v2563, %v2559
    %v3800 = vpack.c.b16 %v2564, %v2560
    %v3801 = vpack.c.b16 %v2565, %v2561
    %v3802 = vpack.c.b16 %v2570, %v2566
    %v3803 = vpack.c.b16 %v2571, %v2567
    %v3804 = vpack.c.b16 %v2572, %v2568
    %v3805 = vpack.c.b16 %v2573, %v2569
    %v3806 = vpack.c.b16 %v2578, %v2574
    %v3807 = vpack.c.b16 %v2579, %v2575
    %v3808 = vpack.c.b16 %v2580, %v2576
    %v3809 = vpack.c.b16 %v2581, %v2577
    %v3810 = vpack.c.b16 %v2586, %v2582
    %v3811 = vpack.c.b16 %v2587, %v2583
    %v3812 = vpack.c.b16 %v2588, %v2584
    %v3813 = vpack.c.b16 %v2589, %v2585
    %v3814 = vpack.c.b16 %v2594, %v2590
    %v3815 = vpack.c.b16 %v2595, %v2591
    %v3816 = vpack.c.b16 %v2596, %v2592
    %v3817 = vpack.c.b16 %v2597, %v2593
    %v3818 = vpack.c.b16 %v2602, %v2598
    %v3819 = vpack.c.b16 %v2603, %v2599
    %v3820 = vpack.c.b16 %v2604, %v2600
    %v3821 = vpack.c.b16 %v2605, %v2601
    %v3822 = vpack.c.b16 %v2610, %v2606
    %v3823 = vpack.c.b16 %v2611, %v2607
    %v3824 = vpack.c.b16 %v2612, %v2608
    %v3825 = vpack.c.b16 %v2613, %v2609
    %v3826 = vpack.c.b16 %v2618, %v2614
    %v3827 = vpack.c.b16 %v2619, %v2615
    %v3828 = vpack.c.b16 %v2620, %v2616
    %v3829 = vpack.c.b16 %v2621, %v2617
    %v3830 = vpack.c.b16 %v2626, %v2622
    %v3831 = vpack.c.b16 %v2627, %v2623
    %v3832 = vpack.c.b16 %v2628, %v2624
    %v3833 = vpack.c.b16 %v2629, %v2625
    %v3834 = vpack.c.b16 %v2634, %v2630
    %v3835 = vpack.c.b16 %v2635, %v2631
    %v3836 = vpack.c.b16 %v2636, %v2632
    %v3837 = vpack.c.b16 %v2637, %v2633
    %v3838 = vpack.c.b16 %v2642, %v2638
    %v3839 = vpack.c.b16 %v2643, %v2639
    %v3840 = vpack.c.b16 %v2644, %v2640
    %v3841 = vpack.c.b16 %v2645, %v2641
    %v3842 = vpack.c.b16 %v2650, %v2646
    %v3843 = vpack.c.b16 %v2651, %v2647
    %v3844 = vpack.c.b16 %v2652, %v2648
    %v3845 = vpack.c.b16 %v2653, %v2649
    %v3846 = vpack.c.b16 %v2658, %v2654
    %v3847 = vpack.c.b16 %v2659, %v2655
    %v3848 = vpack.c.b16 %v2660, %v2656
    %v3849 = vpack.c.b16 %v2661, %v2657
    %v3850 = vpack.c.b16 %v2666, %v2662
    %v3851 = vpack.c.b16 %v2667, %v2663
    %v3852 = vpack.c.b16 %v2668, %v2664
    %v3853 = vpack.c.b16 %v2669, %v2665
    %v3854 = vpack.c.b16 %v2674, %v2670
    %v3855 = vpack.c.b16 %v2675, %v2671
    %v3856 = vpack.c.b16 %v2676, %v2672
    %v3857 = vpack.c.b16 %v2677, %v2673
    %v3858 = vpack.c.b16 %v2682, %v2678
    %v3859 = vpack.c.b16 %v2683, %v2679
    %v3860 = vpack.c.b16 %v2684, %v2680
    %v3861 = vpack.c.b16 %v2685, %v2681
    %v3862 = vpack.c.b16 %v2690, %v2686
    %v3863 = vpack.c.b16 %v2691, %v2687
    %v3864 = vpack.c.b16 %v2692, %v2688
    %v3865 = vpack.c.b16 %v2693, %v2689
    %v3866 = vpack.c.b16 %v2698, %v2694
    %v3867 = vpack.c.b16 %v2699, %v2695
    %v3868 = vpack.c.b16 %v2700, %v2696
    %v3869 = vpack.c.b16 %v2701, %v2697
    %v3870 = vpack.c.b16 %v2706, %v2702
    %v3871 = vpack.c.b16 %v2707, %v2703
    %v3872 = vpack.c.b16 %v2708, %v2704
    %v3873 = vpack.c.b16 %v2709, %v2705
    %v3874 = vpack.c.b16 %v2714, %v2710
    %v3875 = vpack.c.b16 %v2715, %v2711
    %v3876 = vpack.c.b16 %v2716, %v2712
    %v3877 = vpack.c.b16 %v2717, %v2713
    %v3878 = vpack.c.b16 %v2722, %v2718
    %v3879 = vpack.c.b16 %v2723, %v2719
    %v3880 = vpack.c.b16 %v2724, %v2720
    %v3881 = vpack.c.b16 %v2725, %v2721
    %v3882 = vpack.c.b16 %v2730, %v2726
    %v3883 = vpack.c.b16 %v2731, %v2727
    %v3884 = vpack.c.b16 %v2732, %v2728
    %v3885 = vpack.c.b16 %v2733, %v2729
    %v3886 = vpack.c.b16 %v2738, %v2734
    %v3887 = vpack.c.b16 %v2739, %v2735
    %v3888 = vpack.c.b16 %v2740, %v2736
    %v3889 = vpack.c.b16 %v2741, %v2737
    %v3890 = vpack.c.b16 %v2746, %v2742
    %v3891 = vpack.c.b16 %v2747, %v2743
    %v3892 = vpack.c.b16 %v2748, %v2744
    %v3893 = vpack.c.b16 %v2749, %v2745
    %v3894 = vpack.c.b16 %v2754, %v2750
    %v3895 = vpack.c.b16 %v2755, %v2751
    %v3896 = vpack.c.b16 %v2756, %v2752
    %v3897 = vpack.c.b16 %v2757, %v2753
    %v3898 = vpack.c.b16 %v2762, %v2758
    %v3899 = vpack.c.b16 %v2763, %v2759
    %v3900 = vpack.c.b16 %v2764, %v2760
    %v3901 = vpack.c.b16 %v2765, %v2761
    %v3902 = vpack.c.b16 %v2770, %v2766
    %v3903 = vpack.c.b16 %v2771, %v2767
    %v3904 = vpack.c.b16 %v2772, %v2768
    %v3905 = vpack.c.b16 %v2773, %v2769
    %v3906 = vpack.c.b16 %v2778, %v2774
    %v3907 = vpack.c.b16 %v2779, %v2775
    %v3908 = vpack.c.b16 %v2780, %v2776
    %v3909 = vpack.c.b16 %v2781, %v2777
    %v3910 = vpack.c.b16 %v2786, %v2782
    %v3911 = vpack.c.b16 %v2787, %v2783
    %v3912 = vpack.c.b16 %v2788, %v2784
    %v3913 = vpack.c.b16 %v2789, %v2785
    %v3914 = vpack.c.b16 %v2794, %v2790
    %v3915 = vpack.c.b16 %v2795, %v2791
    %v3916 = vpack.c.b16 %v2796, %v2792
    %v3917 = vpack.c.b16 %v2797, %v2793
    %v3918 = vpack.c.b16 %v2802, %v2798
    %v3919 = vpack.c.b16 %v2803, %v2799
    %v3920 = vpack.c.b16 %v2804, %v2800
    %v3921 = vpack.c.b16 %v2805, %v2801
    %v3922 = vpack.c.b16 %v2810, %v2806
    %v3923 = vpack.c.b16 %v2811, %v2807
    %v3924 = vpack.c.b16 %v2812, %v2808
    %v3925 = vpack.c.b16 %v2813, %v2809
    %v3926 = vpack.c.b16 %v2818, %v2814
    %v3927 = vpack.c.b16 %v2819, %v2815
    %v3928 = vpack.c.b16 %v2820, %v2816
    %v3929 = vpack.c.b16 %v2821, %v2817
    %v3930 = vpack.c.b16 %v2826, %v2822
    %v3931 = vpack.c.b16 %v2827, %v2823
    %v3932 = vpack.c.b16 %v2828, %v2824
    %v3933 = vpack.c.b16 %v2829, %v2825
    %v3934 = vpack.c.b16 %v2834, %v2830
    %v3935 = vpack.c.b16 %v2835, %v2831
    %v3936 = vpack.c.b16 %v2836, %v2832
    %v3937 = vpack.c.b16 %v2837, %v2833
    %v3938 = vpack.c.b16 %v2842, %v2838
    %v3939 = vpack.c.b16 %v2843, %v2839
    %v3940 = vpack.c.b16 %v2844, %v2840
    %v3941 = vpack.c.b16 %v2845, %v2841
    %v3942 = vpack.c.b16 %v2850, %v2846
    %v3943 = vpack.c.b16 %v2851, %v2847
    %v3944 = vpack.c.b16 %v2852, %v2848
    %v3945 = vpack.c.b16 %v2853, %v2849
    %v3946 = vpack.c.b16 %v2858, %v2854
    %v3947 = vpack.c.b16 %v2859, %v2855
    %v3948 = vpack.c.b16 %v2860, %v2856
    %v3949 = vpack.c.b16 %v2861, %v2857
    %v3950 = vpack.c.b16 %v2866, %v2862
    %v3951 = vpack.c.b16 %v2867, %v2863
    %v3952 = vpack.c.b16 %v2868, %v2864
    %v3953 = vpack.c.b16 %v2869, %v2865
    %v3954 = vpack.c.b16 %v2874, %v2870
    %v3955 = vpack.c.b16 %v2875, %v2871
    %v3956 = vpack.c.b16 %v2876, %v2872
    %v3957 = vpack.c.b16 %v2877, %v2873
    %v3958 = vpack.c.b16 %v2882, %v2878
    %v3959 = vpack.c.b16 %v2883, %v2879
    %v3960 = vpack.c.b16 %v2884, %v2880
    %v3961 = vpack.c.b16 %v2885, %v2881
    %v3962 = vpack.c.b16 %v2890, %v2886
    %v3963 = vpack.c.b16 %v2891, %v2887
    %v3964 = vpack.c.b16 %v2892, %v2888
    %v3965 = vpack.c.b16 %v2893, %v2889
    %v3966 = vpack.c.b16 %v2898, %v2894
    %v3967 = vpack.c.b16 %v2899, %v2895
    %v3968 = vpack.c.b16 %v2900, %v2896
    %v3969 = vpack.c.b16 %v2901, %v2897
    %v3970 = vpack.c.b16 %v2906, %v2902
    %v3971 = vpack.c.b16 %v2907, %v2903
    %v3972 = vpack.c.b16 %v2908, %v2904
    %v3973 = vpack.c.b16 %v2909, %v2905
    %v3974 = vpack.c.b16 %v2914, %v2910
    %v3975 = vpack.c.b16 %v2915, %v2911
    %v3976 = vpack.c.b16 %v2916, %v2912
    %v3977 = vpack.c.b16 %v2917, %v2913
    %v3978 = vpack.c.b16 %v2922, %v2918
    %v3979 = vpack.c.b16 %v2923, %v2919
    %v3980 = vpack.c.b16 %v2924, %v2920
    %v3981 = vpack.c.b16 %v2925, %v2921
    %v3982 = vpack.c.b16 %v2930, %v2926
    %v3983 = vpack.c.b16 %v2931, %v2927
    %v3984 = vpack.c.b16 %v2932, %v2928
    %v3985 = vpack.c.b16 %v2933, %v2929
    %v3986 = vpack.c.b16 %v2938, %v2934
    %v3987 = vpack.c.b16 %v2939, %v2935
    %v3988 = vpack.c.b16 %v2940, %v2936
    %v3989 = vpack.c.b16 %v2941, %v2937
    %v3990 = vpack.c.b16 %v2946, %v2942
    %v3991 = vpack.c.b16 %v2947, %v2943
    %v3992 = vpack.c.b16 %v2948, %v2944
    %v3993 = vpack.c.b16 %v2949, %v2945
    %v3994 = vpack.c.b16 %v2954, %v2950
    %v3995 = vpack.c.b16 %v2955, %v2951
    %v3996 = vpack.c.b16 %v2956, %v2952
    %v3997 = vpack.c.b16 %v2957, %v2953
    %v3998 = vpack.c.b16 %v2962, %v2958
    %v3999 = vpack.c.b16 %v2963, %v2959
    %v4000 = vpack.c.b16 %v2964, %v2960
    %v4001 = vpack.c.b16 %v2965, %v2961
    %v4002 = vpack.c.b16 %v2970, %v2966
    %v4003 = vpack.c.b16 %v2971, %v2967
    %v4004 = vpack.c.b16 %v2972, %v2968
    %v4005 = vpack.c.b16 %v2973, %v2969
    %v4006 = vpack.c.b16 %v2978, %v2974
    %v4007 = vpack.c.b16 %v2979, %v2975
    %v4008 = vpack.c.b16 %v2980, %v2976
    %v4009 = vpack.c.b16 %v2981, %v2977
    %v4010 = vpack.c.b16 %v2986, %v2982
    %v4011 = vpack.c.b16 %v2987, %v2983
    %v4012 = vpack.c.b16 %v2988, %v2984
    %v4013 = vpack.c.b16 %v2989, %v2985
    %v4014 = vpack.c.b16 %v2994, %v2990
    %v4015 = vpack.c.b16 %v2995, %v2991
    %v4016 = vpack.c.b16 %v2996, %v2992
    %v4017 = vpack.c.b16 %v2997, %v2993
    %v4018 = vpack.c.b16 %v3002, %v2998
    %v4019 = vpack.c.b16 %v3003, %v2999
    %v4020 = vpack.c.b16 %v3004, %v3000
    %v4021 = vpack.c.b16 %v3005, %v3001
    %v4022 = vpack.c.b16 %v3010, %v3006
    %v4023 = vpack.c.b16 %v3011, %v3007
    %v4024 = vpack.c.b16 %v3012, %v3008
    %v4025 = vpack.c.b16 %v3013, %v3009
    %v4026 = vpack.c.b16 %v3018, %v3014
    %v4027 = vpack.c.b16 %v3019, %v3015
    %v4028 = vpack.c.b16 %v3020, %v3016
    %v4029 = vpack.c.b16 %v3021, %v3017
    %v4030 = vpack.c.b16 %v3026, %v3022
    %v4031 = vpack.c.b16 %v3027, %v3023
    %v4032 = vpack.c.b16 %v3028, %v3024
    %v4033 = vpack.c.b16 %v3029, %v3025
    %v4034 = vpack.c.b16 %v3034, %v3030
    %v4035 = vpack.c.b16 %v3035, %v3031
    %v4036 = vpack.c.b16 %v3036, %v3032
    %v4037 = vpack.c.b16 %v3037, %v3033
    %v4038 = vpack.c.b16 %v3042, %v3038
    %v4039 = vpack.c.b16 %v3043, %v3039
    %v4040 = vpack.c.b16 %v3044, %v3040
    %v4041 = vpack.c.b16 %v3045, %v3041
    %v4042 = vpack.c.b16 %v3050, %v3046
    %v4043 = vpack.c.b16 %v3051, %v3047
    %v4044 = vpack.c.b16 %v3052, %v3048
    %v4045 = vpack.c.b16 %v3053, %v3049
    %v4046 = vpack.c.b16 %v3058, %v3054
    %v4047 = vpack.c.b16 %v3059, %v3055
    %v4048 = vpack.c.b16 %v3060, %v3056
    %v4049 = vpack.c.b16 %v3061, %v3057
    %v4050 = vpack.c.b16 %v3066, %v3062
    %v4051 = vpack.c.b16 %v3067, %v3063
    %v4052 = vpack.c.b16 %v3068, %v3064
    %v4053 = vpack.c.b16 %v3069, %v3065
    %v4054 = vpack.c.b16 %v3074, %v3070
    %v4055 = vpack.c.b16 %v3075, %v3071
    %v4056 = vpack.c.b16 %v3076, %v3072
    %v4057 = vpack.c.b16 %v3077, %v3073
    %v4058 = vpack.c.b16 %v3082, %v3078
    %v4059 = vpack.c.b16 %v3083, %v3079
    %v4060 = vpack.c.b16 %v3084, %v3080
    %v4061 = vpack.c.b16 %v3085, %v3081
    %v4062 = vpack.c.b16 %v3090, %v3086
    %v4063 = vpack.c.b16 %v3091, %v3087
    %v4064 = vpack.c.b16 %v3092, %v3088
    %v4065 = vpack.c.b16 %v3093, %v3089
    %v4066 = vpack.c.b16 %v3098, %v3094
    %v4067 = vpack.c.b16 %v3099, %v3095
    %v4068 = vpack.c.b16 %v3100, %v3096
    %v4069 = vpack.c.b16 %v3101, %v3097
    %v4070 = vpack.c.b16 %v3106, %v3102
    %v4071 = vpack.c.b16 %v3107, %v3103
    %v4072 = vpack.c.b16 %v3108, %v3104
    %v4073 = vpack.c.b16 %v3109, %v3105
    %v4074 = vpack.c.b16 %v3114, %v3110
    %v4075 = vpack.c.b16 %v3115, %v3111
    %v4076 = vpack.c.b16 %v3116, %v3112
    %v4077 = vpack.c.b16 %v3117, %v3113
    %v4078 = vpack.c.b16 %v3122, %v3118
    %v4079 = vpack.c.b16 %v3123, %v3119
    %v4080 = vpack.c.b16 %v3124, %v3120
    %v4081 = vpack.c.b16 %v3125, %v3121
    %v4082 = vpack.c.b16 %v3130, %v3126
    %v4083 = vpack.c.b16 %v3131, %v3127
    %v4084 = vpack.c.b16 %v3132, %v3128
    %v4085 = vpack.c.b16 %v3133, %v3129
    %v4086 = vpack.c.b16 %v3138, %v3134
    %v4087 = vpack.c.b16 %v3139, %v3135
    %v4088 = vpack.c.b16 %v3140, %v3136
    %v4089 = vpack.c.b16 %v3141, %v3137
    %v4090 = vpack.c.b16 %v3146, %v3142
    %v4091 = vpack.c.b16 %v3147, %v3143
    %v4092 = vpack.c.b16 %v3148, %v3144
    %v4093 = vpack.c.b16 %v3149, %v3145
    %v4094 = vpack.c.b16 %v3154, %v3150
    %v4095 = vpack.c.b16 %v3155, %v3151
    %v4096 = vpack.c.b16 %v3156, %v3152
    %v4097 = vpack.c.b16 %v3157, %v3153
    %v4098 = vpack.c.b16 %v3162, %v3158
    %v4099 = vpack.c.b16 %v3163, %v3159
    %v4100 = vpack.c.b16 %v3164, %v3160
    %v4101 = vpack.c.b16 %v3165, %v3161
    %v4102 = vpack.c.b16 %v3170, %v3166
    %v4103 = vpack.c.b16 %v3171, %v3167
    %v4104 = vpack.c.b16 %v3172, %v3168
    %v4105 = vpack.c.b16 %v3173, %v3169
    %v4106 = vpack.c.b16 %v3178, %v3174
    %v4107 = vpack.c.b16 %v3179, %v3175
    %v4108 = vpack.c.b16 %v3180, %v3176
    %v4109 = vpack.c.b16 %v3181, %v3177
    %v4110 = vpack.c.b16 %v3186, %v3182
    %v4111 = vpack.c.b16 %v3187, %v3183
    %v4112 = vpack.c.b16 %v3188, %v3184
    %v4113 = vpack.c.b16 %v3189, %v3185
    %v4114 = vpack.c.b16 %v3194, %v3190
    %v4115 = vpack.c.b16 %v3195, %v3191
    %v4116 = vpack.c.b16 %v3196, %v3192
    %v4117 = vpack.c.b16 %v3197, %v3193
    %v4118 = vpack.c.b16 %v3202, %v3198
    %v4119 = vpack.c.b16 %v3203, %v3199
    %v4120 = vpack.c.b16 %v3204, %v3200
    %v4121 = vpack.c.b16 %v3205, %v3201
    %v4122 = vpack.c.b16 %v3210, %v3206
    %v4123 = vpack.c.b16 %v3211, %v3207
    %v4124 = vpack.c.b16 %v3212, %v3208
    %v4125 = vpack.c.b16 %v3213, %v3209
    %v4126 = vpack.c.b16 %v3218, %v3214
    %v4127 = vpack.c.b16 %v3219, %v3215
    %v4128 = vpack.c.b16 %v3220, %v3216
    %v4129 = vpack.c.b16 %v3221, %v3217
    %v4130 = vpack.c.b16 %v3226, %v3222
    %v4131 = vpack.c.b16 %v3227, %v3223
    %v4132 = vpack.c.b16 %v3228, %v3224
    %v4133 = vpack.c.b16 %v3229, %v3225
    %v4134 = vpack.c.b16 %v3234, %v3230
    %v4135 = vpack.c.b16 %v3235, %v3231
    %v4136 = vpack.c.b16 %v3236, %v3232
    %v4137 = vpack.c.b16 %v3237, %v3233
    %v4138 = vpack.c.b16 %v3242, %v3238
    %v4139 = vpack.c.b16 %v3243, %v3239
    %v4140 = vpack.c.b16 %v3244, %v3240
    %v4141 = vpack.c.b16 %v3245, %v3241
    %v4142 = vpack.c.b16 %v3250, %v3246
    %v4143 = vpack.c.b16 %v3251, %v3247
    %v4144 = vpack.c.b16 %v3252, %v3248
    %v4145 = vpack.c.b16 %v3253, %v3249
    %v4146 = vpack.c.b16 %v3258, %v3254
    %v4147 = vpack.c.b16 %v3259, %v3255
    %v4148 = vpack.c.b16 %v3260, %v3256
    %v4149 = vpack.c.b16 %v3261, %v3257
    %v4150 = vpack.c.b16 %v3266, %v3262
    %v4151 = vpack.c.b16 %v3267, %v3263
    %v4152 = vpack.c.b16 %v3268, %v3264
    %v4153 = vpack.c.b16 %v3269, %v3265
    %v4154 = vpack.c.b16 %v3274, %v3270
    %v4155 = vpack.c.b16 %v3275, %v3271
    %v4156 = vpack.c.b16 %v3276, %v3272
    %v4157 = vpack.c.b16 %v3277, %v3273
    %v4158 = vpack.c.b16 %v3282, %v3278
    %v4159 = vpack.c.b16 %v3283, %v3279
    %v4160 = vpack.c.b16 %v3284, %v3280
    %v4161 = vpack.c.b16 %v3285, %v3281
    %v4162 = vpack.c.b16 %v3290, %v3286
    %v4163 = vpack.c.b16 %v3291, %v3287
    %v4164 = vpack.c.b16 %v3292, %v3288
    %v4165 = vpack.c.b16 %v3293, %v3289
    %v4166 = vpack.c.b16 %v3298, %v3294
    %v4167 = vpack.c.b16 %v3299, %v3295
    %v4168 = vpack.c.b16 %v3300, %v3296
    %v4169 = vpack.c.b16 %v3301, %v3297
    %v4170 = vpack.c.b16 %v3306, %v3302
    %v4171 = vpack.c.b16 %v3307, %v3303
    %v4172 = vpack.c.b16 %v3308, %v3304
    %v4173 = vpack.c.b16 %v3309, %v3305
    %v4174 = vpack.c.b16 %v3314, %v3310
    %v4175 = vpack.c.b16 %v3315, %v3311
    %v4176 = vpack.c.b16 %v3316, %v3312
    %v4177 = vpack.c.b16 %v3317, %v3313
    %v4178 = vpack.c.b16 %v3322, %v3318
    %v4179 = vpack.c.b16 %v3323, %v3319
    %v4180 = vpack.c.b16 %v3324, %v3320
    %v4181 = vpack.c.b16 %v3325, %v3321
    %v4182 = vpack.c.b16 %v3330, %v3326
    %v4183 = vpack.c.b16 %v3331, %v3327
    %v4184 = vpack.c.b16 %v3332, %v3328
    %v4185 = vpack.c.b16 %v3333, %v3329
    %v4186 = vpack.c.b16 %v3338, %v3334
    %v4187 = vpack.c.b16 %v3339, %v3335
    %v4188 = vpack.c.b16 %v3340, %v3336
    %v4189 = vpack.c.b16 %v3341, %v3337
    %v4190 = vpack.c.b16 %v3346, %v3342
    %v4191 = vpack.c.b16 %v3347, %v3343
    %v4192 = vpack.c.b16 %v3348, %v3344
    %v4193 = vpack.c.b16 %v3349, %v3345
    %v4194 = vpack.c.b16 %v3354, %v3350
    %v4195 = vpack.c.b16 %v3355, %v3351
    %v4196 = vpack.c.b16 %v3356, %v3352
    %v4197 = vpack.c.b16 %v3357, %v3353
    %v4198 = vpack.c.b16 %v3362, %v3358
    %v4199 = vpack.c.b16 %v3363, %v3359
    %v4200 = vpack.c.b16 %v3364, %v3360
    %v4201 = vpack.c.b16 %v3365, %v3361
    %v4202 = vpack.c.b16 %v3370, %v3366
    %v4203 = vpack.c.b16 %v3371, %v3367
    %v4204 = vpack.c.b16 %v3372, %v3368
    %v4205 = vpack.c.b16 %v3373, %v3369
    %v4206 = vpack.c.b16 %v3378, %v3374
    %v4207 = vpack.c.b16 %v3379, %v3375
    %v4208 = vpack.c.b16 %v3380, %v3376
    %v4209 = vpack.c.b16 %v3381, %v3377
    %v4210 = vpack.c.b16 %v3386, %v3382
    %v4211 = vpack.c.b16 %v3387, %v3383
    %v4212 = vpack.c.b16 %v3388, %v3384
    %v4213 = vpack.c.b16 %v3389, %v3385
    %v4214 = vpack.c.b16 %v3394, %v3390
    %v4215 = vpack.c.b16 %v3395, %v3391
    %v4216 = vpack.c.b16 %v3396, %v3392
    %v4217 = vpack.c.b16 %v3397, %v3393
    %v4218 = vpack.c.b16 %v3402, %v3398
    %v4219 = vpack.c.b16 %v3403, %v3399
    %v4220 = vpack.c.b16 %v3404, %v3400
    %v4221 = vpack.c.b16 %v3405, %v3401
    %v4222 = vpack.c.b16 %v3410, %v3406
    %v4223 = vpack.c.b16 %v3411, %v3407
    %v4224 = vpack.c.b16 %v3412, %v3408
    %v4225 = vpack.c.b16 %v3413, %v3409
    %v4226 = vpack.c.b16 %v3418, %v3414
    %v4227 = vpack.c.b16 %v3419, %v3415
    %v4228 = vpack.c.b16 %v3420, %v3416
    %v4229 = vpack.c.b16 %v3421, %v3417
    %v4230 = vpack.c.b16 %v3426, %v3422
    %v4231 = vpack.c.b16 %v3427, %v3423
    %v4232 = vpack.c.b16 %v3428, %v3424
    %v4233 = vpack.c.b16 %v3429, %v3425
    %v4234 = vpack.c.b16 %v3434, %v3430
    %v4235 = vpack.c.b16 %v3435, %v3431
    %v4236 = vpack.c.b16 %v3436, %v3432
    %v4237 = vpack.c.b16 %v3437, %v3433
    %5038 = vmatprep.subr.bf16.mxu0 %v3467
    %5039 = vmatpush1.bf16.msra.mxu0 %v3466
    %5040 = vmatprep.subr.bf16.mxu0 %v3463
    %5041 = vmatpush1.bf16.msra.mxu0 %v3462
    %5042 = vmatprep.subr.bf16.mxu0 %v3459
    %5043 = vmatpush1.bf16.msra.mxu0 %v3458
    %5044 = vmatprep.subr.bf16.mxu0 %v3455
    %5045 = vmatpush1.bf16.msra.mxu0 %v3454
    %5046 = vmatprep.subr.bf16.mxu0 %v3451
    %5047 = vmatpush1.bf16.msra.mxu0 %v3450
    %5048 = vmatprep.subr.bf16.mxu0 %v3447
    %5049 = vmatpush1.bf16.msra.mxu0 %v3446
    %5050 = vmatprep.subr.bf16.mxu0 %v3443
    %5051 = vmatpush1.bf16.msra.mxu0 %v3442
    %5052 = vmatprep.subr.bf16.mxu0 %v3439
    %5053 = vmatpush1.bf16.msra.mxu0 %v3438
    %5054 = vmatprep.subr.bf16.mxu0 %v3499
    %5055 = vmatpush2.bf16.msra.mxu0 %v3498
    %5056 = vmatprep.subr.bf16.mxu0 %v3495
    %5057 = vmatpush2.bf16.msra.mxu0 %v3494
    %5058 = vmatprep.subr.bf16.mxu0 %v3491
    %5059 = vmatpush2.bf16.msra.mxu0 %v3490
    %5060 = vmatprep.subr.bf16.mxu0 %v3487
    %5061 = vmatpush2.bf16.msra.mxu0 %v3486
    %5062 = vmatprep.subr.bf16.mxu0 %v3483
    %5063 = vmatpush2.bf16.msra.mxu0 %v3482
    %5064 = vmatprep.subr.bf16.mxu0 %v3479
    %5065 = vmatpush2.bf16.msra.mxu0 %v3478
    %5066 = vmatprep.subr.bf16.mxu0 %v3475
    %5067 = vmatpush2.bf16.msra.mxu0 %v3474
    %5068 = vmatprep.subr.bf16.mxu0 %v3471
    %5069 = vmatpush2.bf16.msra.mxu0 %v3470
    %5070 = vmatprep.mubr.bf16.mxu0 %v889
    %5071 = vmatmul.mubr.bf16.gmra.mxu0 %v875
    %v5072 = vpop.f32.mrf.mxu0
    %v5073 = vadd.f32 %v831, %v5072
    %v5074 = vpop.f32.mrf.mxu0
    %v5075 = vadd.f32 %v835, %v5074
    %v5076 = vpop.f32.mrf.mxu0
    %v5077 = vpop.f32.mrf.mxu0
    %5078 = vdwg.mxu0
    %5079 = vmatprep.subr.bf16.mxu0 %v3531
    %5080 = vmatpush1.bf16.msra.mxu0 %v3530
    %5081 = vmatprep.subr.bf16.mxu0 %v3527
    %5082 = vmatpush1.bf16.msra.mxu0 %v3526
    %5083 = vmatprep.subr.bf16.mxu0 %v3523
    %5084 = vmatpush1.bf16.msra.mxu0 %v3522
    %5085 = vmatprep.subr.bf16.mxu0 %v3519
    %5086 = vmatpush1.bf16.msra.mxu0 %v3518
    %5087 = vmatprep.subr.bf16.mxu0 %v3515
    %5088 = vmatpush1.bf16.msra.mxu0 %v3514
    %5089 = vmatprep.subr.bf16.mxu0 %v3511
    %5090 = vmatpush1.bf16.msra.mxu0 %v3510
    %5091 = vmatprep.subr.bf16.mxu0 %v3507
    %5092 = vmatpush1.bf16.msra.mxu0 %v3506
    %5093 = vmatprep.subr.bf16.mxu0 %v3503
    %5094 = vmatpush1.bf16.msra.mxu0 %v3502
    %5095 = vmatprep.subr.bf16.mxu0 %v3563
    %5096 = vmatpush2.bf16.msra.mxu0 %v3562
    %5097 = vmatprep.subr.bf16.mxu0 %v3559
    %5098 = vmatpush2.bf16.msra.mxu0 %v3558
    %5099 = vmatprep.subr.bf16.mxu0 %v3555
    %5100 = vmatpush2.bf16.msra.mxu0 %v3554
    %5101 = vmatprep.subr.bf16.mxu0 %v3551
    %5102 = vmatpush2.bf16.msra.mxu0 %v3550
    %5103 = vmatprep.subr.bf16.mxu0 %v3547
    %5104 = vmatpush2.bf16.msra.mxu0 %v3546
    %5105 = vmatprep.subr.bf16.mxu0 %v3543
    %5106 = vmatpush2.bf16.msra.mxu0 %v3542
    %5107 = vmatprep.subr.bf16.mxu0 %v3539
    %5108 = vmatpush2.bf16.msra.mxu0 %v3538
    %5109 = vmatprep.subr.bf16.mxu0 %v3535
    %5110 = vmatpush2.bf16.msra.mxu0 %v3534
    %5111 = vmatprep.mubr.bf16.mxu0 %v899
    %5112 = vmatmul.mubr.bf16.gmra.mxu0 %v897
    %v5113 = vpop.f32.mrf.mxu0
    %v5114 = vadd.f32 %v5073, %v5113
    %v5115 = vpop.f32.mrf.mxu0
    %v5116 = vadd.f32 %v5075, %v5115
    %v5117 = vpop.f32.mrf.mxu0
    %v5118 = vpop.f32.mrf.mxu0
    %5119 = vdwg.mxu0
    %5120 = vmatprep.subr.bf16.mxu0 %v3595
    %5121 = vmatpush1.bf16.msra.mxu0 %v3594
    %5122 = vmatprep.subr.bf16.mxu0 %v3591
    %5123 = vmatpush1.bf16.msra.mxu0 %v3590
    %5124 = vmatprep.subr.bf16.mxu0 %v3587
    %5125 = vmatpush1.bf16.msra.mxu0 %v3586
    %5126 = vmatprep.subr.bf16.mxu0 %v3583
    %5127 = vmatpush1.bf16.msra.mxu0 %v3582
    %5128 = vmatprep.subr.bf16.mxu0 %v3579
    %5129 = vmatpush1.bf16.msra.mxu0 %v3578
    %5130 = vmatprep.subr.bf16.mxu0 %v3575
    %5131 = vmatpush1.bf16.msra.mxu0 %v3574
    %5132 = vmatprep.subr.bf16.mxu0 %v3571
    %5133 = vmatpush1.bf16.msra.mxu0 %v3570
    %5134 = vmatprep.subr.bf16.mxu0 %v3567
    %5135 = vmatpush1.bf16.msra.mxu0 %v3566
    %5136 = vmatprep.subr.bf16.mxu0 %v3627
    %5137 = vmatpush2.bf16.msra.mxu0 %v3626
    %5138 = vmatprep.subr.bf16.mxu0 %v3623
    %5139 = vmatpush2.bf16.msra.mxu0 %v3622
    %5140 = vmatprep.subr.bf16.mxu0 %v3619
    %5141 = vmatpush2.bf16.msra.mxu0 %v3618
    %5142 = vmatprep.subr.bf16.mxu0 %v3615
    %5143 = vmatpush2.bf16.msra.mxu0 %v3614
    %5144 = vmatprep.subr.bf16.mxu0 %v3611
    %5145 = vmatpush2.bf16.msra.mxu0 %v3610
    %5146 = vmatprep.subr.bf16.mxu0 %v3607
    %5147 = vmatpush2.bf16.msra.mxu0 %v3606
    %5148 = vmatprep.subr.bf16.mxu0 %v3603
    %5149 = vmatpush2.bf16.msra.mxu0 %v3602
    %5150 = vmatprep.subr.bf16.mxu0 %v3599
    %5151 = vmatpush2.bf16.msra.mxu0 %v3598
    %5152 = vmatprep.mubr.bf16.mxu0 %v896
    %5153 = vmatmul.mubr.bf16.gmra.mxu0 %v882
    %v5154 = vpop.f32.mrf.mxu0
    %v5155 = vadd.f32 %v5114, %v5154
    %v5156 = vpop.f32.mrf.mxu0
    %v5157 = vadd.f32 %v5116, %v5156
    %v5158 = vpop.f32.mrf.mxu0
    %v5159 = vpop.f32.mrf.mxu0
    %5160 = vdwg.mxu0
    %5161 = vmatprep.subr.bf16.mxu0 %v3659
    %5162 = vmatpush1.bf16.msra.mxu0 %v3658
    %5163 = vmatprep.subr.bf16.mxu0 %v3655
    %5164 = vmatpush1.bf16.msra.mxu0 %v3654
    %5165 = vmatprep.subr.bf16.mxu0 %v3651
    %5166 = vmatpush1.bf16.msra.mxu0 %v3650
    %5167 = vmatprep.subr.bf16.mxu0 %v3647
    %5168 = vmatpush1.bf16.msra.mxu0 %v3646
    %5169 = vmatprep.subr.bf16.mxu0 %v3643
    %5170 = vmatpush1.bf16.msra.mxu0 %v3642
    %5171 = vmatprep.subr.bf16.mxu0 %v3639
    %5172 = vmatpush1.bf16.msra.mxu0 %v3638
    %5173 = vmatprep.subr.bf16.mxu0 %v3635
    %5174 = vmatpush1.bf16.msra.mxu0 %v3634
    %5175 = vmatprep.subr.bf16.mxu0 %v3631
    %5176 = vmatpush1.bf16.msra.mxu0 %v3630
    %5177 = vmatprep.subr.bf16.mxu0 %v3691
    %5178 = vmatpush2.bf16.msra.mxu0 %v3690
    %5179 = vmatprep.subr.bf16.mxu0 %v3687
    %5180 = vmatpush2.bf16.msra.mxu0 %v3686
    %5181 = vmatprep.subr.bf16.mxu0 %v3683
    %5182 = vmatpush2.bf16.msra.mxu0 %v3682
    %5183 = vmatprep.subr.bf16.mxu0 %v3679
    %5184 = vmatpush2.bf16.msra.mxu0 %v3678
    %5185 = vmatprep.subr.bf16.mxu0 %v3675
    %5186 = vmatpush2.bf16.msra.mxu0 %v3674
    %5187 = vmatprep.subr.bf16.mxu0 %v3671
    %5188 = vmatpush2.bf16.msra.mxu0 %v3670
    %5189 = vmatprep.subr.bf16.mxu0 %v3667
    %5190 = vmatpush2.bf16.msra.mxu0 %v3666
    %5191 = vmatprep.subr.bf16.mxu0 %v3663
    %5192 = vmatpush2.bf16.msra.mxu0 %v3662
    %5193 = vmatprep.mubr.bf16.mxu0 %v900
    %5194 = vmatmul.mubr.bf16.gmra.mxu0 %v898
    %v5195 = vpop.f32.mrf.mxu0
    %v5196 = vadd.f32 %v5155, %v5195
    %v5197 = vpop.f32.mrf.mxu0
    %v5198 = vadd.f32 %v5157, %v5197
    %v5199 = vpop.f32.mrf.mxu0
    %v5200 = vpop.f32.mrf.mxu0
    %5201 = vdwg.mxu0
    %5202 = vmatprep.subr.bf16.mxu0 %v3723
    %5203 = vmatpush1.bf16.msra.mxu0 %v3722
    %5204 = vmatprep.subr.bf16.mxu0 %v3719
    %5205 = vmatpush1.bf16.msra.mxu0 %v3718
    %5206 = vmatprep.subr.bf16.mxu0 %v3715
    %5207 = vmatpush1.bf16.msra.mxu0 %v3714
    %5208 = vmatprep.subr.bf16.mxu0 %v3711
    %5209 = vmatpush1.bf16.msra.mxu0 %v3710
    %5210 = vmatprep.subr.bf16.mxu0 %v3707
    %5211 = vmatpush1.bf16.msra.mxu0 %v3706
    %5212 = vmatprep.subr.bf16.mxu0 %v3703
    %5213 = vmatpush1.bf16.msra.mxu0 %v3702
    %5214 = vmatprep.subr.bf16.mxu0 %v3699
    %5215 = vmatpush1.bf16.msra.mxu0 %v3698
    %5216 = vmatprep.subr.bf16.mxu0 %v3695
    %5217 = vmatpush1.bf16.msra.mxu0 %v3694
    %5218 = vmatprep.subr.bf16.mxu0 %v3755
    %5219 = vmatpush2.bf16.msra.mxu0 %v3754
    %5220 = vmatprep.subr.bf16.mxu0 %v3751
    %5221 = vmatpush2.bf16.msra.mxu0 %v3750
    %5222 = vmatprep.subr.bf16.mxu0 %v3747
    %5223 = vmatpush2.bf16.msra.mxu0 %v3746
    %5224 = vmatprep.subr.bf16.mxu0 %v3743
    %5225 = vmatpush2.bf16.msra.mxu0 %v3742
    %5226 = vmatprep.subr.bf16.mxu0 %v3739
    %5227 = vmatpush2.bf16.msra.mxu0 %v3738
    %5228 = vmatprep.subr.bf16.mxu0 %v3735
    %5229 = vmatpush2.bf16.msra.mxu0 %v3734
    %5230 = vmatprep.subr.bf16.mxu0 %v3731
    %5231 = vmatpush2.bf16.msra.mxu0 %v3730
    %5232 = vmatprep.subr.bf16.mxu0 %v3727
    %5233 = vmatpush2.bf16.msra.mxu0 %v3726
    %5234 = vmatprep.mubr.bf16.mxu0 %v938
    %5235 = vmatmul.mubr.bf16.gmra.mxu0 %v924
    %v5236 = vpop.f32.mrf.mxu0
    %v5237 = vadd.f32 %v5196, %v5236
    %v5238 = vpop.f32.mrf.mxu0
    %v5239 = vadd.f32 %v5198, %v5238
    %v5240 = vpop.f32.mrf.mxu0
    %v5241 = vpop.f32.mrf.mxu0
    %5242 = vdwg.mxu0
    %5243 = vmatprep.subr.bf16.mxu0 %v3787
    %5244 = vmatpush1.bf16.msra.mxu0 %v3786
    %5245 = vmatprep.subr.bf16.mxu0 %v3783
    %5246 = vmatpush1.bf16.msra.mxu0 %v3782
    %5247 = vmatprep.subr.bf16.mxu0 %v3779
    %5248 = vmatpush1.bf16.msra.mxu0 %v3778
    %5249 = vmatprep.subr.bf16.mxu0 %v3775
    %5250 = vmatpush1.bf16.msra.mxu0 %v3774
    %5251 = vmatprep.subr.bf16.mxu0 %v3771
    %5252 = vmatpush1.bf16.msra.mxu0 %v3770
    %5253 = vmatprep.subr.bf16.mxu0 %v3767
    %5254 = vmatpush1.bf16.msra.mxu0 %v3766
    %5255 = vmatprep.subr.bf16.mxu0 %v3763
    %5256 = vmatpush1.bf16.msra.mxu0 %v3762
    %5257 = vmatprep.subr.bf16.mxu0 %v3759
    %5258 = vmatpush1.bf16.msra.mxu0 %v3758
    %5259 = vmatprep.subr.bf16.mxu0 %v3819
    %5260 = vmatpush2.bf16.msra.mxu0 %v3818
    %5261 = vmatprep.subr.bf16.mxu0 %v3815
    %5262 = vmatpush2.bf16.msra.mxu0 %v3814
    %5263 = vmatprep.subr.bf16.mxu0 %v3811
    %5264 = vmatpush2.bf16.msra.mxu0 %v3810
    %5265 = vmatprep.subr.bf16.mxu0 %v3807
    %5266 = vmatpush2.bf16.msra.mxu0 %v3806
    %5267 = vmatprep.subr.bf16.mxu0 %v3803
    %5268 = vmatpush2.bf16.msra.mxu0 %v3802
    %5269 = vmatprep.subr.bf16.mxu0 %v3799
    %5270 = vmatpush2.bf16.msra.mxu0 %v3798
    %5271 = vmatprep.subr.bf16.mxu0 %v3795
    %5272 = vmatpush2.bf16.msra.mxu0 %v3794
    %5273 = vmatprep.subr.bf16.mxu0 %v3791
    %5274 = vmatpush2.bf16.msra.mxu0 %v3790
    %5275 = vmatprep.mubr.bf16.mxu0 %v948
    %5276 = vmatmul.mubr.bf16.gmra.mxu0 %v946
    %v5277 = vpop.f32.mrf.mxu0
    %v5278 = vadd.f32 %v5237, %v5277
    %v5279 = vpop.f32.mrf.mxu0
    %v5280 = vadd.f32 %v5239, %v5279
    %v5281 = vpop.f32.mrf.mxu0
    %v5282 = vpop.f32.mrf.mxu0
    %5283 = vdwg.mxu0
    %5284 = vmatprep.subr.bf16.mxu0 %v3851
    %5285 = vmatpush1.bf16.msra.mxu0 %v3850
    %5286 = vmatprep.subr.bf16.mxu0 %v3847
    %5287 = vmatpush1.bf16.msra.mxu0 %v3846
    %5288 = vmatprep.subr.bf16.mxu0 %v3843
    %5289 = vmatpush1.bf16.msra.mxu0 %v3842
    %5290 = vmatprep.subr.bf16.mxu0 %v3839
    %5291 = vmatpush1.bf16.msra.mxu0 %v3838
    %5292 = vmatprep.subr.bf16.mxu0 %v3835
    %5293 = vmatpush1.bf16.msra.mxu0 %v3834
    %5294 = vmatprep.subr.bf16.mxu0 %v3831
    %5295 = vmatpush1.bf16.msra.mxu0 %v3830
    %5296 = vmatprep.subr.bf16.mxu0 %v3827
    %5297 = vmatpush1.bf16.msra.mxu0 %v3826
    %5298 = vmatprep.subr.bf16.mxu0 %v3823
    %5299 = vmatpush1.bf16.msra.mxu0 %v3822
    %5300 = vmatprep.subr.bf16.mxu0 %v3883
    %5301 = vmatpush2.bf16.msra.mxu0 %v3882
    %5302 = vmatprep.subr.bf16.mxu0 %v3879
    %5303 = vmatpush2.bf16.msra.mxu0 %v3878
    %5304 = vmatprep.subr.bf16.mxu0 %v3875
    %5305 = vmatpush2.bf16.msra.mxu0 %v3874
    %5306 = vmatprep.subr.bf16.mxu0 %v3871
    %5307 = vmatpush2.bf16.msra.mxu0 %v3870
    %5308 = vmatprep.subr.bf16.mxu0 %v3867
    %5309 = vmatpush2.bf16.msra.mxu0 %v3866
    %5310 = vmatprep.subr.bf16.mxu0 %v3863
    %5311 = vmatpush2.bf16.msra.mxu0 %v3862
    %5312 = vmatprep.subr.bf16.mxu0 %v3859
    %5313 = vmatpush2.bf16.msra.mxu0 %v3858
    %5314 = vmatprep.subr.bf16.mxu0 %v3855
    %5315 = vmatpush2.bf16.msra.mxu0 %v3854
    %5316 = vmatprep.mubr.bf16.mxu0 %v945
    %5317 = vmatmul.mubr.bf16.gmra.mxu0 %v931
    %v5318 = vpop.f32.mrf.mxu0
    %v5319 = vadd.f32 %v5278, %v5318
    %v5320 = vpop.f32.mrf.mxu0
    %v5321 = vadd.f32 %v5280, %v5320
    %v5322 = vpop.f32.mrf.mxu0
    %v5323 = vpop.f32.mrf.mxu0
    %5324 = vdwg.mxu0
    %5325 = vmatprep.subr.bf16.mxu0 %v3915
    %5326 = vmatpush1.bf16.msra.mxu0 %v3914
    %5327 = vmatprep.subr.bf16.mxu0 %v3911
    %5328 = vmatpush1.bf16.msra.mxu0 %v3910
    %5329 = vmatprep.subr.bf16.mxu0 %v3907
    %5330 = vmatpush1.bf16.msra.mxu0 %v3906
    %5331 = vmatprep.subr.bf16.mxu0 %v3903
    %5332 = vmatpush1.bf16.msra.mxu0 %v3902
    %5333 = vmatprep.subr.bf16.mxu0 %v3899
    %5334 = vmatpush1.bf16.msra.mxu0 %v3898
    %5335 = vmatprep.subr.bf16.mxu0 %v3895
    %5336 = vmatpush1.bf16.msra.mxu0 %v3894
    %5337 = vmatprep.subr.bf16.mxu0 %v3891
    %5338 = vmatpush1.bf16.msra.mxu0 %v3890
    %5339 = vmatprep.subr.bf16.mxu0 %v3887
    %5340 = vmatpush1.bf16.msra.mxu0 %v3886
    %5341 = vmatprep.subr.bf16.mxu0 %v3947
    %5342 = vmatpush2.bf16.msra.mxu0 %v3946
    %5343 = vmatprep.subr.bf16.mxu0 %v3943
    %5344 = vmatpush2.bf16.msra.mxu0 %v3942
    %5345 = vmatprep.subr.bf16.mxu0 %v3939
    %5346 = vmatpush2.bf16.msra.mxu0 %v3938
    %5347 = vmatprep.subr.bf16.mxu0 %v3935
    %5348 = vmatpush2.bf16.msra.mxu0 %v3934
    %5349 = vmatprep.subr.bf16.mxu0 %v3931
    %5350 = vmatpush2.bf16.msra.mxu0 %v3930
    %5351 = vmatprep.subr.bf16.mxu0 %v3927
    %5352 = vmatpush2.bf16.msra.mxu0 %v3926
    %5353 = vmatprep.subr.bf16.mxu0 %v3923
    %5354 = vmatpush2.bf16.msra.mxu0 %v3922
    %5355 = vmatprep.subr.bf16.mxu0 %v3919
    %5356 = vmatpush2.bf16.msra.mxu0 %v3918
    %5357 = vmatprep.mubr.bf16.mxu0 %v949
    %5358 = vmatmul.mubr.bf16.gmra.mxu0 %v947
    %v5359 = vpop.f32.mrf.mxu0
    %v5360 = vadd.f32 %v5319, %v5359
    %v5361 = vpop.f32.mrf.mxu0
    %v5362 = vadd.f32 %v5321, %v5361
    %v5363 = vpop.f32.mrf.mxu0
    %v5364 = vpop.f32.mrf.mxu0
    %5365 = vdwg.mxu0
    %5366 = vmatprep.subr.bf16.mxu0 %v3979
    %5367 = vmatpush1.bf16.msra.mxu0 %v3978
    %5368 = vmatprep.subr.bf16.mxu0 %v3975
    %5369 = vmatpush1.bf16.msra.mxu0 %v3974
    %5370 = vmatprep.subr.bf16.mxu0 %v3971
    %5371 = vmatpush1.bf16.msra.mxu0 %v3970
    %5372 = vmatprep.subr.bf16.mxu0 %v3967
    %5373 = vmatpush1.bf16.msra.mxu0 %v3966
    %5374 = vmatprep.subr.bf16.mxu0 %v3963
    %5375 = vmatpush1.bf16.msra.mxu0 %v3962
    %5376 = vmatprep.subr.bf16.mxu0 %v3959
    %5377 = vmatpush1.bf16.msra.mxu0 %v3958
    %5378 = vmatprep.subr.bf16.mxu0 %v3955
    %5379 = vmatpush1.bf16.msra.mxu0 %v3954
    %5380 = vmatprep.subr.bf16.mxu0 %v3951
    %5381 = vmatpush1.bf16.msra.mxu0 %v3950
    %5382 = vmatprep.subr.bf16.mxu0 %v4011
    %5383 = vmatpush2.bf16.msra.mxu0 %v4010
    %5384 = vmatprep.subr.bf16.mxu0 %v4007
    %5385 = vmatpush2.bf16.msra.mxu0 %v4006
    %5386 = vmatprep.subr.bf16.mxu0 %v4003
    %5387 = vmatpush2.bf16.msra.mxu0 %v4002
    %5388 = vmatprep.subr.bf16.mxu0 %v3999
    %5389 = vmatpush2.bf16.msra.mxu0 %v3998
    %5390 = vmatprep.subr.bf16.mxu0 %v3995
    %5391 = vmatpush2.bf16.msra.mxu0 %v3994
    %5392 = vmatprep.subr.bf16.mxu0 %v3991
    %5393 = vmatpush2.bf16.msra.mxu0 %v3990
    %5394 = vmatprep.subr.bf16.mxu0 %v3987
    %5395 = vmatpush2.bf16.msra.mxu0 %v3986
    %5396 = vmatprep.subr.bf16.mxu0 %v3983
    %5397 = vmatpush2.bf16.msra.mxu0 %v3982
    %5398 = vmatprep.mubr.bf16.mxu0 %v987
    %5399 = vmatmul.mubr.bf16.gmra.mxu0 %v973
    %v5400 = vpop.f32.mrf.mxu0
    %v5401 = vadd.f32 %v5360, %v5400
    %v5402 = vpop.f32.mrf.mxu0
    %v5403 = vadd.f32 %v5362, %v5402
    %v5404 = vpop.f32.mrf.mxu0
    %v5405 = vpop.f32.mrf.mxu0
    %5406 = vdwg.mxu0
    %5407 = vmatprep.subr.bf16.mxu0 %v4043
    %5408 = vmatpush1.bf16.msra.mxu0 %v4042
    %5409 = vmatprep.subr.bf16.mxu0 %v4039
    %5410 = vmatpush1.bf16.msra.mxu0 %v4038
    %5411 = vmatprep.subr.bf16.mxu0 %v4035
    %5412 = vmatpush1.bf16.msra.mxu0 %v4034
    %5413 = vmatprep.subr.bf16.mxu0 %v4031
    %5414 = vmatpush1.bf16.msra.mxu0 %v4030
    %5415 = vmatprep.subr.bf16.mxu0 %v4027
    %5416 = vmatpush1.bf16.msra.mxu0 %v4026
    %5417 = vmatprep.subr.bf16.mxu0 %v4023
    %5418 = vmatpush1.bf16.msra.mxu0 %v4022
    %5419 = vmatprep.subr.bf16.mxu0 %v4019
    %5420 = vmatpush1.bf16.msra.mxu0 %v4018
    %5421 = vmatprep.subr.bf16.mxu0 %v4015
    %5422 = vmatpush1.bf16.msra.mxu0 %v4014
    %5423 = vmatprep.subr.bf16.mxu0 %v4075
    %5424 = vmatpush2.bf16.msra.mxu0 %v4074
    %5425 = vmatprep.subr.bf16.mxu0 %v4071
    %5426 = vmatpush2.bf16.msra.mxu0 %v4070
    %5427 = vmatprep.subr.bf16.mxu0 %v4067
    %5428 = vmatpush2.bf16.msra.mxu0 %v4066
    %5429 = vmatprep.subr.bf16.mxu0 %v4063
    %5430 = vmatpush2.bf16.msra.mxu0 %v4062
    %5431 = vmatprep.subr.bf16.mxu0 %v4059
    %5432 = vmatpush2.bf16.msra.mxu0 %v4058
    %5433 = vmatprep.subr.bf16.mxu0 %v4055
    %5434 = vmatpush2.bf16.msra.mxu0 %v4054
    %5435 = vmatprep.subr.bf16.mxu0 %v4051
    %5436 = vmatpush2.bf16.msra.mxu0 %v4050
    %5437 = vmatprep.subr.bf16.mxu0 %v4047
    %5438 = vmatpush2.bf16.msra.mxu0 %v4046
    %5439 = vmatprep.mubr.bf16.mxu0 %v997
    %5440 = vmatmul.mubr.bf16.gmra.mxu0 %v995
    %v5441 = vpop.f32.mrf.mxu0
    %v5442 = vadd.f32 %v5401, %v5441
    %v5443 = vpop.f32.mrf.mxu0
    %v5444 = vadd.f32 %v5403, %v5443
    %v5445 = vpop.f32.mrf.mxu0
    %v5446 = vpop.f32.mrf.mxu0
    %5447 = vdwg.mxu0
    %5448 = vmatprep.subr.bf16.mxu0 %v4107
    %5449 = vmatpush1.bf16.msra.mxu0 %v4106
    %5450 = vmatprep.subr.bf16.mxu0 %v4103
    %5451 = vmatpush1.bf16.msra.mxu0 %v4102
    %5452 = vmatprep.subr.bf16.mxu0 %v4099
    %5453 = vmatpush1.bf16.msra.mxu0 %v4098
    %5454 = vmatprep.subr.bf16.mxu0 %v4095
    %5455 = vmatpush1.bf16.msra.mxu0 %v4094
    %5456 = vmatprep.subr.bf16.mxu0 %v4091
    %5457 = vmatpush1.bf16.msra.mxu0 %v4090
    %5458 = vmatprep.subr.bf16.mxu0 %v4087
    %5459 = vmatpush1.bf16.msra.mxu0 %v4086
    %5460 = vmatprep.subr.bf16.mxu0 %v4083
    %5461 = vmatpush1.bf16.msra.mxu0 %v4082
    %5462 = vmatprep.subr.bf16.mxu0 %v4079
    %5463 = vmatpush1.bf16.msra.mxu0 %v4078
    %5464 = vmatprep.subr.bf16.mxu0 %v4139
    %5465 = vmatpush2.bf16.msra.mxu0 %v4138
    %5466 = vmatprep.subr.bf16.mxu0 %v4135
    %5467 = vmatpush2.bf16.msra.mxu0 %v4134
    %5468 = vmatprep.subr.bf16.mxu0 %v4131
    %5469 = vmatpush2.bf16.msra.mxu0 %v4130
    %5470 = vmatprep.subr.bf16.mxu0 %v4127
    %5471 = vmatpush2.bf16.msra.mxu0 %v4126
    %5472 = vmatprep.subr.bf16.mxu0 %v4123
    %5473 = vmatpush2.bf16.msra.mxu0 %v4122
    %5474 = vmatprep.subr.bf16.mxu0 %v4119
    %5475 = vmatpush2.bf16.msra.mxu0 %v4118
    %5476 = vmatprep.subr.bf16.mxu0 %v4115
    %5477 = vmatpush2.bf16.msra.mxu0 %v4114
    %5478 = vmatprep.subr.bf16.mxu0 %v4111
    %5479 = vmatpush2.bf16.msra.mxu0 %v4110
    %5480 = vmatprep.mubr.bf16.mxu0 %v994
    %5481 = vmatmul.mubr.bf16.gmra.mxu0 %v980
    %v5482 = vpop.f32.mrf.mxu0
    %v5483 = vadd.f32 %v5442, %v5482
    %v5484 = vpop.f32.mrf.mxu0
    %v5485 = vadd.f32 %v5444, %v5484
    %v5486 = vpop.f32.mrf.mxu0
    %v5487 = vpop.f32.mrf.mxu0
    %5488 = vdwg.mxu0
    %5489 = vmatprep.subr.bf16.mxu0 %v4171
    %5490 = vmatpush1.bf16.msra.mxu0 %v4170
    %5491 = vmatprep.subr.bf16.mxu0 %v4167
    %5492 = vmatpush1.bf16.msra.mxu0 %v4166
    %5493 = vmatprep.subr.bf16.mxu0 %v4163
    %5494 = vmatpush1.bf16.msra.mxu0 %v4162
    %5495 = vmatprep.subr.bf16.mxu0 %v4159
    %5496 = vmatpush1.bf16.msra.mxu0 %v4158
    %5497 = vmatprep.subr.bf16.mxu0 %v4155
    %5498 = vmatpush1.bf16.msra.mxu0 %v4154
    %5499 = vmatprep.subr.bf16.mxu0 %v4151
    %5500 = vmatpush1.bf16.msra.mxu0 %v4150
    %5501 = vmatprep.subr.bf16.mxu0 %v4147
    %5502 = vmatpush1.bf16.msra.mxu0 %v4146
    %5503 = vmatprep.subr.bf16.mxu0 %v4143
    %5504 = vmatpush1.bf16.msra.mxu0 %v4142
    %5505 = vmatprep.subr.bf16.mxu0 %v4203
    %5506 = vmatpush2.bf16.msra.mxu0 %v4202
    %5507 = vmatprep.subr.bf16.mxu0 %v4199
    %5508 = vmatpush2.bf16.msra.mxu0 %v4198
    %5509 = vmatprep.subr.bf16.mxu0 %v4195
    %5510 = vmatpush2.bf16.msra.mxu0 %v4194
    %5511 = vmatprep.subr.bf16.mxu0 %v4191
    %5512 = vmatpush2.bf16.msra.mxu0 %v4190
    %5513 = vmatprep.subr.bf16.mxu0 %v4187
    %5514 = vmatpush2.bf16.msra.mxu0 %v4186
    %5515 = vmatprep.subr.bf16.mxu0 %v4183
    %5516 = vmatpush2.bf16.msra.mxu0 %v4182
    %5517 = vmatprep.subr.bf16.mxu0 %v4179
    %5518 = vmatpush2.bf16.msra.mxu0 %v4178
    %5519 = vmatprep.subr.bf16.mxu0 %v4175
    %5520 = vmatpush2.bf16.msra.mxu0 %v4174
    %5521 = vmatprep.mubr.bf16.mxu0 %v998
    %5522 = vmatmul.mubr.bf16.gmra.mxu0 %v996
    %v5523 = vpop.f32.mrf.mxu0
    %v5524 = vadd.f32 %v5483, %v5523
    %v5525 = vpop.f32.mrf.mxu0
    %v5526 = vadd.f32 %v5485, %v5525
    %v5527 = vpop.f32.mrf.mxu0
    %v5528 = vpop.f32.mrf.mxu0
    %5529 = vdwg.mxu0
    %5530 = vmatprep.subr.bf16.mxu0 %v4235
    %5531 = vmatpush1.bf16.msra.mxu0 %v4234
    %5532 = vmatprep.subr.bf16.mxu0 %v4231
    %5533 = vmatpush1.bf16.msra.mxu0 %v4230
    %5534 = vmatprep.subr.bf16.mxu0 %v4227
    %5535 = vmatpush1.bf16.msra.mxu0 %v4226
    %5536 = vmatprep.subr.bf16.mxu0 %v4223
    %5537 = vmatpush1.bf16.msra.mxu0 %v4222
    %5538 = vmatprep.subr.bf16.mxu0 %v4219
    %5539 = vmatpush1.bf16.msra.mxu0 %v4218
    %5540 = vmatprep.subr.bf16.mxu0 %v4215
    %5541 = vmatpush1.bf16.msra.mxu0 %v4214
    %5542 = vmatprep.subr.bf16.mxu0 %v4211
    %5543 = vmatpush1.bf16.msra.mxu0 %v4210
    %5544 = vmatprep.subr.bf16.mxu0 %v4207
    %5545 = vmatpush1.bf16.msra.mxu0 %v4206
    %5546 = vmatprep.subr.bf16.mxu0 0
    %5547 = vmatpush2.bf16.msra.mxu0 0
    %5548 = vmatprep.subr.bf16.mxu0 0
    %5549 = vmatpush2.bf16.msra.mxu0 0
    %5550 = vmatprep.subr.bf16.mxu0 0
    %5551 = vmatpush2.bf16.msra.mxu0 0
    %5552 = vmatprep.subr.bf16.mxu0 0
    %5553 = vmatpush2.bf16.msra.mxu0 0
    %5554 = vmatprep.subr.bf16.mxu0 0
    %5555 = vmatpush2.bf16.msra.mxu0 0
    %5556 = vmatprep.subr.bf16.mxu0 0
    %5557 = vmatpush2.bf16.msra.mxu0 0
    %5558 = vmatprep.subr.bf16.mxu0 0
    %5559 = vmatpush2.bf16.msra.mxu0 0
    %5560 = vmatprep.subr.bf16.mxu0 0
    %5561 = vmatpush2.bf16.msra.mxu0 0
    %5562 = vmatprep.mubr.bf16.mxu0 0
    %5563 = vmatmul.mubr.bf16.gmra.mxu0 %v1012
    %v5564 = vpop.f32.mrf.mxu0
    %v5565 = vadd.f32 %v5524, %v5564
    %v5566 = vpop.f32.mrf.mxu0
    %v5567 = vadd.f32 %v5526, %v5566
    %v5568 = vpop.f32.mrf.mxu0
    %v5569 = vpop.f32.mrf.mxu0
    %5570 = vdwg.mxu0
    %5571 = vmatprep.subr.bf16.mxu0 %v3469
    %5572 = vmatpush1.bf16.msra.mxu0 %v3468
    %5573 = vmatprep.subr.bf16.mxu0 %v3465
    %5574 = vmatpush1.bf16.msra.mxu0 %v3464
    %5575 = vmatprep.subr.bf16.mxu0 %v3461
    %5576 = vmatpush1.bf16.msra.mxu0 %v3460
    %5577 = vmatprep.subr.bf16.mxu0 %v3457
    %5578 = vmatpush1.bf16.msra.mxu0 %v3456
    %5579 = vmatprep.subr.bf16.mxu0 %v3453
    %5580 = vmatpush1.bf16.msra.mxu0 %v3452
    %5581 = vmatprep.subr.bf16.mxu0 %v3449
    %5582 = vmatpush1.bf16.msra.mxu0 %v3448
    %5583 = vmatprep.subr.bf16.mxu0 %v3445
    %5584 = vmatpush1.bf16.msra.mxu0 %v3444
    %5585 = vmatprep.subr.bf16.mxu0 %v3441
    %5586 = vmatpush1.bf16.msra.mxu0 %v3440
    %5587 = vmatprep.subr.bf16.mxu0 %v3501
    %5588 = vmatpush2.bf16.msra.mxu0 %v3500
    %5589 = vmatprep.subr.bf16.mxu0 %v3497
    %5590 = vmatpush2.bf16.msra.mxu0 %v3496
    %5591 = vmatprep.subr.bf16.mxu0 %v3493
    %5592 = vmatpush2.bf16.msra.mxu0 %v3492
    %5593 = vmatprep.subr.bf16.mxu0 %v3489
    %5594 = vmatpush2.bf16.msra.mxu0 %v3488
    %5595 = vmatprep.subr.bf16.mxu0 %v3485
    %5596 = vmatpush2.bf16.msra.mxu0 %v3484
    %5597 = vmatprep.subr.bf16.mxu0 %v3481
    %5598 = vmatpush2.bf16.msra.mxu0 %v3480
    %5599 = vmatprep.subr.bf16.mxu0 %v3477
    %5600 = vmatpush2.bf16.msra.mxu0 %v3476
    %5601 = vmatprep.subr.bf16.mxu0 %v3473
    %5602 = vmatpush2.bf16.msra.mxu0 %v3472
    %5603 = vmatprep.mubr.bf16.mxu0 %v889
    %5604 = vmatmul.mubr.bf16.gmra.mxu0 %v875
    %v5605 = vpop.f32.mrf.mxu0
    %v5606 = vadd.f32 %v839, %v5605
    %v5607 = vpop.f32.mrf.mxu0
    %v5608 = vadd.f32 %v843, %v5607
    %v5609 = vpop.f32.mrf.mxu0
    %v5610 = vpop.f32.mrf.mxu0
    %5611 = vdwg.mxu0
    %5612 = vmatprep.subr.bf16.mxu0 %v3533
    %5613 = vmatpush1.bf16.msra.mxu0 %v3532
    %5614 = vmatprep.subr.bf16.mxu0 %v3529
    %5615 = vmatpush1.bf16.msra.mxu0 %v3528
    %5616 = vmatprep.subr.bf16.mxu0 %v3525
    %5617 = vmatpush1.bf16.msra.mxu0 %v3524
    %5618 = vmatprep.subr.bf16.mxu0 %v3521
    %5619 = vmatpush1.bf16.msra.mxu0 %v3520
    %5620 = vmatprep.subr.bf16.mxu0 %v3517
    %5621 = vmatpush1.bf16.msra.mxu0 %v3516
    %5622 = vmatprep.subr.bf16.mxu0 %v3513
    %5623 = vmatpush1.bf16.msra.mxu0 %v3512
    %5624 = vmatprep.subr.bf16.mxu0 %v3509
    %5625 = vmatpush1.bf16.msra.mxu0 %v3508
    %5626 = vmatprep.subr.bf16.mxu0 %v3505
    %5627 = vmatpush1.bf16.msra.mxu0 %v3504
    %5628 = vmatprep.subr.bf16.mxu0 %v3565
    %5629 = vmatpush2.bf16.msra.mxu0 %v3564
    %5630 = vmatprep.subr.bf16.mxu0 %v3561
    %5631 = vmatpush2.bf16.msra.mxu0 %v3560
    %5632 = vmatprep.subr.bf16.mxu0 %v3557
    %5633 = vmatpush2.bf16.msra.mxu0 %v3556
    %5634 = vmatprep.subr.bf16.mxu0 %v3553
    %5635 = vmatpush2.bf16.msra.mxu0 %v3552
    %5636 = vmatprep.subr.bf16.mxu0 %v3549
    %5637 = vmatpush2.bf16.msra.mxu0 %v3548
    %5638 = vmatprep.subr.bf16.mxu0 %v3545
    %5639 = vmatpush2.bf16.msra.mxu0 %v3544
    %5640 = vmatprep.subr.bf16.mxu0 %v3541
    %5641 = vmatpush2.bf16.msra.mxu0 %v3540
    %5642 = vmatprep.subr.bf16.mxu0 %v3537
    %5643 = vmatpush2.bf16.msra.mxu0 %v3536
    %5644 = vmatprep.mubr.bf16.mxu0 %v899
    %5645 = vmatmul.mubr.bf16.gmra.mxu0 %v897
    %v5646 = vpop.f32.mrf.mxu0
    %v5647 = vadd.f32 %v5606, %v5646
    %v5648 = vpop.f32.mrf.mxu0
    %v5649 = vadd.f32 %v5608, %v5648
    %v5650 = vpop.f32.mrf.mxu0
    %v5651 = vpop.f32.mrf.mxu0
    %5652 = vdwg.mxu0
    %5653 = vmatprep.subr.bf16.mxu0 %v3597
    %5654 = vmatpush1.bf16.msra.mxu0 %v3596
    %5655 = vmatprep.subr.bf16.mxu0 %v3593
    %5656 = vmatpush1.bf16.msra.mxu0 %v3592
    %5657 = vmatprep.subr.bf16.mxu0 %v3589
    %5658 = vmatpush1.bf16.msra.mxu0 %v3588
    %5659 = vmatprep.subr.bf16.mxu0 %v3585
    %5660 = vmatpush1.bf16.msra.mxu0 %v3584
    %5661 = vmatprep.subr.bf16.mxu0 %v3581
    %5662 = vmatpush1.bf16.msra.mxu0 %v3580
    %5663 = vmatprep.subr.bf16.mxu0 %v3577
    %5664 = vmatpush1.bf16.msra.mxu0 %v3576
    %5665 = vmatprep.subr.bf16.mxu0 %v3573
    %5666 = vmatpush1.bf16.msra.mxu0 %v3572
    %5667 = vmatprep.subr.bf16.mxu0 %v3569
    %5668 = vmatpush1.bf16.msra.mxu0 %v3568
    %5669 = vmatprep.subr.bf16.mxu0 %v3629
    %5670 = vmatpush2.bf16.msra.mxu0 %v3628
    %5671 = vmatprep.subr.bf16.mxu0 %v3625
    %5672 = vmatpush2.bf16.msra.mxu0 %v3624
    %5673 = vmatprep.subr.bf16.mxu0 %v3621
    %5674 = vmatpush2.bf16.msra.mxu0 %v3620
    %5675 = vmatprep.subr.bf16.mxu0 %v3617
    %5676 = vmatpush2.bf16.msra.mxu0 %v3616
    %5677 = vmatprep.subr.bf16.mxu0 %v3613
    %5678 = vmatpush2.bf16.msra.mxu0 %v3612
    %5679 = vmatprep.subr.bf16.mxu0 %v3609
    %5680 = vmatpush2.bf16.msra.mxu0 %v3608
    %5681 = vmatprep.subr.bf16.mxu0 %v3605
    %5682 = vmatpush2.bf16.msra.mxu0 %v3604
    %5683 = vmatprep.subr.bf16.mxu0 %v3601
    %5684 = vmatpush2.bf16.msra.mxu0 %v3600
    %5685 = vmatprep.mubr.bf16.mxu0 %v896
    %5686 = vmatmul.mubr.bf16.gmra.mxu0 %v882
    %v5687 = vpop.f32.mrf.mxu0
    %v5688 = vadd.f32 %v5647, %v5687
    %v5689 = vpop.f32.mrf.mxu0
    %v5690 = vadd.f32 %v5649, %v5689
    %v5691 = vpop.f32.mrf.mxu0
    %v5692 = vpop.f32.mrf.mxu0
    %5693 = vdwg.mxu0
    %5694 = vmatprep.subr.bf16.mxu0 %v3661
    %5695 = vmatpush1.bf16.msra.mxu0 %v3660
    %5696 = vmatprep.subr.bf16.mxu0 %v3657
    %5697 = vmatpush1.bf16.msra.mxu0 %v3656
    %5698 = vmatprep.subr.bf16.mxu0 %v3653
    %5699 = vmatpush1.bf16.msra.mxu0 %v3652
    %5700 = vmatprep.subr.bf16.mxu0 %v3649
    %5701 = vmatpush1.bf16.msra.mxu0 %v3648
    %5702 = vmatprep.subr.bf16.mxu0 %v3645
    %5703 = vmatpush1.bf16.msra.mxu0 %v3644
    %5704 = vmatprep.subr.bf16.mxu0 %v3641
    %5705 = vmatpush1.bf16.msra.mxu0 %v3640
    %5706 = vmatprep.subr.bf16.mxu0 %v3637
    %5707 = vmatpush1.bf16.msra.mxu0 %v3636
    %5708 = vmatprep.subr.bf16.mxu0 %v3633
    %5709 = vmatpush1.bf16.msra.mxu0 %v3632
    %5710 = vmatprep.subr.bf16.mxu0 %v3693
    %5711 = vmatpush2.bf16.msra.mxu0 %v3692
    %5712 = vmatprep.subr.bf16.mxu0 %v3689
    %5713 = vmatpush2.bf16.msra.mxu0 %v3688
    %5714 = vmatprep.subr.bf16.mxu0 %v3685
    %5715 = vmatpush2.bf16.msra.mxu0 %v3684
    %5716 = vmatprep.subr.bf16.mxu0 %v3681
    %5717 = vmatpush2.bf16.msra.mxu0 %v3680
    %5718 = vmatprep.subr.bf16.mxu0 %v3677
    %5719 = vmatpush2.bf16.msra.mxu0 %v3676
    %5720 = vmatprep.subr.bf16.mxu0 %v3673
    %5721 = vmatpush2.bf16.msra.mxu0 %v3672
    %5722 = vmatprep.subr.bf16.mxu0 %v3669
    %5723 = vmatpush2.bf16.msra.mxu0 %v3668
    %5724 = vmatprep.subr.bf16.mxu0 %v3665
    %5725 = vmatpush2.bf16.msra.mxu0 %v3664
    %5726 = vmatprep.mubr.bf16.mxu0 %v900
    %5727 = vmatmul.mubr.bf16.gmra.mxu0 %v898
    %v5728 = vpop.f32.mrf.mxu0
    %v5729 = vadd.f32 %v5688, %v5728
    %v5730 = vpop.f32.mrf.mxu0
    %v5731 = vadd.f32 %v5690, %v5730
    %v5732 = vpop.f32.mrf.mxu0
    %v5733 = vpop.f32.mrf.mxu0
    %5734 = vdwg.mxu0
    %5735 = vmatprep.subr.bf16.mxu0 %v3725
    %5736 = vmatpush1.bf16.msra.mxu0 %v3724
    %5737 = vmatprep.subr.bf16.mxu0 %v3721
    %5738 = vmatpush1.bf16.msra.mxu0 %v3720
    %5739 = vmatprep.subr.bf16.mxu0 %v3717
    %5740 = vmatpush1.bf16.msra.mxu0 %v3716
    %5741 = vmatprep.subr.bf16.mxu0 %v3713
    %5742 = vmatpush1.bf16.msra.mxu0 %v3712
    %5743 = vmatprep.subr.bf16.mxu0 %v3709
    %5744 = vmatpush1.bf16.msra.mxu0 %v3708
    %5745 = vmatprep.subr.bf16.mxu0 %v3705
    %5746 = vmatpush1.bf16.msra.mxu0 %v3704
    %5747 = vmatprep.subr.bf16.mxu0 %v3701
    %5748 = vmatpush1.bf16.msra.mxu0 %v3700
    %5749 = vmatprep.subr.bf16.mxu0 %v3697
    %5750 = vmatpush1.bf16.msra.mxu0 %v3696
    %5751 = vmatprep.subr.bf16.mxu0 %v3757
    %5752 = vmatpush2.bf16.msra.mxu0 %v3756
    %5753 = vmatprep.subr.bf16.mxu0 %v3753
    %5754 = vmatpush2.bf16.msra.mxu0 %v3752
    %5755 = vmatprep.subr.bf16.mxu0 %v3749
    %5756 = vmatpush2.bf16.msra.mxu0 %v3748
    %5757 = vmatprep.subr.bf16.mxu0 %v3745
    %5758 = vmatpush2.bf16.msra.mxu0 %v3744
    %5759 = vmatprep.subr.bf16.mxu0 %v3741
    %5760 = vmatpush2.bf16.msra.mxu0 %v3740
    %5761 = vmatprep.subr.bf16.mxu0 %v3737
    %5762 = vmatpush2.bf16.msra.mxu0 %v3736
    %5763 = vmatprep.subr.bf16.mxu0 %v3733
    %5764 = vmatpush2.bf16.msra.mxu0 %v3732
    %5765 = vmatprep.subr.bf16.mxu0 %v3729
    %5766 = vmatpush2.bf16.msra.mxu0 %v3728
    %5767 = vmatprep.mubr.bf16.mxu0 %v938
    %5768 = vmatmul.mubr.bf16.gmra.mxu0 %v924
    %v5769 = vpop.f32.mrf.mxu0
    %v5770 = vadd.f32 %v5729, %v5769
    %v5771 = vpop.f32.mrf.mxu0
    %v5772 = vadd.f32 %v5731, %v5771
    %v5773 = vpop.f32.mrf.mxu0
    %v5774 = vpop.f32.mrf.mxu0
    %5775 = vdwg.mxu0
    %5776 = vmatprep.subr.bf16.mxu0 %v3789
    %5777 = vmatpush1.bf16.msra.mxu0 %v3788
    %5778 = vmatprep.subr.bf16.mxu0 %v3785
    %5779 = vmatpush1.bf16.msra.mxu0 %v3784
    %5780 = vmatprep.subr.bf16.mxu0 %v3781
    %5781 = vmatpush1.bf16.msra.mxu0 %v3780
    %5782 = vmatprep.subr.bf16.mxu0 %v3777
    %5783 = vmatpush1.bf16.msra.mxu0 %v3776
    %5784 = vmatprep.subr.bf16.mxu0 %v3773
    %5785 = vmatpush1.bf16.msra.mxu0 %v3772
    %5786 = vmatprep.subr.bf16.mxu0 %v3769
    %5787 = vmatpush1.bf16.msra.mxu0 %v3768
    %5788 = vmatprep.subr.bf16.mxu0 %v3765
    %5789 = vmatpush1.bf16.msra.mxu0 %v3764
    %5790 = vmatprep.subr.bf16.mxu0 %v3761
    %5791 = vmatpush1.bf16.msra.mxu0 %v3760
    %5792 = vmatprep.subr.bf16.mxu0 %v3821
    %5793 = vmatpush2.bf16.msra.mxu0 %v3820
    %5794 = vmatprep.subr.bf16.mxu0 %v3817
    %5795 = vmatpush2.bf16.msra.mxu0 %v3816
    %5796 = vmatprep.subr.bf16.mxu0 %v3813
    %5797 = vmatpush2.bf16.msra.mxu0 %v3812
    %5798 = vmatprep.subr.bf16.mxu0 %v3809
    %5799 = vmatpush2.bf16.msra.mxu0 %v3808
    %5800 = vmatprep.subr.bf16.mxu0 %v3805
    %5801 = vmatpush2.bf16.msra.mxu0 %v3804
    %5802 = vmatprep.subr.bf16.mxu0 %v3801
    %5803 = vmatpush2.bf16.msra.mxu0 %v3800
    %5804 = vmatprep.subr.bf16.mxu0 %v3797
    %5805 = vmatpush2.bf16.msra.mxu0 %v3796
    %5806 = vmatprep.subr.bf16.mxu0 %v3793
    %5807 = vmatpush2.bf16.msra.mxu0 %v3792
    %5808 = vmatprep.mubr.bf16.mxu0 %v948
    %5809 = vmatmul.mubr.bf16.gmra.mxu0 %v946
    %v5810 = vpop.f32.mrf.mxu0
    %v5811 = vadd.f32 %v5770, %v5810
    %v5812 = vpop.f32.mrf.mxu0
    %v5813 = vadd.f32 %v5772, %v5812
    %v5814 = vpop.f32.mrf.mxu0
    %v5815 = vpop.f32.mrf.mxu0
    %5816 = vdwg.mxu0
    %5817 = vmatprep.subr.bf16.mxu0 %v3853
    %5818 = vmatpush1.bf16.msra.mxu0 %v3852
    %5819 = vmatprep.subr.bf16.mxu0 %v3849
    %5820 = vmatpush1.bf16.msra.mxu0 %v3848
    %5821 = vmatprep.subr.bf16.mxu0 %v3845
    %5822 = vmatpush1.bf16.msra.mxu0 %v3844
    %5823 = vmatprep.subr.bf16.mxu0 %v3841
    %5824 = vmatpush1.bf16.msra.mxu0 %v3840
    %5825 = vmatprep.subr.bf16.mxu0 %v3837
    %5826 = vmatpush1.bf16.msra.mxu0 %v3836
    %5827 = vmatprep.subr.bf16.mxu0 %v3833
    %5828 = vmatpush1.bf16.msra.mxu0 %v3832
    %5829 = vmatprep.subr.bf16.mxu0 %v3829
    %5830 = vmatpush1.bf16.msra.mxu0 %v3828
    %5831 = vmatprep.subr.bf16.mxu0 %v3825
    %5832 = vmatpush1.bf16.msra.mxu0 %v3824
    %5833 = vmatprep.subr.bf16.mxu0 %v3885
    %5834 = vmatpush2.bf16.msra.mxu0 %v3884
    %5835 = vmatprep.subr.bf16.mxu0 %v3881
    %5836 = vmatpush2.bf16.msra.mxu0 %v3880
    %5837 = vmatprep.subr.bf16.mxu0 %v3877
    %5838 = vmatpush2.bf16.msra.mxu0 %v3876
    %5839 = vmatprep.subr.bf16.mxu0 %v3873
    %5840 = vmatpush2.bf16.msra.mxu0 %v3872
    %5841 = vmatprep.subr.bf16.mxu0 %v3869
    %5842 = vmatpush2.bf16.msra.mxu0 %v3868
    %5843 = vmatprep.subr.bf16.mxu0 %v3865
    %5844 = vmatpush2.bf16.msra.mxu0 %v3864
    %5845 = vmatprep.subr.bf16.mxu0 %v3861
    %5846 = vmatpush2.bf16.msra.mxu0 %v3860
    %5847 = vmatprep.subr.bf16.mxu0 %v3857
    %5848 = vmatpush2.bf16.msra.mxu0 %v3856
    %5849 = vmatprep.mubr.bf16.mxu0 %v945
    %5850 = vmatmul.mubr.bf16.gmra.mxu0 %v931
    %v5851 = vpop.f32.mrf.mxu0
    %v5852 = vadd.f32 %v5811, %v5851
    %v5853 = vpop.f32.mrf.mxu0
    %v5854 = vadd.f32 %v5813, %v5853
    %v5855 = vpop.f32.mrf.mxu0
    %v5856 = vpop.f32.mrf.mxu0
    %5857 = vdwg.mxu0
    %5858 = vmatprep.subr.bf16.mxu0 %v3917
    %5859 = vmatpush1.bf16.msra.mxu0 %v3916
    %5860 = vmatprep.subr.bf16.mxu0 %v3913
    %5861 = vmatpush1.bf16.msra.mxu0 %v3912
    %5862 = vmatprep.subr.bf16.mxu0 %v3909
    %5863 = vmatpush1.bf16.msra.mxu0 %v3908
    %5864 = vmatprep.subr.bf16.mxu0 %v3905
    %5865 = vmatpush1.bf16.msra.mxu0 %v3904
    %5866 = vmatprep.subr.bf16.mxu0 %v3901
    %5867 = vmatpush1.bf16.msra.mxu0 %v3900
    %5868 = vmatprep.subr.bf16.mxu0 %v3897
    %5869 = vmatpush1.bf16.msra.mxu0 %v3896
    %5870 = vmatprep.subr.bf16.mxu0 %v3893
    %5871 = vmatpush1.bf16.msra.mxu0 %v3892
    %5872 = vmatprep.subr.bf16.mxu0 %v3889
    %5873 = vmatpush1.bf16.msra.mxu0 %v3888
    %5874 = vmatprep.subr.bf16.mxu0 %v3949
    %5875 = vmatpush2.bf16.msra.mxu0 %v3948
    %5876 = vmatprep.subr.bf16.mxu0 %v3945
    %5877 = vmatpush2.bf16.msra.mxu0 %v3944
    %5878 = vmatprep.subr.bf16.mxu0 %v3941
    %5879 = vmatpush2.bf16.msra.mxu0 %v3940
    %5880 = vmatprep.subr.bf16.mxu0 %v3937
    %5881 = vmatpush2.bf16.msra.mxu0 %v3936
    %5882 = vmatprep.subr.bf16.mxu0 %v3933
    %5883 = vmatpush2.bf16.msra.mxu0 %v3932
    %5884 = vmatprep.subr.bf16.mxu0 %v3929
    %5885 = vmatpush2.bf16.msra.mxu0 %v3928
    %5886 = vmatprep.subr.bf16.mxu0 %v3925
    %5887 = vmatpush2.bf16.msra.mxu0 %v3924
    %5888 = vmatprep.subr.bf16.mxu0 %v3921
    %5889 = vmatpush2.bf16.msra.mxu0 %v3920
    %5890 = vmatprep.mubr.bf16.mxu0 %v949
    %5891 = vmatmul.mubr.bf16.gmra.mxu0 %v947
    %v5892 = vpop.f32.mrf.mxu0
    %v5893 = vadd.f32 %v5852, %v5892
    %v5894 = vpop.f32.mrf.mxu0
    %v5895 = vadd.f32 %v5854, %v5894
    %v5896 = vpop.f32.mrf.mxu0
    %v5897 = vpop.f32.mrf.mxu0
    %5898 = vdwg.mxu0
    %5899 = vmatprep.subr.bf16.mxu0 %v3981
    %5900 = vmatpush1.bf16.msra.mxu0 %v3980
    %5901 = vmatprep.subr.bf16.mxu0 %v3977
    %5902 = vmatpush1.bf16.msra.mxu0 %v3976
    %5903 = vmatprep.subr.bf16.mxu0 %v3973
    %5904 = vmatpush1.bf16.msra.mxu0 %v3972
    %5905 = vmatprep.subr.bf16.mxu0 %v3969
    %5906 = vmatpush1.bf16.msra.mxu0 %v3968
    %5907 = vmatprep.subr.bf16.mxu0 %v3965
    %5908 = vmatpush1.bf16.msra.mxu0 %v3964
    %5909 = vmatprep.subr.bf16.mxu0 %v3961
    %5910 = vmatpush1.bf16.msra.mxu0 %v3960
    %5911 = vmatprep.subr.bf16.mxu0 %v3957
    %5912 = vmatpush1.bf16.msra.mxu0 %v3956
    %5913 = vmatprep.subr.bf16.mxu0 %v3953
    %5914 = vmatpush1.bf16.msra.mxu0 %v3952
    %5915 = vmatprep.subr.bf16.mxu0 %v4013
    %5916 = vmatpush2.bf16.msra.mxu0 %v4012
    %5917 = vmatprep.subr.bf16.mxu0 %v4009
    %5918 = vmatpush2.bf16.msra.mxu0 %v4008
    %5919 = vmatprep.subr.bf16.mxu0 %v4005
    %5920 = vmatpush2.bf16.msra.mxu0 %v4004
    %5921 = vmatprep.subr.bf16.mxu0 %v4001
    %5922 = vmatpush2.bf16.msra.mxu0 %v4000
    %5923 = vmatprep.subr.bf16.mxu0 %v3997
    %5924 = vmatpush2.bf16.msra.mxu0 %v3996
    %5925 = vmatprep.subr.bf16.mxu0 %v3993
    %5926 = vmatpush2.bf16.msra.mxu0 %v3992
    %5927 = vmatprep.subr.bf16.mxu0 %v3989
    %5928 = vmatpush2.bf16.msra.mxu0 %v3988
    %5929 = vmatprep.subr.bf16.mxu0 %v3985
    %5930 = vmatpush2.bf16.msra.mxu0 %v3984
    %5931 = vmatprep.mubr.bf16.mxu0 %v987
    %5932 = vmatmul.mubr.bf16.gmra.mxu0 %v973
    %v5933 = vpop.f32.mrf.mxu0
    %v5934 = vadd.f32 %v5893, %v5933
    %v5935 = vpop.f32.mrf.mxu0
    %v5936 = vadd.f32 %v5895, %v5935
    %v5937 = vpop.f32.mrf.mxu0
    %v5938 = vpop.f32.mrf.mxu0
    %5939 = vdwg.mxu0
    %5940 = vmatprep.subr.bf16.mxu0 %v4045
    %5941 = vmatpush1.bf16.msra.mxu0 %v4044
    %5942 = vmatprep.subr.bf16.mxu0 %v4041
    %5943 = vmatpush1.bf16.msra.mxu0 %v4040
    %5944 = vmatprep.subr.bf16.mxu0 %v4037
    %5945 = vmatpush1.bf16.msra.mxu0 %v4036
    %5946 = vmatprep.subr.bf16.mxu0 %v4033
    %5947 = vmatpush1.bf16.msra.mxu0 %v4032
    %5948 = vmatprep.subr.bf16.mxu0 %v4029
    %5949 = vmatpush1.bf16.msra.mxu0 %v4028
    %5950 = vmatprep.subr.bf16.mxu0 %v4025
    %5951 = vmatpush1.bf16.msra.mxu0 %v4024
    %5952 = vmatprep.subr.bf16.mxu0 %v4021
    %5953 = vmatpush1.bf16.msra.mxu0 %v4020
    %5954 = vmatprep.subr.bf16.mxu0 %v4017
    %5955 = vmatpush1.bf16.msra.mxu0 %v4016
    %5956 = vmatprep.subr.bf16.mxu0 %v4077
    %5957 = vmatpush2.bf16.msra.mxu0 %v4076
    %5958 = vmatprep.subr.bf16.mxu0 %v4073
    %5959 = vmatpush2.bf16.msra.mxu0 %v4072
    %5960 = vmatprep.subr.bf16.mxu0 %v4069
    %5961 = vmatpush2.bf16.msra.mxu0 %v4068
    %5962 = vmatprep.subr.bf16.mxu0 %v4065
    %5963 = vmatpush2.bf16.msra.mxu0 %v4064
    %5964 = vmatprep.subr.bf16.mxu0 %v4061
    %5965 = vmatpush2.bf16.msra.mxu0 %v4060
    %5966 = vmatprep.subr.bf16.mxu0 %v4057
    %5967 = vmatpush2.bf16.msra.mxu0 %v4056
    %5968 = vmatprep.subr.bf16.mxu0 %v4053
    %5969 = vmatpush2.bf16.msra.mxu0 %v4052
    %5970 = vmatprep.subr.bf16.mxu0 %v4049
    %5971 = vmatpush2.bf16.msra.mxu0 %v4048
    %5972 = vmatprep.mubr.bf16.mxu0 %v997
    %5973 = vmatmul.mubr.bf16.gmra.mxu0 %v995
    %v5974 = vpop.f32.mrf.mxu0
    %v5975 = vadd.f32 %v5934, %v5974
    %v5976 = vpop.f32.mrf.mxu0
    %v5977 = vadd.f32 %v5936, %v5976
    %v5978 = vpop.f32.mrf.mxu0
    %v5979 = vpop.f32.mrf.mxu0
    %5980 = vdwg.mxu0
    %5981 = vmatprep.subr.bf16.mxu0 %v4109
    %5982 = vmatpush1.bf16.msra.mxu0 %v4108
    %5983 = vmatprep.subr.bf16.mxu0 %v4105
    %5984 = vmatpush1.bf16.msra.mxu0 %v4104
    %5985 = vmatprep.subr.bf16.mxu0 %v4101
    %5986 = vmatpush1.bf16.msra.mxu0 %v4100
    %5987 = vmatprep.subr.bf16.mxu0 %v4097
    %5988 = vmatpush1.bf16.msra.mxu0 %v4096
    %5989 = vmatprep.subr.bf16.mxu0 %v4093
    %5990 = vmatpush1.bf16.msra.mxu0 %v4092
    %5991 = vmatprep.subr.bf16.mxu0 %v4089
    %5992 = vmatpush1.bf16.msra.mxu0 %v4088
    %5993 = vmatprep.subr.bf16.mxu0 %v4085
    %5994 = vmatpush1.bf16.msra.mxu0 %v4084
    %5995 = vmatprep.subr.bf16.mxu0 %v4081
    %5996 = vmatpush1.bf16.msra.mxu0 %v4080
    %5997 = vmatprep.subr.bf16.mxu0 %v4141
    %5998 = vmatpush2.bf16.msra.mxu0 %v4140
    %5999 = vmatprep.subr.bf16.mxu0 %v4137
    %6000 = vmatpush2.bf16.msra.mxu0 %v4136
    %6001 = vmatprep.subr.bf16.mxu0 %v4133
    %6002 = vmatpush2.bf16.msra.mxu0 %v4132
    %6003 = vmatprep.subr.bf16.mxu0 %v4129
    %6004 = vmatpush2.bf16.msra.mxu0 %v4128
    %6005 = vmatprep.subr.bf16.mxu0 %v4125
    %6006 = vmatpush2.bf16.msra.mxu0 %v4124
    %6007 = vmatprep.subr.bf16.mxu0 %v4121
    %6008 = vmatpush2.bf16.msra.mxu0 %v4120
    %6009 = vmatprep.subr.bf16.mxu0 %v4117
    %6010 = vmatpush2.bf16.msra.mxu0 %v4116
    %6011 = vmatprep.subr.bf16.mxu0 %v4113
    %6012 = vmatpush2.bf16.msra.mxu0 %v4112
    %6013 = vmatprep.mubr.bf16.mxu0 %v994
    %6014 = vmatmul.mubr.bf16.gmra.mxu0 %v980
    %v6015 = vpop.f32.mrf.mxu0
    %v6016 = vadd.f32 %v5975, %v6015
    %v6017 = vpop.f32.mrf.mxu0
    %v6018 = vadd.f32 %v5977, %v6017
    %v6019 = vpop.f32.mrf.mxu0
    %v6020 = vpop.f32.mrf.mxu0
    %6021 = vdwg.mxu0
    %6022 = vmatprep.subr.bf16.mxu0 %v4173
    %6023 = vmatpush1.bf16.msra.mxu0 %v4172
    %6024 = vmatprep.subr.bf16.mxu0 %v4169
    %6025 = vmatpush1.bf16.msra.mxu0 %v4168
    %6026 = vmatprep.subr.bf16.mxu0 %v4165
    %6027 = vmatpush1.bf16.msra.mxu0 %v4164
    %6028 = vmatprep.subr.bf16.mxu0 %v4161
    %6029 = vmatpush1.bf16.msra.mxu0 %v4160
    %6030 = vmatprep.subr.bf16.mxu0 %v4157
    %6031 = vmatpush1.bf16.msra.mxu0 %v4156
    %6032 = vmatprep.subr.bf16.mxu0 %v4153
    %6033 = vmatpush1.bf16.msra.mxu0 %v4152
    %6034 = vmatprep.subr.bf16.mxu0 %v4149
    %6035 = vmatpush1.bf16.msra.mxu0 %v4148
    %6036 = vmatprep.subr.bf16.mxu0 %v4145
    %6037 = vmatpush1.bf16.msra.mxu0 %v4144
    %6038 = vmatprep.subr.bf16.mxu0 %v4205
    %6039 = vmatpush2.bf16.msra.mxu0 %v4204
    %6040 = vmatprep.subr.bf16.mxu0 %v4201
    %6041 = vmatpush2.bf16.msra.mxu0 %v4200
    %6042 = vmatprep.subr.bf16.mxu0 %v4197
    %6043 = vmatpush2.bf16.msra.mxu0 %v4196
    %6044 = vmatprep.subr.bf16.mxu0 %v4193
    %6045 = vmatpush2.bf16.msra.mxu0 %v4192
    %6046 = vmatprep.subr.bf16.mxu0 %v4189
    %6047 = vmatpush2.bf16.msra.mxu0 %v4188
    %6048 = vmatprep.subr.bf16.mxu0 %v4185
    %6049 = vmatpush2.bf16.msra.mxu0 %v4184
    %6050 = vmatprep.subr.bf16.mxu0 %v4181
    %6051 = vmatpush2.bf16.msra.mxu0 %v4180
    %6052 = vmatprep.subr.bf16.mxu0 %v4177
    %6053 = vmatpush2.bf16.msra.mxu0 %v4176
    %6054 = vmatprep.mubr.bf16.mxu0 %v998
    %6055 = vmatmul.mubr.bf16.gmra.mxu0 %v996
    %v6056 = vpop.f32.mrf.mxu0
    %v6057 = vadd.f32 %v6016, %v6056
    %v6058 = vpop.f32.mrf.mxu0
    %v6059 = vadd.f32 %v6018, %v6058
    %v6060 = vpop.f32.mrf.mxu0
    %v6061 = vpop.f32.mrf.mxu0
    %6062 = vdwg.mxu0
    %6063 = vmatprep.subr.bf16.mxu0 %v4237
    %6064 = vmatpush1.bf16.msra.mxu0 %v4236
    %6065 = vmatprep.subr.bf16.mxu0 %v4233
    %6066 = vmatpush1.bf16.msra.mxu0 %v4232
    %6067 = vmatprep.subr.bf16.mxu0 %v4229
    %6068 = vmatpush1.bf16.msra.mxu0 %v4228
    %6069 = vmatprep.subr.bf16.mxu0 %v4225
    %6070 = vmatpush1.bf16.msra.mxu0 %v4224
    %6071 = vmatprep.subr.bf16.mxu0 %v4221
    %6072 = vmatpush1.bf16.msra.mxu0 %v4220
    %6073 = vmatprep.subr.bf16.mxu0 %v4217
    %6074 = vmatpush1.bf16.msra.mxu0 %v4216
    %6075 = vmatprep.subr.bf16.mxu0 %v4213
    %6076 = vmatpush1.bf16.msra.mxu0 %v4212
    %6077 = vmatprep.subr.bf16.mxu0 %v4209
    %6078 = vmatpush1.bf16.msra.mxu0 %v4208
    %6079 = vmatprep.subr.bf16.mxu0 0
    %6080 = vmatpush2.bf16.msra.mxu0 0
    %6081 = vmatprep.subr.bf16.mxu0 0
    %6082 = vmatpush2.bf16.msra.mxu0 0
    %6083 = vmatprep.subr.bf16.mxu0 0
    %6084 = vmatpush2.bf16.msra.mxu0 0
    %6085 = vmatprep.subr.bf16.mxu0 0
    %6086 = vmatpush2.bf16.msra.mxu0 0
    %6087 = vmatprep.subr.bf16.mxu0 0
    %6088 = vmatpush2.bf16.msra.mxu0 0
    %6089 = vmatprep.subr.bf16.mxu0 0
    %6090 = vmatpush2.bf16.msra.mxu0 0
    %6091 = vmatprep.subr.bf16.mxu0 0
    %6092 = vmatpush2.bf16.msra.mxu0 0
    %6093 = vmatprep.subr.bf16.mxu0 0
    %6094 = vmatpush2.bf16.msra.mxu0 0
    %6095 = vmatprep.mubr.bf16.mxu0 0
    %6096 = vmatmul.mubr.bf16.gmra.mxu0 %v1012
    %v6097 = vpop.f32.mrf.mxu0
    %v6098 = vadd.f32 %v6057, %v6097
    %v6099 = vpop.f32.mrf.mxu0
    %v6100 = vadd.f32 %v6059, %v6099
    %v6101 = vpop.f32.mrf.mxu0
    %v6102 = vpop.f32.mrf.mxu0
    %6103 = vdwg.mxu0
    %v6104 = vmax.f32 %v5565, 0.0
    %v6105 = vmax.f32 %v5567, 0.0
    %v6106 = vmax.f32 %v6098, 0.0
    %v6107 = vmax.f32 %v6100, 0.0
    %v6108 = vpack.c.bf16 %v6104, %v6104
    %v6109 = vpack.c.bf16 %v6105, %v6105
    %v6110 = vpack.c.bf16 %v6106, %v6106
    %v6111 = vpack.c.bf16 %v6107, %v6107
    %v6112 = vld [vmem:[%s3] sm:$0xf]
    %v6113 = vld [vmem:[%s3 + $0x4] sm:$0xf]
    %v6114 = vld [vmem:[%s3 + $0x8] sm:$0xf]
    %v6115 = vld [vmem:[%s3 + $0xc] sm:$0xf]
    %v6116 = vld [vmem:[%s3 + $0x10] sm:$0xf]
    %v6117 = vld [vmem:[%s3 + $0x14] sm:$0xf]
    %v6118 = vld [vmem:[%s3 + $0x18] sm:$0xf]
    %v6119 = vld [vmem:[%s3 + $0x1c] sm:$0xf]
    %v6120 = vld [vmem:[%s3 + $0x20] sm:$0xf]
    %v6121 = vld [vmem:[%s3 + $0x24] sm:$0xf]
    %v6122 = vld [vmem:[%s3 + $0x28] sm:$0xf]
    %v6123 = vld [vmem:[%s3 + $0x2c] sm:$0xf]
    %v6124 = vld [vmem:[%s3 + $0x30] sm:$0xf]
    %v6125 = vld [vmem:[%s3 + $0x34] sm:$0xf]
    %v6126 = vld [vmem:[%s3 + $0x38] sm:$0xf]
    %v6127 = vld [vmem:[%s3 + $0x3c] sm:$0xf]
    %v6128 = vld [vmem:[%s3 + $0x40] sm:$0xf]
    %v6129 = vld [vmem:[%s3 + $0x44] sm:$0xf]
    %v6130 = vld [vmem:[%s3 + $0x48] sm:$0xf]
    %v6131 = vld [vmem:[%s3 + $0x4c] sm:$0xf]
    %v6132 = vld [vmem:[%s3 + $0x50] sm:$0xf]
    %v6133 = vld [vmem:[%s3 + $0x54] sm:$0xf]
    %v6134 = vld [vmem:[%s3 + $0x58] sm:$0xf]
    %v6135 = vld [vmem:[%s3 + $0x5c] sm:$0xf]
    %v6136 = vld [vmem:[%s3 + $0x60] sm:$0xf]
    %v6137 = vld [vmem:[%s3 + $0x64] sm:$0xf]
    %v6138 = vld [vmem:[%s3 + $0x68] sm:$0xf]
    %v6139 = vld [vmem:[%s3 + $0x6c] sm:$0xf]
    %v6140 = vld [vmem:[%s3 + $0x70] sm:$0xf]
    %v6141 = vld [vmem:[%s3 + $0x74] sm:$0xf]
    %v6142 = vld [vmem:[%s3 + $0x78] sm:$0xf]
    %v6143 = vld [vmem:[%s3 + $0x7c] sm:$0xf]
    %v6144 = vld [vmem:[%s3 + $0x80] sm:$0xf]
    %v6145 = vld [vmem:[%s3 + $0x84] sm:$0xf]
    %v6146 = vld [vmem:[%s3 + $0x88] sm:$0xf]
    %v6147 = vld [vmem:[%s3 + $0x8c] sm:$0xf]
    %v6148 = vld [vmem:[%s3 + $0x90] sm:$0xf]
    %v6149 = vld [vmem:[%s3 + $0x94] sm:$0xf]
    %v6150 = vld [vmem:[%s3 + $0x98] sm:$0xf]
    %v6151 = vld [vmem:[%s3 + $0x9c] sm:$0xf]
    %v6152 = vld [vmem:[%s3 + $0xa0] sm:$0xf]
    %v6153 = vld [vmem:[%s3 + $0xa4] sm:$0xf]
    %v6154 = vld [vmem:[%s3 + $0xa8] sm:$0xf]
    %v6155 = vld [vmem:[%s3 + $0xac] sm:$0xf]
    %v6156 = vld [vmem:[%s3 + $0xb0] sm:$0xf]
    %v6157 = vld [vmem:[%s3 + $0xb4] sm:$0xf]
    %v6158 = vld [vmem:[%s3 + $0xb8] sm:$0xf]
    %v6159 = vld [vmem:[%s3 + $0xbc] sm:$0xf]
    %v6160 = vld [vmem:[%s3 + $0xc0] sm:$0xf]
    %v6161 = vld [vmem:[%s3 + $0xc4] sm:$0xf]
    %v6162 = vld [vmem:[%s3 + $0xc8] sm:$0xf]
    %v6163 = vld [vmem:[%s3 + $0xcc] sm:$0xf]
    %v6164 = vld [vmem:[%s3 + $0xd0] sm:$0xf]
    %v6165 = vld [vmem:[%s3 + $0xd4] sm:$0xf]
    %v6166 = vld [vmem:[%s3 + $0xd8] sm:$0xf]
    %v6167 = vld [vmem:[%s3 + $0xdc] sm:$0xf]
    %v6168 = vld [vmem:[%s3 + $0xe0] sm:$0xf]
    %v6169 = vld [vmem:[%s3 + $0xe4] sm:$0xf]
    %v6170 = vld [vmem:[%s3 + $0xe8] sm:$0xf]
    %v6171 = vld [vmem:[%s3 + $0xec] sm:$0xf]
    %v6172 = vld [vmem:[%s3 + $0xf0] sm:$0xf]
    %v6173 = vld [vmem:[%s3 + $0xf4] sm:$0xf]
    %v6174 = vld [vmem:[%s3 + $0xf8] sm:$0xf]
    %v6175 = vld [vmem:[%s3 + $0xfc] sm:$0xf]
    %v6176 = vld [vmem:[%s4] sm:$0x1]
    %v6178 = vlaneseq
    %v6179 = vshrl.u32 %v6178, 7
    %v6180 = vsub.s32 0, %v6179
    %v6181 = vrot.slane %v6176, %v6180
    %v6247 = vunpack.c.l.b16 %v6112
    %v6248 = vunpack.c.l.b16 %v6113
    %v6249 = vunpack.c.l.b16 %v6114
    %v6250 = vunpack.c.l.b16 %v6115
    %v6251 = vunpack.c.l.b16 %v6116
    %v6252 = vunpack.c.l.b16 %v6117
    %v6253 = vunpack.c.l.b16 %v6118
    %v6254 = vunpack.c.l.b16 %v6119
    %v6255 = vunpack.c.l.b16 %v6120
    %v6256 = vunpack.c.l.b16 %v6121
    %v6257 = vunpack.c.l.b16 %v6122
    %v6258 = vunpack.c.l.b16 %v6123
    %v6259 = vunpack.c.l.b16 %v6124
    %v6260 = vunpack.c.l.b16 %v6125
    %v6261 = vunpack.c.l.b16 %v6126
    %v6262 = vunpack.c.l.b16 %v6127
    %v6263 = vunpack.c.l.b16 %v6128
    %v6264 = vunpack.c.l.b16 %v6129
    %v6265 = vunpack.c.l.b16 %v6130
    %v6266 = vunpack.c.l.b16 %v6131
    %v6267 = vunpack.c.l.b16 %v6132
    %v6268 = vunpack.c.l.b16 %v6133
    %v6269 = vunpack.c.l.b16 %v6134
    %v6270 = vunpack.c.l.b16 %v6135
    %v6271 = vunpack.c.l.b16 %v6136
    %v6272 = vunpack.c.l.b16 %v6137
    %v6273 = vunpack.c.l.b16 %v6138
    %v6274 = vunpack.c.l.b16 %v6139
    %v6275 = vunpack.c.l.b16 %v6140
    %v6276 = vunpack.c.l.b16 %v6141
    %v6277 = vunpack.c.l.b16 %v6142
    %v6278 = vunpack.c.l.b16 %v6143
    %v6279 = vunpack.c.l.b16 %v6144
    %v6280 = vunpack.c.l.b16 %v6145
    %v6281 = vunpack.c.l.b16 %v6146
    %v6282 = vunpack.c.l.b16 %v6147
    %v6283 = vunpack.c.l.b16 %v6148
    %v6284 = vunpack.c.l.b16 %v6149
    %v6285 = vunpack.c.l.b16 %v6150
    %v6286 = vunpack.c.l.b16 %v6151
    %v6287 = vunpack.c.l.b16 %v6152
    %v6288 = vunpack.c.l.b16 %v6153
    %v6289 = vunpack.c.l.b16 %v6154
    %v6290 = vunpack.c.l.b16 %v6155
    %v6291 = vunpack.c.l.b16 %v6156
    %v6292 = vunpack.c.l.b16 %v6157
    %v6293 = vunpack.c.l.b16 %v6158
    %v6294 = vunpack.c.l.b16 %v6159
    %v6295 = vunpack.c.l.b16 %v6160
    %v6296 = vunpack.c.l.b16 %v6161
    %v6297 = vunpack.c.l.b16 %v6162
    %v6298 = vunpack.c.l.b16 %v6163
    %v6299 = vunpack.c.l.b16 %v6164
    %v6300 = vunpack.c.l.b16 %v6165
    %v6301 = vunpack.c.l.b16 %v6166
    %v6302 = vunpack.c.l.b16 %v6167
    %v6303 = vunpack.c.l.b16 %v6168
    %v6304 = vunpack.c.l.b16 %v6169
    %v6305 = vunpack.c.l.b16 %v6170
    %v6306 = vunpack.c.l.b16 %v6171
    %v6307 = vunpack.c.l.b16 %v6172
    %v6308 = vunpack.c.l.b16 %v6173
    %v6309 = vunpack.c.l.b16 %v6174
    %v6310 = vunpack.c.l.b16 %v6175
    %v6311 = vpack.c.b16 %v6248, %v6247
    %v6312 = vpack.c.b16 %v6250, %v6249
    %v6313 = vpack.c.b16 %v6252, %v6251
    %v6314 = vpack.c.b16 %v6254, %v6253
    %v6315 = vpack.c.b16 %v6256, %v6255
    %v6316 = vpack.c.b16 %v6258, %v6257
    %v6317 = vpack.c.b16 %v6260, %v6259
    %v6318 = vpack.c.b16 %v6262, %v6261
    %v6319 = vpack.c.b16 %v6264, %v6263
    %v6320 = vpack.c.b16 %v6266, %v6265
    %v6321 = vpack.c.b16 %v6268, %v6267
    %v6322 = vpack.c.b16 %v6270, %v6269
    %v6323 = vpack.c.b16 %v6272, %v6271
    %v6324 = vpack.c.b16 %v6274, %v6273
    %v6325 = vpack.c.b16 %v6276, %v6275
    %v6326 = vpack.c.b16 %v6278, %v6277
    %v6327 = vpack.c.b16 %v6280, %v6279
    %v6328 = vpack.c.b16 %v6282, %v6281
    %v6329 = vpack.c.b16 %v6284, %v6283
    %v6330 = vpack.c.b16 %v6286, %v6285
    %v6331 = vpack.c.b16 %v6288, %v6287
    %v6332 = vpack.c.b16 %v6290, %v6289
    %v6333 = vpack.c.b16 %v6292, %v6291
    %v6334 = vpack.c.b16 %v6294, %v6293
    %v6335 = vpack.c.b16 %v6296, %v6295
    %v6336 = vpack.c.b16 %v6298, %v6297
    %v6337 = vpack.c.b16 %v6300, %v6299
    %v6338 = vpack.c.b16 %v6302, %v6301
    %v6339 = vpack.c.b16 %v6304, %v6303
    %v6340 = vpack.c.b16 %v6306, %v6305
    %v6341 = vpack.c.b16 %v6308, %v6307
    %v6342 = vpack.c.b16 %v6310, %v6309
    %6375 = vmatprep.subr.bf16.mxu0 0
    %6376 = vmatpush1.bf16.msra.mxu0 %v6318
    %6377 = vmatprep.subr.bf16.mxu0 0
    %6378 = vmatpush1.bf16.msra.mxu0 %v6317
    %6379 = vmatprep.subr.bf16.mxu0 0
    %6380 = vmatpush1.bf16.msra.mxu0 %v6316
    %6381 = vmatprep.subr.bf16.mxu0 0
    %6382 = vmatpush1.bf16.msra.mxu0 %v6315
    %6383 = vmatprep.subr.bf16.mxu0 0
    %6384 = vmatpush1.bf16.msra.mxu0 %v6314
    %6385 = vmatprep.subr.bf16.mxu0 0
    %6386 = vmatpush1.bf16.msra.mxu0 %v6313
    %6387 = vmatprep.subr.bf16.mxu0 0
    %6388 = vmatpush1.bf16.msra.mxu0 %v6312
    %6389 = vmatprep.subr.bf16.mxu0 0
    %6390 = vmatpush1.bf16.msra.mxu0 %v6311
    %6391 = vmatprep.subr.bf16.mxu0 0
    %6392 = vmatpush2.bf16.msra.mxu0 %v6326
    %6393 = vmatprep.subr.bf16.mxu0 0
    %6394 = vmatpush2.bf16.msra.mxu0 %v6325
    %6395 = vmatprep.subr.bf16.mxu0 0
    %6396 = vmatpush2.bf16.msra.mxu0 %v6324
    %6397 = vmatprep.subr.bf16.mxu0 0
    %6398 = vmatpush2.bf16.msra.mxu0 %v6323
    %6399 = vmatprep.subr.bf16.mxu0 0
    %6400 = vmatpush2.bf16.msra.mxu0 %v6322
    %6401 = vmatprep.subr.bf16.mxu0 0
    %6402 = vmatpush2.bf16.msra.mxu0 %v6321
    %6403 = vmatprep.subr.bf16.mxu0 0
    %6404 = vmatpush2.bf16.msra.mxu0 %v6320
    %6405 = vmatprep.subr.bf16.mxu0 0
    %6406 = vmatpush2.bf16.msra.mxu0 %v6319
    %6407 = vmatprep.mubr.bf16.mxu0 %v6109
    %6408 = vmatmul.mubr.bf16.gmra.mxu0 %v6108
    %v6409 = vpop.f32.mrf.mxu0
    %v6410 = vadd.f32 %v6181, %v6409
    %v6411 = vpop.f32.mrf.mxu0
    %v6412 = vpop.f32.mrf.mxu0
    %v6413 = vpop.f32.mrf.mxu0
    %6414 = vdwg.mxu0
    %6415 = vmatprep.subr.bf16.mxu0 0
    %6416 = vmatpush1.bf16.msra.mxu0 %v6334
    %6417 = vmatprep.subr.bf16.mxu0 0
    %6418 = vmatpush1.bf16.msra.mxu0 %v6333
    %6419 = vmatprep.subr.bf16.mxu0 0
    %6420 = vmatpush1.bf16.msra.mxu0 %v6332
    %6421 = vmatprep.subr.bf16.mxu0 0
    %6422 = vmatpush1.bf16.msra.mxu0 %v6331
    %6423 = vmatprep.subr.bf16.mxu0 0
    %6424 = vmatpush1.bf16.msra.mxu0 %v6330
    %6425 = vmatprep.subr.bf16.mxu0 0
    %6426 = vmatpush1.bf16.msra.mxu0 %v6329
    %6427 = vmatprep.subr.bf16.mxu0 0
    %6428 = vmatpush1.bf16.msra.mxu0 %v6328
    %6429 = vmatprep.subr.bf16.mxu0 0
    %6430 = vmatpush1.bf16.msra.mxu0 %v6327
    %6431 = vmatprep.subr.bf16.mxu0 0
    %6432 = vmatpush2.bf16.msra.mxu0 %v6342
    %6433 = vmatprep.subr.bf16.mxu0 0
    %6434 = vmatpush2.bf16.msra.mxu0 %v6341
    %6435 = vmatprep.subr.bf16.mxu0 0
    %6436 = vmatpush2.bf16.msra.mxu0 %v6340
    %6437 = vmatprep.subr.bf16.mxu0 0
    %6438 = vmatpush2.bf16.msra.mxu0 %v6339
    %6439 = vmatprep.subr.bf16.mxu0 0
    %6440 = vmatpush2.bf16.msra.mxu0 %v6338
    %6441 = vmatprep.subr.bf16.mxu0 0
    %6442 = vmatpush2.bf16.msra.mxu0 %v6337
    %6443 = vmatprep.subr.bf16.mxu0 0
    %6444 = vmatpush2.bf16.msra.mxu0 %v6336
    %6445 = vmatprep.subr.bf16.mxu0 0
    %6446 = vmatpush2.bf16.msra.mxu0 %v6335
    %6447 = vmatprep.mubr.bf16.mxu0 %v6111
    %6448 = vmatmul.mubr.bf16.gmra.mxu0 %v6110
    %v6449 = vpop.f32.mrf.mxu0
    %v6450 = vadd.f32 %v6410, %v6449
    %v6451 = vpop.f32.mrf.mxu0
    %v6452 = vpop.f32.mrf.mxu0
    %v6453 = vpop.f32.mrf.mxu0
    %6454 = vdwg.mxu0
    %6455 = vst [vmem:[#allocation2] sm:$0x3] %v6450
    // Predicated region
    $region22: #{_lambda_.3} parent=1 // pred_check
      _
    $region23: #{_lambda_.3} parent=1 // pred_check_branch
      %6457 = sbr.rel (0) target = $region25
    $region24: #{_lambda_.3} parent=1 // pred_region
      %s6459 = ssub.s32 32, 32
      %6460 = vsyncadd [#allocation3], %s6459
      %s6462 = sshll.u32 [#allocation2], 4
      %s6463 = int_to_ptr.vmem [resolvable:$true] %s6462
      %6465 = dma.vmem_to_hbm [thread:$0]  %s6463, 32, %s5, [#allocation3]
    $region25: #{_lambda_.3} parent=1 // pred_fallthru
      _
    // Predicated region
    $region26: #{_lambda_.3} parent=1 // pred_check
      _
    $region27: #{_lambda_.3} parent=1 // pred_check_branch
      %6467 = sbr.rel (0) target = $region29
    $region28: #{_lambda_.3} parent=1 // pred_region
      %6468 = dma.done [#allocation3], 32
    $region29: #{_lambda_.3} parent=1 // pred_fallthru
      _
    %6469 = vsyncpa [#allocation3], 1

</llo_original>
